<compile_context>
chip_gen: v6e
topology: v6e:2x2x1
jax: 0.10.0
libtpu: 0.0.40
codegen_flags: <defaults>
</compile_context>

<pallas_src>
import functools
import math

import jax
import jax.numpy as jnp
from jax.experimental import pallas as pl
from jax.experimental.pallas import tpu as pltpu


# ------------------------------ fused kernel ---------------------------------

def _fused_traj_lstm_kernel(num_layers, *refs):
    """refs = (x, [wih, whh, b] * num_layers, fw1, fb1, fw2, fb2,
               out, gx_scratch, hseq_scratch)."""
    x_ref = refs[0]
    layer_refs = refs[1:1 + 3 * num_layers]
    (fw1_ref, fb1_ref, fw2_ref, fb2_ref,
     out_ref, gx_sc, hseq_sc) = refs[1 + 3 * num_layers:]

    T, Bp, F = x_ref.shape
    H = hseq_sc.shape[-1]

    def run_layer(gx_flat, whh_ref, write_hseq):
        """gx_flat: (T*Bp, 4H) precomputed input contribution (bias folded in)."""
        gx_sc[...] = gx_flat.reshape(T, Bp, 4 * H)
        whh = whh_ref[...]                      # hoist weight load out of the loop
        h = jnp.zeros((Bp, H), jnp.float32)
        c = jnp.zeros((Bp, H), jnp.float32)
        # T is static -> Python loop fully unrolls (same as fori_loop unroll=True),
        # giving static (lane-aligned) slices and full LLO scheduler visibility.
        for t in range(T):
            gates = gx_sc[t] + jnp.dot(h, whh, preferred_element_type=jnp.float32)
            # gate column order is [i, f, o, g]: one sigmoid on a (Bp, 3H) slab,
            # one tanh on a (Bp, H) slab.
            s = jax.nn.sigmoid(gates[:, :3 * H])
            i_g = s[:, 0 * H:1 * H]
            f_g = s[:, 1 * H:2 * H]
            o_g = s[:, 2 * H:3 * H]
            g_g = jnp.tanh(gates[:, 3 * H:4 * H])
            c = f_g * c + i_g * g_g
            h = o_g * jnp.tanh(c)
            if write_hseq:
                hseq_sc[t] = h
        return h

    # (T, Bp, F) -> (T*Bp, F): leading-dim merge, layout-preserving.
    layer_in = x_ref[...].reshape(T * Bp, F)
    h_last = None
    for layer in range(num_layers):
        wih_ref, whh_ref, b_ref = layer_refs[3 * layer:3 * layer + 3]
        # Input-to-hidden term for ALL timesteps in one matmul; bias folded in
        # (single broadcast per layer, outside the time loop).
        gx_flat = (jnp.dot(layer_in, wih_ref[...], preferred_element_type=jnp.float32)
                   + b_ref[...])
        is_last = layer == num_layers - 1
        h_last = run_layer(gx_flat, whh_ref, write_hseq=not is_last)
        if not is_last:
            layer_in = hseq_sc[...].reshape(T * Bp, H)

    # FC head on out[:, -1, :] == final h of last layer: Linear -> ReLU -> Linear.
    z = jnp.dot(h_last, fw1_ref[...], preferred_element_type=jnp.float32) + fb1_ref[...]
    z = jnp.maximum(z, 0.0)
    out = jnp.dot(z, fw2_ref[...], preferred_element_type=jnp.float32) + fb2_ref[...]
    out_ref[...] = out.astype(out_ref.dtype)


# --------------------------------- wrapper ------------------------------------

@jax.jit
def traj_lstm_forward(x_btf, lstm_params, fc_w1, fc_b1, fc_w2, fc_b2):
    """x_btf: (B, T, F) float32 -> (B, out_dim). Matches PyTorch TrajLSTM.forward.

    lstm_params: tuple of (W_ih^T (F_in,4H), W_hh^T (H,4H), bias (1,4H)) per
    layer with gate columns already permuted to kernel order [i,f,o,g]."""
    B, T, F = x_btf.shape
    num_layers = len(lstm_params)
    H = lstm_params[0][1].shape[0]
    out_dim = fc_w2.shape[1]
    B_pad = max(8, ((B + 7) // 8) * 8)          # f32 sublane minimum

    # Tiny layout prep (fuses into one XLA op): time-major + batch pad to 8.
    x_tm = jnp.transpose(x_btf.astype(jnp.float32), (1, 0, 2))   # (T, B, F)
    x_tm = jnp.pad(x_tm, ((0, 0), (0, B_pad - B), (0, 0)))       # (T, B_pad, F)

    flat_params = []
    for (wih, whh, b) in lstm_params:
        flat_params += [wih, whh, b]

    kernel = functools.partial(_fused_traj_lstm_kernel, num_layers)
    out_p = pl.pallas_call(
        kernel,
        out_shape=jax.ShapeDtypeStruct((B_pad, out_dim), jnp.float32),
        scratch_shapes=[
            pltpu.VMEM((T, B_pad, 4 * H), jnp.float32),   # precomputed X@W_ih + b
            pltpu.VMEM((T, B_pad, H), jnp.float32),       # per-layer hidden sequence
        ],
    )(x_tm, *flat_params, fc_w1, fc_b1, fc_w2, fc_b2)
    return out_p[:B]


# ------------------- parameter layout prep (done once, outside jit) -----------

def _permute_ifgo_to_ifog(a):
    """Permute last-dim gate blocks from PyTorch [i,f,g,o] to [i,f,o,g]."""
    H = a.shape[-1] // 4
    return jnp.concatenate(
        [a[..., :2 * H], a[..., 3 * H:4 * H], a[..., 2 * H:3 * H]], axis=-1)


def to_kernel_layout(lstm_params_ifgo):
    return tuple((_permute_ifgo_to_ifog(wih),
                  _permute_ifgo_to_ifog(whh),
                  _permute_ifgo_to_ifog(b))
                 for (wih, whh, b) in lstm_params_ifgo)


# ------------------------------ pure-JAX reference -----------------------------

def traj_lstm_ref(x_btf, lstm_params, w1, b1, w2, b2):
    """Reference using PyTorch gate order [i,f,g,o]."""
    B, T, _ = x_btf.shape
    h_in = x_btf
    for (wih, whh, b) in lstm_params:
        H = whh.shape[0]
        h = jnp.zeros((B, H), jnp.float32)
        c = jnp.zeros((B, H), jnp.float32)
        outs = []
        for t in range(T):
            g = h_in[:, t, :] @ wih + h @ whh + b
            i_g = jax.nn.sigmoid(g[:, :H])
            f_g = jax.nn.sigmoid(g[:, H:2 * H])
            g_g = jnp.tanh(g[:, 2 * H:3 * H])
            o_g = jax.nn.sigmoid(g[:, 3 * H:])
            c = f_g * c + i_g * g_g
            h = o_g * jnp.tanh(c)
            outs.append(h)
        h_in = jnp.stack(outs, axis=1)
    z = jnp.maximum(h_in[:, -1, :] @ w1 + b1, 0.0)
    return z @ w2 + b2


# ------------------------------------ main ------------------------------------

if __name__ == "__main__":
    # Shapes per the module: input_size=2, hidden_size=128, num_layers=3,
    # fc: 128 -> 64 -> 2.
    B, T, F = 2, 8, 2
    H, NUM_LAYERS, FC_HID, OUT = 128, 3, 64, 2

    key = jax.random.PRNGKey(0)

    def uniform(key, shape, bound):
        return jax.random.uniform(key, shape, jnp.float32, -bound, bound)

    # PyTorch-style init U(-1/sqrt(H), 1/sqrt(H)); weights stored transposed,
    # gate columns in PyTorch order [i, f, g, o], combined bias b_ih + b_hh.
    lstm_params = []
    bound = 1.0 / math.sqrt(H)
    for layer in range(NUM_LAYERS):
        in_dim = F if layer == 0 else H
        key, k1, k2, k3, k4 = jax.random.split(key, 5)
        wih = uniform(k1, (in_dim, 4 * H), bound)    # = W_ih^T
        whh = uniform(k2, (H, 4 * H), bound)         # = W_hh^T
        b = uniform(k3, (1, 4 * H), bound) + uniform(k4, (1, 4 * H), bound)
        lstm_params.append((wih, whh, b))
    lstm_params = tuple(lstm_params)

    key, k1, k2, k3, k4, kx = jax.random.split(key, 6)
    w1 = uniform(k1, (H, FC_HID), 1.0 / math.sqrt(H))
    b1 = uniform(k2, (1, FC_HID), 1.0 / math.sqrt(H))
    w2 = uniform(k3, (FC_HID, OUT), 1.0 / math.sqrt(FC_HID))
    b2 = uniform(k4, (1, OUT), 1.0 / math.sqrt(FC_HID))

    x = jax.random.normal(kx, (B, T, F), jnp.float32)

    # One-time (outside jit) gate-column permutation to kernel layout.
    kernel_lstm_params = jax.tree_util.tree_map(
        lambda a: a, to_kernel_layout(lstm_params))

    out = traj_lstm_forward(x, kernel_lstm_params, w1, b1, w2, b2)
    out = jax.block_until_ready(out)
    assert out.shape == (B, OUT) and out.dtype == jnp.float32

    ref = traj_lstm_ref(x, lstm_params, w1, b1, w2, b2)
    assert jnp.allclose(out, ref, atol=1e-4, rtol=1e-4), (out, ref)

    print("KERNEL_OK")
</pallas_src>

<mosaic_0001>
module attributes {stable_mosaic.version = 11 : i64} {
  func.func @_fused_traj_lstm_kernel(%arg0: memref<8x8x2xf32, #tpu.memory_space<vmem>>, %arg1: memref<2x512xf32, #tpu.memory_space<vmem>>, %arg2: memref<128x512xf32, #tpu.memory_space<vmem>>, %arg3: memref<1x512xf32, #tpu.memory_space<vmem>>, %arg4: memref<128x512xf32, #tpu.memory_space<vmem>>, %arg5: memref<128x512xf32, #tpu.memory_space<vmem>>, %arg6: memref<1x512xf32, #tpu.memory_space<vmem>>, %arg7: memref<128x512xf32, #tpu.memory_space<vmem>>, %arg8: memref<128x512xf32, #tpu.memory_space<vmem>>, %arg9: memref<1x512xf32, #tpu.memory_space<vmem>>, %arg10: memref<128x64xf32, #tpu.memory_space<vmem>>, %arg11: memref<1x64xf32, #tpu.memory_space<vmem>>, %arg12: memref<64x2xf32, #tpu.memory_space<vmem>>, %arg13: memref<1x2xf32, #tpu.memory_space<vmem>>, %arg14: memref<8x2xf32, #tpu.memory_space<vmem>>, %arg15: memref<8x8x512xf32, #tpu.memory_space<vmem>>, %arg16: memref<8x8x128xf32, #tpu.memory_space<vmem>>) attributes {dimension_semantics = [], scalar_prefetch = 0 : i64, scratch_operands = 2 : i64, tpu.core_type = #tpu.core_type<tc>} {
    %c0 = arith.constant 0 : index
    %c0_0 = arith.constant 0 : index
    %c0_1 = arith.constant 0 : index
    %0 = vector.load %arg0[%c0, %c0_0, %c0_1] : memref<8x8x2xf32, #tpu.memory_space<vmem>>, vector<8x8x2xf32>
    %1 = vector.shape_cast %0 : vector<8x8x2xf32> to vector<64x2xf32>
    %c0_2 = arith.constant 0 : index
    %c0_3 = arith.constant 0 : index
    %2 = vector.load %arg1[%c0_2, %c0_3] : memref<2x512xf32, #tpu.memory_space<vmem>>, vector<2x512xf32>
    %cst = arith.constant dense<0.000000e+00> : vector<64x512xf32>
    %3 = tpu.matmul %1, %2, %cst {dimension_numbers = #tpu.dot_dimension_numbers<[1], [0], [0], [1], [0, 0, 1, 1], [], []>} : vector<64x2xf32>, vector<2x512xf32>, vector<64x512xf32> -> vector<64x512xf32>
    %c0_4 = arith.constant 0 : index
    %c0_5 = arith.constant 0 : index
    %4 = vector.load %arg3[%c0_4, %c0_5] : memref<1x512xf32, #tpu.memory_space<vmem>>, vector<1x512xf32>
    %5 = vector.broadcast %4 : vector<1x512xf32> to vector<64x512xf32>
    %6 = arith.addf %3, %5 : vector<64x512xf32>
    %7 = vector.shape_cast %6 : vector<64x512xf32> to vector<8x8x512xf32>
    %c0_6 = arith.constant 0 : index
    %c0_7 = arith.constant 0 : index
    %c0_8 = arith.constant 0 : index
    %8 = vector.load %arg15[%c0_6, %c0_7, %c0_8] : memref<8x8x512xf32, #tpu.memory_space<vmem>>, vector<8x8x512xf32>
    tpu.vector_store %arg15[%c0_6, %c0_7, %c0_8], %7 {strides = array<i32>} : memref<8x8x512xf32, #tpu.memory_space<vmem>>, vector<8x8x512xf32>,
    %c0_9 = arith.constant 0 : index
    %c0_10 = arith.constant 0 : index
    %9 = vector.load %arg2[%c0_9, %c0_10] : memref<128x512xf32, #tpu.memory_space<vmem>>, vector<128x512xf32>
    %cst_11 = arith.constant 0.000000e+00 : f32
    %10 = vector.broadcast %cst_11 : f32 to vector<8x128xf32>
    %cst_12 = arith.constant 0.000000e+00 : f32
    %11 = vector.broadcast %cst_12 : f32 to vector<8x128xf32>
    %c0_13 = arith.constant 0 : index
    %c0_14 = arith.constant 0 : index
    %c0_15 = arith.constant 0 : index
    %12 = vector.load %arg15[%c0_13, %c0_14, %c0_15] : memref<8x8x512xf32, #tpu.memory_space<vmem>>, vector<1x8x512xf32>
    %13 = vector.shape_cast %12 : vector<1x8x512xf32> to vector<8x512xf32>
    %cst_16 = arith.constant dense<0.000000e+00> : vector<8x512xf32>
    %14 = tpu.matmul %10, %9, %cst_16 {dimension_numbers = #tpu.dot_dimension_numbers<[1], [0], [0], [1], [0, 0, 1, 1], [], []>} : vector<8x128xf32>, vector<128x512xf32>, vector<8x512xf32> -> vector<8x512xf32>
    %15 = arith.addf %13, %14 : vector<8x512xf32>
    %16 = vector.extract_strided_slice %15 {offsets = [0, 0], sizes = [8, 384], strides = [1, 1]} : vector<8x512xf32> to vector<8x384xf32>
    %17 = arith.negf %16 : vector<8x384xf32>
    %18 = math.exp %17 : vector<8x384xf32>
    %cst_17 = arith.constant 1.000000e+00 : f32
    %19 = vector.broadcast %cst_17 : f32 to vector<8x384xf32>
    %20 = arith.addf %19, %18 : vector<8x384xf32>
    %21 = arith.divf %19, %20 : vector<8x384xf32>
    %22 = vector.extract_strided_slice %21 {offsets = [0, 0], sizes = [8, 128], strides = [1, 1]} : vector<8x384xf32> to vector<8x128xf32>
    %23 = vector.extract_strided_slice %21 {offsets = [0, 128], sizes = [8, 128], strides = [1, 1]} : vector<8x384xf32> to vector<8x128xf32>
    %24 = vector.extract_strided_slice %21 {offsets = [0, 256], sizes = [8, 128], strides = [1, 1]} : vector<8x384xf32> to vector<8x128xf32>
    %25 = vector.extract_strided_slice %15 {offsets = [0, 384], sizes = [8, 128], strides = [1, 1]} : vector<8x512xf32> to vector<8x128xf32>
    %26 = math.tanh %25 : vector<8x128xf32>
    %27 = arith.mulf %23, %11 : vector<8x128xf32>
    %28 = arith.mulf %22, %26 : vector<8x128xf32>
    %29 = arith.addf %27, %28 : vector<8x128xf32>
    %30 = math.tanh %29 : vector<8x128xf32>
    %31 = arith.mulf %24, %30 : vector<8x128xf32>
    %c0_18 = arith.constant 0 : index
    %c0_19 = arith.constant 0 : index
    %c0_20 = arith.constant 0 : index
    %32 = vector.load %arg16[%c0_18, %c0_19, %c0_20] : memref<8x8x128xf32, #tpu.memory_space<vmem>>, vector<1x8x128xf32>
    %33 = vector.shape_cast %32 : vector<1x8x128xf32> to vector<8x128xf32>
    %34 = vector.shape_cast %31 : vector<8x128xf32> to vector<1x8x128xf32>
    tpu.vector_store %arg16[%c0_18, %c0_19, %c0_20], %34 {strides = array<i32>} : memref<8x8x128xf32, #tpu.memory_space<vmem>>, vector<1x8x128xf32>,
    %c1 = arith.constant 1 : index
    %c0_21 = arith.constant 0 : index
    %c0_22 = arith.constant 0 : index
    %35 = vector.load %arg15[%c1, %c0_21, %c0_22] : memref<8x8x512xf32, #tpu.memory_space<vmem>>, vector<1x8x512xf32>
    %36 = vector.shape_cast %35 : vector<1x8x512xf32> to vector<8x512xf32>
    %cst_23 = arith.constant dense<0.000000e+00> : vector<8x512xf32>
    %37 = tpu.matmul %31, %9, %cst_23 {dimension_numbers = #tpu.dot_dimension_numbers<[1], [0], [0], [1], [0, 0, 1, 1], [], []>} : vector<8x128xf32>, vector<128x512xf32>, vector<8x512xf32> -> vector<8x512xf32>
    %38 = arith.addf %36, %37 : vector<8x512xf32>
    %39 = vector.extract_strided_slice %38 {offsets = [0, 0], sizes = [8, 384], strides = [1, 1]} : vector<8x512xf32> to vector<8x384xf32>
    %40 = arith.negf %39 : vector<8x384xf32>
    %41 = math.exp %40 : vector<8x384xf32>
    %cst_24 = arith.constant 1.000000e+00 : f32
    %42 = vector.broadcast %cst_24 : f32 to vector<8x384xf32>
    %43 = arith.addf %42, %41 : vector<8x384xf32>
    %44 = arith.divf %42, %43 : vector<8x384xf32>
    %45 = vector.extract_strided_slice %44 {offsets = [0, 0], sizes = [8, 128], strides = [1, 1]} : vector<8x384xf32> to vector<8x128xf32>
    %46 = vector.extract_strided_slice %44 {offsets = [0, 128], sizes = [8, 128], strides = [1, 1]} : vector<8x384xf32> to vector<8x128xf32>
    %47 = vector.extract_strided_slice %44 {offsets = [0, 256], sizes = [8, 128], strides = [1, 1]} : vector<8x384xf32> to vector<8x128xf32>
    %48 = vector.extract_strided_slice %38 {offsets = [0, 384], sizes = [8, 128], strides = [1, 1]} : vector<8x512xf32> to vector<8x128xf32>
    %49 = math.tanh %48 : vector<8x128xf32>
    %50 = arith.mulf %46, %29 : vector<8x128xf32>
    %51 = arith.mulf %45, %49 : vector<8x128xf32>
    %52 = arith.addf %50, %51 : vector<8x128xf32>
    %53 = math.tanh %52 : vector<8x128xf32>
    %54 = arith.mulf %47, %53 : vector<8x128xf32>
    %c1_25 = arith.constant 1 : index
    %c0_26 = arith.constant 0 : index
    %c0_27 = arith.constant 0 : index
    %55 = vector.load %arg16[%c1_25, %c0_26, %c0_27] : memref<8x8x128xf32, #tpu.memory_space<vmem>>, vector<1x8x128xf32>
    %56 = vector.shape_cast %55 : vector<1x8x128xf32> to vector<8x128xf32>
    %57 = vector.shape_cast %54 : vector<8x128xf32> to vector<1x8x128xf32>
    tpu.vector_store %arg16[%c1_25, %c0_26, %c0_27], %57 {strides = array<i32>} : memref<8x8x128xf32, #tpu.memory_space<vmem>>, vector<1x8x128xf32>,
    %c2 = arith.constant 2 : index
    %c0_28 = arith.constant 0 : index
    %c0_29 = arith.constant 0 : index
    %58 = vector.load %arg15[%c2, %c0_28, %c0_29] : memref<8x8x512xf32, #tpu.memory_space<vmem>>, vector<1x8x512xf32>
    %59 = vector.shape_cast %58 : vector<1x8x512xf32> to vector<8x512xf32>
    %cst_30 = arith.constant dense<0.000000e+00> : vector<8x512xf32>
    %60 = tpu.matmul %54, %9, %cst_30 {dimension_numbers = #tpu.dot_dimension_numbers<[1], [0], [0], [1], [0, 0, 1, 1], [], []>} : vector<8x128xf32>, vector<128x512xf32>, vector<8x512xf32> -> vector<8x512xf32>
    %61 = arith.addf %59, %60 : vector<8x512xf32>
    %62 = vector.extract_strided_slice %61 {offsets = [0, 0], sizes = [8, 384], strides = [1, 1]} : vector<8x512xf32> to vector<8x384xf32>
    %63 = arith.negf %62 : vector<8x384xf32>
    %64 = math.exp %63 : vector<8x384xf32>
    %cst_31 = arith.constant 1.000000e+00 : f32
    %65 = vector.broadcast %cst_31 : f32 to vector<8x384xf32>
    %66 = arith.addf %65, %64 : vector<8x384xf32>
    %67 = arith.divf %65, %66 : vector<8x384xf32>
    %68 = vector.extract_strided_slice %67 {offsets = [0, 0], sizes = [8, 128], strides = [1, 1]} : vector<8x384xf32> to vector<8x128xf32>
    %69 = vector.extract_strided_slice %67 {offsets = [0, 128], sizes = [8, 128], strides = [1, 1]} : vector<8x384xf32> to vector<8x128xf32>
    %70 = vector.extract_strided_slice %67 {offsets = [0, 256], sizes = [8, 128], strides = [1, 1]} : vector<8x384xf32> to vector<8x128xf32>
    %71 = vector.extract_strided_slice %61 {offsets = [0, 384], sizes = [8, 128], strides = [1, 1]} : vector<8x512xf32> to vector<8x128xf32>
    %72 = math.tanh %71 : vector<8x128xf32>
    %73 = arith.mulf %69, %52 : vector<8x128xf32>
    %74 = arith.mulf %68, %72 : vector<8x128xf32>
    %75 = arith.addf %73, %74 : vector<8x128xf32>
    %76 = math.tanh %75 : vector<8x128xf32>
    %77 = arith.mulf %70, %76 : vector<8x128xf32>
    %c2_32 = arith.constant 2 : index
    %c0_33 = arith.constant 0 : index
    %c0_34 = arith.constant 0 : index
    %78 = vector.load %arg16[%c2_32, %c0_33, %c0_34] : memref<8x8x128xf32, #tpu.memory_space<vmem>>, vector<1x8x128xf32>
    %79 = vector.shape_cast %78 : vector<1x8x128xf32> to vector<8x128xf32>
    %80 = vector.shape_cast %77 : vector<8x128xf32> to vector<1x8x128xf32>
    tpu.vector_store %arg16[%c2_32, %c0_33, %c0_34], %80 {strides = array<i32>} : memref<8x8x128xf32, #tpu.memory_space<vmem>>, vector<1x8x128xf32>,
    %c3 = arith.constant 3 : index
    %c0_35 = arith.constant 0 : index
    %c0_36 = arith.constant 0 : index
    %81 = vector.load %arg15[%c3, %c0_35, %c0_36] : memref<8x8x512xf32, #tpu.memory_space<vmem>>, vector<1x8x512xf32>
    %82 = vector.shape_cast %81 : vector<1x8x512xf32> to vector<8x512xf32>
    %cst_37 = arith.constant dense<0.000000e+00> : vector<8x512xf32>
    %83 = tpu.matmul %77, %9, %cst_37 {dimension_numbers = #tpu.dot_dimension_numbers<[1], [0], [0], [1], [0, 0, 1, 1], [], []>} : vector<8x128xf32>, vector<128x512xf32>, vector<8x512xf32> -> vector<8x512xf32>
    %84 = arith.addf %82, %83 : vector<8x512xf32>
    %85 = vector.extract_strided_slice %84 {offsets = [0, 0], sizes = [8, 384], strides = [1, 1]} : vector<8x512xf32> to vector<8x384xf32>
    %86 = arith.negf %85 : vector<8x384xf32>
    %87 = math.exp %86 : vector<8x384xf32>
    %cst_38 = arith.constant 1.000000e+00 : f32
    %88 = vector.broadcast %cst_38 : f32 to vector<8x384xf32>
    %89 = arith.addf %88, %87 : vector<8x384xf32>
    %90 = arith.divf %88, %89 : vector<8x384xf32>
    %91 = vector.extract_strided_slice %90 {offsets = [0, 0], sizes = [8, 128], strides = [1, 1]} : vector<8x384xf32> to vector<8x128xf32>
    %92 = vector.extract_strided_slice %90 {offsets = [0, 128], sizes = [8, 128], strides = [1, 1]} : vector<8x384xf32> to vector<8x128xf32>
    %93 = vector.extract_strided_slice %90 {offsets = [0, 256], sizes = [8, 128], strides = [1, 1]} : vector<8x384xf32> to vector<8x128xf32>
    %94 = vector.extract_strided_slice %84 {offsets = [0, 384], sizes = [8, 128], strides = [1, 1]} : vector<8x512xf32> to vector<8x128xf32>
    %95 = math.tanh %94 : vector<8x128xf32>
    %96 = arith.mulf %92, %75 : vector<8x128xf32>
    %97 = arith.mulf %91, %95 : vector<8x128xf32>
    %98 = arith.addf %96, %97 : vector<8x128xf32>
    %99 = math.tanh %98 : vector<8x128xf32>
    %100 = arith.mulf %93, %99 : vector<8x128xf32>
    %c3_39 = arith.constant 3 : index
    %c0_40 = arith.constant 0 : index
    %c0_41 = arith.constant 0 : index
    %101 = vector.load %arg16[%c3_39, %c0_40, %c0_41] : memref<8x8x128xf32, #tpu.memory_space<vmem>>, vector<1x8x128xf32>
    %102 = vector.shape_cast %101 : vector<1x8x128xf32> to vector<8x128xf32>
    %103 = vector.shape_cast %100 : vector<8x128xf32> to vector<1x8x128xf32>
    tpu.vector_store %arg16[%c3_39, %c0_40, %c0_41], %103 {strides = array<i32>} : memref<8x8x128xf32, #tpu.memory_space<vmem>>, vector<1x8x128xf32>,
    %c4 = arith.constant 4 : index
    %c0_42 = arith.constant 0 : index
    %c0_43 = arith.constant 0 : index
    %104 = vector.load %arg15[%c4, %c0_42, %c0_43] : memref<8x8x512xf32, #tpu.memory_space<vmem>>, vector<1x8x512xf32>
    %105 = vector.shape_cast %104 : vector<1x8x512xf32> to vector<8x512xf32>
    %cst_44 = arith.constant dense<0.000000e+00> : vector<8x512xf32>
    %106 = tpu.matmul %100, %9, %cst_44 {dimension_numbers = #tpu.dot_dimension_numbers<[1], [0], [0], [1], [0, 0, 1, 1], [], []>} : vector<8x128xf32>, vector<128x512xf32>, vector<8x512xf32> -> vector<8x512xf32>
    %107 = arith.addf %105, %106 : vector<8x512xf32>
    %108 = vector.extract_strided_slice %107 {offsets = [0, 0], sizes = [8, 384], strides = [1, 1]} : vector<8x512xf32> to vector<8x384xf32>
    %109 = arith.negf %108 : vector<8x384xf32>
    %110 = math.exp %109 : vector<8x384xf32>
    %cst_45 = arith.constant 1.000000e+00 : f32
    %111 = vector.broadcast %cst_45 : f32 to vector<8x384xf32>
    %112 = arith.addf %111, %110 : vector<8x384xf32>
    %113 = arith.divf %111, %112 : vector<8x384xf32>
    %114 = vector.extract_strided_slice %113 {offsets = [0, 0], sizes = [8, 128], strides = [1, 1]} : vector<8x384xf32> to vector<8x128xf32>
    %115 = vector.extract_strided_slice %113 {offsets = [0, 128], sizes = [8, 128], strides = [1, 1]} : vector<8x384xf32> to vector<8x128xf32>
    %116 = vector.extract_strided_slice %113 {offsets = [0, 256], sizes = [8, 128], strides = [1, 1]} : vector<8x384xf32> to vector<8x128xf32>
    %117 = vector.extract_strided_slice %107 {offsets = [0, 384], sizes = [8, 128], strides = [1, 1]} : vector<8x512xf32> to vector<8x128xf32>
    %118 = math.tanh %117 : vector<8x128xf32>
    %119 = arith.mulf %115, %98 : vector<8x128xf32>
    %120 = arith.mulf %114, %118 : vector<8x128xf32>
    %121 = arith.addf %119, %120 : vector<8x128xf32>
    %122 = math.tanh %121 : vector<8x128xf32>
    %123 = arith.mulf %116, %122 : vector<8x128xf32>
    %c4_46 = arith.constant 4 : index
    %c0_47 = arith.constant 0 : index
    %c0_48 = arith.constant 0 : index
    %124 = vector.load %arg16[%c4_46, %c0_47, %c0_48] : memref<8x8x128xf32, #tpu.memory_space<vmem>>, vector<1x8x128xf32>
    %125 = vector.shape_cast %124 : vector<1x8x128xf32> to vector<8x128xf32>
    %126 = vector.shape_cast %123 : vector<8x128xf32> to vector<1x8x128xf32>
    tpu.vector_store %arg16[%c4_46, %c0_47, %c0_48], %126 {strides = array<i32>} : memref<8x8x128xf32, #tpu.memory_space<vmem>>, vector<1x8x128xf32>,
    %c5 = arith.constant 5 : index
    %c0_49 = arith.constant 0 : index
    %c0_50 = arith.constant 0 : index
    %127 = vector.load %arg15[%c5, %c0_49, %c0_50] : memref<8x8x512xf32, #tpu.memory_space<vmem>>, vector<1x8x512xf32>
    %128 = vector.shape_cast %127 : vector<1x8x512xf32> to vector<8x512xf32>
    %cst_51 = arith.constant dense<0.000000e+00> : vector<8x512xf32>
    %129 = tpu.matmul %123, %9, %cst_51 {dimension_numbers = #tpu.dot_dimension_numbers<[1], [0], [0], [1], [0, 0, 1, 1], [], []>} : vector<8x128xf32>, vector<128x512xf32>, vector<8x512xf32> -> vector<8x512xf32>
    %130 = arith.addf %128, %129 : vector<8x512xf32>
    %131 = vector.extract_strided_slice %130 {offsets = [0, 0], sizes = [8, 384], strides = [1, 1]} : vector<8x512xf32> to vector<8x384xf32>
    %132 = arith.negf %131 : vector<8x384xf32>
    %133 = math.exp %132 : vector<8x384xf32>
    %cst_52 = arith.constant 1.000000e+00 : f32
    %134 = vector.broadcast %cst_52 : f32 to vector<8x384xf32>
    %135 = arith.addf %134, %133 : vector<8x384xf32>
    %136 = arith.divf %134, %135 : vector<8x384xf32>
    %137 = vector.extract_strided_slice %136 {offsets = [0, 0], sizes = [8, 128], strides = [1, 1]} : vector<8x384xf32> to vector<8x128xf32>
    %138 = vector.extract_strided_slice %136 {offsets = [0, 128], sizes = [8, 128], strides = [1, 1]} : vector<8x384xf32> to vector<8x128xf32>
    %139 = vector.extract_strided_slice %136 {offsets = [0, 256], sizes = [8, 128], strides = [1, 1]} : vector<8x384xf32> to vector<8x128xf32>
    %140 = vector.extract_strided_slice %130 {offsets = [0, 384], sizes = [8, 128], strides = [1, 1]} : vector<8x512xf32> to vector<8x128xf32>
    %141 = math.tanh %140 : vector<8x128xf32>
    %142 = arith.mulf %138, %121 : vector<8x128xf32>
    %143 = arith.mulf %137, %141 : vector<8x128xf32>
    %144 = arith.addf %142, %143 : vector<8x128xf32>
    %145 = math.tanh %144 : vector<8x128xf32>
    %146 = arith.mulf %139, %145 : vector<8x128xf32>
    %c5_53 = arith.constant 5 : index
    %c0_54 = arith.constant 0 : index
    %c0_55 = arith.constant 0 : index
    %147 = vector.load %arg16[%c5_53, %c0_54, %c0_55] : memref<8x8x128xf32, #tpu.memory_space<vmem>>, vector<1x8x128xf32>
    %148 = vector.shape_cast %147 : vector<1x8x128xf32> to vector<8x128xf32>
    %149 = vector.shape_cast %146 : vector<8x128xf32> to vector<1x8x128xf32>
    tpu.vector_store %arg16[%c5_53, %c0_54, %c0_55], %149 {strides = array<i32>} : memref<8x8x128xf32, #tpu.memory_space<vmem>>, vector<1x8x128xf32>,
    %c6 = arith.constant 6 : index
    %c0_56 = arith.constant 0 : index
    %c0_57 = arith.constant 0 : index
    %150 = vector.load %arg15[%c6, %c0_56, %c0_57] : memref<8x8x512xf32, #tpu.memory_space<vmem>>, vector<1x8x512xf32>
    %151 = vector.shape_cast %150 : vector<1x8x512xf32> to vector<8x512xf32>
    %cst_58 = arith.constant dense<0.000000e+00> : vector<8x512xf32>
    %152 = tpu.matmul %146, %9, %cst_58 {dimension_numbers = #tpu.dot_dimension_numbers<[1], [0], [0], [1], [0, 0, 1, 1], [], []>} : vector<8x128xf32>, vector<128x512xf32>, vector<8x512xf32> -> vector<8x512xf32>
    %153 = arith.addf %151, %152 : vector<8x512xf32>
    %154 = vector.extract_strided_slice %153 {offsets = [0, 0], sizes = [8, 384], strides = [1, 1]} : vector<8x512xf32> to vector<8x384xf32>
    %155 = arith.negf %154 : vector<8x384xf32>
    %156 = math.exp %155 : vector<8x384xf32>
    %cst_59 = arith.constant 1.000000e+00 : f32
    %157 = vector.broadcast %cst_59 : f32 to vector<8x384xf32>
    %158 = arith.addf %157, %156 : vector<8x384xf32>
    %159 = arith.divf %157, %158 : vector<8x384xf32>
    %160 = vector.extract_strided_slice %159 {offsets = [0, 0], sizes = [8, 128], strides = [1, 1]} : vector<8x384xf32> to vector<8x128xf32>
    %161 = vector.extract_strided_slice %159 {offsets = [0, 128], sizes = [8, 128], strides = [1, 1]} : vector<8x384xf32> to vector<8x128xf32>
    %162 = vector.extract_strided_slice %159 {offsets = [0, 256], sizes = [8, 128], strides = [1, 1]} : vector<8x384xf32> to vector<8x128xf32>
    %163 = vector.extract_strided_slice %153 {offsets = [0, 384], sizes = [8, 128], strides = [1, 1]} : vector<8x512xf32> to vector<8x128xf32>
    %164 = math.tanh %163 : vector<8x128xf32>
    %165 = arith.mulf %161, %144 : vector<8x128xf32>
    %166 = arith.mulf %160, %164 : vector<8x128xf32>
    %167 = arith.addf %165, %166 : vector<8x128xf32>
    %168 = math.tanh %167 : vector<8x128xf32>
    %169 = arith.mulf %162, %168 : vector<8x128xf32>
    %c6_60 = arith.constant 6 : index
    %c0_61 = arith.constant 0 : index
    %c0_62 = arith.constant 0 : index
    %170 = vector.load %arg16[%c6_60, %c0_61, %c0_62] : memref<8x8x128xf32, #tpu.memory_space<vmem>>, vector<1x8x128xf32>
    %171 = vector.shape_cast %170 : vector<1x8x128xf32> to vector<8x128xf32>
    %172 = vector.shape_cast %169 : vector<8x128xf32> to vector<1x8x128xf32>
    tpu.vector_store %arg16[%c6_60, %c0_61, %c0_62], %172 {strides = array<i32>} : memref<8x8x128xf32, #tpu.memory_space<vmem>>, vector<1x8x128xf32>,
    %c7 = arith.constant 7 : index
    %c0_63 = arith.constant 0 : index
    %c0_64 = arith.constant 0 : index
    %173 = vector.load %arg15[%c7, %c0_63, %c0_64] : memref<8x8x512xf32, #tpu.memory_space<vmem>>, vector<1x8x512xf32>
    %174 = vector.shape_cast %173 : vector<1x8x512xf32> to vector<8x512xf32>
    %cst_65 = arith.constant dense<0.000000e+00> : vector<8x512xf32>
    %175 = tpu.matmul %169, %9, %cst_65 {dimension_numbers = #tpu.dot_dimension_numbers<[1], [0], [0], [1], [0, 0, 1, 1], [], []>} : vector<8x128xf32>, vector<128x512xf32>, vector<8x512xf32> -> vector<8x512xf32>
    %176 = arith.addf %174, %175 : vector<8x512xf32>
    %177 = vector.extract_strided_slice %176 {offsets = [0, 0], sizes = [8, 384], strides = [1, 1]} : vector<8x512xf32> to vector<8x384xf32>
    %178 = arith.negf %177 : vector<8x384xf32>
    %179 = math.exp %178 : vector<8x384xf32>
    %cst_66 = arith.constant 1.000000e+00 : f32
    %180 = vector.broadcast %cst_66 : f32 to vector<8x384xf32>
    %181 = arith.addf %180, %179 : vector<8x384xf32>
    %182 = arith.divf %180, %181 : vector<8x384xf32>
    %183 = vector.extract_strided_slice %182 {offsets = [0, 0], sizes = [8, 128], strides = [1, 1]} : vector<8x384xf32> to vector<8x128xf32>
    %184 = vector.extract_strided_slice %182 {offsets = [0, 128], sizes = [8, 128], strides = [1, 1]} : vector<8x384xf32> to vector<8x128xf32>
    %185 = vector.extract_strided_slice %182 {offsets = [0, 256], sizes = [8, 128], strides = [1, 1]} : vector<8x384xf32> to vector<8x128xf32>
    %186 = vector.extract_strided_slice %176 {offsets = [0, 384], sizes = [8, 128], strides = [1, 1]} : vector<8x512xf32> to vector<8x128xf32>
    %187 = math.tanh %186 : vector<8x128xf32>
    %188 = arith.mulf %184, %167 : vector<8x128xf32>
    %189 = arith.mulf %183, %187 : vector<8x128xf32>
    %190 = arith.addf %188, %189 : vector<8x128xf32>
    %191 = math.tanh %190 : vector<8x128xf32>
    %192 = arith.mulf %185, %191 : vector<8x128xf32>
    %c7_67 = arith.constant 7 : index
    %c0_68 = arith.constant 0 : index
    %c0_69 = arith.constant 0 : index
    %193 = vector.load %arg16[%c7_67, %c0_68, %c0_69] : memref<8x8x128xf32, #tpu.memory_space<vmem>>, vector<1x8x128xf32>
    %194 = vector.shape_cast %193 : vector<1x8x128xf32> to vector<8x128xf32>
    %195 = vector.shape_cast %192 : vector<8x128xf32> to vector<1x8x128xf32>
    tpu.vector_store %arg16[%c7_67, %c0_68, %c0_69], %195 {strides = array<i32>} : memref<8x8x128xf32, #tpu.memory_space<vmem>>, vector<1x8x128xf32>,
    %c0_70 = arith.constant 0 : index
    %c0_71 = arith.constant 0 : index
    %c0_72 = arith.constant 0 : index
    %196 = vector.load %arg16[%c0_70, %c0_71, %c0_72] : memref<8x8x128xf32, #tpu.memory_space<vmem>>, vector<8x8x128xf32>
    %197 = vector.shape_cast %196 : vector<8x8x128xf32> to vector<64x128xf32>
    %c0_73 = arith.constant 0 : index
    %c0_74 = arith.constant 0 : index
    %198 = vector.load %arg4[%c0_73, %c0_74] : memref<128x512xf32, #tpu.memory_space<vmem>>, vector<128x512xf32>
    %cst_75 = arith.constant dense<0.000000e+00> : vector<64x512xf32>
    %199 = tpu.matmul %197, %198, %cst_75 {dimension_numbers = #tpu.dot_dimension_numbers<[1], [0], [0], [1], [0, 0, 1, 1], [], []>} : vector<64x128xf32>, vector<128x512xf32>, vector<64x512xf32> -> vector<64x512xf32>
    %c0_76 = arith.constant 0 : index
    %c0_77 = arith.constant 0 : index
    %200 = vector.load %arg6[%c0_76, %c0_77] : memref<1x512xf32, #tpu.memory_space<vmem>>, vector<1x512xf32>
    %201 = vector.broadcast %200 : vector<1x512xf32> to vector<64x512xf32>
    %202 = arith.addf %199, %201 : vector<64x512xf32>
    %203 = vector.shape_cast %202 : vector<64x512xf32> to vector<8x8x512xf32>
    %c0_78 = arith.constant 0 : index
    %c0_79 = arith.constant 0 : index
    %c0_80 = arith.constant 0 : index
    %204 = vector.load %arg15[%c0_78, %c0_79, %c0_80] : memref<8x8x512xf32, #tpu.memory_space<vmem>>, vector<8x8x512xf32>
    tpu.vector_store %arg15[%c0_78, %c0_79, %c0_80], %203 {strides = array<i32>} : memref<8x8x512xf32, #tpu.memory_space<vmem>>, vector<8x8x512xf32>,
    %c0_81 = arith.constant 0 : index
    %c0_82 = arith.constant 0 : index
    %205 = vector.load %arg5[%c0_81, %c0_82] : memref<128x512xf32, #tpu.memory_space<vmem>>, vector<128x512xf32>
    %cst_83 = arith.constant 0.000000e+00 : f32
    %206 = vector.broadcast %cst_83 : f32 to vector<8x128xf32>
    %cst_84 = arith.constant 0.000000e+00 : f32
    %207 = vector.broadcast %cst_84 : f32 to vector<8x128xf32>
    %c0_85 = arith.constant 0 : index
    %c0_86 = arith.constant 0 : index
    %c0_87 = arith.constant 0 : index
    %208 = vector.load %arg15[%c0_85, %c0_86, %c0_87] : memref<8x8x512xf32, #tpu.memory_space<vmem>>, vector<1x8x512xf32>
    %209 = vector.shape_cast %208 : vector<1x8x512xf32> to vector<8x512xf32>
    %cst_88 = arith.constant dense<0.000000e+00> : vector<8x512xf32>
    %210 = tpu.matmul %206, %205, %cst_88 {dimension_numbers = #tpu.dot_dimension_numbers<[1], [0], [0], [1], [0, 0, 1, 1], [], []>} : vector<8x128xf32>, vector<128x512xf32>, vector<8x512xf32> -> vector<8x512xf32>
    %211 = arith.addf %209, %210 : vector<8x512xf32>
    %212 = vector.extract_strided_slice %211 {offsets = [0, 0], sizes = [8, 384], strides = [1, 1]} : vector<8x512xf32> to vector<8x384xf32>
    %213 = arith.negf %212 : vector<8x384xf32>
    %214 = math.exp %213 : vector<8x384xf32>
    %cst_89 = arith.constant 1.000000e+00 : f32
    %215 = vector.broadcast %cst_89 : f32 to vector<8x384xf32>
    %216 = arith.addf %215, %214 : vector<8x384xf32>
    %217 = arith.divf %215, %216 : vector<8x384xf32>
    %218 = vector.extract_strided_slice %217 {offsets = [0, 0], sizes = [8, 128], strides = [1, 1]} : vector<8x384xf32> to vector<8x128xf32>
    %219 = vector.extract_strided_slice %217 {offsets = [0, 128], sizes = [8, 128], strides = [1, 1]} : vector<8x384xf32> to vector<8x128xf32>
    %220 = vector.extract_strided_slice %217 {offsets = [0, 256], sizes = [8, 128], strides = [1, 1]} : vector<8x384xf32> to vector<8x128xf32>
    %221 = vector.extract_strided_slice %211 {offsets = [0, 384], sizes = [8, 128], strides = [1, 1]} : vector<8x512xf32> to vector<8x128xf32>
    %222 = math.tanh %221 : vector<8x128xf32>
    %223 = arith.mulf %219, %207 : vector<8x128xf32>
    %224 = arith.mulf %218, %222 : vector<8x128xf32>
    %225 = arith.addf %223, %224 : vector<8x128xf32>
    %226 = math.tanh %225 : vector<8x128xf32>
    %227 = arith.mulf %220, %226 : vector<8x128xf32>
    %c0_90 = arith.constant 0 : index
    %c0_91 = arith.constant 0 : index
    %c0_92 = arith.constant 0 : index
    %228 = vector.load %arg16[%c0_90, %c0_91, %c0_92] : memref<8x8x128xf32, #tpu.memory_space<vmem>>, vector<1x8x128xf32>
    %229 = vector.shape_cast %228 : vector<1x8x128xf32> to vector<8x128xf32>
    %230 = vector.shape_cast %227 : vector<8x128xf32> to vector<1x8x128xf32>
    tpu.vector_store %arg16[%c0_90, %c0_91, %c0_92], %230 {strides = array<i32>} : memref<8x8x128xf32, #tpu.memory_space<vmem>>, vector<1x8x128xf32>,
    %c1_93 = arith.constant 1 : index
    %c0_94 = arith.constant 0 : index
    %c0_95 = arith.constant 0 : index
    %231 = vector.load %arg15[%c1_93, %c0_94, %c0_95] : memref<8x8x512xf32, #tpu.memory_space<vmem>>, vector<1x8x512xf32>
    %232 = vector.shape_cast %231 : vector<1x8x512xf32> to vector<8x512xf32>
    %cst_96 = arith.constant dense<0.000000e+00> : vector<8x512xf32>
    %233 = tpu.matmul %227, %205, %cst_96 {dimension_numbers = #tpu.dot_dimension_numbers<[1], [0], [0], [1], [0, 0, 1, 1], [], []>} : vector<8x128xf32>, vector<128x512xf32>, vector<8x512xf32> -> vector<8x512xf32>
    %234 = arith.addf %232, %233 : vector<8x512xf32>
    %235 = vector.extract_strided_slice %234 {offsets = [0, 0], sizes = [8, 384], strides = [1, 1]} : vector<8x512xf32> to vector<8x384xf32>
    %236 = arith.negf %235 : vector<8x384xf32>
    %237 = math.exp %236 : vector<8x384xf32>
    %cst_97 = arith.constant 1.000000e+00 : f32
    %238 = vector.broadcast %cst_97 : f32 to vector<8x384xf32>
    %239 = arith.addf %238, %237 : vector<8x384xf32>
    %240 = arith.divf %238, %239 : vector<8x384xf32>
    %241 = vector.extract_strided_slice %240 {offsets = [0, 0], sizes = [8, 128], strides = [1, 1]} : vector<8x384xf32> to vector<8x128xf32>
    %242 = vector.extract_strided_slice %240 {offsets = [0, 128], sizes = [8, 128], strides = [1, 1]} : vector<8x384xf32> to vector<8x128xf32>
    %243 = vector.extract_strided_slice %240 {offsets = [0, 256], sizes = [8, 128], strides = [1, 1]} : vector<8x384xf32> to vector<8x128xf32>
    %244 = vector.extract_strided_slice %234 {offsets = [0, 384], sizes = [8, 128], strides = [1, 1]} : vector<8x512xf32> to vector<8x128xf32>
    %245 = math.tanh %244 : vector<8x128xf32>
    %246 = arith.mulf %242, %225 : vector<8x128xf32>
    %247 = arith.mulf %241, %245 : vector<8x128xf32>
    %248 = arith.addf %246, %247 : vector<8x128xf32>
    %249 = math.tanh %248 : vector<8x128xf32>
    %250 = arith.mulf %243, %249 : vector<8x128xf32>
    %c1_98 = arith.constant 1 : index
    %c0_99 = arith.constant 0 : index
    %c0_100 = arith.constant 0 : index
    %251 = vector.load %arg16[%c1_98, %c0_99, %c0_100] : memref<8x8x128xf32, #tpu.memory_space<vmem>>, vector<1x8x128xf32>
    %252 = vector.shape_cast %251 : vector<1x8x128xf32> to vector<8x128xf32>
    %253 = vector.shape_cast %250 : vector<8x128xf32> to vector<1x8x128xf32>
    tpu.vector_store %arg16[%c1_98, %c0_99, %c0_100], %253 {strides = array<i32>} : memref<8x8x128xf32, #tpu.memory_space<vmem>>, vector<1x8x128xf32>,
    %c2_101 = arith.constant 2 : index
    %c0_102 = arith.constant 0 : index
    %c0_103 = arith.constant 0 : index
    %254 = vector.load %arg15[%c2_101, %c0_102, %c0_103] : memref<8x8x512xf32, #tpu.memory_space<vmem>>, vector<1x8x512xf32>
    %255 = vector.shape_cast %254 : vector<1x8x512xf32> to vector<8x512xf32>
    %cst_104 = arith.constant dense<0.000000e+00> : vector<8x512xf32>
    %256 = tpu.matmul %250, %205, %cst_104 {dimension_numbers = #tpu.dot_dimension_numbers<[1], [0], [0], [1], [0, 0, 1, 1], [], []>} : vector<8x128xf32>, vector<128x512xf32>, vector<8x512xf32> -> vector<8x512xf32>
    %257 = arith.addf %255, %256 : vector<8x512xf32>
    %258 = vector.extract_strided_slice %257 {offsets = [0, 0], sizes = [8, 384], strides = [1, 1]} : vector<8x512xf32> to vector<8x384xf32>
    %259 = arith.negf %258 : vector<8x384xf32>
    %260 = math.exp %259 : vector<8x384xf32>
    %cst_105 = arith.constant 1.000000e+00 : f32
    %261 = vector.broadcast %cst_105 : f32 to vector<8x384xf32>
    %262 = arith.addf %261, %260 : vector<8x384xf32>
    %263 = arith.divf %261, %262 : vector<8x384xf32>
    %264 = vector.extract_strided_slice %263 {offsets = [0, 0], sizes = [8, 128], strides = [1, 1]} : vector<8x384xf32> to vector<8x128xf32>
    %265 = vector.extract_strided_slice %263 {offsets = [0, 128], sizes = [8, 128], strides = [1, 1]} : vector<8x384xf32> to vector<8x128xf32>
    %266 = vector.extract_strided_slice %263 {offsets = [0, 256], sizes = [8, 128], strides = [1, 1]} : vector<8x384xf32> to vector<8x128xf32>
    %267 = vector.extract_strided_slice %257 {offsets = [0, 384], sizes = [8, 128], strides = [1, 1]} : vector<8x512xf32> to vector<8x128xf32>
    %268 = math.tanh %267 : vector<8x128xf32>
    %269 = arith.mulf %265, %248 : vector<8x128xf32>
    %270 = arith.mulf %264, %268 : vector<8x128xf32>
    %271 = arith.addf %269, %270 : vector<8x128xf32>
    %272 = math.tanh %271 : vector<8x128xf32>
    %273 = arith.mulf %266, %272 : vector<8x128xf32>
    %c2_106 = arith.constant 2 : index
    %c0_107 = arith.constant 0 : index
    %c0_108 = arith.constant 0 : index
    %274 = vector.load %arg16[%c2_106, %c0_107, %c0_108] : memref<8x8x128xf32, #tpu.memory_space<vmem>>, vector<1x8x128xf32>
    %275 = vector.shape_cast %274 : vector<1x8x128xf32> to vector<8x128xf32>
    %276 = vector.shape_cast %273 : vector<8x128xf32> to vector<1x8x128xf32>
    tpu.vector_store %arg16[%c2_106, %c0_107, %c0_108], %276 {strides = array<i32>} : memref<8x8x128xf32, #tpu.memory_space<vmem>>, vector<1x8x128xf32>,
    %c3_109 = arith.constant 3 : index
    %c0_110 = arith.constant 0 : index
    %c0_111 = arith.constant 0 : index
    %277 = vector.load %arg15[%c3_109, %c0_110, %c0_111] : memref<8x8x512xf32, #tpu.memory_space<vmem>>, vector<1x8x512xf32>
    %278 = vector.shape_cast %277 : vector<1x8x512xf32> to vector<8x512xf32>
    %cst_112 = arith.constant dense<0.000000e+00> : vector<8x512xf32>
    %279 = tpu.matmul %273, %205, %cst_112 {dimension_numbers = #tpu.dot_dimension_numbers<[1], [0], [0], [1], [0, 0, 1, 1], [], []>} : vector<8x128xf32>, vector<128x512xf32>, vector<8x512xf32> -> vector<8x512xf32>
    %280 = arith.addf %278, %279 : vector<8x512xf32>
    %281 = vector.extract_strided_slice %280 {offsets = [0, 0], sizes = [8, 384], strides = [1, 1]} : vector<8x512xf32> to vector<8x384xf32>
    %282 = arith.negf %281 : vector<8x384xf32>
    %283 = math.exp %282 : vector<8x384xf32>
    %cst_113 = arith.constant 1.000000e+00 : f32
    %284 = vector.broadcast %cst_113 : f32 to vector<8x384xf32>
    %285 = arith.addf %284, %283 : vector<8x384xf32>
    %286 = arith.divf %284, %285 : vector<8x384xf32>
    %287 = vector.extract_strided_slice %286 {offsets = [0, 0], sizes = [8, 128], strides = [1, 1]} : vector<8x384xf32> to vector<8x128xf32>
    %288 = vector.extract_strided_slice %286 {offsets = [0, 128], sizes = [8, 128], strides = [1, 1]} : vector<8x384xf32> to vector<8x128xf32>
    %289 = vector.extract_strided_slice %286 {offsets = [0, 256], sizes = [8, 128], strides = [1, 1]} : vector<8x384xf32> to vector<8x128xf32>
    %290 = vector.extract_strided_slice %280 {offsets = [0, 384], sizes = [8, 128], strides = [1, 1]} : vector<8x512xf32> to vector<8x128xf32>
    %291 = math.tanh %290 : vector<8x128xf32>
    %292 = arith.mulf %288, %271 : vector<8x128xf32>
    %293 = arith.mulf %287, %291 : vector<8x128xf32>
    %294 = arith.addf %292, %293 : vector<8x128xf32>
    %295 = math.tanh %294 : vector<8x128xf32>
    %296 = arith.mulf %289, %295 : vector<8x128xf32>
    %c3_114 = arith.constant 3 : index
    %c0_115 = arith.constant 0 : index
    %c0_116 = arith.constant 0 : index
    %297 = vector.load %arg16[%c3_114, %c0_115, %c0_116] : memref<8x8x128xf32, #tpu.memory_space<vmem>>, vector<1x8x128xf32>
    %298 = vector.shape_cast %297 : vector<1x8x128xf32> to vector<8x128xf32>
    %299 = vector.shape_cast %296 : vector<8x128xf32> to vector<1x8x128xf32>
    tpu.vector_store %arg16[%c3_114, %c0_115, %c0_116], %299 {strides = array<i32>} : memref<8x8x128xf32, #tpu.memory_space<vmem>>, vector<1x8x128xf32>,
    %c4_117 = arith.constant 4 : index
    %c0_118 = arith.constant 0 : index
    %c0_119 = arith.constant 0 : index
    %300 = vector.load %arg15[%c4_117, %c0_118, %c0_119] : memref<8x8x512xf32, #tpu.memory_space<vmem>>, vector<1x8x512xf32>
    %301 = vector.shape_cast %300 : vector<1x8x512xf32> to vector<8x512xf32>
    %cst_120 = arith.constant dense<0.000000e+00> : vector<8x512xf32>
    %302 = tpu.matmul %296, %205, %cst_120 {dimension_numbers = #tpu.dot_dimension_numbers<[1], [0], [0], [1], [0, 0, 1, 1], [], []>} : vector<8x128xf32>, vector<128x512xf32>, vector<8x512xf32> -> vector<8x512xf32>
    %303 = arith.addf %301, %302 : vector<8x512xf32>
    %304 = vector.extract_strided_slice %303 {offsets = [0, 0], sizes = [8, 384], strides = [1, 1]} : vector<8x512xf32> to vector<8x384xf32>
    %305 = arith.negf %304 : vector<8x384xf32>
    %306 = math.exp %305 : vector<8x384xf32>
    %cst_121 = arith.constant 1.000000e+00 : f32
    %307 = vector.broadcast %cst_121 : f32 to vector<8x384xf32>
    %308 = arith.addf %307, %306 : vector<8x384xf32>
    %309 = arith.divf %307, %308 : vector<8x384xf32>
    %310 = vector.extract_strided_slice %309 {offsets = [0, 0], sizes = [8, 128], strides = [1, 1]} : vector<8x384xf32> to vector<8x128xf32>
    %311 = vector.extract_strided_slice %309 {offsets = [0, 128], sizes = [8, 128], strides = [1, 1]} : vector<8x384xf32> to vector<8x128xf32>
    %312 = vector.extract_strided_slice %309 {offsets = [0, 256], sizes = [8, 128], strides = [1, 1]} : vector<8x384xf32> to vector<8x128xf32>
    %313 = vector.extract_strided_slice %303 {offsets = [0, 384], sizes = [8, 128], strides = [1, 1]} : vector<8x512xf32> to vector<8x128xf32>
    %314 = math.tanh %313 : vector<8x128xf32>
    %315 = arith.mulf %311, %294 : vector<8x128xf32>
    %316 = arith.mulf %310, %314 : vector<8x128xf32>
    %317 = arith.addf %315, %316 : vector<8x128xf32>
    %318 = math.tanh %317 : vector<8x128xf32>
    %319 = arith.mulf %312, %318 : vector<8x128xf32>
    %c4_122 = arith.constant 4 : index
    %c0_123 = arith.constant 0 : index
    %c0_124 = arith.constant 0 : index
    %320 = vector.load %arg16[%c4_122, %c0_123, %c0_124] : memref<8x8x128xf32, #tpu.memory_space<vmem>>, vector<1x8x128xf32>
    %321 = vector.shape_cast %320 : vector<1x8x128xf32> to vector<8x128xf32>
    %322 = vector.shape_cast %319 : vector<8x128xf32> to vector<1x8x128xf32>
    tpu.vector_store %arg16[%c4_122, %c0_123, %c0_124], %322 {strides = array<i32>} : memref<8x8x128xf32, #tpu.memory_space<vmem>>, vector<1x8x128xf32>,
    %c5_125 = arith.constant 5 : index
    %c0_126 = arith.constant 0 : index
    %c0_127 = arith.constant 0 : index
    %323 = vector.load %arg15[%c5_125, %c0_126, %c0_127] : memref<8x8x512xf32, #tpu.memory_space<vmem>>, vector<1x8x512xf32>
    %324 = vector.shape_cast %323 : vector<1x8x512xf32> to vector<8x512xf32>
    %cst_128 = arith.constant dense<0.000000e+00> : vector<8x512xf32>
    %325 = tpu.matmul %319, %205, %cst_128 {dimension_numbers = #tpu.dot_dimension_numbers<[1], [0], [0], [1], [0, 0, 1, 1], [], []>} : vector<8x128xf32>, vector<128x512xf32>, vector<8x512xf32> -> vector<8x512xf32>
    %326 = arith.addf %324, %325 : vector<8x512xf32>
    %327 = vector.extract_strided_slice %326 {offsets = [0, 0], sizes = [8, 384], strides = [1, 1]} : vector<8x512xf32> to vector<8x384xf32>
    %328 = arith.negf %327 : vector<8x384xf32>
    %329 = math.exp %328 : vector<8x384xf32>
    %cst_129 = arith.constant 1.000000e+00 : f32
    %330 = vector.broadcast %cst_129 : f32 to vector<8x384xf32>
    %331 = arith.addf %330, %329 : vector<8x384xf32>
    %332 = arith.divf %330, %331 : vector<8x384xf32>
    %333 = vector.extract_strided_slice %332 {offsets = [0, 0], sizes = [8, 128], strides = [1, 1]} : vector<8x384xf32> to vector<8x128xf32>
    %334 = vector.extract_strided_slice %332 {offsets = [0, 128], sizes = [8, 128], strides = [1, 1]} : vector<8x384xf32> to vector<8x128xf32>
    %335 = vector.extract_strided_slice %332 {offsets = [0, 256], sizes = [8, 128], strides = [1, 1]} : vector<8x384xf32> to vector<8x128xf32>
    %336 = vector.extract_strided_slice %326 {offsets = [0, 384], sizes = [8, 128], strides = [1, 1]} : vector<8x512xf32> to vector<8x128xf32>
    %337 = math.tanh %336 : vector<8x128xf32>
    %338 = arith.mulf %334, %317 : vector<8x128xf32>
    %339 = arith.mulf %333, %337 : vector<8x128xf32>
    %340 = arith.addf %338, %339 : vector<8x128xf32>
    %341 = math.tanh %340 : vector<8x128xf32>
    %342 = arith.mulf %335, %341 : vector<8x128xf32>
    %c5_130 = arith.constant 5 : index
    %c0_131 = arith.constant 0 : index
    %c0_132 = arith.constant 0 : index
    %343 = vector.load %arg16[%c5_130, %c0_131, %c0_132] : memref<8x8x128xf32, #tpu.memory_space<vmem>>, vector<1x8x128xf32>
    %344 = vector.shape_cast %343 : vector<1x8x128xf32> to vector<8x128xf32>
    %345 = vector.shape_cast %342 : vector<8x128xf32> to vector<1x8x128xf32>
    tpu.vector_store %arg16[%c5_130, %c0_131, %c0_132], %345 {strides = array<i32>} : memref<8x8x128xf32, #tpu.memory_space<vmem>>, vector<1x8x128xf32>,
    %c6_133 = arith.constant 6 : index
    %c0_134 = arith.constant 0 : index
    %c0_135 = arith.constant 0 : index
    %346 = vector.load %arg15[%c6_133, %c0_134, %c0_135] : memref<8x8x512xf32, #tpu.memory_space<vmem>>, vector<1x8x512xf32>
    %347 = vector.shape_cast %346 : vector<1x8x512xf32> to vector<8x512xf32>
    %cst_136 = arith.constant dense<0.000000e+00> : vector<8x512xf32>
    %348 = tpu.matmul %342, %205, %cst_136 {dimension_numbers = #tpu.dot_dimension_numbers<[1], [0], [0], [1], [0, 0, 1, 1], [], []>} : vector<8x128xf32>, vector<128x512xf32>, vector<8x512xf32> -> vector<8x512xf32>
    %349 = arith.addf %347, %348 : vector<8x512xf32>
    %350 = vector.extract_strided_slice %349 {offsets = [0, 0], sizes = [8, 384], strides = [1, 1]} : vector<8x512xf32> to vector<8x384xf32>
    %351 = arith.negf %350 : vector<8x384xf32>
    %352 = math.exp %351 : vector<8x384xf32>
    %cst_137 = arith.constant 1.000000e+00 : f32
    %353 = vector.broadcast %cst_137 : f32 to vector<8x384xf32>
    %354 = arith.addf %353, %352 : vector<8x384xf32>
    %355 = arith.divf %353, %354 : vector<8x384xf32>
    %356 = vector.extract_strided_slice %355 {offsets = [0, 0], sizes = [8, 128], strides = [1, 1]} : vector<8x384xf32> to vector<8x128xf32>
    %357 = vector.extract_strided_slice %355 {offsets = [0, 128], sizes = [8, 128], strides = [1, 1]} : vector<8x384xf32> to vector<8x128xf32>
    %358 = vector.extract_strided_slice %355 {offsets = [0, 256], sizes = [8, 128], strides = [1, 1]} : vector<8x384xf32> to vector<8x128xf32>
    %359 = vector.extract_strided_slice %349 {offsets = [0, 384], sizes = [8, 128], strides = [1, 1]} : vector<8x512xf32> to vector<8x128xf32>
    %360 = math.tanh %359 : vector<8x128xf32>
    %361 = arith.mulf %357, %340 : vector<8x128xf32>
    %362 = arith.mulf %356, %360 : vector<8x128xf32>
    %363 = arith.addf %361, %362 : vector<8x128xf32>
    %364 = math.tanh %363 : vector<8x128xf32>
    %365 = arith.mulf %358, %364 : vector<8x128xf32>
    %c6_138 = arith.constant 6 : index
    %c0_139 = arith.constant 0 : index
    %c0_140 = arith.constant 0 : index
    %366 = vector.load %arg16[%c6_138, %c0_139, %c0_140] : memref<8x8x128xf32, #tpu.memory_space<vmem>>, vector<1x8x128xf32>
    %367 = vector.shape_cast %366 : vector<1x8x128xf32> to vector<8x128xf32>
    %368 = vector.shape_cast %365 : vector<8x128xf32> to vector<1x8x128xf32>
    tpu.vector_store %arg16[%c6_138, %c0_139, %c0_140], %368 {strides = array<i32>} : memref<8x8x128xf32, #tpu.memory_space<vmem>>, vector<1x8x128xf32>,
    %c7_141 = arith.constant 7 : index
    %c0_142 = arith.constant 0 : index
    %c0_143 = arith.constant 0 : index
    %369 = vector.load %arg15[%c7_141, %c0_142, %c0_143] : memref<8x8x512xf32, #tpu.memory_space<vmem>>, vector<1x8x512xf32>
    %370 = vector.shape_cast %369 : vector<1x8x512xf32> to vector<8x512xf32>
    %cst_144 = arith.constant dense<0.000000e+00> : vector<8x512xf32>
    %371 = tpu.matmul %365, %205, %cst_144 {dimension_numbers = #tpu.dot_dimension_numbers<[1], [0], [0], [1], [0, 0, 1, 1], [], []>} : vector<8x128xf32>, vector<128x512xf32>, vector<8x512xf32> -> vector<8x512xf32>
    %372 = arith.addf %370, %371 : vector<8x512xf32>
    %373 = vector.extract_strided_slice %372 {offsets = [0, 0], sizes = [8, 384], strides = [1, 1]} : vector<8x512xf32> to vector<8x384xf32>
    %374 = arith.negf %373 : vector<8x384xf32>
    %375 = math.exp %374 : vector<8x384xf32>
    %cst_145 = arith.constant 1.000000e+00 : f32
    %376 = vector.broadcast %cst_145 : f32 to vector<8x384xf32>
    %377 = arith.addf %376, %375 : vector<8x384xf32>
    %378 = arith.divf %376, %377 : vector<8x384xf32>
    %379 = vector.extract_strided_slice %378 {offsets = [0, 0], sizes = [8, 128], strides = [1, 1]} : vector<8x384xf32> to vector<8x128xf32>
    %380 = vector.extract_strided_slice %378 {offsets = [0, 128], sizes = [8, 128], strides = [1, 1]} : vector<8x384xf32> to vector<8x128xf32>
    %381 = vector.extract_strided_slice %378 {offsets = [0, 256], sizes = [8, 128], strides = [1, 1]} : vector<8x384xf32> to vector<8x128xf32>
    %382 = vector.extract_strided_slice %372 {offsets = [0, 384], sizes = [8, 128], strides = [1, 1]} : vector<8x512xf32> to vector<8x128xf32>
    %383 = math.tanh %382 : vector<8x128xf32>
    %384 = arith.mulf %380, %363 : vector<8x128xf32>
    %385 = arith.mulf %379, %383 : vector<8x128xf32>
    %386 = arith.addf %384, %385 : vector<8x128xf32>
    %387 = math.tanh %386 : vector<8x128xf32>
    %388 = arith.mulf %381, %387 : vector<8x128xf32>
    %c7_146 = arith.constant 7 : index
    %c0_147 = arith.constant 0 : index
    %c0_148 = arith.constant 0 : index
    %389 = vector.load %arg16[%c7_146, %c0_147, %c0_148] : memref<8x8x128xf32, #tpu.memory_space<vmem>>, vector<1x8x128xf32>
    %390 = vector.shape_cast %389 : vector<1x8x128xf32> to vector<8x128xf32>
    %391 = vector.shape_cast %388 : vector<8x128xf32> to vector<1x8x128xf32>
    tpu.vector_store %arg16[%c7_146, %c0_147, %c0_148], %391 {strides = array<i32>} : memref<8x8x128xf32, #tpu.memory_space<vmem>>, vector<1x8x128xf32>,
    %c0_149 = arith.constant 0 : index
    %c0_150 = arith.constant 0 : index
    %c0_151 = arith.constant 0 : index
    %392 = vector.load %arg16[%c0_149, %c0_150, %c0_151] : memref<8x8x128xf32, #tpu.memory_space<vmem>>, vector<8x8x128xf32>
    %393 = vector.shape_cast %392 : vector<8x8x128xf32> to vector<64x128xf32>
    %c0_152 = arith.constant 0 : index
    %c0_153 = arith.constant 0 : index
    %394 = vector.load %arg7[%c0_152, %c0_153] : memref<128x512xf32, #tpu.memory_space<vmem>>, vector<128x512xf32>
    %cst_154 = arith.constant dense<0.000000e+00> : vector<64x512xf32>
    %395 = tpu.matmul %393, %394, %cst_154 {dimension_numbers = #tpu.dot_dimension_numbers<[1], [0], [0], [1], [0, 0, 1, 1], [], []>} : vector<64x128xf32>, vector<128x512xf32>, vector<64x512xf32> -> vector<64x512xf32>
    %c0_155 = arith.constant 0 : index
    %c0_156 = arith.constant 0 : index
    %396 = vector.load %arg9[%c0_155, %c0_156] : memref<1x512xf32, #tpu.memory_space<vmem>>, vector<1x512xf32>
    %397 = vector.broadcast %396 : vector<1x512xf32> to vector<64x512xf32>
    %398 = arith.addf %395, %397 : vector<64x512xf32>
    %399 = vector.shape_cast %398 : vector<64x512xf32> to vector<8x8x512xf32>
    %c0_157 = arith.constant 0 : index
    %c0_158 = arith.constant 0 : index
    %c0_159 = arith.constant 0 : index
    %400 = vector.load %arg15[%c0_157, %c0_158, %c0_159] : memref<8x8x512xf32, #tpu.memory_space<vmem>>, vector<8x8x512xf32>
    tpu.vector_store %arg15[%c0_157, %c0_158, %c0_159], %399 {strides = array<i32>} : memref<8x8x512xf32, #tpu.memory_space<vmem>>, vector<8x8x512xf32>,
    %c0_160 = arith.constant 0 : index
    %c0_161 = arith.constant 0 : index
    %401 = vector.load %arg8[%c0_160, %c0_161] : memref<128x512xf32, #tpu.memory_space<vmem>>, vector<128x512xf32>
    %cst_162 = arith.constant 0.000000e+00 : f32
    %402 = vector.broadcast %cst_162 : f32 to vector<8x128xf32>
    %cst_163 = arith.constant 0.000000e+00 : f32
    %403 = vector.broadcast %cst_163 : f32 to vector<8x128xf32>
    %c0_164 = arith.constant 0 : index
    %c0_165 = arith.constant 0 : index
    %c0_166 = arith.constant 0 : index
    %404 = vector.load %arg15[%c0_164, %c0_165, %c0_166] : memref<8x8x512xf32, #tpu.memory_space<vmem>>, vector<1x8x512xf32>
    %405 = vector.shape_cast %404 : vector<1x8x512xf32> to vector<8x512xf32>
    %cst_167 = arith.constant dense<0.000000e+00> : vector<8x512xf32>
    %406 = tpu.matmul %402, %401, %cst_167 {dimension_numbers = #tpu.dot_dimension_numbers<[1], [0], [0], [1], [0, 0, 1, 1], [], []>} : vector<8x128xf32>, vector<128x512xf32>, vector<8x512xf32> -> vector<8x512xf32>
    %407 = arith.addf %405, %406 : vector<8x512xf32>
    %408 = vector.extract_strided_slice %407 {offsets = [0, 0], sizes = [8, 384], strides = [1, 1]} : vector<8x512xf32> to vector<8x384xf32>
    %409 = arith.negf %408 : vector<8x384xf32>
    %410 = math.exp %409 : vector<8x384xf32>
    %cst_168 = arith.constant 1.000000e+00 : f32
    %411 = vector.broadcast %cst_168 : f32 to vector<8x384xf32>
    %412 = arith.addf %411, %410 : vector<8x384xf32>
    %413 = arith.divf %411, %412 : vector<8x384xf32>
    %414 = vector.extract_strided_slice %413 {offsets = [0, 0], sizes = [8, 128], strides = [1, 1]} : vector<8x384xf32> to vector<8x128xf32>
    %415 = vector.extract_strided_slice %413 {offsets = [0, 128], sizes = [8, 128], strides = [1, 1]} : vector<8x384xf32> to vector<8x128xf32>
    %416 = vector.extract_strided_slice %413 {offsets = [0, 256], sizes = [8, 128], strides = [1, 1]} : vector<8x384xf32> to vector<8x128xf32>
    %417 = vector.extract_strided_slice %407 {offsets = [0, 384], sizes = [8, 128], strides = [1, 1]} : vector<8x512xf32> to vector<8x128xf32>
    %418 = math.tanh %417 : vector<8x128xf32>
    %419 = arith.mulf %415, %403 : vector<8x128xf32>
    %420 = arith.mulf %414, %418 : vector<8x128xf32>
    %421 = arith.addf %419, %420 : vector<8x128xf32>
    %422 = math.tanh %421 : vector<8x128xf32>
    %423 = arith.mulf %416, %422 : vector<8x128xf32>
    %c1_169 = arith.constant 1 : index
    %c0_170 = arith.constant 0 : index
    %c0_171 = arith.constant 0 : index
    %424 = vector.load %arg15[%c1_169, %c0_170, %c0_171] : memref<8x8x512xf32, #tpu.memory_space<vmem>>, vector<1x8x512xf32>
    %425 = vector.shape_cast %424 : vector<1x8x512xf32> to vector<8x512xf32>
    %cst_172 = arith.constant dense<0.000000e+00> : vector<8x512xf32>
    %426 = tpu.matmul %423, %401, %cst_172 {dimension_numbers = #tpu.dot_dimension_numbers<[1], [0], [0], [1], [0, 0, 1, 1], [], []>} : vector<8x128xf32>, vector<128x512xf32>, vector<8x512xf32> -> vector<8x512xf32>
    %427 = arith.addf %425, %426 : vector<8x512xf32>
    %428 = vector.extract_strided_slice %427 {offsets = [0, 0], sizes = [8, 384], strides = [1, 1]} : vector<8x512xf32> to vector<8x384xf32>
    %429 = arith.negf %428 : vector<8x384xf32>
    %430 = math.exp %429 : vector<8x384xf32>
    %cst_173 = arith.constant 1.000000e+00 : f32
    %431 = vector.broadcast %cst_173 : f32 to vector<8x384xf32>
    %432 = arith.addf %431, %430 : vector<8x384xf32>
    %433 = arith.divf %431, %432 : vector<8x384xf32>
    %434 = vector.extract_strided_slice %433 {offsets = [0, 0], sizes = [8, 128], strides = [1, 1]} : vector<8x384xf32> to vector<8x128xf32>
    %435 = vector.extract_strided_slice %433 {offsets = [0, 128], sizes = [8, 128], strides = [1, 1]} : vector<8x384xf32> to vector<8x128xf32>
    %436 = vector.extract_strided_slice %433 {offsets = [0, 256], sizes = [8, 128], strides = [1, 1]} : vector<8x384xf32> to vector<8x128xf32>
    %437 = vector.extract_strided_slice %427 {offsets = [0, 384], sizes = [8, 128], strides = [1, 1]} : vector<8x512xf32> to vector<8x128xf32>
    %438 = math.tanh %437 : vector<8x128xf32>
    %439 = arith.mulf %435, %421 : vector<8x128xf32>
    %440 = arith.mulf %434, %438 : vector<8x128xf32>
    %441 = arith.addf %439, %440 : vector<8x128xf32>
    %442 = math.tanh %441 : vector<8x128xf32>
    %443 = arith.mulf %436, %442 : vector<8x128xf32>
    %c2_174 = arith.constant 2 : index
    %c0_175 = arith.constant 0 : index
    %c0_176 = arith.constant 0 : index
    %444 = vector.load %arg15[%c2_174, %c0_175, %c0_176] : memref<8x8x512xf32, #tpu.memory_space<vmem>>, vector<1x8x512xf32>
    %445 = vector.shape_cast %444 : vector<1x8x512xf32> to vector<8x512xf32>
    %cst_177 = arith.constant dense<0.000000e+00> : vector<8x512xf32>
    %446 = tpu.matmul %443, %401, %cst_177 {dimension_numbers = #tpu.dot_dimension_numbers<[1], [0], [0], [1], [0, 0, 1, 1], [], []>} : vector<8x128xf32>, vector<128x512xf32>, vector<8x512xf32> -> vector<8x512xf32>
    %447 = arith.addf %445, %446 : vector<8x512xf32>
    %448 = vector.extract_strided_slice %447 {offsets = [0, 0], sizes = [8, 384], strides = [1, 1]} : vector<8x512xf32> to vector<8x384xf32>
    %449 = arith.negf %448 : vector<8x384xf32>
    %450 = math.exp %449 : vector<8x384xf32>
    %cst_178 = arith.constant 1.000000e+00 : f32
    %451 = vector.broadcast %cst_178 : f32 to vector<8x384xf32>
    %452 = arith.addf %451, %450 : vector<8x384xf32>
    %453 = arith.divf %451, %452 : vector<8x384xf32>
    %454 = vector.extract_strided_slice %453 {offsets = [0, 0], sizes = [8, 128], strides = [1, 1]} : vector<8x384xf32> to vector<8x128xf32>
    %455 = vector.extract_strided_slice %453 {offsets = [0, 128], sizes = [8, 128], strides = [1, 1]} : vector<8x384xf32> to vector<8x128xf32>
    %456 = vector.extract_strided_slice %453 {offsets = [0, 256], sizes = [8, 128], strides = [1, 1]} : vector<8x384xf32> to vector<8x128xf32>
    %457 = vector.extract_strided_slice %447 {offsets = [0, 384], sizes = [8, 128], strides = [1, 1]} : vector<8x512xf32> to vector<8x128xf32>
    %458 = math.tanh %457 : vector<8x128xf32>
    %459 = arith.mulf %455, %441 : vector<8x128xf32>
    %460 = arith.mulf %454, %458 : vector<8x128xf32>
    %461 = arith.addf %459, %460 : vector<8x128xf32>
    %462 = math.tanh %461 : vector<8x128xf32>
    %463 = arith.mulf %456, %462 : vector<8x128xf32>
    %c3_179 = arith.constant 3 : index
    %c0_180 = arith.constant 0 : index
    %c0_181 = arith.constant 0 : index
    %464 = vector.load %arg15[%c3_179, %c0_180, %c0_181] : memref<8x8x512xf32, #tpu.memory_space<vmem>>, vector<1x8x512xf32>
    %465 = vector.shape_cast %464 : vector<1x8x512xf32> to vector<8x512xf32>
    %cst_182 = arith.constant dense<0.000000e+00> : vector<8x512xf32>
    %466 = tpu.matmul %463, %401, %cst_182 {dimension_numbers = #tpu.dot_dimension_numbers<[1], [0], [0], [1], [0, 0, 1, 1], [], []>} : vector<8x128xf32>, vector<128x512xf32>, vector<8x512xf32> -> vector<8x512xf32>
    %467 = arith.addf %465, %466 : vector<8x512xf32>
    %468 = vector.extract_strided_slice %467 {offsets = [0, 0], sizes = [8, 384], strides = [1, 1]} : vector<8x512xf32> to vector<8x384xf32>
    %469 = arith.negf %468 : vector<8x384xf32>
    %470 = math.exp %469 : vector<8x384xf32>
    %cst_183 = arith.constant 1.000000e+00 : f32
    %471 = vector.broadcast %cst_183 : f32 to vector<8x384xf32>
    %472 = arith.addf %471, %470 : vector<8x384xf32>
    %473 = arith.divf %471, %472 : vector<8x384xf32>
    %474 = vector.extract_strided_slice %473 {offsets = [0, 0], sizes = [8, 128], strides = [1, 1]} : vector<8x384xf32> to vector<8x128xf32>
    %475 = vector.extract_strided_slice %473 {offsets = [0, 128], sizes = [8, 128], strides = [1, 1]} : vector<8x384xf32> to vector<8x128xf32>
    %476 = vector.extract_strided_slice %473 {offsets = [0, 256], sizes = [8, 128], strides = [1, 1]} : vector<8x384xf32> to vector<8x128xf32>
    %477 = vector.extract_strided_slice %467 {offsets = [0, 384], sizes = [8, 128], strides = [1, 1]} : vector<8x512xf32> to vector<8x128xf32>
    %478 = math.tanh %477 : vector<8x128xf32>
    %479 = arith.mulf %475, %461 : vector<8x128xf32>
    %480 = arith.mulf %474, %478 : vector<8x128xf32>
    %481 = arith.addf %479, %480 : vector<8x128xf32>
    %482 = math.tanh %481 : vector<8x128xf32>
    %483 = arith.mulf %476, %482 : vector<8x128xf32>
    %c4_184 = arith.constant 4 : index
    %c0_185 = arith.constant 0 : index
    %c0_186 = arith.constant 0 : index
    %484 = vector.load %arg15[%c4_184, %c0_185, %c0_186] : memref<8x8x512xf32, #tpu.memory_space<vmem>>, vector<1x8x512xf32>
    %485 = vector.shape_cast %484 : vector<1x8x512xf32> to vector<8x512xf32>
    %cst_187 = arith.constant dense<0.000000e+00> : vector<8x512xf32>
    %486 = tpu.matmul %483, %401, %cst_187 {dimension_numbers = #tpu.dot_dimension_numbers<[1], [0], [0], [1], [0, 0, 1, 1], [], []>} : vector<8x128xf32>, vector<128x512xf32>, vector<8x512xf32> -> vector<8x512xf32>
    %487 = arith.addf %485, %486 : vector<8x512xf32>
    %488 = vector.extract_strided_slice %487 {offsets = [0, 0], sizes = [8, 384], strides = [1, 1]} : vector<8x512xf32> to vector<8x384xf32>
    %489 = arith.negf %488 : vector<8x384xf32>
    %490 = math.exp %489 : vector<8x384xf32>
    %cst_188 = arith.constant 1.000000e+00 : f32
    %491 = vector.broadcast %cst_188 : f32 to vector<8x384xf32>
    %492 = arith.addf %491, %490 : vector<8x384xf32>
    %493 = arith.divf %491, %492 : vector<8x384xf32>
    %494 = vector.extract_strided_slice %493 {offsets = [0, 0], sizes = [8, 128], strides = [1, 1]} : vector<8x384xf32> to vector<8x128xf32>
    %495 = vector.extract_strided_slice %493 {offsets = [0, 128], sizes = [8, 128], strides = [1, 1]} : vector<8x384xf32> to vector<8x128xf32>
    %496 = vector.extract_strided_slice %493 {offsets = [0, 256], sizes = [8, 128], strides = [1, 1]} : vector<8x384xf32> to vector<8x128xf32>
    %497 = vector.extract_strided_slice %487 {offsets = [0, 384], sizes = [8, 128], strides = [1, 1]} : vector<8x512xf32> to vector<8x128xf32>
    %498 = math.tanh %497 : vector<8x128xf32>
    %499 = arith.mulf %495, %481 : vector<8x128xf32>
    %500 = arith.mulf %494, %498 : vector<8x128xf32>
    %501 = arith.addf %499, %500 : vector<8x128xf32>
    %502 = math.tanh %501 : vector<8x128xf32>
    %503 = arith.mulf %496, %502 : vector<8x128xf32>
    %c5_189 = arith.constant 5 : index
    %c0_190 = arith.constant 0 : index
    %c0_191 = arith.constant 0 : index
    %504 = vector.load %arg15[%c5_189, %c0_190, %c0_191] : memref<8x8x512xf32, #tpu.memory_space<vmem>>, vector<1x8x512xf32>
    %505 = vector.shape_cast %504 : vector<1x8x512xf32> to vector<8x512xf32>
    %cst_192 = arith.constant dense<0.000000e+00> : vector<8x512xf32>
    %506 = tpu.matmul %503, %401, %cst_192 {dimension_numbers = #tpu.dot_dimension_numbers<[1], [0], [0], [1], [0, 0, 1, 1], [], []>} : vector<8x128xf32>, vector<128x512xf32>, vector<8x512xf32> -> vector<8x512xf32>
    %507 = arith.addf %505, %506 : vector<8x512xf32>
    %508 = vector.extract_strided_slice %507 {offsets = [0, 0], sizes = [8, 384], strides = [1, 1]} : vector<8x512xf32> to vector<8x384xf32>
    %509 = arith.negf %508 : vector<8x384xf32>
    %510 = math.exp %509 : vector<8x384xf32>
    %cst_193 = arith.constant 1.000000e+00 : f32
    %511 = vector.broadcast %cst_193 : f32 to vector<8x384xf32>
    %512 = arith.addf %511, %510 : vector<8x384xf32>
    %513 = arith.divf %511, %512 : vector<8x384xf32>
    %514 = vector.extract_strided_slice %513 {offsets = [0, 0], sizes = [8, 128], strides = [1, 1]} : vector<8x384xf32> to vector<8x128xf32>
    %515 = vector.extract_strided_slice %513 {offsets = [0, 128], sizes = [8, 128], strides = [1, 1]} : vector<8x384xf32> to vector<8x128xf32>
    %516 = vector.extract_strided_slice %513 {offsets = [0, 256], sizes = [8, 128], strides = [1, 1]} : vector<8x384xf32> to vector<8x128xf32>
    %517 = vector.extract_strided_slice %507 {offsets = [0, 384], sizes = [8, 128], strides = [1, 1]} : vector<8x512xf32> to vector<8x128xf32>
    %518 = math.tanh %517 : vector<8x128xf32>
    %519 = arith.mulf %515, %501 : vector<8x128xf32>
    %520 = arith.mulf %514, %518 : vector<8x128xf32>
    %521 = arith.addf %519, %520 : vector<8x128xf32>
    %522 = math.tanh %521 : vector<8x128xf32>
    %523 = arith.mulf %516, %522 : vector<8x128xf32>
    %c6_194 = arith.constant 6 : index
    %c0_195 = arith.constant 0 : index
    %c0_196 = arith.constant 0 : index
    %524 = vector.load %arg15[%c6_194, %c0_195, %c0_196] : memref<8x8x512xf32, #tpu.memory_space<vmem>>, vector<1x8x512xf32>
    %525 = vector.shape_cast %524 : vector<1x8x512xf32> to vector<8x512xf32>
    %cst_197 = arith.constant dense<0.000000e+00> : vector<8x512xf32>
    %526 = tpu.matmul %523, %401, %cst_197 {dimension_numbers = #tpu.dot_dimension_numbers<[1], [0], [0], [1], [0, 0, 1, 1], [], []>} : vector<8x128xf32>, vector<128x512xf32>, vector<8x512xf32> -> vector<8x512xf32>
    %527 = arith.addf %525, %526 : vector<8x512xf32>
    %528 = vector.extract_strided_slice %527 {offsets = [0, 0], sizes = [8, 384], strides = [1, 1]} : vector<8x512xf32> to vector<8x384xf32>
    %529 = arith.negf %528 : vector<8x384xf32>
    %530 = math.exp %529 : vector<8x384xf32>
    %cst_198 = arith.constant 1.000000e+00 : f32
    %531 = vector.broadcast %cst_198 : f32 to vector<8x384xf32>
    %532 = arith.addf %531, %530 : vector<8x384xf32>
    %533 = arith.divf %531, %532 : vector<8x384xf32>
    %534 = vector.extract_strided_slice %533 {offsets = [0, 0], sizes = [8, 128], strides = [1, 1]} : vector<8x384xf32> to vector<8x128xf32>
    %535 = vector.extract_strided_slice %533 {offsets = [0, 128], sizes = [8, 128], strides = [1, 1]} : vector<8x384xf32> to vector<8x128xf32>
    %536 = vector.extract_strided_slice %533 {offsets = [0, 256], sizes = [8, 128], strides = [1, 1]} : vector<8x384xf32> to vector<8x128xf32>
    %537 = vector.extract_strided_slice %527 {offsets = [0, 384], sizes = [8, 128], strides = [1, 1]} : vector<8x512xf32> to vector<8x128xf32>
    %538 = math.tanh %537 : vector<8x128xf32>
    %539 = arith.mulf %535, %521 : vector<8x128xf32>
    %540 = arith.mulf %534, %538 : vector<8x128xf32>
    %541 = arith.addf %539, %540 : vector<8x128xf32>
    %542 = math.tanh %541 : vector<8x128xf32>
    %543 = arith.mulf %536, %542 : vector<8x128xf32>
    %c7_199 = arith.constant 7 : index
    %c0_200 = arith.constant 0 : index
    %c0_201 = arith.constant 0 : index
    %544 = vector.load %arg15[%c7_199, %c0_200, %c0_201] : memref<8x8x512xf32, #tpu.memory_space<vmem>>, vector<1x8x512xf32>
    %545 = vector.shape_cast %544 : vector<1x8x512xf32> to vector<8x512xf32>
    %cst_202 = arith.constant dense<0.000000e+00> : vector<8x512xf32>
    %546 = tpu.matmul %543, %401, %cst_202 {dimension_numbers = #tpu.dot_dimension_numbers<[1], [0], [0], [1], [0, 0, 1, 1], [], []>} : vector<8x128xf32>, vector<128x512xf32>, vector<8x512xf32> -> vector<8x512xf32>
    %547 = arith.addf %545, %546 : vector<8x512xf32>
    %548 = vector.extract_strided_slice %547 {offsets = [0, 0], sizes = [8, 384], strides = [1, 1]} : vector<8x512xf32> to vector<8x384xf32>
    %549 = arith.negf %548 : vector<8x384xf32>
    %550 = math.exp %549 : vector<8x384xf32>
    %cst_203 = arith.constant 1.000000e+00 : f32
    %551 = vector.broadcast %cst_203 : f32 to vector<8x384xf32>
    %552 = arith.addf %551, %550 : vector<8x384xf32>
    %553 = arith.divf %551, %552 : vector<8x384xf32>
    %554 = vector.extract_strided_slice %553 {offsets = [0, 0], sizes = [8, 128], strides = [1, 1]} : vector<8x384xf32> to vector<8x128xf32>
    %555 = vector.extract_strided_slice %553 {offsets = [0, 128], sizes = [8, 128], strides = [1, 1]} : vector<8x384xf32> to vector<8x128xf32>
    %556 = vector.extract_strided_slice %553 {offsets = [0, 256], sizes = [8, 128], strides = [1, 1]} : vector<8x384xf32> to vector<8x128xf32>
    %557 = vector.extract_strided_slice %547 {offsets = [0, 384], sizes = [8, 128], strides = [1, 1]} : vector<8x512xf32> to vector<8x128xf32>
    %558 = math.tanh %557 : vector<8x128xf32>
    %559 = arith.mulf %555, %541 : vector<8x128xf32>
    %560 = arith.mulf %554, %558 : vector<8x128xf32>
    %561 = arith.addf %559, %560 : vector<8x128xf32>
    %562 = math.tanh %561 : vector<8x128xf32>
    %563 = arith.mulf %556, %562 : vector<8x128xf32>
    %c0_204 = arith.constant 0 : index
    %c0_205 = arith.constant 0 : index
    %564 = vector.load %arg10[%c0_204, %c0_205] : memref<128x64xf32, #tpu.memory_space<vmem>>, vector<128x64xf32>
    %cst_206 = arith.constant dense<0.000000e+00> : vector<8x64xf32>
    %565 = tpu.matmul %563, %564, %cst_206 {dimension_numbers = #tpu.dot_dimension_numbers<[1], [0], [0], [1], [0, 0, 1, 1], [], []>} : vector<8x128xf32>, vector<128x64xf32>, vector<8x64xf32> -> vector<8x64xf32>
    %c0_207 = arith.constant 0 : index
    %c0_208 = arith.constant 0 : index
    %566 = vector.load %arg11[%c0_207, %c0_208] : memref<1x64xf32, #tpu.memory_space<vmem>>, vector<1x64xf32>
    %567 = vector.broadcast %566 : vector<1x64xf32> to vector<8x64xf32>
    %568 = arith.addf %565, %567 : vector<8x64xf32>
    %cst_209 = arith.constant 0.000000e+00 : f32
    %569 = vector.broadcast %cst_209 : f32 to vector<8x64xf32>
    %570 = arith.maximumf %568, %569 : vector<8x64xf32>
    %c0_210 = arith.constant 0 : index
    %c0_211 = arith.constant 0 : index
    %571 = vector.load %arg12[%c0_210, %c0_211] : memref<64x2xf32, #tpu.memory_space<vmem>>, vector<64x2xf32>
    %cst_212 = arith.constant dense<0.000000e+00> : vector<8x2xf32>
    %572 = tpu.matmul %570, %571, %cst_212 {dimension_numbers = #tpu.dot_dimension_numbers<[1], [0], [0], [1], [0, 0, 1, 1], [], []>} : vector<8x64xf32>, vector<64x2xf32>, vector<8x2xf32> -> vector<8x2xf32>
    %c0_213 = arith.constant 0 : index
    %c0_214 = arith.constant 0 : index
    %573 = vector.load %arg13[%c0_213, %c0_214] : memref<1x2xf32, #tpu.memory_space<vmem>>, vector<1x2xf32>
    %574 = vector.broadcast %573 : vector<1x2xf32> to vector<8x2xf32>
    %575 = arith.addf %572, %574 : vector<8x2xf32>
    %c0_215 = arith.constant 0 : index
    %c0_216 = arith.constant 0 : index
    %576 = vector.load %arg14[%c0_215, %c0_216] : memref<8x2xf32, #tpu.memory_space<vmem>>, vector<8x2xf32>
    tpu.vector_store %arg14[%c0_215, %c0_216], %575 {strides = array<i32>} : memref<8x2xf32, #tpu.memory_space<vmem>>, vector<8x2xf32>,
    return
  }
}

</mosaic_0001>

<llo_original>
// kernel: traj_lstm_forward.1
$region0: #{traj_lstm_forward.1}
  #allocation0 [shape = 'u32[]', space=smem, size = 0x4, offset = 0x4, fixed_abs, tag = 'smem constant byte address 0x4 - core index']
  #allocation1 [shape = 'u32[144,128]{1,0:T(1,128)}', space=vmem, size = 0x12000, scoped, tag = 'internal scratch']
  #allocation2 [shape = 'f32[8,8,512]{2,1,0:T(8,128)}', space=vmem, size = 0x20000, scoped, tag = 'scratch operand']
  #allocation3 [shape = 'f32[8,8,128]{2,1,0:T(8,128)}', space=vmem, size = 0x8000, scoped, tag = 'scratch operand']
  %s0 = inlined_call_operand.vmem [shape: f32[8,8,2], index: 0, kind: input, shape index: {}]
  %s1 = inlined_call_operand.vmem [shape: f32[2,512], index: 1, kind: input, shape index: {}]
  %s2 = inlined_call_operand.hbm [shape: f32[128,512], index: 2, kind: input, shape index: {}]
  %s3 = inlined_call_operand.vmem [shape: f32[1,512], index: 3, kind: input, shape index: {}]
  %s4 = inlined_call_operand.hbm [shape: f32[128,512], index: 4, kind: input, shape index: {}]
  %s5 = inlined_call_operand.hbm [shape: f32[128,512], index: 5, kind: input, shape index: {}]
  %s6 = inlined_call_operand.vmem [shape: f32[1,512], index: 6, kind: input, shape index: {}]
  %s7 = inlined_call_operand.hbm [shape: f32[128,512], index: 7, kind: input, shape index: {}]
  %s8 = inlined_call_operand.hbm [shape: f32[128,512], index: 8, kind: input, shape index: {}]
  %s9 = inlined_call_operand.vmem [shape: f32[1,512], index: 9, kind: input, shape index: {}]
  %s10 = inlined_call_operand.vmem [shape: f32[128,64], index: 10, kind: input, shape index: {}]
  %s11 = inlined_call_operand.vmem [shape: f32[1,64], index: 11, kind: input, shape index: {}]
  %s12 = inlined_call_operand.vmem [shape: f32[64,2], index: 12, kind: input, shape index: {}]
  %s13 = inlined_call_operand.vmem [shape: f32[1,2], index: 13, kind: input, shape index: {}]
  %s14 = inlined_call_operand.vmem [shape: f32[8,2], index: 14, kind: output, shape index: {}]
  %s15 = sld [smem:[#allocation0]]
  $region86: #{traj_lstm_forward.1} parent=0
    _
  %s17 = ssub.s32 1, %s15
  %s18 = scalar_select 0, %s17, %s15
  $region1: #{traj_lstm_forward.1} parent=0
    #allocation4 [shape = 'u8[262144]{0}', space=vmem, size = 0x40000, scoped, tag = 'input window, operand 2, single buffered']
    #allocation5 [shape = 's32[1]{0}', space=sflag, size = 0x4, scoped, tag = 'scoped memory for traj_lstm_forward.1']
    #allocation6 [shape = 'u8[262144]{0}', space=vmem, size = 0x40000, scoped, tag = 'input window, operand 4, single buffered']
    #allocation7 [shape = 's32[1]{0}', space=sflag, size = 0x4, scoped, tag = 'scoped memory for traj_lstm_forward.1']
    #allocation8 [shape = 'u8[262144]{0}', space=vmem, size = 0x40000, scoped, tag = 'input window, operand 5, single buffered']
    #allocation9 [shape = 'u8[262144]{0}', space=vmem, size = 0x40000, scoped, tag = 'input window, operand 7, single buffered']
    #allocation10 [shape = 's32[1]{0}', space=sflag, size = 0x4, scoped, tag = 'scoped memory for traj_lstm_forward.1']
    #allocation11 [shape = 'u8[262144]{0}', space=vmem, size = 0x40000, scoped, tag = 'input window, operand 8, single buffered']
    %19 = vsyncpa [#allocation5], 0
    %20 = vsyncpa [#allocation7], 0
    %21 = vsyncpa [#allocation10], 0
    // Predicated region
    $region2: #{traj_lstm_forward.1} parent=1 // pred_check
      _
    $region3: #{traj_lstm_forward.1} parent=1 // pred_check_branch
      %23 = sbr.rel (0) target = $region5
    $region4: #{traj_lstm_forward.1} parent=1 // pred_region
      _
    $region5: #{traj_lstm_forward.1} parent=1 // pred_fallthru
      _
    // Predicated region
    $region6: #{traj_lstm_forward.1} parent=1 // pred_check
      _
    $region7: #{traj_lstm_forward.1} parent=1 // pred_check_branch
      %25 = sbr.rel (0) target = $region9
    $region8: #{traj_lstm_forward.1} parent=1 // pred_region
      _
    $region9: #{traj_lstm_forward.1} parent=1 // pred_fallthru
      _
    // Predicated region
    $region10: #{traj_lstm_forward.1} parent=1 // pred_check
      _
    $region11: #{traj_lstm_forward.1} parent=1 // pred_check_branch
      %27 = sbr.rel (0) target = $region13
    $region12: #{traj_lstm_forward.1} parent=1 // pred_region
      %s29 = ssub.s32 8192, 8192
      %30 = vsyncadd [#allocation5], %s29
      %s31 = sshll.u32 [#allocation4], 4
      %s32 = int_to_ptr.vmem [resolvable:$true] %s31
      %37 = dma.hbm_to_vmem [thread:$0]  %s2, 8192, %s32, [#allocation5], 512, 512, 32
    $region13: #{traj_lstm_forward.1} parent=1 // pred_fallthru
      _
    // Predicated region
    $region14: #{traj_lstm_forward.1} parent=1 // pred_check
      _
    $region15: #{traj_lstm_forward.1} parent=1 // pred_check_branch
      %39 = sbr.rel (0) target = $region17
    $region16: #{traj_lstm_forward.1} parent=1 // pred_region
      _
    $region17: #{traj_lstm_forward.1} parent=1 // pred_fallthru
      _
    // Predicated region
    $region18: #{traj_lstm_forward.1} parent=1 // pred_check
      _
    $region19: #{traj_lstm_forward.1} parent=1 // pred_check_branch
      %41 = sbr.rel (0) target = $region21
    $region20: #{traj_lstm_forward.1} parent=1 // pred_region
      %s43 = ssub.s32 8192, 8192
      %44 = vsyncadd [#allocation7], %s43
      %s45 = sshll.u32 [#allocation6], 4
      %s46 = int_to_ptr.vmem [resolvable:$true] %s45
      %51 = dma.hbm_to_vmem [thread:$0]  %s4, 8192, %s46, [#allocation7], 512, 512, 32
    $region21: #{traj_lstm_forward.1} parent=1 // pred_fallthru
      _
    // Predicated region
    $region22: #{traj_lstm_forward.1} parent=1 // pred_check
      _
    $region23: #{traj_lstm_forward.1} parent=1 // pred_check_branch
      %53 = sbr.rel (0) target = $region25
    $region24: #{traj_lstm_forward.1} parent=1 // pred_region
      %s55 = ssub.s32 8192, 8192
      %56 = vsyncadd [#allocation7], %s55
      %s57 = sshll.u32 [#allocation8], 4
      %s58 = int_to_ptr.vmem [resolvable:$true] %s57
      %63 = dma.hbm_to_vmem [thread:$0]  %s5, 8192, %s58, [#allocation7], 512, 512, 32
    $region25: #{traj_lstm_forward.1} parent=1 // pred_fallthru
      _
    // Predicated region
    $region26: #{traj_lstm_forward.1} parent=1 // pred_check
      _
    $region27: #{traj_lstm_forward.1} parent=1 // pred_check_branch
      %65 = sbr.rel (0) target = $region29
    $region28: #{traj_lstm_forward.1} parent=1 // pred_region
      _
    $region29: #{traj_lstm_forward.1} parent=1 // pred_fallthru
      _
    // Predicated region
    $region30: #{traj_lstm_forward.1} parent=1 // pred_check
      _
    $region31: #{traj_lstm_forward.1} parent=1 // pred_check_branch
      %67 = sbr.rel (0) target = $region33
    $region32: #{traj_lstm_forward.1} parent=1 // pred_region
      %s69 = ssub.s32 8192, 8192
      %70 = vsyncadd [#allocation10], %s69
      %s71 = sshll.u32 [#allocation9], 4
      %s72 = int_to_ptr.vmem [resolvable:$true] %s71
      %77 = dma.hbm_to_vmem [thread:$0]  %s7, 8192, %s72, [#allocation10], 512, 512, 32
    $region33: #{traj_lstm_forward.1} parent=1 // pred_fallthru
      _
    // Predicated region
    $region34: #{traj_lstm_forward.1} parent=1 // pred_check
      _
    $region35: #{traj_lstm_forward.1} parent=1 // pred_check_branch
      %79 = sbr.rel (0) target = $region37
    $region36: #{traj_lstm_forward.1} parent=1 // pred_region
      %s81 = ssub.s32 8192, 8192
      %82 = vsyncadd [#allocation10], %s81
      %s83 = sshll.u32 [#allocation11], 4
      %s84 = int_to_ptr.vmem [resolvable:$true] %s83
      %89 = dma.hbm_to_vmem [thread:$0]  %s8, 8192, %s84, [#allocation10], 512, 512, 32
    $region37: #{traj_lstm_forward.1} parent=1 // pred_fallthru
      _
    // Predicated region
    $region38: #{traj_lstm_forward.1} parent=1 // pred_check
      _
    $region39: #{traj_lstm_forward.1} parent=1 // pred_check_branch
      %91 = sbr.rel (0) target = $region41
    $region40: #{traj_lstm_forward.1} parent=1 // pred_region
      _
    $region41: #{traj_lstm_forward.1} parent=1 // pred_fallthru
      _
    // Predicated region
    $region42: #{traj_lstm_forward.1} parent=1 // pred_check
      _
    $region43: #{traj_lstm_forward.1} parent=1 // pred_check_branch
      %93 = sbr.rel (0) target = $region45
    $region44: #{traj_lstm_forward.1} parent=1 // pred_region
      _
    $region45: #{traj_lstm_forward.1} parent=1 // pred_fallthru
      _
    // Predicated region
    $region46: #{traj_lstm_forward.1} parent=1 // pred_check
      _
    $region47: #{traj_lstm_forward.1} parent=1 // pred_check_branch
      %95 = sbr.rel (0) target = $region49
    $region48: #{traj_lstm_forward.1} parent=1 // pred_region
      _
    $region49: #{traj_lstm_forward.1} parent=1 // pred_fallthru
      _
    // Predicated region
    $region50: #{traj_lstm_forward.1} parent=1 // pred_check
      _
    $region51: #{traj_lstm_forward.1} parent=1 // pred_check_branch
      %97 = sbr.rel (0) target = $region53
    $region52: #{traj_lstm_forward.1} parent=1 // pred_region
      _
    $region53: #{traj_lstm_forward.1} parent=1 // pred_fallthru
      _
    // Predicated region
    $region54: #{traj_lstm_forward.1} parent=1 // pred_check
      _
    $region55: #{traj_lstm_forward.1} parent=1 // pred_check_branch
      %99 = sbr.rel (0) target = $region57
    $region56: #{traj_lstm_forward.1} parent=1 // pred_region
      _
    $region57: #{traj_lstm_forward.1} parent=1 // pred_fallthru
      _
    // Predicated region
    $region58: #{traj_lstm_forward.1} parent=1 // pred_check
      _
    $region59: #{traj_lstm_forward.1} parent=1 // pred_check_branch
      %101 = sbr.rel (0) target = $region61
    $region60: #{traj_lstm_forward.1} parent=1 // pred_region
      %102 = dma.done [#allocation5], 8192
    $region61: #{traj_lstm_forward.1} parent=1 // pred_fallthru
      _
    // Predicated region
    $region62: #{traj_lstm_forward.1} parent=1 // pred_check
      _
    $region63: #{traj_lstm_forward.1} parent=1 // pred_check_branch
      %104 = sbr.rel (0) target = $region65
    $region64: #{traj_lstm_forward.1} parent=1 // pred_region
      %105 = dma.done [#allocation7], 8192
    $region65: #{traj_lstm_forward.1} parent=1 // pred_fallthru
      _
    // Predicated region
    $region66: #{traj_lstm_forward.1} parent=1 // pred_check
      _
    $region67: #{traj_lstm_forward.1} parent=1 // pred_check_branch
      %107 = sbr.rel (0) target = $region69
    $region68: #{traj_lstm_forward.1} parent=1 // pred_region
      %108 = dma.done [#allocation7], 8192
    $region69: #{traj_lstm_forward.1} parent=1 // pred_fallthru
      _
    // Predicated region
    $region70: #{traj_lstm_forward.1} parent=1 // pred_check
      _
    $region71: #{traj_lstm_forward.1} parent=1 // pred_check_branch
      %110 = sbr.rel (0) target = $region73
    $region72: #{traj_lstm_forward.1} parent=1 // pred_region
      %111 = dma.done [#allocation10], 8192
    $region73: #{traj_lstm_forward.1} parent=1 // pred_fallthru
      _
    // Predicated region
    $region74: #{traj_lstm_forward.1} parent=1 // pred_check
      _
    $region75: #{traj_lstm_forward.1} parent=1 // pred_check_branch
      %113 = sbr.rel (0) target = $region77
    $region76: #{traj_lstm_forward.1} parent=1 // pred_region
      %114 = dma.done [#allocation10], 8192
    $region77: #{traj_lstm_forward.1} parent=1 // pred_fallthru
      _
    %v115 = vld [vmem:[%s0] sm:$0xff]
    %v116 = vld [vmem:[%s0 + $0x8] sm:$0xff]
    %v117 = vld [vmem:[%s0 + $0x10] sm:$0xff]
    %v118 = vld [vmem:[%s0 + $0x18] sm:$0xff]
    %v119 = vld [vmem:[%s0 + $0x20] sm:$0xff]
    %v120 = vld [vmem:[%s0 + $0x28] sm:$0xff]
    %v121 = vld [vmem:[%s0 + $0x30] sm:$0xff]
    %v122 = vld [vmem:[%s0 + $0x38] sm:$0xff]
    %v123 = vld [vmem:[%s1] sm:$0xff]
    %v124 = vld [vmem:[%s3] sm:$0xf]
    %v126 = vlaneseq
    %v127 = vshrl.u32 %v126, 7
    %v128 = vsub.s32 0, %v127
    %v129 = vrot.slane %v124, %v128
    %v130 = vlaneseq
    %v131 = vshrl.u32 %v130, 7
    %v132 = vsub.s32 1, %v131
    %v133 = vrot.slane %v124, %v132
    %v134 = vlaneseq
    %v135 = vshrl.u32 %v134, 7
    %v136 = vsub.s32 2, %v135
    %v137 = vrot.slane %v124, %v136
    %v138 = vlaneseq
    %v139 = vshrl.u32 %v138, 7
    %v140 = vsub.s32 3, %v139
    %v141 = vrot.slane %v124, %v140
    %v147 = vcombine.high %v123, %v123
    %v149 = vunpack.c.l.s4 1983009808
    %v150 = vunpack.c.0.s8 %v149
    %v151 = vlaneseq
    %v152 = vshrl.u32 %v151, 7
    %v153 = vsub.s32 %v150, %v152
    %v154 = vrot.slane %v123, %v153
    %v156 = vunpack.c.l.s4 1983009808
    %v157 = vunpack.c.0.s8 %v156
    %v158 = vlaneseq
    %v159 = vshrl.u32 %v158, 7
    %v160 = vsub.s32 %v157, %v159
    %v161 = vrot.slane %v147, %v160
    %v162 = vcombine.high %v154, %v154
    %v163 = vcombine.high %v161, %v161
    %vm164 = vcmask 15360
    %v166 = vsel %vm164, %v115, 0
    %v169 = vsel %vm164, %v116, 0
    %v172 = vsel %vm164, %v117, 0
    %v175 = vsel %vm164, %v118, 0
    %v178 = vsel %vm164, %v119, 0
    %v181 = vsel %vm164, %v120, 0
    %v184 = vsel %vm164, %v121, 0
    %v187 = vsel %vm164, %v122, 0
    %vm189 = vcmask 1041408
    %v190 = vsel %vm189, %v154, 0
    %v192 = vsel %vm189, %v162, 0
    %v194 = vsel %vm189, %v161, 0
    %v196 = vsel %vm189, %v163, 0
    %198 = vmatprep.subr.mxu0 0.0
    %199 = vmatpush1.msra.mxu0 0.0
    %200 = vmatprep.subr.mxu0 0.0
    %201 = vmatpush1.msra.mxu0 0.0
    %202 = vmatprep.subr.mxu0 0.0
    %203 = vmatpush1.msra.mxu0 0.0
    %204 = vmatprep.subr.mxu0 0.0
    %205 = vmatpush1.msra.mxu0 0.0
    %206 = vmatprep.subr.mxu0 0.0
    %207 = vmatpush1.msra.mxu0 0.0
    %208 = vmatprep.subr.mxu0 0.0
    %209 = vmatpush1.msra.mxu0 0.0
    %210 = vmatprep.subr.mxu0 0.0
    %211 = vmatpush1.msra.mxu0 0.0
    %212 = vmatprep.subr.mxu0 0.0
    %213 = vmatpush1.msra.mxu0 0.0
    %214 = vmatprep.subr.mxu0 0.0
    %215 = vmatpush1.msra.mxu0 0.0
    %216 = vmatprep.subr.mxu0 0.0
    %217 = vmatpush1.msra.mxu0 0.0
    %218 = vmatprep.subr.mxu0 0.0
    %219 = vmatpush1.msra.mxu0 0.0
    %220 = vmatprep.subr.mxu0 0.0
    %221 = vmatpush1.msra.mxu0 0.0
    %222 = vmatprep.subr.mxu0 0.0
    %223 = vmatpush1.msra.mxu0 0.0
    %224 = vmatprep.subr.mxu0 0.0
    %225 = vmatpush1.msra.mxu0 0.0
    %226 = vmatprep.subr.mxu0 0.0
    %227 = vmatpush1.msra.mxu0 0.0
    %228 = vmatprep.subr.mxu0 %v192
    %229 = vmatpush1.msra.mxu0 %v190
    %230 = vmatprep.subr.mxu0 0.0
    %231 = vmatpush2.msra.mxu0 0.0
    %232 = vmatprep.subr.mxu0 0.0
    %233 = vmatpush2.msra.mxu0 0.0
    %234 = vmatprep.subr.mxu0 0.0
    %235 = vmatpush2.msra.mxu0 0.0
    %236 = vmatprep.subr.mxu0 0.0
    %237 = vmatpush2.msra.mxu0 0.0
    %238 = vmatprep.subr.mxu0 0.0
    %239 = vmatpush2.msra.mxu0 0.0
    %240 = vmatprep.subr.mxu0 0.0
    %241 = vmatpush2.msra.mxu0 0.0
    %242 = vmatprep.subr.mxu0 0.0
    %243 = vmatpush2.msra.mxu0 0.0
    %244 = vmatprep.subr.mxu0 0.0
    %245 = vmatpush2.msra.mxu0 0.0
    %246 = vmatprep.subr.mxu0 0.0
    %247 = vmatpush2.msra.mxu0 0.0
    %248 = vmatprep.subr.mxu0 0.0
    %249 = vmatpush2.msra.mxu0 0.0
    %250 = vmatprep.subr.mxu0 0.0
    %251 = vmatpush2.msra.mxu0 0.0
    %252 = vmatprep.subr.mxu0 0.0
    %253 = vmatpush2.msra.mxu0 0.0
    %254 = vmatprep.subr.mxu0 0.0
    %255 = vmatpush2.msra.mxu0 0.0
    %256 = vmatprep.subr.mxu0 0.0
    %257 = vmatpush2.msra.mxu0 0.0
    %258 = vmatprep.subr.mxu0 0.0
    %259 = vmatpush2.msra.mxu0 0.0
    %260 = vmatprep.subr.mxu0 0.0
    %261 = vmatpush2.msra.mxu0 0.0
    %262 = vmatprep.mubr.f32.mxu0 0.0
    %263 = vmatmul.mubr.f32.gmra.mxu0 %v166
    %v264 = vpop.f32.mrf.mxu0
    %v265 = vadd.f32 %v129, %v264
    %v266 = vpop.f32.mrf.mxu0
    %v267 = vadd.f32 %v133, %v266
    %268 = vmatprep.mubr.f32.mxu0 0.0
    %269 = vmatmul.mubr.f32.gmra.mxu0 %v169
    %v270 = vpop.f32.mrf.mxu0
    %v271 = vadd.f32 %v129, %v270
    %v272 = vpop.f32.mrf.mxu0
    %v273 = vadd.f32 %v133, %v272
    %274 = vmatprep.mubr.f32.mxu0 0.0
    %275 = vmatmul.mubr.f32.gmra.mxu0 %v172
    %v276 = vpop.f32.mrf.mxu0
    %v277 = vadd.f32 %v129, %v276
    %v278 = vpop.f32.mrf.mxu0
    %v279 = vadd.f32 %v133, %v278
    %280 = vmatprep.mubr.f32.mxu0 0.0
    %281 = vmatmul.mubr.f32.gmra.mxu0 %v175
    %v282 = vpop.f32.mrf.mxu0
    %v283 = vadd.f32 %v129, %v282
    %v284 = vpop.f32.mrf.mxu0
    %v285 = vadd.f32 %v133, %v284
    %286 = vmatprep.mubr.f32.mxu0 0.0
    %287 = vmatmul.mubr.f32.gmra.mxu0 %v178
    %v288 = vpop.f32.mrf.mxu0
    %v289 = vadd.f32 %v129, %v288
    %v290 = vpop.f32.mrf.mxu0
    %v291 = vadd.f32 %v133, %v290
    %292 = vmatprep.mubr.f32.mxu0 0.0
    %293 = vmatmul.mubr.f32.gmra.mxu0 %v181
    %v294 = vpop.f32.mrf.mxu0
    %v295 = vadd.f32 %v129, %v294
    %v296 = vpop.f32.mrf.mxu0
    %v297 = vadd.f32 %v133, %v296
    %298 = vmatprep.mubr.f32.mxu0 0.0
    %299 = vmatmul.mubr.f32.gmra.mxu0 %v184
    %v300 = vpop.f32.mrf.mxu0
    %v301 = vadd.f32 %v129, %v300
    %v302 = vpop.f32.mrf.mxu0
    %v303 = vadd.f32 %v133, %v302
    %304 = vmatprep.mubr.f32.mxu0 0.0
    %305 = vmatmul.mubr.f32.gmra.mxu0 %v187
    %v306 = vpop.f32.mrf.mxu0
    %v307 = vadd.f32 %v129, %v306
    %v308 = vpop.f32.mrf.mxu0
    %v309 = vadd.f32 %v133, %v308
    %310 = vdwg.mxu0
    %311 = vmatprep.subr.mxu0 0.0
    %312 = vmatpush1.msra.mxu0 0.0
    %313 = vmatprep.subr.mxu0 0.0
    %314 = vmatpush1.msra.mxu0 0.0
    %315 = vmatprep.subr.mxu0 0.0
    %316 = vmatpush1.msra.mxu0 0.0
    %317 = vmatprep.subr.mxu0 0.0
    %318 = vmatpush1.msra.mxu0 0.0
    %319 = vmatprep.subr.mxu0 0.0
    %320 = vmatpush1.msra.mxu0 0.0
    %321 = vmatprep.subr.mxu0 0.0
    %322 = vmatpush1.msra.mxu0 0.0
    %323 = vmatprep.subr.mxu0 0.0
    %324 = vmatpush1.msra.mxu0 0.0
    %325 = vmatprep.subr.mxu0 0.0
    %326 = vmatpush1.msra.mxu0 0.0
    %327 = vmatprep.subr.mxu0 0.0
    %328 = vmatpush1.msra.mxu0 0.0
    %329 = vmatprep.subr.mxu0 0.0
    %330 = vmatpush1.msra.mxu0 0.0
    %331 = vmatprep.subr.mxu0 0.0
    %332 = vmatpush1.msra.mxu0 0.0
    %333 = vmatprep.subr.mxu0 0.0
    %334 = vmatpush1.msra.mxu0 0.0
    %335 = vmatprep.subr.mxu0 0.0
    %336 = vmatpush1.msra.mxu0 0.0
    %337 = vmatprep.subr.mxu0 0.0
    %338 = vmatpush1.msra.mxu0 0.0
    %339 = vmatprep.subr.mxu0 0.0
    %340 = vmatpush1.msra.mxu0 0.0
    %341 = vmatprep.subr.mxu0 %v196
    %342 = vmatpush1.msra.mxu0 %v194
    %343 = vmatprep.subr.mxu0 0.0
    %344 = vmatpush2.msra.mxu0 0.0
    %345 = vmatprep.subr.mxu0 0.0
    %346 = vmatpush2.msra.mxu0 0.0
    %347 = vmatprep.subr.mxu0 0.0
    %348 = vmatpush2.msra.mxu0 0.0
    %349 = vmatprep.subr.mxu0 0.0
    %350 = vmatpush2.msra.mxu0 0.0
    %351 = vmatprep.subr.mxu0 0.0
    %352 = vmatpush2.msra.mxu0 0.0
    %353 = vmatprep.subr.mxu0 0.0
    %354 = vmatpush2.msra.mxu0 0.0
    %355 = vmatprep.subr.mxu0 0.0
    %356 = vmatpush2.msra.mxu0 0.0
    %357 = vmatprep.subr.mxu0 0.0
    %358 = vmatpush2.msra.mxu0 0.0
    %359 = vmatprep.subr.mxu0 0.0
    %360 = vmatpush2.msra.mxu0 0.0
    %361 = vmatprep.subr.mxu0 0.0
    %362 = vmatpush2.msra.mxu0 0.0
    %363 = vmatprep.subr.mxu0 0.0
    %364 = vmatpush2.msra.mxu0 0.0
    %365 = vmatprep.subr.mxu0 0.0
    %366 = vmatpush2.msra.mxu0 0.0
    %367 = vmatprep.subr.mxu0 0.0
    %368 = vmatpush2.msra.mxu0 0.0
    %369 = vmatprep.subr.mxu0 0.0
    %370 = vmatpush2.msra.mxu0 0.0
    %371 = vmatprep.subr.mxu0 0.0
    %372 = vmatpush2.msra.mxu0 0.0
    %373 = vmatprep.subr.mxu0 0.0
    %374 = vmatpush2.msra.mxu0 0.0
    %375 = vmatprep.mubr.f32.mxu0 0.0
    %376 = vmatmul.mubr.f32.gmra.mxu0 %v166
    %v377 = vpop.f32.mrf.mxu0
    %v378 = vadd.f32 %v137, %v377
    %v379 = vpop.f32.mrf.mxu0
    %v380 = vadd.f32 %v141, %v379
    %381 = vmatprep.mubr.f32.mxu0 0.0
    %382 = vmatmul.mubr.f32.gmra.mxu0 %v169
    %v383 = vpop.f32.mrf.mxu0
    %v384 = vadd.f32 %v137, %v383
    %v385 = vpop.f32.mrf.mxu0
    %v386 = vadd.f32 %v141, %v385
    %387 = vmatprep.mubr.f32.mxu0 0.0
    %388 = vmatmul.mubr.f32.gmra.mxu0 %v172
    %v389 = vpop.f32.mrf.mxu0
    %v390 = vadd.f32 %v137, %v389
    %v391 = vpop.f32.mrf.mxu0
    %v392 = vadd.f32 %v141, %v391
    %393 = vmatprep.mubr.f32.mxu0 0.0
    %394 = vmatmul.mubr.f32.gmra.mxu0 %v175
    %v395 = vpop.f32.mrf.mxu0
    %v396 = vadd.f32 %v137, %v395
    %v397 = vpop.f32.mrf.mxu0
    %v398 = vadd.f32 %v141, %v397
    %399 = vmatprep.mubr.f32.mxu0 0.0
    %400 = vmatmul.mubr.f32.gmra.mxu0 %v178
    %v401 = vpop.f32.mrf.mxu0
    %v402 = vadd.f32 %v137, %v401
    %v403 = vpop.f32.mrf.mxu0
    %v404 = vadd.f32 %v141, %v403
    %405 = vmatprep.mubr.f32.mxu0 0.0
    %406 = vmatmul.mubr.f32.gmra.mxu0 %v181
    %v407 = vpop.f32.mrf.mxu0
    %v408 = vadd.f32 %v137, %v407
    %v409 = vpop.f32.mrf.mxu0
    %v410 = vadd.f32 %v141, %v409
    %411 = vmatprep.mubr.f32.mxu0 0.0
    %412 = vmatmul.mubr.f32.gmra.mxu0 %v184
    %v413 = vpop.f32.mrf.mxu0
    %v414 = vadd.f32 %v137, %v413
    %v415 = vpop.f32.mrf.mxu0
    %v416 = vadd.f32 %v141, %v415
    %417 = vmatprep.mubr.f32.mxu0 0.0
    %418 = vmatmul.mubr.f32.gmra.mxu0 %v187
    %v419 = vpop.f32.mrf.mxu0
    %v420 = vadd.f32 %v137, %v419
    %v421 = vpop.f32.mrf.mxu0
    %v422 = vadd.f32 %v141, %v421
    %423 = vdwg.mxu0
    %424 = vst [vmem:[#allocation2] sm:$0xff] %v265
    %425 = vst [vmem:[#allocation2 + $0x8] sm:$0xff] %v267
    %426 = vst [vmem:[#allocation2 + $0x10] sm:$0xff] %v378
    %427 = vst [vmem:[#allocation2 + $0x18] sm:$0xff] %v380
    %428 = vst [vmem:[#allocation2 + $0x20] sm:$0xff] %v271
    %429 = vst [vmem:[#allocation2 + $0x28] sm:$0xff] %v273
    %430 = vst [vmem:[#allocation2 + $0x30] sm:$0xff] %v384
    %431 = vst [vmem:[#allocation2 + $0x38] sm:$0xff] %v386
    %432 = vst [vmem:[#allocation2 + $0x40] sm:$0xff] %v277
    %433 = vst [vmem:[#allocation2 + $0x48] sm:$0xff] %v279
    %434 = vst [vmem:[#allocation2 + $0x50] sm:$0xff] %v390
    %435 = vst [vmem:[#allocation2 + $0x58] sm:$0xff] %v392
    %436 = vst [vmem:[#allocation2 + $0x60] sm:$0xff] %v283
    %437 = vst [vmem:[#allocation2 + $0x68] sm:$0xff] %v285
    %438 = vst [vmem:[#allocation2 + $0x70] sm:$0xff] %v396
    %439 = vst [vmem:[#allocation2 + $0x78] sm:$0xff] %v398
    %440 = vst [vmem:[#allocation2 + $0x80] sm:$0xff] %v289
    %441 = vst [vmem:[#allocation2 + $0x88] sm:$0xff] %v291
    %442 = vst [vmem:[#allocation2 + $0x90] sm:$0xff] %v402
    %443 = vst [vmem:[#allocation2 + $0x98] sm:$0xff] %v404
    %444 = vst [vmem:[#allocation2 + $0xa0] sm:$0xff] %v295
    %445 = vst [vmem:[#allocation2 + $0xa8] sm:$0xff] %v297
    %446 = vst [vmem:[#allocation2 + $0xb0] sm:$0xff] %v408
    %447 = vst [vmem:[#allocation2 + $0xb8] sm:$0xff] %v410
    %448 = vst [vmem:[#allocation2 + $0xc0] sm:$0xff] %v301
    %449 = vst [vmem:[#allocation2 + $0xc8] sm:$0xff] %v303
    %450 = vst [vmem:[#allocation2 + $0xd0] sm:$0xff] %v414
    %451 = vst [vmem:[#allocation2 + $0xd8] sm:$0xff] %v416
    %452 = vst [vmem:[#allocation2 + $0xe0] sm:$0xff] %v307
    %453 = vst [vmem:[#allocation2 + $0xe8] sm:$0xff] %v309
    %454 = vst [vmem:[#allocation2 + $0xf0] sm:$0xff] %v420
    %455 = vst [vmem:[#allocation2 + $0xf8] sm:$0xff] %v422
    %v456 = vld [vmem:[#allocation4] sm:$0xff]
    %v457 = vld [vmem:[#allocation4 + $0x8] sm:$0xff]
    %v458 = vld [vmem:[#allocation4 + $0x10] sm:$0xff]
    %v459 = vld [vmem:[#allocation4 + $0x18] sm:$0xff]
    %v460 = vld [vmem:[#allocation4 + $0x20] sm:$0xff]
    %v461 = vld [vmem:[#allocation4 + $0x28] sm:$0xff]
    %v462 = vld [vmem:[#allocation4 + $0x30] sm:$0xff]
    %v463 = vld [vmem:[#allocation4 + $0x38] sm:$0xff]
    %v464 = vld [vmem:[#allocation4 + $0x40] sm:$0xff]
    %v465 = vld [vmem:[#allocation4 + $0x48] sm:$0xff]
    %v466 = vld [vmem:[#allocation4 + $0x50] sm:$0xff]
    %v467 = vld [vmem:[#allocation4 + $0x58] sm:$0xff]
    %v468 = vld [vmem:[#allocation4 + $0x60] sm:$0xff]
    %v469 = vld [vmem:[#allocation4 + $0x68] sm:$0xff]
    %v470 = vld [vmem:[#allocation4 + $0x70] sm:$0xff]
    %v471 = vld [vmem:[#allocation4 + $0x78] sm:$0xff]
    %v472 = vld [vmem:[#allocation4 + $0x80] sm:$0xff]
    %v473 = vld [vmem:[#allocation4 + $0x88] sm:$0xff]
    %v474 = vld [vmem:[#allocation4 + $0x90] sm:$0xff]
    %v475 = vld [vmem:[#allocation4 + $0x98] sm:$0xff]
    %v476 = vld [vmem:[#allocation4 + $0xa0] sm:$0xff]
    %v477 = vld [vmem:[#allocation4 + $0xa8] sm:$0xff]
    %v478 = vld [vmem:[#allocation4 + $0xb0] sm:$0xff]
    %v479 = vld [vmem:[#allocation4 + $0xb8] sm:$0xff]
    %v480 = vld [vmem:[#allocation4 + $0xc0] sm:$0xff]
    %v481 = vld [vmem:[#allocation4 + $0xc8] sm:$0xff]
    %v482 = vld [vmem:[#allocation4 + $0xd0] sm:$0xff]
    %v483 = vld [vmem:[#allocation4 + $0xd8] sm:$0xff]
    %v484 = vld [vmem:[#allocation4 + $0xe0] sm:$0xff]
    %v485 = vld [vmem:[#allocation4 + $0xe8] sm:$0xff]
    %v486 = vld [vmem:[#allocation4 + $0xf0] sm:$0xff]
    %v487 = vld [vmem:[#allocation4 + $0xf8] sm:$0xff]
    %v488 = vld [vmem:[#allocation4 + $0x100] sm:$0xff]
    %v489 = vld [vmem:[#allocation4 + $0x108] sm:$0xff]
    %v490 = vld [vmem:[#allocation4 + $0x110] sm:$0xff]
    %v491 = vld [vmem:[#allocation4 + $0x118] sm:$0xff]
    %v492 = vld [vmem:[#allocation4 + $0x120] sm:$0xff]
    %v493 = vld [vmem:[#allocation4 + $0x128] sm:$0xff]
    %v494 = vld [vmem:[#allocation4 + $0x130] sm:$0xff]
    %v495 = vld [vmem:[#allocation4 + $0x138] sm:$0xff]
    %v496 = vld [vmem:[#allocation4 + $0x140] sm:$0xff]
    %v497 = vld [vmem:[#allocation4 + $0x148] sm:$0xff]
    %v498 = vld [vmem:[#allocation4 + $0x150] sm:$0xff]
    %v499 = vld [vmem:[#allocation4 + $0x158] sm:$0xff]
    %v500 = vld [vmem:[#allocation4 + $0x160] sm:$0xff]
    %v501 = vld [vmem:[#allocation4 + $0x168] sm:$0xff]
    %v502 = vld [vmem:[#allocation4 + $0x170] sm:$0xff]
    %v503 = vld [vmem:[#allocation4 + $0x178] sm:$0xff]
    %v504 = vld [vmem:[#allocation4 + $0x180] sm:$0xff]
    %v505 = vld [vmem:[#allocation4 + $0x188] sm:$0xff]
    %v506 = vld [vmem:[#allocation4 + $0x190] sm:$0xff]
    %v507 = vld [vmem:[#allocation4 + $0x198] sm:$0xff]
    %v508 = vld [vmem:[#allocation4 + $0x1a0] sm:$0xff]
    %v509 = vld [vmem:[#allocation4 + $0x1a8] sm:$0xff]
    %v510 = vld [vmem:[#allocation4 + $0x1b0] sm:$0xff]
    %v511 = vld [vmem:[#allocation4 + $0x1b8] sm:$0xff]
    %v512 = vld [vmem:[#allocation4 + $0x1c0] sm:$0xff]
    %v513 = vld [vmem:[#allocation4 + $0x1c8] sm:$0xff]
    %v514 = vld [vmem:[#allocation4 + $0x1d0] sm:$0xff]
    %v515 = vld [vmem:[#allocation4 + $0x1d8] sm:$0xff]
    %v516 = vld [vmem:[#allocation4 + $0x1e0] sm:$0xff]
    %v517 = vld [vmem:[#allocation4 + $0x1e8] sm:$0xff]
    %v518 = vld [vmem:[#allocation4 + $0x1f0] sm:$0xff]
    %v519 = vld [vmem:[#allocation4 + $0x1f8] sm:$0xff]
    %v520 = vld [vmem:[#allocation2] sm:$0xff]
    %v521 = vld [vmem:[#allocation2 + $0x8] sm:$0xff]
    %v522 = vld [vmem:[#allocation2 + $0x10] sm:$0xff]
    %v523 = vld [vmem:[#allocation2 + $0x18] sm:$0xff]
    %524 = vmatprep.subr.mxu0 %v517
    %525 = vmatpush1.msra.mxu0 %v516
    %526 = vmatprep.subr.mxu0 %v513
    %527 = vmatpush1.msra.mxu0 %v512
    %528 = vmatprep.subr.mxu0 %v509
    %529 = vmatpush1.msra.mxu0 %v508
    %530 = vmatprep.subr.mxu0 %v505
    %531 = vmatpush1.msra.mxu0 %v504
    %532 = vmatprep.subr.mxu0 %v501
    %533 = vmatpush1.msra.mxu0 %v500
    %534 = vmatprep.subr.mxu0 %v497
    %535 = vmatpush1.msra.mxu0 %v496
    %536 = vmatprep.subr.mxu0 %v493
    %537 = vmatpush1.msra.mxu0 %v492
    %538 = vmatprep.subr.mxu0 %v489
    %539 = vmatpush1.msra.mxu0 %v488
    %540 = vmatprep.subr.mxu0 %v485
    %541 = vmatpush1.msra.mxu0 %v484
    %542 = vmatprep.subr.mxu0 %v481
    %543 = vmatpush1.msra.mxu0 %v480
    %544 = vmatprep.subr.mxu0 %v477
    %545 = vmatpush1.msra.mxu0 %v476
    %546 = vmatprep.subr.mxu0 %v473
    %547 = vmatpush1.msra.mxu0 %v472
    %548 = vmatprep.subr.mxu0 %v469
    %549 = vmatpush1.msra.mxu0 %v468
    %550 = vmatprep.subr.mxu0 %v465
    %551 = vmatpush1.msra.mxu0 %v464
    %552 = vmatprep.subr.mxu0 %v461
    %553 = vmatpush1.msra.mxu0 %v460
    %554 = vmatprep.subr.mxu0 %v457
    %555 = vmatpush1.msra.mxu0 %v456
    %556 = vmatprep.subr.mxu0 0.0
    %557 = vmatpush2.msra.mxu0 0.0
    %558 = vmatprep.subr.mxu0 0.0
    %559 = vmatpush2.msra.mxu0 0.0
    %560 = vmatprep.subr.mxu0 0.0
    %561 = vmatpush2.msra.mxu0 0.0
    %562 = vmatprep.subr.mxu0 0.0
    %563 = vmatpush2.msra.mxu0 0.0
    %564 = vmatprep.subr.mxu0 0.0
    %565 = vmatpush2.msra.mxu0 0.0
    %566 = vmatprep.subr.mxu0 0.0
    %567 = vmatpush2.msra.mxu0 0.0
    %568 = vmatprep.subr.mxu0 0.0
    %569 = vmatpush2.msra.mxu0 0.0
    %570 = vmatprep.subr.mxu0 0.0
    %571 = vmatpush2.msra.mxu0 0.0
    %572 = vmatprep.subr.mxu0 0.0
    %573 = vmatpush2.msra.mxu0 0.0
    %574 = vmatprep.subr.mxu0 0.0
    %575 = vmatpush2.msra.mxu0 0.0
    %576 = vmatprep.subr.mxu0 0.0
    %577 = vmatpush2.msra.mxu0 0.0
    %578 = vmatprep.subr.mxu0 0.0
    %579 = vmatpush2.msra.mxu0 0.0
    %580 = vmatprep.subr.mxu0 0.0
    %581 = vmatpush2.msra.mxu0 0.0
    %582 = vmatprep.subr.mxu0 0.0
    %583 = vmatpush2.msra.mxu0 0.0
    %584 = vmatprep.subr.mxu0 0.0
    %585 = vmatpush2.msra.mxu0 0.0
    %586 = vmatprep.subr.mxu0 0.0
    %587 = vmatpush2.msra.mxu0 0.0
    %588 = vmatprep.mubr.f32.mxu0 0.0
    %589 = vmatmul.mubr.f32.gmra.mxu0 0.0
    %v590 = vpop.f32.mrf.mxu0
    %v591 = vadd.f32 0.0, %v590
    %v592 = vpop.f32.mrf.mxu0
    %v593 = vadd.f32 0.0, %v592
    %594 = vdwg.mxu0
    %595 = vmatprep.subr.mxu0 %v519
    %596 = vmatpush1.msra.mxu0 %v518
    %597 = vmatprep.subr.mxu0 %v515
    %598 = vmatpush1.msra.mxu0 %v514
    %599 = vmatprep.subr.mxu0 %v511
    %600 = vmatpush1.msra.mxu0 %v510
    %601 = vmatprep.subr.mxu0 %v507
    %602 = vmatpush1.msra.mxu0 %v506
    %603 = vmatprep.subr.mxu0 %v503
    %604 = vmatpush1.msra.mxu0 %v502
    %605 = vmatprep.subr.mxu0 %v499
    %606 = vmatpush1.msra.mxu0 %v498
    %607 = vmatprep.subr.mxu0 %v495
    %608 = vmatpush1.msra.mxu0 %v494
    %609 = vmatprep.subr.mxu0 %v491
    %610 = vmatpush1.msra.mxu0 %v490
    %611 = vmatprep.subr.mxu0 %v487
    %612 = vmatpush1.msra.mxu0 %v486
    %613 = vmatprep.subr.mxu0 %v483
    %614 = vmatpush1.msra.mxu0 %v482
    %615 = vmatprep.subr.mxu0 %v479
    %616 = vmatpush1.msra.mxu0 %v478
    %617 = vmatprep.subr.mxu0 %v475
    %618 = vmatpush1.msra.mxu0 %v474
    %619 = vmatprep.subr.mxu0 %v471
    %620 = vmatpush1.msra.mxu0 %v470
    %621 = vmatprep.subr.mxu0 %v467
    %622 = vmatpush1.msra.mxu0 %v466
    %623 = vmatprep.subr.mxu0 %v463
    %624 = vmatpush1.msra.mxu0 %v462
    %625 = vmatprep.subr.mxu0 %v459
    %626 = vmatpush1.msra.mxu0 %v458
    %627 = vmatprep.subr.mxu0 0.0
    %628 = vmatpush2.msra.mxu0 0.0
    %629 = vmatprep.subr.mxu0 0.0
    %630 = vmatpush2.msra.mxu0 0.0
    %631 = vmatprep.subr.mxu0 0.0
    %632 = vmatpush2.msra.mxu0 0.0
    %633 = vmatprep.subr.mxu0 0.0
    %634 = vmatpush2.msra.mxu0 0.0
    %635 = vmatprep.subr.mxu0 0.0
    %636 = vmatpush2.msra.mxu0 0.0
    %637 = vmatprep.subr.mxu0 0.0
    %638 = vmatpush2.msra.mxu0 0.0
    %639 = vmatprep.subr.mxu0 0.0
    %640 = vmatpush2.msra.mxu0 0.0
    %641 = vmatprep.subr.mxu0 0.0
    %642 = vmatpush2.msra.mxu0 0.0
    %643 = vmatprep.subr.mxu0 0.0
    %644 = vmatpush2.msra.mxu0 0.0
    %645 = vmatprep.subr.mxu0 0.0
    %646 = vmatpush2.msra.mxu0 0.0
    %647 = vmatprep.subr.mxu0 0.0
    %648 = vmatpush2.msra.mxu0 0.0
    %649 = vmatprep.subr.mxu0 0.0
    %650 = vmatpush2.msra.mxu0 0.0
    %651 = vmatprep.subr.mxu0 0.0
    %652 = vmatpush2.msra.mxu0 0.0
    %653 = vmatprep.subr.mxu0 0.0
    %654 = vmatpush2.msra.mxu0 0.0
    %655 = vmatprep.subr.mxu0 0.0
    %656 = vmatpush2.msra.mxu0 0.0
    %657 = vmatprep.subr.mxu0 0.0
    %658 = vmatpush2.msra.mxu0 0.0
    %659 = vmatprep.mubr.f32.mxu0 0.0
    %660 = vmatmul.mubr.f32.gmra.mxu0 0.0
    %v661 = vpop.f32.mrf.mxu0
    %v662 = vadd.f32 0.0, %v661
    %v663 = vpop.f32.mrf.mxu0
    %v664 = vadd.f32 0.0, %v663
    %665 = vdwg.mxu0
    %v666 = vadd.f32 %v520, %v591
    %v667 = vadd.f32 %v521, %v593
    %v668 = vadd.f32 %v522, %v662
    %v669 = vadd.f32 %v523, %v664
    %v670 = vxor.u32 %v666, 2147483648
    %v671 = vxor.u32 %v667, 2147483648
    %v672 = vxor.u32 %v668, 2147483648
    %v673 = vmul.f32 %v670, 1.442695
    %v674 = vpow.pop %v673
    %v675 = vmul.f32 %v671, 1.442695
    %v676 = vpow.pop %v675
    %v677 = vmul.f32 %v672, 1.442695
    %v678 = vpow.pop %v677
    %v679 = vadd.f32 %v674, 1.0
    %v680 = vadd.f32 %v676, 1.0
    %v681 = vadd.f32 %v678, 1.0
    %v682 = vrcp.pop %v679
    %v683 = vmul.f32 1.0, %v682
    %v684 = vrcp.pop %v680
    %v685 = vmul.f32 1.0, %v684
    %v686 = vrcp.pop %v681
    %v687 = vmul.f32 1.0, %v686
    %v688 = vtanh.pop %v669
    %v689 = vmul.f32 %v685, 0.0
    %v690 = vmul.f32 %v683, %v688
    %v691 = vadd.f32 %v689, %v690
    %v692 = vtanh.pop %v691
    %v693 = vmul.f32 %v687, %v692
    %694 = vst [vmem:[#allocation3] sm:$0xff] %v693
    %s695 = scalar_lea.vmem [#allocation2], 32
    %v696 = vld [vmem:[%s695] sm:$0xff]
    %v697 = vld [vmem:[%s695 + $0x8] sm:$0xff]
    %v698 = vld [vmem:[%s695 + $0x10] sm:$0xff]
    %v699 = vld [vmem:[%s695 + $0x18] sm:$0xff]
    %700 = vmatprep.subr.mxu0 %v517
    %701 = vmatpush1.msra.mxu0 %v516
    %702 = vmatprep.subr.mxu0 %v513
    %703 = vmatpush1.msra.mxu0 %v512
    %704 = vmatprep.subr.mxu0 %v509
    %705 = vmatpush1.msra.mxu0 %v508
    %706 = vmatprep.subr.mxu0 %v505
    %707 = vmatpush1.msra.mxu0 %v504
    %708 = vmatprep.subr.mxu0 %v501
    %709 = vmatpush1.msra.mxu0 %v500
    %710 = vmatprep.subr.mxu0 %v497
    %711 = vmatpush1.msra.mxu0 %v496
    %712 = vmatprep.subr.mxu0 %v493
    %713 = vmatpush1.msra.mxu0 %v492
    %714 = vmatprep.subr.mxu0 %v489
    %715 = vmatpush1.msra.mxu0 %v488
    %716 = vmatprep.subr.mxu0 %v485
    %717 = vmatpush1.msra.mxu0 %v484
    %718 = vmatprep.subr.mxu0 %v481
    %719 = vmatpush1.msra.mxu0 %v480
    %720 = vmatprep.subr.mxu0 %v477
    %721 = vmatpush1.msra.mxu0 %v476
    %722 = vmatprep.subr.mxu0 %v473
    %723 = vmatpush1.msra.mxu0 %v472
    %724 = vmatprep.subr.mxu0 %v469
    %725 = vmatpush1.msra.mxu0 %v468
    %726 = vmatprep.subr.mxu0 %v465
    %727 = vmatpush1.msra.mxu0 %v464
    %728 = vmatprep.subr.mxu0 %v461
    %729 = vmatpush1.msra.mxu0 %v460
    %730 = vmatprep.subr.mxu0 %v457
    %731 = vmatpush1.msra.mxu0 %v456
    %732 = vmatprep.subr.mxu0 0.0
    %733 = vmatpush2.msra.mxu0 0.0
    %734 = vmatprep.subr.mxu0 0.0
    %735 = vmatpush2.msra.mxu0 0.0
    %736 = vmatprep.subr.mxu0 0.0
    %737 = vmatpush2.msra.mxu0 0.0
    %738 = vmatprep.subr.mxu0 0.0
    %739 = vmatpush2.msra.mxu0 0.0
    %740 = vmatprep.subr.mxu0 0.0
    %741 = vmatpush2.msra.mxu0 0.0
    %742 = vmatprep.subr.mxu0 0.0
    %743 = vmatpush2.msra.mxu0 0.0
    %744 = vmatprep.subr.mxu0 0.0
    %745 = vmatpush2.msra.mxu0 0.0
    %746 = vmatprep.subr.mxu0 0.0
    %747 = vmatpush2.msra.mxu0 0.0
    %748 = vmatprep.subr.mxu0 0.0
    %749 = vmatpush2.msra.mxu0 0.0
    %750 = vmatprep.subr.mxu0 0.0
    %751 = vmatpush2.msra.mxu0 0.0
    %752 = vmatprep.subr.mxu0 0.0
    %753 = vmatpush2.msra.mxu0 0.0
    %754 = vmatprep.subr.mxu0 0.0
    %755 = vmatpush2.msra.mxu0 0.0
    %756 = vmatprep.subr.mxu0 0.0
    %757 = vmatpush2.msra.mxu0 0.0
    %758 = vmatprep.subr.mxu0 0.0
    %759 = vmatpush2.msra.mxu0 0.0
    %760 = vmatprep.subr.mxu0 0.0
    %761 = vmatpush2.msra.mxu0 0.0
    %762 = vmatprep.subr.mxu0 0.0
    %763 = vmatpush2.msra.mxu0 0.0
    %764 = vmatprep.mubr.f32.mxu0 0.0
    %765 = vmatmul.mubr.f32.gmra.mxu0 %v693
    %v766 = vpop.f32.mrf.mxu0
    %v767 = vadd.f32 0.0, %v766
    %v768 = vpop.f32.mrf.mxu0
    %v769 = vadd.f32 0.0, %v768
    %770 = vdwg.mxu0
    %771 = vmatprep.subr.mxu0 %v519
    %772 = vmatpush1.msra.mxu0 %v518
    %773 = vmatprep.subr.mxu0 %v515
    %774 = vmatpush1.msra.mxu0 %v514
    %775 = vmatprep.subr.mxu0 %v511
    %776 = vmatpush1.msra.mxu0 %v510
    %777 = vmatprep.subr.mxu0 %v507
    %778 = vmatpush1.msra.mxu0 %v506
    %779 = vmatprep.subr.mxu0 %v503
    %780 = vmatpush1.msra.mxu0 %v502
    %781 = vmatprep.subr.mxu0 %v499
    %782 = vmatpush1.msra.mxu0 %v498
    %783 = vmatprep.subr.mxu0 %v495
    %784 = vmatpush1.msra.mxu0 %v494
    %785 = vmatprep.subr.mxu0 %v491
    %786 = vmatpush1.msra.mxu0 %v490
    %787 = vmatprep.subr.mxu0 %v487
    %788 = vmatpush1.msra.mxu0 %v486
    %789 = vmatprep.subr.mxu0 %v483
    %790 = vmatpush1.msra.mxu0 %v482
    %791 = vmatprep.subr.mxu0 %v479
    %792 = vmatpush1.msra.mxu0 %v478
    %793 = vmatprep.subr.mxu0 %v475
    %794 = vmatpush1.msra.mxu0 %v474
    %795 = vmatprep.subr.mxu0 %v471
    %796 = vmatpush1.msra.mxu0 %v470
    %797 = vmatprep.subr.mxu0 %v467
    %798 = vmatpush1.msra.mxu0 %v466
    %799 = vmatprep.subr.mxu0 %v463
    %800 = vmatpush1.msra.mxu0 %v462
    %801 = vmatprep.subr.mxu0 %v459
    %802 = vmatpush1.msra.mxu0 %v458
    %803 = vmatprep.subr.mxu0 0.0
    %804 = vmatpush2.msra.mxu0 0.0
    %805 = vmatprep.subr.mxu0 0.0
    %806 = vmatpush2.msra.mxu0 0.0
    %807 = vmatprep.subr.mxu0 0.0
    %808 = vmatpush2.msra.mxu0 0.0
    %809 = vmatprep.subr.mxu0 0.0
    %810 = vmatpush2.msra.mxu0 0.0
    %811 = vmatprep.subr.mxu0 0.0
    %812 = vmatpush2.msra.mxu0 0.0
    %813 = vmatprep.subr.mxu0 0.0
    %814 = vmatpush2.msra.mxu0 0.0
    %815 = vmatprep.subr.mxu0 0.0
    %816 = vmatpush2.msra.mxu0 0.0
    %817 = vmatprep.subr.mxu0 0.0
    %818 = vmatpush2.msra.mxu0 0.0
    %819 = vmatprep.subr.mxu0 0.0
    %820 = vmatpush2.msra.mxu0 0.0
    %821 = vmatprep.subr.mxu0 0.0
    %822 = vmatpush2.msra.mxu0 0.0
    %823 = vmatprep.subr.mxu0 0.0
    %824 = vmatpush2.msra.mxu0 0.0
    %825 = vmatprep.subr.mxu0 0.0
    %826 = vmatpush2.msra.mxu0 0.0
    %827 = vmatprep.subr.mxu0 0.0
    %828 = vmatpush2.msra.mxu0 0.0
    %829 = vmatprep.subr.mxu0 0.0
    %830 = vmatpush2.msra.mxu0 0.0
    %831 = vmatprep.subr.mxu0 0.0
    %832 = vmatpush2.msra.mxu0 0.0
    %833 = vmatprep.subr.mxu0 0.0
    %834 = vmatpush2.msra.mxu0 0.0
    %835 = vmatprep.mubr.f32.mxu0 0.0
    %836 = vmatmul.mubr.f32.gmra.mxu0 %v693
    %v837 = vpop.f32.mrf.mxu0
    %v838 = vadd.f32 0.0, %v837
    %v839 = vpop.f32.mrf.mxu0
    %v840 = vadd.f32 0.0, %v839
    %841 = vdwg.mxu0
    %v842 = vadd.f32 %v696, %v767
    %v843 = vadd.f32 %v697, %v769
    %v844 = vadd.f32 %v698, %v838
    %v845 = vadd.f32 %v699, %v840
    %v846 = vxor.u32 %v842, 2147483648
    %v847 = vxor.u32 %v843, 2147483648
    %v848 = vxor.u32 %v844, 2147483648
    %v849 = vmul.f32 %v846, 1.442695
    %v850 = vpow.pop %v849
    %v851 = vmul.f32 %v847, 1.442695
    %v852 = vpow.pop %v851
    %v853 = vmul.f32 %v848, 1.442695
    %v854 = vpow.pop %v853
    %v855 = vadd.f32 %v850, 1.0
    %v856 = vadd.f32 %v852, 1.0
    %v857 = vadd.f32 %v854, 1.0
    %v858 = vrcp.pop %v855
    %v859 = vmul.f32 1.0, %v858
    %v860 = vrcp.pop %v856
    %v861 = vmul.f32 1.0, %v860
    %v862 = vrcp.pop %v857
    %v863 = vmul.f32 1.0, %v862
    %v864 = vtanh.pop %v845
    %v865 = vmul.f32 %v861, %v691
    %v866 = vmul.f32 %v859, %v864
    %v867 = vadd.f32 %v865, %v866
    %v868 = vtanh.pop %v867
    %v869 = vmul.f32 %v863, %v868
    %s870 = scalar_lea.vmem [#allocation3], 8
    %871 = vst [vmem:[%s870] sm:$0xff] %v869
    %s872 = scalar_lea.vmem [#allocation2], 64
    %v873 = vld [vmem:[%s872] sm:$0xff]
    %v874 = vld [vmem:[%s872 + $0x8] sm:$0xff]
    %v875 = vld [vmem:[%s872 + $0x10] sm:$0xff]
    %v876 = vld [vmem:[%s872 + $0x18] sm:$0xff]
    %877 = vmatprep.subr.mxu0 %v517
    %878 = vmatpush1.msra.mxu0 %v516
    %879 = vmatprep.subr.mxu0 %v513
    %880 = vmatpush1.msra.mxu0 %v512
    %881 = vmatprep.subr.mxu0 %v509
    %882 = vmatpush1.msra.mxu0 %v508
    %883 = vmatprep.subr.mxu0 %v505
    %884 = vmatpush1.msra.mxu0 %v504
    %885 = vmatprep.subr.mxu0 %v501
    %886 = vmatpush1.msra.mxu0 %v500
    %887 = vmatprep.subr.mxu0 %v497
    %888 = vmatpush1.msra.mxu0 %v496
    %889 = vmatprep.subr.mxu0 %v493
    %890 = vmatpush1.msra.mxu0 %v492
    %891 = vmatprep.subr.mxu0 %v489
    %892 = vmatpush1.msra.mxu0 %v488
    %893 = vmatprep.subr.mxu0 %v485
    %894 = vmatpush1.msra.mxu0 %v484
    %895 = vmatprep.subr.mxu0 %v481
    %896 = vmatpush1.msra.mxu0 %v480
    %897 = vmatprep.subr.mxu0 %v477
    %898 = vmatpush1.msra.mxu0 %v476
    %899 = vmatprep.subr.mxu0 %v473
    %900 = vmatpush1.msra.mxu0 %v472
    %901 = vmatprep.subr.mxu0 %v469
    %902 = vmatpush1.msra.mxu0 %v468
    %903 = vmatprep.subr.mxu0 %v465
    %904 = vmatpush1.msra.mxu0 %v464
    %905 = vmatprep.subr.mxu0 %v461
    %906 = vmatpush1.msra.mxu0 %v460
    %907 = vmatprep.subr.mxu0 %v457
    %908 = vmatpush1.msra.mxu0 %v456
    %909 = vmatprep.subr.mxu0 0.0
    %910 = vmatpush2.msra.mxu0 0.0
    %911 = vmatprep.subr.mxu0 0.0
    %912 = vmatpush2.msra.mxu0 0.0
    %913 = vmatprep.subr.mxu0 0.0
    %914 = vmatpush2.msra.mxu0 0.0
    %915 = vmatprep.subr.mxu0 0.0
    %916 = vmatpush2.msra.mxu0 0.0
    %917 = vmatprep.subr.mxu0 0.0
    %918 = vmatpush2.msra.mxu0 0.0
    %919 = vmatprep.subr.mxu0 0.0
    %920 = vmatpush2.msra.mxu0 0.0
    %921 = vmatprep.subr.mxu0 0.0
    %922 = vmatpush2.msra.mxu0 0.0
    %923 = vmatprep.subr.mxu0 0.0
    %924 = vmatpush2.msra.mxu0 0.0
    %925 = vmatprep.subr.mxu0 0.0
    %926 = vmatpush2.msra.mxu0 0.0
    %927 = vmatprep.subr.mxu0 0.0
    %928 = vmatpush2.msra.mxu0 0.0
    %929 = vmatprep.subr.mxu0 0.0
    %930 = vmatpush2.msra.mxu0 0.0
    %931 = vmatprep.subr.mxu0 0.0
    %932 = vmatpush2.msra.mxu0 0.0
    %933 = vmatprep.subr.mxu0 0.0
    %934 = vmatpush2.msra.mxu0 0.0
    %935 = vmatprep.subr.mxu0 0.0
    %936 = vmatpush2.msra.mxu0 0.0
    %937 = vmatprep.subr.mxu0 0.0
    %938 = vmatpush2.msra.mxu0 0.0
    %939 = vmatprep.subr.mxu0 0.0
    %940 = vmatpush2.msra.mxu0 0.0
    %941 = vmatprep.mubr.f32.mxu0 0.0
    %942 = vmatmul.mubr.f32.gmra.mxu0 %v869
    %v943 = vpop.f32.mrf.mxu0
    %v944 = vadd.f32 0.0, %v943
    %v945 = vpop.f32.mrf.mxu0
    %v946 = vadd.f32 0.0, %v945
    %947 = vdwg.mxu0
    %948 = vmatprep.subr.mxu0 %v519
    %949 = vmatpush1.msra.mxu0 %v518
    %950 = vmatprep.subr.mxu0 %v515
    %951 = vmatpush1.msra.mxu0 %v514
    %952 = vmatprep.subr.mxu0 %v511
    %953 = vmatpush1.msra.mxu0 %v510
    %954 = vmatprep.subr.mxu0 %v507
    %955 = vmatpush1.msra.mxu0 %v506
    %956 = vmatprep.subr.mxu0 %v503
    %957 = vmatpush1.msra.mxu0 %v502
    %958 = vmatprep.subr.mxu0 %v499
    %959 = vmatpush1.msra.mxu0 %v498
    %960 = vmatprep.subr.mxu0 %v495
    %961 = vmatpush1.msra.mxu0 %v494
    %962 = vmatprep.subr.mxu0 %v491
    %963 = vmatpush1.msra.mxu0 %v490
    %964 = vmatprep.subr.mxu0 %v487
    %965 = vmatpush1.msra.mxu0 %v486
    %966 = vmatprep.subr.mxu0 %v483
    %967 = vmatpush1.msra.mxu0 %v482
    %968 = vmatprep.subr.mxu0 %v479
    %969 = vmatpush1.msra.mxu0 %v478
    %970 = vmatprep.subr.mxu0 %v475
    %971 = vmatpush1.msra.mxu0 %v474
    %972 = vmatprep.subr.mxu0 %v471
    %973 = vmatpush1.msra.mxu0 %v470
    %974 = vmatprep.subr.mxu0 %v467
    %975 = vmatpush1.msra.mxu0 %v466
    %976 = vmatprep.subr.mxu0 %v463
    %977 = vmatpush1.msra.mxu0 %v462
    %978 = vmatprep.subr.mxu0 %v459
    %979 = vmatpush1.msra.mxu0 %v458
    %980 = vmatprep.subr.mxu0 0.0
    %981 = vmatpush2.msra.mxu0 0.0
    %982 = vmatprep.subr.mxu0 0.0
    %983 = vmatpush2.msra.mxu0 0.0
    %984 = vmatprep.subr.mxu0 0.0
    %985 = vmatpush2.msra.mxu0 0.0
    %986 = vmatprep.subr.mxu0 0.0
    %987 = vmatpush2.msra.mxu0 0.0
    %988 = vmatprep.subr.mxu0 0.0
    %989 = vmatpush2.msra.mxu0 0.0
    %990 = vmatprep.subr.mxu0 0.0
    %991 = vmatpush2.msra.mxu0 0.0
    %992 = vmatprep.subr.mxu0 0.0
    %993 = vmatpush2.msra.mxu0 0.0
    %994 = vmatprep.subr.mxu0 0.0
    %995 = vmatpush2.msra.mxu0 0.0
    %996 = vmatprep.subr.mxu0 0.0
    %997 = vmatpush2.msra.mxu0 0.0
    %998 = vmatprep.subr.mxu0 0.0
    %999 = vmatpush2.msra.mxu0 0.0
    %1000 = vmatprep.subr.mxu0 0.0
    %1001 = vmatpush2.msra.mxu0 0.0
    %1002 = vmatprep.subr.mxu0 0.0
    %1003 = vmatpush2.msra.mxu0 0.0
    %1004 = vmatprep.subr.mxu0 0.0
    %1005 = vmatpush2.msra.mxu0 0.0
    %1006 = vmatprep.subr.mxu0 0.0
    %1007 = vmatpush2.msra.mxu0 0.0
    %1008 = vmatprep.subr.mxu0 0.0
    %1009 = vmatpush2.msra.mxu0 0.0
    %1010 = vmatprep.subr.mxu0 0.0
    %1011 = vmatpush2.msra.mxu0 0.0
    %1012 = vmatprep.mubr.f32.mxu0 0.0
    %1013 = vmatmul.mubr.f32.gmra.mxu0 %v869
    %v1014 = vpop.f32.mrf.mxu0
    %v1015 = vadd.f32 0.0, %v1014
    %v1016 = vpop.f32.mrf.mxu0
    %v1017 = vadd.f32 0.0, %v1016
    %1018 = vdwg.mxu0
    %v1019 = vadd.f32 %v873, %v944
    %v1020 = vadd.f32 %v874, %v946
    %v1021 = vadd.f32 %v875, %v1015
    %v1022 = vadd.f32 %v876, %v1017
    %v1023 = vxor.u32 %v1019, 2147483648
    %v1024 = vxor.u32 %v1020, 2147483648
    %v1025 = vxor.u32 %v1021, 2147483648
    %v1026 = vmul.f32 %v1023, 1.442695
    %v1027 = vpow.pop %v1026
    %v1028 = vmul.f32 %v1024, 1.442695
    %v1029 = vpow.pop %v1028
    %v1030 = vmul.f32 %v1025, 1.442695
    %v1031 = vpow.pop %v1030
    %v1032 = vadd.f32 %v1027, 1.0
    %v1033 = vadd.f32 %v1029, 1.0
    %v1034 = vadd.f32 %v1031, 1.0
    %v1035 = vrcp.pop %v1032
    %v1036 = vmul.f32 1.0, %v1035
    %v1037 = vrcp.pop %v1033
    %v1038 = vmul.f32 1.0, %v1037
    %v1039 = vrcp.pop %v1034
    %v1040 = vmul.f32 1.0, %v1039
    %v1041 = vtanh.pop %v1022
    %v1042 = vmul.f32 %v1038, %v867
    %v1043 = vmul.f32 %v1036, %v1041
    %v1044 = vadd.f32 %v1042, %v1043
    %v1045 = vtanh.pop %v1044
    %v1046 = vmul.f32 %v1040, %v1045
    %s1047 = scalar_lea.vmem [#allocation3], 16
    %1048 = vst [vmem:[%s1047] sm:$0xff] %v1046
    %s1049 = scalar_lea.vmem [#allocation2], 96
    %v1050 = vld [vmem:[%s1049] sm:$0xff]
    %v1051 = vld [vmem:[%s1049 + $0x8] sm:$0xff]
    %v1052 = vld [vmem:[%s1049 + $0x10] sm:$0xff]
    %v1053 = vld [vmem:[%s1049 + $0x18] sm:$0xff]
    %1054 = vmatprep.subr.mxu0 %v517
    %1055 = vmatpush1.msra.mxu0 %v516
    %1056 = vmatprep.subr.mxu0 %v513
    %1057 = vmatpush1.msra.mxu0 %v512
    %1058 = vmatprep.subr.mxu0 %v509
    %1059 = vmatpush1.msra.mxu0 %v508
    %1060 = vmatprep.subr.mxu0 %v505
    %1061 = vmatpush1.msra.mxu0 %v504
    %1062 = vmatprep.subr.mxu0 %v501
    %1063 = vmatpush1.msra.mxu0 %v500
    %1064 = vmatprep.subr.mxu0 %v497
    %1065 = vmatpush1.msra.mxu0 %v496
    %1066 = vmatprep.subr.mxu0 %v493
    %1067 = vmatpush1.msra.mxu0 %v492
    %1068 = vmatprep.subr.mxu0 %v489
    %1069 = vmatpush1.msra.mxu0 %v488
    %1070 = vmatprep.subr.mxu0 %v485
    %1071 = vmatpush1.msra.mxu0 %v484
    %1072 = vmatprep.subr.mxu0 %v481
    %1073 = vmatpush1.msra.mxu0 %v480
    %1074 = vmatprep.subr.mxu0 %v477
    %1075 = vmatpush1.msra.mxu0 %v476
    %1076 = vmatprep.subr.mxu0 %v473
    %1077 = vmatpush1.msra.mxu0 %v472
    %1078 = vmatprep.subr.mxu0 %v469
    %1079 = vmatpush1.msra.mxu0 %v468
    %1080 = vmatprep.subr.mxu0 %v465
    %1081 = vmatpush1.msra.mxu0 %v464
    %1082 = vmatprep.subr.mxu0 %v461
    %1083 = vmatpush1.msra.mxu0 %v460
    %1084 = vmatprep.subr.mxu0 %v457
    %1085 = vmatpush1.msra.mxu0 %v456
    %1086 = vmatprep.subr.mxu0 0.0
    %1087 = vmatpush2.msra.mxu0 0.0
    %1088 = vmatprep.subr.mxu0 0.0
    %1089 = vmatpush2.msra.mxu0 0.0
    %1090 = vmatprep.subr.mxu0 0.0
    %1091 = vmatpush2.msra.mxu0 0.0
    %1092 = vmatprep.subr.mxu0 0.0
    %1093 = vmatpush2.msra.mxu0 0.0
    %1094 = vmatprep.subr.mxu0 0.0
    %1095 = vmatpush2.msra.mxu0 0.0
    %1096 = vmatprep.subr.mxu0 0.0
    %1097 = vmatpush2.msra.mxu0 0.0
    %1098 = vmatprep.subr.mxu0 0.0
    %1099 = vmatpush2.msra.mxu0 0.0
    %1100 = vmatprep.subr.mxu0 0.0
    %1101 = vmatpush2.msra.mxu0 0.0
    %1102 = vmatprep.subr.mxu0 0.0
    %1103 = vmatpush2.msra.mxu0 0.0
    %1104 = vmatprep.subr.mxu0 0.0
    %1105 = vmatpush2.msra.mxu0 0.0
    %1106 = vmatprep.subr.mxu0 0.0
    %1107 = vmatpush2.msra.mxu0 0.0
    %1108 = vmatprep.subr.mxu0 0.0
    %1109 = vmatpush2.msra.mxu0 0.0
    %1110 = vmatprep.subr.mxu0 0.0
    %1111 = vmatpush2.msra.mxu0 0.0
    %1112 = vmatprep.subr.mxu0 0.0
    %1113 = vmatpush2.msra.mxu0 0.0
    %1114 = vmatprep.subr.mxu0 0.0
    %1115 = vmatpush2.msra.mxu0 0.0
    %1116 = vmatprep.subr.mxu0 0.0
    %1117 = vmatpush2.msra.mxu0 0.0
    %1118 = vmatprep.mubr.f32.mxu0 0.0
    %1119 = vmatmul.mubr.f32.gmra.mxu0 %v1046
    %v1120 = vpop.f32.mrf.mxu0
    %v1121 = vadd.f32 0.0, %v1120
    %v1122 = vpop.f32.mrf.mxu0
    %v1123 = vadd.f32 0.0, %v1122
    %1124 = vdwg.mxu0
    %1125 = vmatprep.subr.mxu0 %v519
    %1126 = vmatpush1.msra.mxu0 %v518
    %1127 = vmatprep.subr.mxu0 %v515
    %1128 = vmatpush1.msra.mxu0 %v514
    %1129 = vmatprep.subr.mxu0 %v511
    %1130 = vmatpush1.msra.mxu0 %v510
    %1131 = vmatprep.subr.mxu0 %v507
    %1132 = vmatpush1.msra.mxu0 %v506
    %1133 = vmatprep.subr.mxu0 %v503
    %1134 = vmatpush1.msra.mxu0 %v502
    %1135 = vmatprep.subr.mxu0 %v499
    %1136 = vmatpush1.msra.mxu0 %v498
    %1137 = vmatprep.subr.mxu0 %v495
    %1138 = vmatpush1.msra.mxu0 %v494
    %1139 = vmatprep.subr.mxu0 %v491
    %1140 = vmatpush1.msra.mxu0 %v490
    %1141 = vmatprep.subr.mxu0 %v487
    %1142 = vmatpush1.msra.mxu0 %v486
    %1143 = vmatprep.subr.mxu0 %v483
    %1144 = vmatpush1.msra.mxu0 %v482
    %1145 = vmatprep.subr.mxu0 %v479
    %1146 = vmatpush1.msra.mxu0 %v478
    %1147 = vmatprep.subr.mxu0 %v475
    %1148 = vmatpush1.msra.mxu0 %v474
    %1149 = vmatprep.subr.mxu0 %v471
    %1150 = vmatpush1.msra.mxu0 %v470
    %1151 = vmatprep.subr.mxu0 %v467
    %1152 = vmatpush1.msra.mxu0 %v466
    %1153 = vmatprep.subr.mxu0 %v463
    %1154 = vmatpush1.msra.mxu0 %v462
    %1155 = vmatprep.subr.mxu0 %v459
    %1156 = vmatpush1.msra.mxu0 %v458
    %1157 = vmatprep.subr.mxu0 0.0
    %1158 = vmatpush2.msra.mxu0 0.0
    %1159 = vmatprep.subr.mxu0 0.0
    %1160 = vmatpush2.msra.mxu0 0.0
    %1161 = vmatprep.subr.mxu0 0.0
    %1162 = vmatpush2.msra.mxu0 0.0
    %1163 = vmatprep.subr.mxu0 0.0
    %1164 = vmatpush2.msra.mxu0 0.0
    %1165 = vmatprep.subr.mxu0 0.0
    %1166 = vmatpush2.msra.mxu0 0.0
    %1167 = vmatprep.subr.mxu0 0.0
    %1168 = vmatpush2.msra.mxu0 0.0
    %1169 = vmatprep.subr.mxu0 0.0
    %1170 = vmatpush2.msra.mxu0 0.0
    %1171 = vmatprep.subr.mxu0 0.0
    %1172 = vmatpush2.msra.mxu0 0.0
    %1173 = vmatprep.subr.mxu0 0.0
    %1174 = vmatpush2.msra.mxu0 0.0
    %1175 = vmatprep.subr.mxu0 0.0
    %1176 = vmatpush2.msra.mxu0 0.0
    %1177 = vmatprep.subr.mxu0 0.0
    %1178 = vmatpush2.msra.mxu0 0.0
    %1179 = vmatprep.subr.mxu0 0.0
    %1180 = vmatpush2.msra.mxu0 0.0
    %1181 = vmatprep.subr.mxu0 0.0
    %1182 = vmatpush2.msra.mxu0 0.0
    %1183 = vmatprep.subr.mxu0 0.0
    %1184 = vmatpush2.msra.mxu0 0.0
    %1185 = vmatprep.subr.mxu0 0.0
    %1186 = vmatpush2.msra.mxu0 0.0
    %1187 = vmatprep.subr.mxu0 0.0
    %1188 = vmatpush2.msra.mxu0 0.0
    %1189 = vmatprep.mubr.f32.mxu0 0.0
    %1190 = vmatmul.mubr.f32.gmra.mxu0 %v1046
    %v1191 = vpop.f32.mrf.mxu0
    %v1192 = vadd.f32 0.0, %v1191
    %v1193 = vpop.f32.mrf.mxu0
    %v1194 = vadd.f32 0.0, %v1193
    %1195 = vdwg.mxu0
    %v1196 = vadd.f32 %v1050, %v1121
    %v1197 = vadd.f32 %v1051, %v1123
    %v1198 = vadd.f32 %v1052, %v1192
    %v1199 = vadd.f32 %v1053, %v1194
    %v1200 = vxor.u32 %v1196, 2147483648
    %v1201 = vxor.u32 %v1197, 2147483648
    %v1202 = vxor.u32 %v1198, 2147483648
    %v1203 = vmul.f32 %v1200, 1.442695
    %v1204 = vpow.pop %v1203
    %v1205 = vmul.f32 %v1201, 1.442695
    %v1206 = vpow.pop %v1205
    %v1207 = vmul.f32 %v1202, 1.442695
    %v1208 = vpow.pop %v1207
    %v1209 = vadd.f32 %v1204, 1.0
    %v1210 = vadd.f32 %v1206, 1.0
    %v1211 = vadd.f32 %v1208, 1.0
    %v1212 = vrcp.pop %v1209
    %v1213 = vmul.f32 1.0, %v1212
    %v1214 = vrcp.pop %v1210
    %v1215 = vmul.f32 1.0, %v1214
    %v1216 = vrcp.pop %v1211
    %v1217 = vmul.f32 1.0, %v1216
    %v1218 = vtanh.pop %v1199
    %v1219 = vmul.f32 %v1215, %v1044
    %v1220 = vmul.f32 %v1213, %v1218
    %v1221 = vadd.f32 %v1219, %v1220
    %v1222 = vtanh.pop %v1221
    %v1223 = vmul.f32 %v1217, %v1222
    %s1224 = scalar_lea.vmem [#allocation3], 24
    %1225 = vst [vmem:[%s1224] sm:$0xff] %v1223
    %s1226 = scalar_lea.vmem [#allocation2], 128
    %v1227 = vld [vmem:[%s1226] sm:$0xff]
    %v1228 = vld [vmem:[%s1226 + $0x8] sm:$0xff]
    %v1229 = vld [vmem:[%s1226 + $0x10] sm:$0xff]
    %v1230 = vld [vmem:[%s1226 + $0x18] sm:$0xff]
    %1231 = vmatprep.subr.mxu0 %v517
    %1232 = vmatpush1.msra.mxu0 %v516
    %1233 = vmatprep.subr.mxu0 %v513
    %1234 = vmatpush1.msra.mxu0 %v512
    %1235 = vmatprep.subr.mxu0 %v509
    %1236 = vmatpush1.msra.mxu0 %v508
    %1237 = vmatprep.subr.mxu0 %v505
    %1238 = vmatpush1.msra.mxu0 %v504
    %1239 = vmatprep.subr.mxu0 %v501
    %1240 = vmatpush1.msra.mxu0 %v500
    %1241 = vmatprep.subr.mxu0 %v497
    %1242 = vmatpush1.msra.mxu0 %v496
    %1243 = vmatprep.subr.mxu0 %v493
    %1244 = vmatpush1.msra.mxu0 %v492
    %1245 = vmatprep.subr.mxu0 %v489
    %1246 = vmatpush1.msra.mxu0 %v488
    %1247 = vmatprep.subr.mxu0 %v485
    %1248 = vmatpush1.msra.mxu0 %v484
    %1249 = vmatprep.subr.mxu0 %v481
    %1250 = vmatpush1.msra.mxu0 %v480
    %1251 = vmatprep.subr.mxu0 %v477
    %1252 = vmatpush1.msra.mxu0 %v476
    %1253 = vmatprep.subr.mxu0 %v473
    %1254 = vmatpush1.msra.mxu0 %v472
    %1255 = vmatprep.subr.mxu0 %v469
    %1256 = vmatpush1.msra.mxu0 %v468
    %1257 = vmatprep.subr.mxu0 %v465
    %1258 = vmatpush1.msra.mxu0 %v464
    %1259 = vmatprep.subr.mxu0 %v461
    %1260 = vmatpush1.msra.mxu0 %v460
    %1261 = vmatprep.subr.mxu0 %v457
    %1262 = vmatpush1.msra.mxu0 %v456
    %1263 = vmatprep.subr.mxu0 0.0
    %1264 = vmatpush2.msra.mxu0 0.0
    %1265 = vmatprep.subr.mxu0 0.0
    %1266 = vmatpush2.msra.mxu0 0.0
    %1267 = vmatprep.subr.mxu0 0.0
    %1268 = vmatpush2.msra.mxu0 0.0
    %1269 = vmatprep.subr.mxu0 0.0
    %1270 = vmatpush2.msra.mxu0 0.0
    %1271 = vmatprep.subr.mxu0 0.0
    %1272 = vmatpush2.msra.mxu0 0.0
    %1273 = vmatprep.subr.mxu0 0.0
    %1274 = vmatpush2.msra.mxu0 0.0
    %1275 = vmatprep.subr.mxu0 0.0
    %1276 = vmatpush2.msra.mxu0 0.0
    %1277 = vmatprep.subr.mxu0 0.0
    %1278 = vmatpush2.msra.mxu0 0.0
    %1279 = vmatprep.subr.mxu0 0.0
    %1280 = vmatpush2.msra.mxu0 0.0
    %1281 = vmatprep.subr.mxu0 0.0
    %1282 = vmatpush2.msra.mxu0 0.0
    %1283 = vmatprep.subr.mxu0 0.0
    %1284 = vmatpush2.msra.mxu0 0.0
    %1285 = vmatprep.subr.mxu0 0.0
    %1286 = vmatpush2.msra.mxu0 0.0
    %1287 = vmatprep.subr.mxu0 0.0
    %1288 = vmatpush2.msra.mxu0 0.0
    %1289 = vmatprep.subr.mxu0 0.0
    %1290 = vmatpush2.msra.mxu0 0.0
    %1291 = vmatprep.subr.mxu0 0.0
    %1292 = vmatpush2.msra.mxu0 0.0
    %1293 = vmatprep.subr.mxu0 0.0
    %1294 = vmatpush2.msra.mxu0 0.0
    %1295 = vmatprep.mubr.f32.mxu0 0.0
    %1296 = vmatmul.mubr.f32.gmra.mxu0 %v1223
    %v1297 = vpop.f32.mrf.mxu0
    %v1298 = vadd.f32 0.0, %v1297
    %v1299 = vpop.f32.mrf.mxu0
    %v1300 = vadd.f32 0.0, %v1299
    %1301 = vdwg.mxu0
    %1302 = vmatprep.subr.mxu0 %v519
    %1303 = vmatpush1.msra.mxu0 %v518
    %1304 = vmatprep.subr.mxu0 %v515
    %1305 = vmatpush1.msra.mxu0 %v514
    %1306 = vmatprep.subr.mxu0 %v511
    %1307 = vmatpush1.msra.mxu0 %v510
    %1308 = vmatprep.subr.mxu0 %v507
    %1309 = vmatpush1.msra.mxu0 %v506
    %1310 = vmatprep.subr.mxu0 %v503
    %1311 = vmatpush1.msra.mxu0 %v502
    %1312 = vmatprep.subr.mxu0 %v499
    %1313 = vmatpush1.msra.mxu0 %v498
    %1314 = vmatprep.subr.mxu0 %v495
    %1315 = vmatpush1.msra.mxu0 %v494
    %1316 = vmatprep.subr.mxu0 %v491
    %1317 = vmatpush1.msra.mxu0 %v490
    %1318 = vmatprep.subr.mxu0 %v487
    %1319 = vmatpush1.msra.mxu0 %v486
    %1320 = vmatprep.subr.mxu0 %v483
    %1321 = vmatpush1.msra.mxu0 %v482
    %1322 = vmatprep.subr.mxu0 %v479
    %1323 = vmatpush1.msra.mxu0 %v478
    %1324 = vmatprep.subr.mxu0 %v475
    %1325 = vmatpush1.msra.mxu0 %v474
    %1326 = vmatprep.subr.mxu0 %v471
    %1327 = vmatpush1.msra.mxu0 %v470
    %1328 = vmatprep.subr.mxu0 %v467
    %1329 = vmatpush1.msra.mxu0 %v466
    %1330 = vmatprep.subr.mxu0 %v463
    %1331 = vmatpush1.msra.mxu0 %v462
    %1332 = vmatprep.subr.mxu0 %v459
    %1333 = vmatpush1.msra.mxu0 %v458
    %1334 = vmatprep.subr.mxu0 0.0
    %1335 = vmatpush2.msra.mxu0 0.0
    %1336 = vmatprep.subr.mxu0 0.0
    %1337 = vmatpush2.msra.mxu0 0.0
    %1338 = vmatprep.subr.mxu0 0.0
    %1339 = vmatpush2.msra.mxu0 0.0
    %1340 = vmatprep.subr.mxu0 0.0
    %1341 = vmatpush2.msra.mxu0 0.0
    %1342 = vmatprep.subr.mxu0 0.0
    %1343 = vmatpush2.msra.mxu0 0.0
    %1344 = vmatprep.subr.mxu0 0.0
    %1345 = vmatpush2.msra.mxu0 0.0
    %1346 = vmatprep.subr.mxu0 0.0
    %1347 = vmatpush2.msra.mxu0 0.0
    %1348 = vmatprep.subr.mxu0 0.0
    %1349 = vmatpush2.msra.mxu0 0.0
    %1350 = vmatprep.subr.mxu0 0.0
    %1351 = vmatpush2.msra.mxu0 0.0
    %1352 = vmatprep.subr.mxu0 0.0
    %1353 = vmatpush2.msra.mxu0 0.0
    %1354 = vmatprep.subr.mxu0 0.0
    %1355 = vmatpush2.msra.mxu0 0.0
    %1356 = vmatprep.subr.mxu0 0.0
    %1357 = vmatpush2.msra.mxu0 0.0
    %1358 = vmatprep.subr.mxu0 0.0
    %1359 = vmatpush2.msra.mxu0 0.0
    %1360 = vmatprep.subr.mxu0 0.0
    %1361 = vmatpush2.msra.mxu0 0.0
    %1362 = vmatprep.subr.mxu0 0.0
    %1363 = vmatpush2.msra.mxu0 0.0
    %1364 = vmatprep.subr.mxu0 0.0
    %1365 = vmatpush2.msra.mxu0 0.0
    %1366 = vmatprep.mubr.f32.mxu0 0.0
    %1367 = vmatmul.mubr.f32.gmra.mxu0 %v1223
    %v1368 = vpop.f32.mrf.mxu0
    %v1369 = vadd.f32 0.0, %v1368
    %v1370 = vpop.f32.mrf.mxu0
    %v1371 = vadd.f32 0.0, %v1370
    %1372 = vdwg.mxu0
    %v1373 = vadd.f32 %v1227, %v1298
    %v1374 = vadd.f32 %v1228, %v1300
    %v1375 = vadd.f32 %v1229, %v1369
    %v1376 = vadd.f32 %v1230, %v1371
    %v1377 = vxor.u32 %v1373, 2147483648
    %v1378 = vxor.u32 %v1374, 2147483648
    %v1379 = vxor.u32 %v1375, 2147483648
    %v1380 = vmul.f32 %v1377, 1.442695
    %v1381 = vpow.pop %v1380
    %v1382 = vmul.f32 %v1378, 1.442695
    %v1383 = vpow.pop %v1382
    %v1384 = vmul.f32 %v1379, 1.442695
    %v1385 = vpow.pop %v1384
    %v1386 = vadd.f32 %v1381, 1.0
    %v1387 = vadd.f32 %v1383, 1.0
    %v1388 = vadd.f32 %v1385, 1.0
    %v1389 = vrcp.pop %v1386
    %v1390 = vmul.f32 1.0, %v1389
    %v1391 = vrcp.pop %v1387
    %v1392 = vmul.f32 1.0, %v1391
    %v1393 = vrcp.pop %v1388
    %v1394 = vmul.f32 1.0, %v1393
    %v1395 = vtanh.pop %v1376
    %v1396 = vmul.f32 %v1392, %v1221
    %v1397 = vmul.f32 %v1390, %v1395
    %v1398 = vadd.f32 %v1396, %v1397
    %v1399 = vtanh.pop %v1398
    %v1400 = vmul.f32 %v1394, %v1399
    %s1401 = scalar_lea.vmem [#allocation3], 32
    %1402 = vst [vmem:[%s1401] sm:$0xff] %v1400
    %s1403 = scalar_lea.vmem [#allocation2], 160
    %v1404 = vld [vmem:[%s1403] sm:$0xff]
    %v1405 = vld [vmem:[%s1403 + $0x8] sm:$0xff]
    %v1406 = vld [vmem:[%s1403 + $0x10] sm:$0xff]
    %v1407 = vld [vmem:[%s1403 + $0x18] sm:$0xff]
    %1408 = vmatprep.subr.mxu0 %v517
    %1409 = vmatpush1.msra.mxu0 %v516
    %1410 = vmatprep.subr.mxu0 %v513
    %1411 = vmatpush1.msra.mxu0 %v512
    %1412 = vmatprep.subr.mxu0 %v509
    %1413 = vmatpush1.msra.mxu0 %v508
    %1414 = vmatprep.subr.mxu0 %v505
    %1415 = vmatpush1.msra.mxu0 %v504
    %1416 = vmatprep.subr.mxu0 %v501
    %1417 = vmatpush1.msra.mxu0 %v500
    %1418 = vmatprep.subr.mxu0 %v497
    %1419 = vmatpush1.msra.mxu0 %v496
    %1420 = vmatprep.subr.mxu0 %v493
    %1421 = vmatpush1.msra.mxu0 %v492
    %1422 = vmatprep.subr.mxu0 %v489
    %1423 = vmatpush1.msra.mxu0 %v488
    %1424 = vmatprep.subr.mxu0 %v485
    %1425 = vmatpush1.msra.mxu0 %v484
    %1426 = vmatprep.subr.mxu0 %v481
    %1427 = vmatpush1.msra.mxu0 %v480
    %1428 = vmatprep.subr.mxu0 %v477
    %1429 = vmatpush1.msra.mxu0 %v476
    %1430 = vmatprep.subr.mxu0 %v473
    %1431 = vmatpush1.msra.mxu0 %v472
    %1432 = vmatprep.subr.mxu0 %v469
    %1433 = vmatpush1.msra.mxu0 %v468
    %1434 = vmatprep.subr.mxu0 %v465
    %1435 = vmatpush1.msra.mxu0 %v464
    %1436 = vmatprep.subr.mxu0 %v461
    %1437 = vmatpush1.msra.mxu0 %v460
    %1438 = vmatprep.subr.mxu0 %v457
    %1439 = vmatpush1.msra.mxu0 %v456
    %1440 = vmatprep.subr.mxu0 0.0
    %1441 = vmatpush2.msra.mxu0 0.0
    %1442 = vmatprep.subr.mxu0 0.0
    %1443 = vmatpush2.msra.mxu0 0.0
    %1444 = vmatprep.subr.mxu0 0.0
    %1445 = vmatpush2.msra.mxu0 0.0
    %1446 = vmatprep.subr.mxu0 0.0
    %1447 = vmatpush2.msra.mxu0 0.0
    %1448 = vmatprep.subr.mxu0 0.0
    %1449 = vmatpush2.msra.mxu0 0.0
    %1450 = vmatprep.subr.mxu0 0.0
    %1451 = vmatpush2.msra.mxu0 0.0
    %1452 = vmatprep.subr.mxu0 0.0
    %1453 = vmatpush2.msra.mxu0 0.0
    %1454 = vmatprep.subr.mxu0 0.0
    %1455 = vmatpush2.msra.mxu0 0.0
    %1456 = vmatprep.subr.mxu0 0.0
    %1457 = vmatpush2.msra.mxu0 0.0
    %1458 = vmatprep.subr.mxu0 0.0
    %1459 = vmatpush2.msra.mxu0 0.0
    %1460 = vmatprep.subr.mxu0 0.0
    %1461 = vmatpush2.msra.mxu0 0.0
    %1462 = vmatprep.subr.mxu0 0.0
    %1463 = vmatpush2.msra.mxu0 0.0
    %1464 = vmatprep.subr.mxu0 0.0
    %1465 = vmatpush2.msra.mxu0 0.0
    %1466 = vmatprep.subr.mxu0 0.0
    %1467 = vmatpush2.msra.mxu0 0.0
    %1468 = vmatprep.subr.mxu0 0.0
    %1469 = vmatpush2.msra.mxu0 0.0
    %1470 = vmatprep.subr.mxu0 0.0
    %1471 = vmatpush2.msra.mxu0 0.0
    %1472 = vmatprep.mubr.f32.mxu0 0.0
    %1473 = vmatmul.mubr.f32.gmra.mxu0 %v1400
    %v1474 = vpop.f32.mrf.mxu0
    %v1475 = vadd.f32 0.0, %v1474
    %v1476 = vpop.f32.mrf.mxu0
    %v1477 = vadd.f32 0.0, %v1476
    %1478 = vdwg.mxu0
    %1479 = vmatprep.subr.mxu0 %v519
    %1480 = vmatpush1.msra.mxu0 %v518
    %1481 = vmatprep.subr.mxu0 %v515
    %1482 = vmatpush1.msra.mxu0 %v514
    %1483 = vmatprep.subr.mxu0 %v511
    %1484 = vmatpush1.msra.mxu0 %v510
    %1485 = vmatprep.subr.mxu0 %v507
    %1486 = vmatpush1.msra.mxu0 %v506
    %1487 = vmatprep.subr.mxu0 %v503
    %1488 = vmatpush1.msra.mxu0 %v502
    %1489 = vmatprep.subr.mxu0 %v499
    %1490 = vmatpush1.msra.mxu0 %v498
    %1491 = vmatprep.subr.mxu0 %v495
    %1492 = vmatpush1.msra.mxu0 %v494
    %1493 = vmatprep.subr.mxu0 %v491
    %1494 = vmatpush1.msra.mxu0 %v490
    %1495 = vmatprep.subr.mxu0 %v487
    %1496 = vmatpush1.msra.mxu0 %v486
    %1497 = vmatprep.subr.mxu0 %v483
    %1498 = vmatpush1.msra.mxu0 %v482
    %1499 = vmatprep.subr.mxu0 %v479
    %1500 = vmatpush1.msra.mxu0 %v478
    %1501 = vmatprep.subr.mxu0 %v475
    %1502 = vmatpush1.msra.mxu0 %v474
    %1503 = vmatprep.subr.mxu0 %v471
    %1504 = vmatpush1.msra.mxu0 %v470
    %1505 = vmatprep.subr.mxu0 %v467
    %1506 = vmatpush1.msra.mxu0 %v466
    %1507 = vmatprep.subr.mxu0 %v463
    %1508 = vmatpush1.msra.mxu0 %v462
    %1509 = vmatprep.subr.mxu0 %v459
    %1510 = vmatpush1.msra.mxu0 %v458
    %1511 = vmatprep.subr.mxu0 0.0
    %1512 = vmatpush2.msra.mxu0 0.0
    %1513 = vmatprep.subr.mxu0 0.0
    %1514 = vmatpush2.msra.mxu0 0.0
    %1515 = vmatprep.subr.mxu0 0.0
    %1516 = vmatpush2.msra.mxu0 0.0
    %1517 = vmatprep.subr.mxu0 0.0
    %1518 = vmatpush2.msra.mxu0 0.0
    %1519 = vmatprep.subr.mxu0 0.0
    %1520 = vmatpush2.msra.mxu0 0.0
    %1521 = vmatprep.subr.mxu0 0.0
    %1522 = vmatpush2.msra.mxu0 0.0
    %1523 = vmatprep.subr.mxu0 0.0
    %1524 = vmatpush2.msra.mxu0 0.0
    %1525 = vmatprep.subr.mxu0 0.0
    %1526 = vmatpush2.msra.mxu0 0.0
    %1527 = vmatprep.subr.mxu0 0.0
    %1528 = vmatpush2.msra.mxu0 0.0
    %1529 = vmatprep.subr.mxu0 0.0
    %1530 = vmatpush2.msra.mxu0 0.0
    %1531 = vmatprep.subr.mxu0 0.0
    %1532 = vmatpush2.msra.mxu0 0.0
    %1533 = vmatprep.subr.mxu0 0.0
    %1534 = vmatpush2.msra.mxu0 0.0
    %1535 = vmatprep.subr.mxu0 0.0
    %1536 = vmatpush2.msra.mxu0 0.0
    %1537 = vmatprep.subr.mxu0 0.0
    %1538 = vmatpush2.msra.mxu0 0.0
    %1539 = vmatprep.subr.mxu0 0.0
    %1540 = vmatpush2.msra.mxu0 0.0
    %1541 = vmatprep.subr.mxu0 0.0
    %1542 = vmatpush2.msra.mxu0 0.0
    %1543 = vmatprep.mubr.f32.mxu0 0.0
    %1544 = vmatmul.mubr.f32.gmra.mxu0 %v1400
    %v1545 = vpop.f32.mrf.mxu0
    %v1546 = vadd.f32 0.0, %v1545
    %v1547 = vpop.f32.mrf.mxu0
    %v1548 = vadd.f32 0.0, %v1547
    %1549 = vdwg.mxu0
    %v1550 = vadd.f32 %v1404, %v1475
    %v1551 = vadd.f32 %v1405, %v1477
    %v1552 = vadd.f32 %v1406, %v1546
    %v1553 = vadd.f32 %v1407, %v1548
    %v1554 = vxor.u32 %v1550, 2147483648
    %v1555 = vxor.u32 %v1551, 2147483648
    %v1556 = vxor.u32 %v1552, 2147483648
    %v1557 = vmul.f32 %v1554, 1.442695
    %v1558 = vpow.pop %v1557
    %v1559 = vmul.f32 %v1555, 1.442695
    %v1560 = vpow.pop %v1559
    %v1561 = vmul.f32 %v1556, 1.442695
    %v1562 = vpow.pop %v1561
    %v1563 = vadd.f32 %v1558, 1.0
    %v1564 = vadd.f32 %v1560, 1.0
    %v1565 = vadd.f32 %v1562, 1.0
    %v1566 = vrcp.pop %v1563
    %v1567 = vmul.f32 1.0, %v1566
    %v1568 = vrcp.pop %v1564
    %v1569 = vmul.f32 1.0, %v1568
    %v1570 = vrcp.pop %v1565
    %v1571 = vmul.f32 1.0, %v1570
    %v1572 = vtanh.pop %v1553
    %v1573 = vmul.f32 %v1569, %v1398
    %v1574 = vmul.f32 %v1567, %v1572
    %v1575 = vadd.f32 %v1573, %v1574
    %v1576 = vtanh.pop %v1575
    %v1577 = vmul.f32 %v1571, %v1576
    %s1578 = scalar_lea.vmem [#allocation3], 40
    %1579 = vst [vmem:[%s1578] sm:$0xff] %v1577
    %s1580 = scalar_lea.vmem [#allocation2], 192
    %v1581 = vld [vmem:[%s1580] sm:$0xff]
    %v1582 = vld [vmem:[%s1580 + $0x8] sm:$0xff]
    %v1583 = vld [vmem:[%s1580 + $0x10] sm:$0xff]
    %v1584 = vld [vmem:[%s1580 + $0x18] sm:$0xff]
    %1585 = vmatprep.subr.mxu0 %v517
    %1586 = vmatpush1.msra.mxu0 %v516
    %1587 = vmatprep.subr.mxu0 %v513
    %1588 = vmatpush1.msra.mxu0 %v512
    %1589 = vmatprep.subr.mxu0 %v509
    %1590 = vmatpush1.msra.mxu0 %v508
    %1591 = vmatprep.subr.mxu0 %v505
    %1592 = vmatpush1.msra.mxu0 %v504
    %1593 = vmatprep.subr.mxu0 %v501
    %1594 = vmatpush1.msra.mxu0 %v500
    %1595 = vmatprep.subr.mxu0 %v497
    %1596 = vmatpush1.msra.mxu0 %v496
    %1597 = vmatprep.subr.mxu0 %v493
    %1598 = vmatpush1.msra.mxu0 %v492
    %1599 = vmatprep.subr.mxu0 %v489
    %1600 = vmatpush1.msra.mxu0 %v488
    %1601 = vmatprep.subr.mxu0 %v485
    %1602 = vmatpush1.msra.mxu0 %v484
    %1603 = vmatprep.subr.mxu0 %v481
    %1604 = vmatpush1.msra.mxu0 %v480
    %1605 = vmatprep.subr.mxu0 %v477
    %1606 = vmatpush1.msra.mxu0 %v476
    %1607 = vmatprep.subr.mxu0 %v473
    %1608 = vmatpush1.msra.mxu0 %v472
    %1609 = vmatprep.subr.mxu0 %v469
    %1610 = vmatpush1.msra.mxu0 %v468
    %1611 = vmatprep.subr.mxu0 %v465
    %1612 = vmatpush1.msra.mxu0 %v464
    %1613 = vmatprep.subr.mxu0 %v461
    %1614 = vmatpush1.msra.mxu0 %v460
    %1615 = vmatprep.subr.mxu0 %v457
    %1616 = vmatpush1.msra.mxu0 %v456
    %1617 = vmatprep.subr.mxu0 0.0
    %1618 = vmatpush2.msra.mxu0 0.0
    %1619 = vmatprep.subr.mxu0 0.0
    %1620 = vmatpush2.msra.mxu0 0.0
    %1621 = vmatprep.subr.mxu0 0.0
    %1622 = vmatpush2.msra.mxu0 0.0
    %1623 = vmatprep.subr.mxu0 0.0
    %1624 = vmatpush2.msra.mxu0 0.0
    %1625 = vmatprep.subr.mxu0 0.0
    %1626 = vmatpush2.msra.mxu0 0.0
    %1627 = vmatprep.subr.mxu0 0.0
    %1628 = vmatpush2.msra.mxu0 0.0
    %1629 = vmatprep.subr.mxu0 0.0
    %1630 = vmatpush2.msra.mxu0 0.0
    %1631 = vmatprep.subr.mxu0 0.0
    %1632 = vmatpush2.msra.mxu0 0.0
    %1633 = vmatprep.subr.mxu0 0.0
    %1634 = vmatpush2.msra.mxu0 0.0
    %1635 = vmatprep.subr.mxu0 0.0
    %1636 = vmatpush2.msra.mxu0 0.0
    %1637 = vmatprep.subr.mxu0 0.0
    %1638 = vmatpush2.msra.mxu0 0.0
    %1639 = vmatprep.subr.mxu0 0.0
    %1640 = vmatpush2.msra.mxu0 0.0
    %1641 = vmatprep.subr.mxu0 0.0
    %1642 = vmatpush2.msra.mxu0 0.0
    %1643 = vmatprep.subr.mxu0 0.0
    %1644 = vmatpush2.msra.mxu0 0.0
    %1645 = vmatprep.subr.mxu0 0.0
    %1646 = vmatpush2.msra.mxu0 0.0
    %1647 = vmatprep.subr.mxu0 0.0
    %1648 = vmatpush2.msra.mxu0 0.0
    %1649 = vmatprep.mubr.f32.mxu0 0.0
    %1650 = vmatmul.mubr.f32.gmra.mxu0 %v1577
    %v1651 = vpop.f32.mrf.mxu0
    %v1652 = vadd.f32 0.0, %v1651
    %v1653 = vpop.f32.mrf.mxu0
    %v1654 = vadd.f32 0.0, %v1653
    %1655 = vdwg.mxu0
    %1656 = vmatprep.subr.mxu0 %v519
    %1657 = vmatpush1.msra.mxu0 %v518
    %1658 = vmatprep.subr.mxu0 %v515
    %1659 = vmatpush1.msra.mxu0 %v514
    %1660 = vmatprep.subr.mxu0 %v511
    %1661 = vmatpush1.msra.mxu0 %v510
    %1662 = vmatprep.subr.mxu0 %v507
    %1663 = vmatpush1.msra.mxu0 %v506
    %1664 = vmatprep.subr.mxu0 %v503
    %1665 = vmatpush1.msra.mxu0 %v502
    %1666 = vmatprep.subr.mxu0 %v499
    %1667 = vmatpush1.msra.mxu0 %v498
    %1668 = vmatprep.subr.mxu0 %v495
    %1669 = vmatpush1.msra.mxu0 %v494
    %1670 = vmatprep.subr.mxu0 %v491
    %1671 = vmatpush1.msra.mxu0 %v490
    %1672 = vmatprep.subr.mxu0 %v487
    %1673 = vmatpush1.msra.mxu0 %v486
    %1674 = vmatprep.subr.mxu0 %v483
    %1675 = vmatpush1.msra.mxu0 %v482
    %1676 = vmatprep.subr.mxu0 %v479
    %1677 = vmatpush1.msra.mxu0 %v478
    %1678 = vmatprep.subr.mxu0 %v475
    %1679 = vmatpush1.msra.mxu0 %v474
    %1680 = vmatprep.subr.mxu0 %v471
    %1681 = vmatpush1.msra.mxu0 %v470
    %1682 = vmatprep.subr.mxu0 %v467
    %1683 = vmatpush1.msra.mxu0 %v466
    %1684 = vmatprep.subr.mxu0 %v463
    %1685 = vmatpush1.msra.mxu0 %v462
    %1686 = vmatprep.subr.mxu0 %v459
    %1687 = vmatpush1.msra.mxu0 %v458
    %1688 = vmatprep.subr.mxu0 0.0
    %1689 = vmatpush2.msra.mxu0 0.0
    %1690 = vmatprep.subr.mxu0 0.0
    %1691 = vmatpush2.msra.mxu0 0.0
    %1692 = vmatprep.subr.mxu0 0.0
    %1693 = vmatpush2.msra.mxu0 0.0
    %1694 = vmatprep.subr.mxu0 0.0
    %1695 = vmatpush2.msra.mxu0 0.0
    %1696 = vmatprep.subr.mxu0 0.0
    %1697 = vmatpush2.msra.mxu0 0.0
    %1698 = vmatprep.subr.mxu0 0.0
    %1699 = vmatpush2.msra.mxu0 0.0
    %1700 = vmatprep.subr.mxu0 0.0
    %1701 = vmatpush2.msra.mxu0 0.0
    %1702 = vmatprep.subr.mxu0 0.0
    %1703 = vmatpush2.msra.mxu0 0.0
    %1704 = vmatprep.subr.mxu0 0.0
    %1705 = vmatpush2.msra.mxu0 0.0
    %1706 = vmatprep.subr.mxu0 0.0
    %1707 = vmatpush2.msra.mxu0 0.0
    %1708 = vmatprep.subr.mxu0 0.0
    %1709 = vmatpush2.msra.mxu0 0.0
    %1710 = vmatprep.subr.mxu0 0.0
    %1711 = vmatpush2.msra.mxu0 0.0
    %1712 = vmatprep.subr.mxu0 0.0
    %1713 = vmatpush2.msra.mxu0 0.0
    %1714 = vmatprep.subr.mxu0 0.0
    %1715 = vmatpush2.msra.mxu0 0.0
    %1716 = vmatprep.subr.mxu0 0.0
    %1717 = vmatpush2.msra.mxu0 0.0
    %1718 = vmatprep.subr.mxu0 0.0
    %1719 = vmatpush2.msra.mxu0 0.0
    %1720 = vmatprep.mubr.f32.mxu0 0.0
    %1721 = vmatmul.mubr.f32.gmra.mxu0 %v1577
    %v1722 = vpop.f32.mrf.mxu0
    %v1723 = vadd.f32 0.0, %v1722
    %v1724 = vpop.f32.mrf.mxu0
    %v1725 = vadd.f32 0.0, %v1724
    %1726 = vdwg.mxu0
    %v1727 = vadd.f32 %v1581, %v1652
    %v1728 = vadd.f32 %v1582, %v1654
    %v1729 = vadd.f32 %v1583, %v1723
    %v1730 = vadd.f32 %v1584, %v1725
    %v1731 = vxor.u32 %v1727, 2147483648
    %v1732 = vxor.u32 %v1728, 2147483648
    %v1733 = vxor.u32 %v1729, 2147483648
    %v1734 = vmul.f32 %v1731, 1.442695
    %v1735 = vpow.pop %v1734
    %v1736 = vmul.f32 %v1732, 1.442695
    %v1737 = vpow.pop %v1736
    %v1738 = vmul.f32 %v1733, 1.442695
    %v1739 = vpow.pop %v1738
    %v1740 = vadd.f32 %v1735, 1.0
    %v1741 = vadd.f32 %v1737, 1.0
    %v1742 = vadd.f32 %v1739, 1.0
    %v1743 = vrcp.pop %v1740
    %v1744 = vmul.f32 1.0, %v1743
    %v1745 = vrcp.pop %v1741
    %v1746 = vmul.f32 1.0, %v1745
    %v1747 = vrcp.pop %v1742
    %v1748 = vmul.f32 1.0, %v1747
    %v1749 = vtanh.pop %v1730
    %v1750 = vmul.f32 %v1746, %v1575
    %v1751 = vmul.f32 %v1744, %v1749
    %v1752 = vadd.f32 %v1750, %v1751
    %v1753 = vtanh.pop %v1752
    %v1754 = vmul.f32 %v1748, %v1753
    %s1755 = scalar_lea.vmem [#allocation3], 48
    %1756 = vst [vmem:[%s1755] sm:$0xff] %v1754
    %s1757 = scalar_lea.vmem [#allocation2], 224
    %v1758 = vld [vmem:[%s1757] sm:$0xff]
    %v1759 = vld [vmem:[%s1757 + $0x8] sm:$0xff]
    %v1760 = vld [vmem:[%s1757 + $0x10] sm:$0xff]
    %v1761 = vld [vmem:[%s1757 + $0x18] sm:$0xff]
    %1762 = vmatprep.subr.mxu0 %v517
    %1763 = vmatpush1.msra.mxu0 %v516
    %1764 = vmatprep.subr.mxu0 %v513
    %1765 = vmatpush1.msra.mxu0 %v512
    %1766 = vmatprep.subr.mxu0 %v509
    %1767 = vmatpush1.msra.mxu0 %v508
    %1768 = vmatprep.subr.mxu0 %v505
    %1769 = vmatpush1.msra.mxu0 %v504
    %1770 = vmatprep.subr.mxu0 %v501
    %1771 = vmatpush1.msra.mxu0 %v500
    %1772 = vmatprep.subr.mxu0 %v497
    %1773 = vmatpush1.msra.mxu0 %v496
    %1774 = vmatprep.subr.mxu0 %v493
    %1775 = vmatpush1.msra.mxu0 %v492
    %1776 = vmatprep.subr.mxu0 %v489
    %1777 = vmatpush1.msra.mxu0 %v488
    %1778 = vmatprep.subr.mxu0 %v485
    %1779 = vmatpush1.msra.mxu0 %v484
    %1780 = vmatprep.subr.mxu0 %v481
    %1781 = vmatpush1.msra.mxu0 %v480
    %1782 = vmatprep.subr.mxu0 %v477
    %1783 = vmatpush1.msra.mxu0 %v476
    %1784 = vmatprep.subr.mxu0 %v473
    %1785 = vmatpush1.msra.mxu0 %v472
    %1786 = vmatprep.subr.mxu0 %v469
    %1787 = vmatpush1.msra.mxu0 %v468
    %1788 = vmatprep.subr.mxu0 %v465
    %1789 = vmatpush1.msra.mxu0 %v464
    %1790 = vmatprep.subr.mxu0 %v461
    %1791 = vmatpush1.msra.mxu0 %v460
    %1792 = vmatprep.subr.mxu0 %v457
    %1793 = vmatpush1.msra.mxu0 %v456
    %1794 = vmatprep.subr.mxu0 0.0
    %1795 = vmatpush2.msra.mxu0 0.0
    %1796 = vmatprep.subr.mxu0 0.0
    %1797 = vmatpush2.msra.mxu0 0.0
    %1798 = vmatprep.subr.mxu0 0.0
    %1799 = vmatpush2.msra.mxu0 0.0
    %1800 = vmatprep.subr.mxu0 0.0
    %1801 = vmatpush2.msra.mxu0 0.0
    %1802 = vmatprep.subr.mxu0 0.0
    %1803 = vmatpush2.msra.mxu0 0.0
    %1804 = vmatprep.subr.mxu0 0.0
    %1805 = vmatpush2.msra.mxu0 0.0
    %1806 = vmatprep.subr.mxu0 0.0
    %1807 = vmatpush2.msra.mxu0 0.0
    %1808 = vmatprep.subr.mxu0 0.0
    %1809 = vmatpush2.msra.mxu0 0.0
    %1810 = vmatprep.subr.mxu0 0.0
    %1811 = vmatpush2.msra.mxu0 0.0
    %1812 = vmatprep.subr.mxu0 0.0
    %1813 = vmatpush2.msra.mxu0 0.0
    %1814 = vmatprep.subr.mxu0 0.0
    %1815 = vmatpush2.msra.mxu0 0.0
    %1816 = vmatprep.subr.mxu0 0.0
    %1817 = vmatpush2.msra.mxu0 0.0
    %1818 = vmatprep.subr.mxu0 0.0
    %1819 = vmatpush2.msra.mxu0 0.0
    %1820 = vmatprep.subr.mxu0 0.0
    %1821 = vmatpush2.msra.mxu0 0.0
    %1822 = vmatprep.subr.mxu0 0.0
    %1823 = vmatpush2.msra.mxu0 0.0
    %1824 = vmatprep.subr.mxu0 0.0
    %1825 = vmatpush2.msra.mxu0 0.0
    %1826 = vmatprep.mubr.f32.mxu0 0.0
    %1827 = vmatmul.mubr.f32.gmra.mxu0 %v1754
    %v1828 = vpop.f32.mrf.mxu0
    %v1829 = vadd.f32 0.0, %v1828
    %v1830 = vpop.f32.mrf.mxu0
    %v1831 = vadd.f32 0.0, %v1830
    %1832 = vdwg.mxu0
    %1833 = vmatprep.subr.mxu0 %v519
    %1834 = vmatpush1.msra.mxu0 %v518
    %1835 = vmatprep.subr.mxu0 %v515
    %1836 = vmatpush1.msra.mxu0 %v514
    %1837 = vmatprep.subr.mxu0 %v511
    %1838 = vmatpush1.msra.mxu0 %v510
    %1839 = vmatprep.subr.mxu0 %v507
    %1840 = vmatpush1.msra.mxu0 %v506
    %1841 = vmatprep.subr.mxu0 %v503
    %1842 = vmatpush1.msra.mxu0 %v502
    %1843 = vmatprep.subr.mxu0 %v499
    %1844 = vmatpush1.msra.mxu0 %v498
    %1845 = vmatprep.subr.mxu0 %v495
    %1846 = vmatpush1.msra.mxu0 %v494
    %1847 = vmatprep.subr.mxu0 %v491
    %1848 = vmatpush1.msra.mxu0 %v490
    %1849 = vmatprep.subr.mxu0 %v487
    %1850 = vmatpush1.msra.mxu0 %v486
    %1851 = vmatprep.subr.mxu0 %v483
    %1852 = vmatpush1.msra.mxu0 %v482
    %1853 = vmatprep.subr.mxu0 %v479
    %1854 = vmatpush1.msra.mxu0 %v478
    %1855 = vmatprep.subr.mxu0 %v475
    %1856 = vmatpush1.msra.mxu0 %v474
    %1857 = vmatprep.subr.mxu0 %v471
    %1858 = vmatpush1.msra.mxu0 %v470
    %1859 = vmatprep.subr.mxu0 %v467
    %1860 = vmatpush1.msra.mxu0 %v466
    %1861 = vmatprep.subr.mxu0 %v463
    %1862 = vmatpush1.msra.mxu0 %v462
    %1863 = vmatprep.subr.mxu0 %v459
    %1864 = vmatpush1.msra.mxu0 %v458
    %1865 = vmatprep.subr.mxu0 0.0
    %1866 = vmatpush2.msra.mxu0 0.0
    %1867 = vmatprep.subr.mxu0 0.0
    %1868 = vmatpush2.msra.mxu0 0.0
    %1869 = vmatprep.subr.mxu0 0.0
    %1870 = vmatpush2.msra.mxu0 0.0
    %1871 = vmatprep.subr.mxu0 0.0
    %1872 = vmatpush2.msra.mxu0 0.0
    %1873 = vmatprep.subr.mxu0 0.0
    %1874 = vmatpush2.msra.mxu0 0.0
    %1875 = vmatprep.subr.mxu0 0.0
    %1876 = vmatpush2.msra.mxu0 0.0
    %1877 = vmatprep.subr.mxu0 0.0
    %1878 = vmatpush2.msra.mxu0 0.0
    %1879 = vmatprep.subr.mxu0 0.0
    %1880 = vmatpush2.msra.mxu0 0.0
    %1881 = vmatprep.subr.mxu0 0.0
    %1882 = vmatpush2.msra.mxu0 0.0
    %1883 = vmatprep.subr.mxu0 0.0
    %1884 = vmatpush2.msra.mxu0 0.0
    %1885 = vmatprep.subr.mxu0 0.0
    %1886 = vmatpush2.msra.mxu0 0.0
    %1887 = vmatprep.subr.mxu0 0.0
    %1888 = vmatpush2.msra.mxu0 0.0
    %1889 = vmatprep.subr.mxu0 0.0
    %1890 = vmatpush2.msra.mxu0 0.0
    %1891 = vmatprep.subr.mxu0 0.0
    %1892 = vmatpush2.msra.mxu0 0.0
    %1893 = vmatprep.subr.mxu0 0.0
    %1894 = vmatpush2.msra.mxu0 0.0
    %1895 = vmatprep.subr.mxu0 0.0
    %1896 = vmatpush2.msra.mxu0 0.0
    %1897 = vmatprep.mubr.f32.mxu0 0.0
    %1898 = vmatmul.mubr.f32.gmra.mxu0 %v1754
    %v1899 = vpop.f32.mrf.mxu0
    %v1900 = vadd.f32 0.0, %v1899
    %v1901 = vpop.f32.mrf.mxu0
    %v1902 = vadd.f32 0.0, %v1901
    %1903 = vdwg.mxu0
    %v1904 = vadd.f32 %v1758, %v1829
    %v1905 = vadd.f32 %v1759, %v1831
    %v1906 = vadd.f32 %v1760, %v1900
    %v1907 = vadd.f32 %v1761, %v1902
    %v1908 = vxor.u32 %v1904, 2147483648
    %v1909 = vxor.u32 %v1905, 2147483648
    %v1910 = vxor.u32 %v1906, 2147483648
    %v1911 = vmul.f32 %v1908, 1.442695
    %v1912 = vpow.pop %v1911
    %v1913 = vmul.f32 %v1909, 1.442695
    %v1914 = vpow.pop %v1913
    %v1915 = vmul.f32 %v1910, 1.442695
    %v1916 = vpow.pop %v1915
    %v1917 = vadd.f32 %v1912, 1.0
    %v1918 = vadd.f32 %v1914, 1.0
    %v1919 = vadd.f32 %v1916, 1.0
    %v1920 = vrcp.pop %v1917
    %v1921 = vmul.f32 1.0, %v1920
    %v1922 = vrcp.pop %v1918
    %v1923 = vmul.f32 1.0, %v1922
    %v1924 = vrcp.pop %v1919
    %v1925 = vmul.f32 1.0, %v1924
    %v1926 = vtanh.pop %v1907
    %v1927 = vmul.f32 %v1923, %v1752
    %v1928 = vmul.f32 %v1921, %v1926
    %v1929 = vadd.f32 %v1927, %v1928
    %v1930 = vtanh.pop %v1929
    %v1931 = vmul.f32 %v1925, %v1930
    %s1932 = scalar_lea.vmem [#allocation3], 56
    %1933 = vst [vmem:[%s1932] sm:$0xff] %v1931
    %v1934 = vld [vmem:[#allocation3] sm:$0xff]
    %v1935 = vld [vmem:[#allocation3 + $0x8] sm:$0xff]
    %v1936 = vld [vmem:[#allocation3 + $0x10] sm:$0xff]
    %v1937 = vld [vmem:[#allocation3 + $0x18] sm:$0xff]
    %v1938 = vld [vmem:[#allocation3 + $0x20] sm:$0xff]
    %v1939 = vld [vmem:[#allocation3 + $0x28] sm:$0xff]
    %v1940 = vld [vmem:[#allocation3 + $0x30] sm:$0xff]
    %v1941 = vld [vmem:[#allocation3 + $0x38] sm:$0xff]
    %v1942 = vld [vmem:[#allocation6] sm:$0xff]
    %v1943 = vld [vmem:[#allocation6 + $0x8] sm:$0xff]
    %v1944 = vld [vmem:[#allocation6 + $0x10] sm:$0xff]
    %v1945 = vld [vmem:[#allocation6 + $0x18] sm:$0xff]
    %v1946 = vld [vmem:[#allocation6 + $0x20] sm:$0xff]
    %v1947 = vld [vmem:[#allocation6 + $0x28] sm:$0xff]
    %v1948 = vld [vmem:[#allocation6 + $0x30] sm:$0xff]
    %v1949 = vld [vmem:[#allocation6 + $0x38] sm:$0xff]
    %v1950 = vld [vmem:[#allocation6 + $0x40] sm:$0xff]
    %v1951 = vld [vmem:[#allocation6 + $0x48] sm:$0xff]
    %v1952 = vld [vmem:[#allocation6 + $0x50] sm:$0xff]
    %v1953 = vld [vmem:[#allocation6 + $0x58] sm:$0xff]
    %v1954 = vld [vmem:[#allocation6 + $0x60] sm:$0xff]
    %v1955 = vld [vmem:[#allocation6 + $0x68] sm:$0xff]
    %v1956 = vld [vmem:[#allocation6 + $0x70] sm:$0xff]
    %v1957 = vld [vmem:[#allocation6 + $0x78] sm:$0xff]
    %v1958 = vld [vmem:[#allocation6 + $0x80] sm:$0xff]
    %v1959 = vld [vmem:[#allocation6 + $0x88] sm:$0xff]
    %v1960 = vld [vmem:[#allocation6 + $0x90] sm:$0xff]
    %v1961 = vld [vmem:[#allocation6 + $0x98] sm:$0xff]
    %v1962 = vld [vmem:[#allocation6 + $0xa0] sm:$0xff]
    %v1963 = vld [vmem:[#allocation6 + $0xa8] sm:$0xff]
    %v1964 = vld [vmem:[#allocation6 + $0xb0] sm:$0xff]
    %v1965 = vld [vmem:[#allocation6 + $0xb8] sm:$0xff]
    %v1966 = vld [vmem:[#allocation6 + $0xc0] sm:$0xff]
    %v1967 = vld [vmem:[#allocation6 + $0xc8] sm:$0xff]
    %v1968 = vld [vmem:[#allocation6 + $0xd0] sm:$0xff]
    %v1969 = vld [vmem:[#allocation6 + $0xd8] sm:$0xff]
    %v1970 = vld [vmem:[#allocation6 + $0xe0] sm:$0xff]
    %v1971 = vld [vmem:[#allocation6 + $0xe8] sm:$0xff]
    %v1972 = vld [vmem:[#allocation6 + $0xf0] sm:$0xff]
    %v1973 = vld [vmem:[#allocation6 + $0xf8] sm:$0xff]
    %v1974 = vld [vmem:[#allocation6 + $0x100] sm:$0xff]
    %v1975 = vld [vmem:[#allocation6 + $0x108] sm:$0xff]
    %v1976 = vld [vmem:[#allocation6 + $0x110] sm:$0xff]
    %v1977 = vld [vmem:[#allocation6 + $0x118] sm:$0xff]
    %v1978 = vld [vmem:[#allocation6 + $0x120] sm:$0xff]
    %v1979 = vld [vmem:[#allocation6 + $0x128] sm:$0xff]
    %v1980 = vld [vmem:[#allocation6 + $0x130] sm:$0xff]
    %v1981 = vld [vmem:[#allocation6 + $0x138] sm:$0xff]
    %v1982 = vld [vmem:[#allocation6 + $0x140] sm:$0xff]
    %v1983 = vld [vmem:[#allocation6 + $0x148] sm:$0xff]
    %v1984 = vld [vmem:[#allocation6 + $0x150] sm:$0xff]
    %v1985 = vld [vmem:[#allocation6 + $0x158] sm:$0xff]
    %v1986 = vld [vmem:[#allocation6 + $0x160] sm:$0xff]
    %v1987 = vld [vmem:[#allocation6 + $0x168] sm:$0xff]
    %v1988 = vld [vmem:[#allocation6 + $0x170] sm:$0xff]
    %v1989 = vld [vmem:[#allocation6 + $0x178] sm:$0xff]
    %v1990 = vld [vmem:[#allocation6 + $0x180] sm:$0xff]
    %v1991 = vld [vmem:[#allocation6 + $0x188] sm:$0xff]
    %v1992 = vld [vmem:[#allocation6 + $0x190] sm:$0xff]
    %v1993 = vld [vmem:[#allocation6 + $0x198] sm:$0xff]
    %v1994 = vld [vmem:[#allocation6 + $0x1a0] sm:$0xff]
    %v1995 = vld [vmem:[#allocation6 + $0x1a8] sm:$0xff]
    %v1996 = vld [vmem:[#allocation6 + $0x1b0] sm:$0xff]
    %v1997 = vld [vmem:[#allocation6 + $0x1b8] sm:$0xff]
    %v1998 = vld [vmem:[#allocation6 + $0x1c0] sm:$0xff]
    %v1999 = vld [vmem:[#allocation6 + $0x1c8] sm:$0xff]
    %v2000 = vld [vmem:[#allocation6 + $0x1d0] sm:$0xff]
    %v2001 = vld [vmem:[#allocation6 + $0x1d8] sm:$0xff]
    %v2002 = vld [vmem:[#allocation6 + $0x1e0] sm:$0xff]
    %v2003 = vld [vmem:[#allocation6 + $0x1e8] sm:$0xff]
    %v2004 = vld [vmem:[#allocation6 + $0x1f0] sm:$0xff]
    %v2005 = vld [vmem:[#allocation6 + $0x1f8] sm:$0xff]
    %v2006 = vld [vmem:[%s6] sm:$0xf]
    %v2008 = vlaneseq
    %v2009 = vshrl.u32 %v2008, 7
    %v2010 = vsub.s32 0, %v2009
    %v2011 = vrot.slane %v2006, %v2010
    %v2012 = vlaneseq
    %v2013 = vshrl.u32 %v2012, 7
    %v2014 = vsub.s32 1, %v2013
    %v2015 = vrot.slane %v2006, %v2014
    %v2016 = vlaneseq
    %v2017 = vshrl.u32 %v2016, 7
    %v2018 = vsub.s32 2, %v2017
    %v2019 = vrot.slane %v2006, %v2018
    %v2020 = vlaneseq
    %v2021 = vshrl.u32 %v2020, 7
    %v2022 = vsub.s32 3, %v2021
    %v2023 = vrot.slane %v2006, %v2022
    %2028 = vmatprep.subr.mxu0 %v2003
    %2029 = vmatpush1.msra.mxu0 %v2002
    %2030 = vmatprep.subr.mxu0 %v1999
    %2031 = vmatpush1.msra.mxu0 %v1998
    %2032 = vmatprep.subr.mxu0 %v1995
    %2033 = vmatpush1.msra.mxu0 %v1994
    %2034 = vmatprep.subr.mxu0 %v1991
    %2035 = vmatpush1.msra.mxu0 %v1990
    %2036 = vmatprep.subr.mxu0 %v1987
    %2037 = vmatpush1.msra.mxu0 %v1986
    %2038 = vmatprep.subr.mxu0 %v1983
    %2039 = vmatpush1.msra.mxu0 %v1982
    %2040 = vmatprep.subr.mxu0 %v1979
    %2041 = vmatpush1.msra.mxu0 %v1978
    %2042 = vmatprep.subr.mxu0 %v1975
    %2043 = vmatpush1.msra.mxu0 %v1974
    %2044 = vmatprep.subr.mxu0 %v1971
    %2045 = vmatpush1.msra.mxu0 %v1970
    %2046 = vmatprep.subr.mxu0 %v1967
    %2047 = vmatpush1.msra.mxu0 %v1966
    %2048 = vmatprep.subr.mxu0 %v1963
    %2049 = vmatpush1.msra.mxu0 %v1962
    %2050 = vmatprep.subr.mxu0 %v1959
    %2051 = vmatpush1.msra.mxu0 %v1958
    %2052 = vmatprep.subr.mxu0 %v1955
    %2053 = vmatpush1.msra.mxu0 %v1954
    %2054 = vmatprep.subr.mxu0 %v1951
    %2055 = vmatpush1.msra.mxu0 %v1950
    %2056 = vmatprep.subr.mxu0 %v1947
    %2057 = vmatpush1.msra.mxu0 %v1946
    %2058 = vmatprep.subr.mxu0 %v1943
    %2059 = vmatpush1.msra.mxu0 %v1942
    %2060 = vmatprep.subr.mxu0 0.0
    %2061 = vmatpush2.msra.mxu0 0.0
    %2062 = vmatprep.subr.mxu0 0.0
    %2063 = vmatpush2.msra.mxu0 0.0
    %2064 = vmatprep.subr.mxu0 0.0
    %2065 = vmatpush2.msra.mxu0 0.0
    %2066 = vmatprep.subr.mxu0 0.0
    %2067 = vmatpush2.msra.mxu0 0.0
    %2068 = vmatprep.subr.mxu0 0.0
    %2069 = vmatpush2.msra.mxu0 0.0
    %2070 = vmatprep.subr.mxu0 0.0
    %2071 = vmatpush2.msra.mxu0 0.0
    %2072 = vmatprep.subr.mxu0 0.0
    %2073 = vmatpush2.msra.mxu0 0.0
    %2074 = vmatprep.subr.mxu0 0.0
    %2075 = vmatpush2.msra.mxu0 0.0
    %2076 = vmatprep.subr.mxu0 0.0
    %2077 = vmatpush2.msra.mxu0 0.0
    %2078 = vmatprep.subr.mxu0 0.0
    %2079 = vmatpush2.msra.mxu0 0.0
    %2080 = vmatprep.subr.mxu0 0.0
    %2081 = vmatpush2.msra.mxu0 0.0
    %2082 = vmatprep.subr.mxu0 0.0
    %2083 = vmatpush2.msra.mxu0 0.0
    %2084 = vmatprep.subr.mxu0 0.0
    %2085 = vmatpush2.msra.mxu0 0.0
    %2086 = vmatprep.subr.mxu0 0.0
    %2087 = vmatpush2.msra.mxu0 0.0
    %2088 = vmatprep.subr.mxu0 0.0
    %2089 = vmatpush2.msra.mxu0 0.0
    %2090 = vmatprep.subr.mxu0 0.0
    %2091 = vmatpush2.msra.mxu0 0.0
    %2092 = vmatprep.mubr.f32.mxu0 0.0
    %2093 = vmatmul.mubr.f32.gmra.mxu0 %v1934
    %v2094 = vpop.f32.mrf.mxu0
    %v2095 = vadd.f32 %v2011, %v2094
    %v2096 = vpop.f32.mrf.mxu0
    %v2097 = vadd.f32 %v2015, %v2096
    %2098 = vmatprep.mubr.f32.mxu0 0.0
    %2099 = vmatmul.mubr.f32.gmra.mxu0 %v1935
    %v2100 = vpop.f32.mrf.mxu0
    %v2101 = vadd.f32 %v2011, %v2100
    %v2102 = vpop.f32.mrf.mxu0
    %v2103 = vadd.f32 %v2015, %v2102
    %2104 = vmatprep.mubr.f32.mxu0 0.0
    %2105 = vmatmul.mubr.f32.gmra.mxu0 %v1936
    %v2106 = vpop.f32.mrf.mxu0
    %v2107 = vadd.f32 %v2011, %v2106
    %v2108 = vpop.f32.mrf.mxu0
    %v2109 = vadd.f32 %v2015, %v2108
    %2110 = vmatprep.mubr.f32.mxu0 0.0
    %2111 = vmatmul.mubr.f32.gmra.mxu0 %v1937
    %v2112 = vpop.f32.mrf.mxu0
    %v2113 = vadd.f32 %v2011, %v2112
    %v2114 = vpop.f32.mrf.mxu0
    %v2115 = vadd.f32 %v2015, %v2114
    %2116 = vmatprep.mubr.f32.mxu0 0.0
    %2117 = vmatmul.mubr.f32.gmra.mxu0 %v1938
    %v2118 = vpop.f32.mrf.mxu0
    %v2119 = vadd.f32 %v2011, %v2118
    %v2120 = vpop.f32.mrf.mxu0
    %v2121 = vadd.f32 %v2015, %v2120
    %2122 = vmatprep.mubr.f32.mxu0 0.0
    %2123 = vmatmul.mubr.f32.gmra.mxu0 %v1939
    %v2124 = vpop.f32.mrf.mxu0
    %v2125 = vadd.f32 %v2011, %v2124
    %v2126 = vpop.f32.mrf.mxu0
    %v2127 = vadd.f32 %v2015, %v2126
    %2128 = vmatprep.mubr.f32.mxu0 0.0
    %2129 = vmatmul.mubr.f32.gmra.mxu0 %v1940
    %v2130 = vpop.f32.mrf.mxu0
    %v2131 = vadd.f32 %v2011, %v2130
    %v2132 = vpop.f32.mrf.mxu0
    %v2133 = vadd.f32 %v2015, %v2132
    %2134 = vmatprep.mubr.f32.mxu0 0.0
    %2135 = vmatmul.mubr.f32.gmra.mxu0 %v1941
    %v2136 = vpop.f32.mrf.mxu0
    %v2137 = vadd.f32 %v2011, %v2136
    %v2138 = vpop.f32.mrf.mxu0
    %v2139 = vadd.f32 %v2015, %v2138
    %2140 = vdwg.mxu0
    %2141 = vmatprep.subr.mxu0 %v2005
    %2142 = vmatpush1.msra.mxu0 %v2004
    %2143 = vmatprep.subr.mxu0 %v2001
    %2144 = vmatpush1.msra.mxu0 %v2000
    %2145 = vmatprep.subr.mxu0 %v1997
    %2146 = vmatpush1.msra.mxu0 %v1996
    %2147 = vmatprep.subr.mxu0 %v1993
    %2148 = vmatpush1.msra.mxu0 %v1992
    %2149 = vmatprep.subr.mxu0 %v1989
    %2150 = vmatpush1.msra.mxu0 %v1988
    %2151 = vmatprep.subr.mxu0 %v1985
    %2152 = vmatpush1.msra.mxu0 %v1984
    %2153 = vmatprep.subr.mxu0 %v1981
    %2154 = vmatpush1.msra.mxu0 %v1980
    %2155 = vmatprep.subr.mxu0 %v1977
    %2156 = vmatpush1.msra.mxu0 %v1976
    %2157 = vmatprep.subr.mxu0 %v1973
    %2158 = vmatpush1.msra.mxu0 %v1972
    %2159 = vmatprep.subr.mxu0 %v1969
    %2160 = vmatpush1.msra.mxu0 %v1968
    %2161 = vmatprep.subr.mxu0 %v1965
    %2162 = vmatpush1.msra.mxu0 %v1964
    %2163 = vmatprep.subr.mxu0 %v1961
    %2164 = vmatpush1.msra.mxu0 %v1960
    %2165 = vmatprep.subr.mxu0 %v1957
    %2166 = vmatpush1.msra.mxu0 %v1956
    %2167 = vmatprep.subr.mxu0 %v1953
    %2168 = vmatpush1.msra.mxu0 %v1952
    %2169 = vmatprep.subr.mxu0 %v1949
    %2170 = vmatpush1.msra.mxu0 %v1948
    %2171 = vmatprep.subr.mxu0 %v1945
    %2172 = vmatpush1.msra.mxu0 %v1944
    %2173 = vmatprep.subr.mxu0 0.0
    %2174 = vmatpush2.msra.mxu0 0.0
    %2175 = vmatprep.subr.mxu0 0.0
    %2176 = vmatpush2.msra.mxu0 0.0
    %2177 = vmatprep.subr.mxu0 0.0
    %2178 = vmatpush2.msra.mxu0 0.0
    %2179 = vmatprep.subr.mxu0 0.0
    %2180 = vmatpush2.msra.mxu0 0.0
    %2181 = vmatprep.subr.mxu0 0.0
    %2182 = vmatpush2.msra.mxu0 0.0
    %2183 = vmatprep.subr.mxu0 0.0
    %2184 = vmatpush2.msra.mxu0 0.0
    %2185 = vmatprep.subr.mxu0 0.0
    %2186 = vmatpush2.msra.mxu0 0.0
    %2187 = vmatprep.subr.mxu0 0.0
    %2188 = vmatpush2.msra.mxu0 0.0
    %2189 = vmatprep.subr.mxu0 0.0
    %2190 = vmatpush2.msra.mxu0 0.0
    %2191 = vmatprep.subr.mxu0 0.0
    %2192 = vmatpush2.msra.mxu0 0.0
    %2193 = vmatprep.subr.mxu0 0.0
    %2194 = vmatpush2.msra.mxu0 0.0
    %2195 = vmatprep.subr.mxu0 0.0
    %2196 = vmatpush2.msra.mxu0 0.0
    %2197 = vmatprep.subr.mxu0 0.0
    %2198 = vmatpush2.msra.mxu0 0.0
    %2199 = vmatprep.subr.mxu0 0.0
    %2200 = vmatpush2.msra.mxu0 0.0
    %2201 = vmatprep.subr.mxu0 0.0
    %2202 = vmatpush2.msra.mxu0 0.0
    %2203 = vmatprep.subr.mxu0 0.0
    %2204 = vmatpush2.msra.mxu0 0.0
    %2205 = vmatprep.mubr.f32.mxu0 0.0
    %2206 = vmatmul.mubr.f32.gmra.mxu0 %v1934
    %v2207 = vpop.f32.mrf.mxu0
    %v2208 = vadd.f32 %v2019, %v2207
    %v2209 = vpop.f32.mrf.mxu0
    %v2210 = vadd.f32 %v2023, %v2209
    %2211 = vmatprep.mubr.f32.mxu0 0.0
    %2212 = vmatmul.mubr.f32.gmra.mxu0 %v1935
    %v2213 = vpop.f32.mrf.mxu0
    %v2214 = vadd.f32 %v2019, %v2213
    %v2215 = vpop.f32.mrf.mxu0
    %v2216 = vadd.f32 %v2023, %v2215
    %2217 = vmatprep.mubr.f32.mxu0 0.0
    %2218 = vmatmul.mubr.f32.gmra.mxu0 %v1936
    %v2219 = vpop.f32.mrf.mxu0
    %v2220 = vadd.f32 %v2019, %v2219
    %v2221 = vpop.f32.mrf.mxu0
    %v2222 = vadd.f32 %v2023, %v2221
    %2223 = vmatprep.mubr.f32.mxu0 0.0
    %2224 = vmatmul.mubr.f32.gmra.mxu0 %v1937
    %v2225 = vpop.f32.mrf.mxu0
    %v2226 = vadd.f32 %v2019, %v2225
    %v2227 = vpop.f32.mrf.mxu0
    %v2228 = vadd.f32 %v2023, %v2227
    %2229 = vmatprep.mubr.f32.mxu0 0.0
    %2230 = vmatmul.mubr.f32.gmra.mxu0 %v1938
    %v2231 = vpop.f32.mrf.mxu0
    %v2232 = vadd.f32 %v2019, %v2231
    %v2233 = vpop.f32.mrf.mxu0
    %v2234 = vadd.f32 %v2023, %v2233
    %2235 = vmatprep.mubr.f32.mxu0 0.0
    %2236 = vmatmul.mubr.f32.gmra.mxu0 %v1939
    %v2237 = vpop.f32.mrf.mxu0
    %v2238 = vadd.f32 %v2019, %v2237
    %v2239 = vpop.f32.mrf.mxu0
    %v2240 = vadd.f32 %v2023, %v2239
    %2241 = vmatprep.mubr.f32.mxu0 0.0
    %2242 = vmatmul.mubr.f32.gmra.mxu0 %v1940
    %v2243 = vpop.f32.mrf.mxu0
    %v2244 = vadd.f32 %v2019, %v2243
    %v2245 = vpop.f32.mrf.mxu0
    %v2246 = vadd.f32 %v2023, %v2245
    %2247 = vmatprep.mubr.f32.mxu0 0.0
    %2248 = vmatmul.mubr.f32.gmra.mxu0 %v1941
    %v2249 = vpop.f32.mrf.mxu0
    %v2250 = vadd.f32 %v2019, %v2249
    %v2251 = vpop.f32.mrf.mxu0
    %v2252 = vadd.f32 %v2023, %v2251
    %2253 = vdwg.mxu0
    %2254 = vst [vmem:[#allocation2] sm:$0xff] %v2095
    %2255 = vst [vmem:[#allocation2 + $0x8] sm:$0xff] %v2097
    %2256 = vst [vmem:[#allocation2 + $0x10] sm:$0xff] %v2208
    %2257 = vst [vmem:[#allocation2 + $0x18] sm:$0xff] %v2210
    %2258 = vst [vmem:[#allocation2 + $0x20] sm:$0xff] %v2101
    %2259 = vst [vmem:[#allocation2 + $0x28] sm:$0xff] %v2103
    %2260 = vst [vmem:[#allocation2 + $0x30] sm:$0xff] %v2214
    %2261 = vst [vmem:[#allocation2 + $0x38] sm:$0xff] %v2216
    %2262 = vst [vmem:[#allocation2 + $0x40] sm:$0xff] %v2107
    %2263 = vst [vmem:[#allocation2 + $0x48] sm:$0xff] %v2109
    %2264 = vst [vmem:[#allocation2 + $0x50] sm:$0xff] %v2220
    %2265 = vst [vmem:[#allocation2 + $0x58] sm:$0xff] %v2222
    %2266 = vst [vmem:[#allocation2 + $0x60] sm:$0xff] %v2113
    %2267 = vst [vmem:[#allocation2 + $0x68] sm:$0xff] %v2115
    %2268 = vst [vmem:[#allocation2 + $0x70] sm:$0xff] %v2226
    %2269 = vst [vmem:[#allocation2 + $0x78] sm:$0xff] %v2228
    %2270 = vst [vmem:[#allocation2 + $0x80] sm:$0xff] %v2119
    %2271 = vst [vmem:[#allocation2 + $0x88] sm:$0xff] %v2121
    %2272 = vst [vmem:[#allocation2 + $0x90] sm:$0xff] %v2232
    %2273 = vst [vmem:[#allocation2 + $0x98] sm:$0xff] %v2234
    %2274 = vst [vmem:[#allocation2 + $0xa0] sm:$0xff] %v2125
    %2275 = vst [vmem:[#allocation2 + $0xa8] sm:$0xff] %v2127
    %2276 = vst [vmem:[#allocation2 + $0xb0] sm:$0xff] %v2238
    %2277 = vst [vmem:[#allocation2 + $0xb8] sm:$0xff] %v2240
    %2278 = vst [vmem:[#allocation2 + $0xc0] sm:$0xff] %v2131
    %2279 = vst [vmem:[#allocation2 + $0xc8] sm:$0xff] %v2133
    %2280 = vst [vmem:[#allocation2 + $0xd0] sm:$0xff] %v2244
    %2281 = vst [vmem:[#allocation2 + $0xd8] sm:$0xff] %v2246
    %2282 = vst [vmem:[#allocation2 + $0xe0] sm:$0xff] %v2137
    %2283 = vst [vmem:[#allocation2 + $0xe8] sm:$0xff] %v2139
    %2284 = vst [vmem:[#allocation2 + $0xf0] sm:$0xff] %v2250
    %2285 = vst [vmem:[#allocation2 + $0xf8] sm:$0xff] %v2252
    %v2286 = vld [vmem:[#allocation8] sm:$0xff]
    %v2287 = vld [vmem:[#allocation8 + $0x8] sm:$0xff]
    %v2288 = vld [vmem:[#allocation8 + $0x10] sm:$0xff]
    %v2289 = vld [vmem:[#allocation8 + $0x18] sm:$0xff]
    %v2290 = vld [vmem:[#allocation8 + $0x20] sm:$0xff]
    %v2291 = vld [vmem:[#allocation8 + $0x28] sm:$0xff]
    %v2292 = vld [vmem:[#allocation8 + $0x30] sm:$0xff]
    %v2293 = vld [vmem:[#allocation8 + $0x38] sm:$0xff]
    %v2294 = vld [vmem:[#allocation8 + $0x40] sm:$0xff]
    %v2295 = vld [vmem:[#allocation8 + $0x48] sm:$0xff]
    %v2296 = vld [vmem:[#allocation8 + $0x50] sm:$0xff]
    %v2297 = vld [vmem:[#allocation8 + $0x58] sm:$0xff]
    %v2298 = vld [vmem:[#allocation8 + $0x60] sm:$0xff]
    %v2299 = vld [vmem:[#allocation8 + $0x68] sm:$0xff]
    %v2300 = vld [vmem:[#allocation8 + $0x70] sm:$0xff]
    %v2301 = vld [vmem:[#allocation8 + $0x78] sm:$0xff]
    %v2302 = vld [vmem:[#allocation8 + $0x80] sm:$0xff]
    %v2303 = vld [vmem:[#allocation8 + $0x88] sm:$0xff]
    %v2304 = vld [vmem:[#allocation8 + $0x90] sm:$0xff]
    %v2305 = vld [vmem:[#allocation8 + $0x98] sm:$0xff]
    %v2306 = vld [vmem:[#allocation8 + $0xa0] sm:$0xff]
    %v2307 = vld [vmem:[#allocation8 + $0xa8] sm:$0xff]
    %v2308 = vld [vmem:[#allocation8 + $0xb0] sm:$0xff]
    %v2309 = vld [vmem:[#allocation8 + $0xb8] sm:$0xff]
    %v2310 = vld [vmem:[#allocation8 + $0xc0] sm:$0xff]
    %v2311 = vld [vmem:[#allocation8 + $0xc8] sm:$0xff]
    %v2312 = vld [vmem:[#allocation8 + $0xd0] sm:$0xff]
    %v2313 = vld [vmem:[#allocation8 + $0xd8] sm:$0xff]
    %v2314 = vld [vmem:[#allocation8 + $0xe0] sm:$0xff]
    %v2315 = vld [vmem:[#allocation8 + $0xe8] sm:$0xff]
    %v2316 = vld [vmem:[#allocation8 + $0xf0] sm:$0xff]
    %v2317 = vld [vmem:[#allocation8 + $0xf8] sm:$0xff]
    %v2318 = vld [vmem:[#allocation8 + $0x100] sm:$0xff]
    %v2319 = vld [vmem:[#allocation8 + $0x108] sm:$0xff]
    %v2320 = vld [vmem:[#allocation8 + $0x110] sm:$0xff]
    %v2321 = vld [vmem:[#allocation8 + $0x118] sm:$0xff]
    %v2322 = vld [vmem:[#allocation8 + $0x120] sm:$0xff]
    %v2323 = vld [vmem:[#allocation8 + $0x128] sm:$0xff]
    %v2324 = vld [vmem:[#allocation8 + $0x130] sm:$0xff]
    %v2325 = vld [vmem:[#allocation8 + $0x138] sm:$0xff]
    %v2326 = vld [vmem:[#allocation8 + $0x140] sm:$0xff]
    %v2327 = vld [vmem:[#allocation8 + $0x148] sm:$0xff]
    %v2328 = vld [vmem:[#allocation8 + $0x150] sm:$0xff]
    %v2329 = vld [vmem:[#allocation8 + $0x158] sm:$0xff]
    %v2330 = vld [vmem:[#allocation8 + $0x160] sm:$0xff]
    %v2331 = vld [vmem:[#allocation8 + $0x168] sm:$0xff]
    %v2332 = vld [vmem:[#allocation8 + $0x170] sm:$0xff]
    %v2333 = vld [vmem:[#allocation8 + $0x178] sm:$0xff]
    %v2334 = vld [vmem:[#allocation8 + $0x180] sm:$0xff]
    %v2335 = vld [vmem:[#allocation8 + $0x188] sm:$0xff]
    %v2336 = vld [vmem:[#allocation8 + $0x190] sm:$0xff]
    %v2337 = vld [vmem:[#allocation8 + $0x198] sm:$0xff]
    %v2338 = vld [vmem:[#allocation8 + $0x1a0] sm:$0xff]
    %v2339 = vld [vmem:[#allocation8 + $0x1a8] sm:$0xff]
    %v2340 = vld [vmem:[#allocation8 + $0x1b0] sm:$0xff]
    %v2341 = vld [vmem:[#allocation8 + $0x1b8] sm:$0xff]
    %v2342 = vld [vmem:[#allocation8 + $0x1c0] sm:$0xff]
    %v2343 = vld [vmem:[#allocation8 + $0x1c8] sm:$0xff]
    %v2344 = vld [vmem:[#allocation8 + $0x1d0] sm:$0xff]
    %v2345 = vld [vmem:[#allocation8 + $0x1d8] sm:$0xff]
    %v2346 = vld [vmem:[#allocation8 + $0x1e0] sm:$0xff]
    %v2347 = vld [vmem:[#allocation8 + $0x1e8] sm:$0xff]
    %v2348 = vld [vmem:[#allocation8 + $0x1f0] sm:$0xff]
    %v2349 = vld [vmem:[#allocation8 + $0x1f8] sm:$0xff]
    %v2350 = vld [vmem:[#allocation2] sm:$0xff]
    %v2351 = vld [vmem:[#allocation2 + $0x8] sm:$0xff]
    %v2352 = vld [vmem:[#allocation2 + $0x10] sm:$0xff]
    %v2353 = vld [vmem:[#allocation2 + $0x18] sm:$0xff]
    %2354 = vmatprep.subr.mxu0 %v2347
    %2355 = vmatpush1.msra.mxu0 %v2346
    %2356 = vmatprep.subr.mxu0 %v2343
    %2357 = vmatpush1.msra.mxu0 %v2342
    %2358 = vmatprep.subr.mxu0 %v2339
    %2359 = vmatpush1.msra.mxu0 %v2338
    %2360 = vmatprep.subr.mxu0 %v2335
    %2361 = vmatpush1.msra.mxu0 %v2334
    %2362 = vmatprep.subr.mxu0 %v2331
    %2363 = vmatpush1.msra.mxu0 %v2330
    %2364 = vmatprep.subr.mxu0 %v2327
    %2365 = vmatpush1.msra.mxu0 %v2326
    %2366 = vmatprep.subr.mxu0 %v2323
    %2367 = vmatpush1.msra.mxu0 %v2322
    %2368 = vmatprep.subr.mxu0 %v2319
    %2369 = vmatpush1.msra.mxu0 %v2318
    %2370 = vmatprep.subr.mxu0 %v2315
    %2371 = vmatpush1.msra.mxu0 %v2314
    %2372 = vmatprep.subr.mxu0 %v2311
    %2373 = vmatpush1.msra.mxu0 %v2310
    %2374 = vmatprep.subr.mxu0 %v2307
    %2375 = vmatpush1.msra.mxu0 %v2306
    %2376 = vmatprep.subr.mxu0 %v2303
    %2377 = vmatpush1.msra.mxu0 %v2302
    %2378 = vmatprep.subr.mxu0 %v2299
    %2379 = vmatpush1.msra.mxu0 %v2298
    %2380 = vmatprep.subr.mxu0 %v2295
    %2381 = vmatpush1.msra.mxu0 %v2294
    %2382 = vmatprep.subr.mxu0 %v2291
    %2383 = vmatpush1.msra.mxu0 %v2290
    %2384 = vmatprep.subr.mxu0 %v2287
    %2385 = vmatpush1.msra.mxu0 %v2286
    %2386 = vmatprep.subr.mxu0 0.0
    %2387 = vmatpush2.msra.mxu0 0.0
    %2388 = vmatprep.subr.mxu0 0.0
    %2389 = vmatpush2.msra.mxu0 0.0
    %2390 = vmatprep.subr.mxu0 0.0
    %2391 = vmatpush2.msra.mxu0 0.0
    %2392 = vmatprep.subr.mxu0 0.0
    %2393 = vmatpush2.msra.mxu0 0.0
    %2394 = vmatprep.subr.mxu0 0.0
    %2395 = vmatpush2.msra.mxu0 0.0
    %2396 = vmatprep.subr.mxu0 0.0
    %2397 = vmatpush2.msra.mxu0 0.0
    %2398 = vmatprep.subr.mxu0 0.0
    %2399 = vmatpush2.msra.mxu0 0.0
    %2400 = vmatprep.subr.mxu0 0.0
    %2401 = vmatpush2.msra.mxu0 0.0
    %2402 = vmatprep.subr.mxu0 0.0
    %2403 = vmatpush2.msra.mxu0 0.0
    %2404 = vmatprep.subr.mxu0 0.0
    %2405 = vmatpush2.msra.mxu0 0.0
    %2406 = vmatprep.subr.mxu0 0.0
    %2407 = vmatpush2.msra.mxu0 0.0
    %2408 = vmatprep.subr.mxu0 0.0
    %2409 = vmatpush2.msra.mxu0 0.0
    %2410 = vmatprep.subr.mxu0 0.0
    %2411 = vmatpush2.msra.mxu0 0.0
    %2412 = vmatprep.subr.mxu0 0.0
    %2413 = vmatpush2.msra.mxu0 0.0
    %2414 = vmatprep.subr.mxu0 0.0
    %2415 = vmatpush2.msra.mxu0 0.0
    %2416 = vmatprep.subr.mxu0 0.0
    %2417 = vmatpush2.msra.mxu0 0.0
    %2418 = vmatprep.mubr.f32.mxu0 0.0
    %2419 = vmatmul.mubr.f32.gmra.mxu0 0.0
    %v2420 = vpop.f32.mrf.mxu0
    %v2421 = vadd.f32 0.0, %v2420
    %v2422 = vpop.f32.mrf.mxu0
    %v2423 = vadd.f32 0.0, %v2422
    %2424 = vdwg.mxu0
    %2425 = vmatprep.subr.mxu0 %v2349
    %2426 = vmatpush1.msra.mxu0 %v2348
    %2427 = vmatprep.subr.mxu0 %v2345
    %2428 = vmatpush1.msra.mxu0 %v2344
    %2429 = vmatprep.subr.mxu0 %v2341
    %2430 = vmatpush1.msra.mxu0 %v2340
    %2431 = vmatprep.subr.mxu0 %v2337
    %2432 = vmatpush1.msra.mxu0 %v2336
    %2433 = vmatprep.subr.mxu0 %v2333
    %2434 = vmatpush1.msra.mxu0 %v2332
    %2435 = vmatprep.subr.mxu0 %v2329
    %2436 = vmatpush1.msra.mxu0 %v2328
    %2437 = vmatprep.subr.mxu0 %v2325
    %2438 = vmatpush1.msra.mxu0 %v2324
    %2439 = vmatprep.subr.mxu0 %v2321
    %2440 = vmatpush1.msra.mxu0 %v2320
    %2441 = vmatprep.subr.mxu0 %v2317
    %2442 = vmatpush1.msra.mxu0 %v2316
    %2443 = vmatprep.subr.mxu0 %v2313
    %2444 = vmatpush1.msra.mxu0 %v2312
    %2445 = vmatprep.subr.mxu0 %v2309
    %2446 = vmatpush1.msra.mxu0 %v2308
    %2447 = vmatprep.subr.mxu0 %v2305
    %2448 = vmatpush1.msra.mxu0 %v2304
    %2449 = vmatprep.subr.mxu0 %v2301
    %2450 = vmatpush1.msra.mxu0 %v2300
    %2451 = vmatprep.subr.mxu0 %v2297
    %2452 = vmatpush1.msra.mxu0 %v2296
    %2453 = vmatprep.subr.mxu0 %v2293
    %2454 = vmatpush1.msra.mxu0 %v2292
    %2455 = vmatprep.subr.mxu0 %v2289
    %2456 = vmatpush1.msra.mxu0 %v2288
    %2457 = vmatprep.subr.mxu0 0.0
    %2458 = vmatpush2.msra.mxu0 0.0
    %2459 = vmatprep.subr.mxu0 0.0
    %2460 = vmatpush2.msra.mxu0 0.0
    %2461 = vmatprep.subr.mxu0 0.0
    %2462 = vmatpush2.msra.mxu0 0.0
    %2463 = vmatprep.subr.mxu0 0.0
    %2464 = vmatpush2.msra.mxu0 0.0
    %2465 = vmatprep.subr.mxu0 0.0
    %2466 = vmatpush2.msra.mxu0 0.0
    %2467 = vmatprep.subr.mxu0 0.0
    %2468 = vmatpush2.msra.mxu0 0.0
    %2469 = vmatprep.subr.mxu0 0.0
    %2470 = vmatpush2.msra.mxu0 0.0
    %2471 = vmatprep.subr.mxu0 0.0
    %2472 = vmatpush2.msra.mxu0 0.0
    %2473 = vmatprep.subr.mxu0 0.0
    %2474 = vmatpush2.msra.mxu0 0.0
    %2475 = vmatprep.subr.mxu0 0.0
    %2476 = vmatpush2.msra.mxu0 0.0
    %2477 = vmatprep.subr.mxu0 0.0
    %2478 = vmatpush2.msra.mxu0 0.0
    %2479 = vmatprep.subr.mxu0 0.0
    %2480 = vmatpush2.msra.mxu0 0.0
    %2481 = vmatprep.subr.mxu0 0.0
    %2482 = vmatpush2.msra.mxu0 0.0
    %2483 = vmatprep.subr.mxu0 0.0
    %2484 = vmatpush2.msra.mxu0 0.0
    %2485 = vmatprep.subr.mxu0 0.0
    %2486 = vmatpush2.msra.mxu0 0.0
    %2487 = vmatprep.subr.mxu0 0.0
    %2488 = vmatpush2.msra.mxu0 0.0
    %2489 = vmatprep.mubr.f32.mxu0 0.0
    %2490 = vmatmul.mubr.f32.gmra.mxu0 0.0
    %v2491 = vpop.f32.mrf.mxu0
    %v2492 = vadd.f32 0.0, %v2491
    %v2493 = vpop.f32.mrf.mxu0
    %v2494 = vadd.f32 0.0, %v2493
    %2495 = vdwg.mxu0
    %v2496 = vadd.f32 %v2350, %v2421
    %v2497 = vadd.f32 %v2351, %v2423
    %v2498 = vadd.f32 %v2352, %v2492
    %v2499 = vadd.f32 %v2353, %v2494
    %v2500 = vxor.u32 %v2496, 2147483648
    %v2501 = vxor.u32 %v2497, 2147483648
    %v2502 = vxor.u32 %v2498, 2147483648
    %v2503 = vmul.f32 %v2500, 1.442695
    %v2504 = vpow.pop %v2503
    %v2505 = vmul.f32 %v2501, 1.442695
    %v2506 = vpow.pop %v2505
    %v2507 = vmul.f32 %v2502, 1.442695
    %v2508 = vpow.pop %v2507
    %v2509 = vadd.f32 %v2504, 1.0
    %v2510 = vadd.f32 %v2506, 1.0
    %v2511 = vadd.f32 %v2508, 1.0
    %v2512 = vrcp.pop %v2509
    %v2513 = vmul.f32 1.0, %v2512
    %v2514 = vrcp.pop %v2510
    %v2515 = vmul.f32 1.0, %v2514
    %v2516 = vrcp.pop %v2511
    %v2517 = vmul.f32 1.0, %v2516
    %v2518 = vtanh.pop %v2499
    %v2519 = vmul.f32 %v2515, 0.0
    %v2520 = vmul.f32 %v2513, %v2518
    %v2521 = vadd.f32 %v2519, %v2520
    %v2522 = vtanh.pop %v2521
    %v2523 = vmul.f32 %v2517, %v2522
    %2524 = vst [vmem:[#allocation3] sm:$0xff] %v2523
    %v2525 = vld [vmem:[%s695] sm:$0xff]
    %v2526 = vld [vmem:[%s695 + $0x8] sm:$0xff]
    %v2527 = vld [vmem:[%s695 + $0x10] sm:$0xff]
    %v2528 = vld [vmem:[%s695 + $0x18] sm:$0xff]
    %2529 = vmatprep.subr.mxu0 %v2347
    %2530 = vmatpush1.msra.mxu0 %v2346
    %2531 = vmatprep.subr.mxu0 %v2343
    %2532 = vmatpush1.msra.mxu0 %v2342
    %2533 = vmatprep.subr.mxu0 %v2339
    %2534 = vmatpush1.msra.mxu0 %v2338
    %2535 = vmatprep.subr.mxu0 %v2335
    %2536 = vmatpush1.msra.mxu0 %v2334
    %2537 = vmatprep.subr.mxu0 %v2331
    %2538 = vmatpush1.msra.mxu0 %v2330
    %2539 = vmatprep.subr.mxu0 %v2327
    %2540 = vmatpush1.msra.mxu0 %v2326
    %2541 = vmatprep.subr.mxu0 %v2323
    %2542 = vmatpush1.msra.mxu0 %v2322
    %2543 = vmatprep.subr.mxu0 %v2319
    %2544 = vmatpush1.msra.mxu0 %v2318
    %2545 = vmatprep.subr.mxu0 %v2315
    %2546 = vmatpush1.msra.mxu0 %v2314
    %2547 = vmatprep.subr.mxu0 %v2311
    %2548 = vmatpush1.msra.mxu0 %v2310
    %2549 = vmatprep.subr.mxu0 %v2307
    %2550 = vmatpush1.msra.mxu0 %v2306
    %2551 = vmatprep.subr.mxu0 %v2303
    %2552 = vmatpush1.msra.mxu0 %v2302
    %2553 = vmatprep.subr.mxu0 %v2299
    %2554 = vmatpush1.msra.mxu0 %v2298
    %2555 = vmatprep.subr.mxu0 %v2295
    %2556 = vmatpush1.msra.mxu0 %v2294
    %2557 = vmatprep.subr.mxu0 %v2291
    %2558 = vmatpush1.msra.mxu0 %v2290
    %2559 = vmatprep.subr.mxu0 %v2287
    %2560 = vmatpush1.msra.mxu0 %v2286
    %2561 = vmatprep.subr.mxu0 0.0
    %2562 = vmatpush2.msra.mxu0 0.0
    %2563 = vmatprep.subr.mxu0 0.0
    %2564 = vmatpush2.msra.mxu0 0.0
    %2565 = vmatprep.subr.mxu0 0.0
    %2566 = vmatpush2.msra.mxu0 0.0
    %2567 = vmatprep.subr.mxu0 0.0
    %2568 = vmatpush2.msra.mxu0 0.0
    %2569 = vmatprep.subr.mxu0 0.0
    %2570 = vmatpush2.msra.mxu0 0.0
    %2571 = vmatprep.subr.mxu0 0.0
    %2572 = vmatpush2.msra.mxu0 0.0
    %2573 = vmatprep.subr.mxu0 0.0
    %2574 = vmatpush2.msra.mxu0 0.0
    %2575 = vmatprep.subr.mxu0 0.0
    %2576 = vmatpush2.msra.mxu0 0.0
    %2577 = vmatprep.subr.mxu0 0.0
    %2578 = vmatpush2.msra.mxu0 0.0
    %2579 = vmatprep.subr.mxu0 0.0
    %2580 = vmatpush2.msra.mxu0 0.0
    %2581 = vmatprep.subr.mxu0 0.0
    %2582 = vmatpush2.msra.mxu0 0.0
    %2583 = vmatprep.subr.mxu0 0.0
    %2584 = vmatpush2.msra.mxu0 0.0
    %2585 = vmatprep.subr.mxu0 0.0
    %2586 = vmatpush2.msra.mxu0 0.0
    %2587 = vmatprep.subr.mxu0 0.0
    %2588 = vmatpush2.msra.mxu0 0.0
    %2589 = vmatprep.subr.mxu0 0.0
    %2590 = vmatpush2.msra.mxu0 0.0
    %2591 = vmatprep.subr.mxu0 0.0
    %2592 = vmatpush2.msra.mxu0 0.0
    %2593 = vmatprep.mubr.f32.mxu0 0.0
    %2594 = vmatmul.mubr.f32.gmra.mxu0 %v2523
    %v2595 = vpop.f32.mrf.mxu0
    %v2596 = vadd.f32 0.0, %v2595
    %v2597 = vpop.f32.mrf.mxu0
    %v2598 = vadd.f32 0.0, %v2597
    %2599 = vdwg.mxu0
    %2600 = vmatprep.subr.mxu0 %v2349
    %2601 = vmatpush1.msra.mxu0 %v2348
    %2602 = vmatprep.subr.mxu0 %v2345
    %2603 = vmatpush1.msra.mxu0 %v2344
    %2604 = vmatprep.subr.mxu0 %v2341
    %2605 = vmatpush1.msra.mxu0 %v2340
    %2606 = vmatprep.subr.mxu0 %v2337
    %2607 = vmatpush1.msra.mxu0 %v2336
    %2608 = vmatprep.subr.mxu0 %v2333
    %2609 = vmatpush1.msra.mxu0 %v2332
    %2610 = vmatprep.subr.mxu0 %v2329
    %2611 = vmatpush1.msra.mxu0 %v2328
    %2612 = vmatprep.subr.mxu0 %v2325
    %2613 = vmatpush1.msra.mxu0 %v2324
    %2614 = vmatprep.subr.mxu0 %v2321
    %2615 = vmatpush1.msra.mxu0 %v2320
    %2616 = vmatprep.subr.mxu0 %v2317
    %2617 = vmatpush1.msra.mxu0 %v2316
    %2618 = vmatprep.subr.mxu0 %v2313
    %2619 = vmatpush1.msra.mxu0 %v2312
    %2620 = vmatprep.subr.mxu0 %v2309
    %2621 = vmatpush1.msra.mxu0 %v2308
    %2622 = vmatprep.subr.mxu0 %v2305
    %2623 = vmatpush1.msra.mxu0 %v2304
    %2624 = vmatprep.subr.mxu0 %v2301
    %2625 = vmatpush1.msra.mxu0 %v2300
    %2626 = vmatprep.subr.mxu0 %v2297
    %2627 = vmatpush1.msra.mxu0 %v2296
    %2628 = vmatprep.subr.mxu0 %v2293
    %2629 = vmatpush1.msra.mxu0 %v2292
    %2630 = vmatprep.subr.mxu0 %v2289
    %2631 = vmatpush1.msra.mxu0 %v2288
    %2632 = vmatprep.subr.mxu0 0.0
    %2633 = vmatpush2.msra.mxu0 0.0
    %2634 = vmatprep.subr.mxu0 0.0
    %2635 = vmatpush2.msra.mxu0 0.0
    %2636 = vmatprep.subr.mxu0 0.0
    %2637 = vmatpush2.msra.mxu0 0.0
    %2638 = vmatprep.subr.mxu0 0.0
    %2639 = vmatpush2.msra.mxu0 0.0
    %2640 = vmatprep.subr.mxu0 0.0
    %2641 = vmatpush2.msra.mxu0 0.0
    %2642 = vmatprep.subr.mxu0 0.0
    %2643 = vmatpush2.msra.mxu0 0.0
    %2644 = vmatprep.subr.mxu0 0.0
    %2645 = vmatpush2.msra.mxu0 0.0
    %2646 = vmatprep.subr.mxu0 0.0
    %2647 = vmatpush2.msra.mxu0 0.0
    %2648 = vmatprep.subr.mxu0 0.0
    %2649 = vmatpush2.msra.mxu0 0.0
    %2650 = vmatprep.subr.mxu0 0.0
    %2651 = vmatpush2.msra.mxu0 0.0
    %2652 = vmatprep.subr.mxu0 0.0
    %2653 = vmatpush2.msra.mxu0 0.0
    %2654 = vmatprep.subr.mxu0 0.0
    %2655 = vmatpush2.msra.mxu0 0.0
    %2656 = vmatprep.subr.mxu0 0.0
    %2657 = vmatpush2.msra.mxu0 0.0
    %2658 = vmatprep.subr.mxu0 0.0
    %2659 = vmatpush2.msra.mxu0 0.0
    %2660 = vmatprep.subr.mxu0 0.0
    %2661 = vmatpush2.msra.mxu0 0.0
    %2662 = vmatprep.subr.mxu0 0.0
    %2663 = vmatpush2.msra.mxu0 0.0
    %2664 = vmatprep.mubr.f32.mxu0 0.0
    %2665 = vmatmul.mubr.f32.gmra.mxu0 %v2523
    %v2666 = vpop.f32.mrf.mxu0
    %v2667 = vadd.f32 0.0, %v2666
    %v2668 = vpop.f32.mrf.mxu0
    %v2669 = vadd.f32 0.0, %v2668
    %2670 = vdwg.mxu0
    %v2671 = vadd.f32 %v2525, %v2596
    %v2672 = vadd.f32 %v2526, %v2598
    %v2673 = vadd.f32 %v2527, %v2667
    %v2674 = vadd.f32 %v2528, %v2669
    %v2675 = vxor.u32 %v2671, 2147483648
    %v2676 = vxor.u32 %v2672, 2147483648
    %v2677 = vxor.u32 %v2673, 2147483648
    %v2678 = vmul.f32 %v2675, 1.442695
    %v2679 = vpow.pop %v2678
    %v2680 = vmul.f32 %v2676, 1.442695
    %v2681 = vpow.pop %v2680
    %v2682 = vmul.f32 %v2677, 1.442695
    %v2683 = vpow.pop %v2682
    %v2684 = vadd.f32 %v2679, 1.0
    %v2685 = vadd.f32 %v2681, 1.0
    %v2686 = vadd.f32 %v2683, 1.0
    %v2687 = vrcp.pop %v2684
    %v2688 = vmul.f32 1.0, %v2687
    %v2689 = vrcp.pop %v2685
    %v2690 = vmul.f32 1.0, %v2689
    %v2691 = vrcp.pop %v2686
    %v2692 = vmul.f32 1.0, %v2691
    %v2693 = vtanh.pop %v2674
    %v2694 = vmul.f32 %v2690, %v2521
    %v2695 = vmul.f32 %v2688, %v2693
    %v2696 = vadd.f32 %v2694, %v2695
    %v2697 = vtanh.pop %v2696
    %v2698 = vmul.f32 %v2692, %v2697
    %2699 = vst [vmem:[%s870] sm:$0xff] %v2698
    %v2700 = vld [vmem:[%s872] sm:$0xff]
    %v2701 = vld [vmem:[%s872 + $0x8] sm:$0xff]
    %v2702 = vld [vmem:[%s872 + $0x10] sm:$0xff]
    %v2703 = vld [vmem:[%s872 + $0x18] sm:$0xff]
    %2704 = vmatprep.subr.mxu0 %v2347
    %2705 = vmatpush1.msra.mxu0 %v2346
    %2706 = vmatprep.subr.mxu0 %v2343
    %2707 = vmatpush1.msra.mxu0 %v2342
    %2708 = vmatprep.subr.mxu0 %v2339
    %2709 = vmatpush1.msra.mxu0 %v2338
    %2710 = vmatprep.subr.mxu0 %v2335
    %2711 = vmatpush1.msra.mxu0 %v2334
    %2712 = vmatprep.subr.mxu0 %v2331
    %2713 = vmatpush1.msra.mxu0 %v2330
    %2714 = vmatprep.subr.mxu0 %v2327
    %2715 = vmatpush1.msra.mxu0 %v2326
    %2716 = vmatprep.subr.mxu0 %v2323
    %2717 = vmatpush1.msra.mxu0 %v2322
    %2718 = vmatprep.subr.mxu0 %v2319
    %2719 = vmatpush1.msra.mxu0 %v2318
    %2720 = vmatprep.subr.mxu0 %v2315
    %2721 = vmatpush1.msra.mxu0 %v2314
    %2722 = vmatprep.subr.mxu0 %v2311
    %2723 = vmatpush1.msra.mxu0 %v2310
    %2724 = vmatprep.subr.mxu0 %v2307
    %2725 = vmatpush1.msra.mxu0 %v2306
    %2726 = vmatprep.subr.mxu0 %v2303
    %2727 = vmatpush1.msra.mxu0 %v2302
    %2728 = vmatprep.subr.mxu0 %v2299
    %2729 = vmatpush1.msra.mxu0 %v2298
    %2730 = vmatprep.subr.mxu0 %v2295
    %2731 = vmatpush1.msra.mxu0 %v2294
    %2732 = vmatprep.subr.mxu0 %v2291
    %2733 = vmatpush1.msra.mxu0 %v2290
    %2734 = vmatprep.subr.mxu0 %v2287
    %2735 = vmatpush1.msra.mxu0 %v2286
    %2736 = vmatprep.subr.mxu0 0.0
    %2737 = vmatpush2.msra.mxu0 0.0
    %2738 = vmatprep.subr.mxu0 0.0
    %2739 = vmatpush2.msra.mxu0 0.0
    %2740 = vmatprep.subr.mxu0 0.0
    %2741 = vmatpush2.msra.mxu0 0.0
    %2742 = vmatprep.subr.mxu0 0.0
    %2743 = vmatpush2.msra.mxu0 0.0
    %2744 = vmatprep.subr.mxu0 0.0
    %2745 = vmatpush2.msra.mxu0 0.0
    %2746 = vmatprep.subr.mxu0 0.0
    %2747 = vmatpush2.msra.mxu0 0.0
    %2748 = vmatprep.subr.mxu0 0.0
    %2749 = vmatpush2.msra.mxu0 0.0
    %2750 = vmatprep.subr.mxu0 0.0
    %2751 = vmatpush2.msra.mxu0 0.0
    %2752 = vmatprep.subr.mxu0 0.0
    %2753 = vmatpush2.msra.mxu0 0.0
    %2754 = vmatprep.subr.mxu0 0.0
    %2755 = vmatpush2.msra.mxu0 0.0
    %2756 = vmatprep.subr.mxu0 0.0
    %2757 = vmatpush2.msra.mxu0 0.0
    %2758 = vmatprep.subr.mxu0 0.0
    %2759 = vmatpush2.msra.mxu0 0.0
    %2760 = vmatprep.subr.mxu0 0.0
    %2761 = vmatpush2.msra.mxu0 0.0
    %2762 = vmatprep.subr.mxu0 0.0
    %2763 = vmatpush2.msra.mxu0 0.0
    %2764 = vmatprep.subr.mxu0 0.0
    %2765 = vmatpush2.msra.mxu0 0.0
    %2766 = vmatprep.subr.mxu0 0.0
    %2767 = vmatpush2.msra.mxu0 0.0
    %2768 = vmatprep.mubr.f32.mxu0 0.0
    %2769 = vmatmul.mubr.f32.gmra.mxu0 %v2698
    %v2770 = vpop.f32.mrf.mxu0
    %v2771 = vadd.f32 0.0, %v2770
    %v2772 = vpop.f32.mrf.mxu0
    %v2773 = vadd.f32 0.0, %v2772
    %2774 = vdwg.mxu0
    %2775 = vmatprep.subr.mxu0 %v2349
    %2776 = vmatpush1.msra.mxu0 %v2348
    %2777 = vmatprep.subr.mxu0 %v2345
    %2778 = vmatpush1.msra.mxu0 %v2344
    %2779 = vmatprep.subr.mxu0 %v2341
    %2780 = vmatpush1.msra.mxu0 %v2340
    %2781 = vmatprep.subr.mxu0 %v2337
    %2782 = vmatpush1.msra.mxu0 %v2336
    %2783 = vmatprep.subr.mxu0 %v2333
    %2784 = vmatpush1.msra.mxu0 %v2332
    %2785 = vmatprep.subr.mxu0 %v2329
    %2786 = vmatpush1.msra.mxu0 %v2328
    %2787 = vmatprep.subr.mxu0 %v2325
    %2788 = vmatpush1.msra.mxu0 %v2324
    %2789 = vmatprep.subr.mxu0 %v2321
    %2790 = vmatpush1.msra.mxu0 %v2320
    %2791 = vmatprep.subr.mxu0 %v2317
    %2792 = vmatpush1.msra.mxu0 %v2316
    %2793 = vmatprep.subr.mxu0 %v2313
    %2794 = vmatpush1.msra.mxu0 %v2312
    %2795 = vmatprep.subr.mxu0 %v2309
    %2796 = vmatpush1.msra.mxu0 %v2308
    %2797 = vmatprep.subr.mxu0 %v2305
    %2798 = vmatpush1.msra.mxu0 %v2304
    %2799 = vmatprep.subr.mxu0 %v2301
    %2800 = vmatpush1.msra.mxu0 %v2300
    %2801 = vmatprep.subr.mxu0 %v2297
    %2802 = vmatpush1.msra.mxu0 %v2296
    %2803 = vmatprep.subr.mxu0 %v2293
    %2804 = vmatpush1.msra.mxu0 %v2292
    %2805 = vmatprep.subr.mxu0 %v2289
    %2806 = vmatpush1.msra.mxu0 %v2288
    %2807 = vmatprep.subr.mxu0 0.0
    %2808 = vmatpush2.msra.mxu0 0.0
    %2809 = vmatprep.subr.mxu0 0.0
    %2810 = vmatpush2.msra.mxu0 0.0
    %2811 = vmatprep.subr.mxu0 0.0
    %2812 = vmatpush2.msra.mxu0 0.0
    %2813 = vmatprep.subr.mxu0 0.0
    %2814 = vmatpush2.msra.mxu0 0.0
    %2815 = vmatprep.subr.mxu0 0.0
    %2816 = vmatpush2.msra.mxu0 0.0
    %2817 = vmatprep.subr.mxu0 0.0
    %2818 = vmatpush2.msra.mxu0 0.0
    %2819 = vmatprep.subr.mxu0 0.0
    %2820 = vmatpush2.msra.mxu0 0.0
    %2821 = vmatprep.subr.mxu0 0.0
    %2822 = vmatpush2.msra.mxu0 0.0
    %2823 = vmatprep.subr.mxu0 0.0
    %2824 = vmatpush2.msra.mxu0 0.0
    %2825 = vmatprep.subr.mxu0 0.0
    %2826 = vmatpush2.msra.mxu0 0.0
    %2827 = vmatprep.subr.mxu0 0.0
    %2828 = vmatpush2.msra.mxu0 0.0
    %2829 = vmatprep.subr.mxu0 0.0
    %2830 = vmatpush2.msra.mxu0 0.0
    %2831 = vmatprep.subr.mxu0 0.0
    %2832 = vmatpush2.msra.mxu0 0.0
    %2833 = vmatprep.subr.mxu0 0.0
    %2834 = vmatpush2.msra.mxu0 0.0
    %2835 = vmatprep.subr.mxu0 0.0
    %2836 = vmatpush2.msra.mxu0 0.0
    %2837 = vmatprep.subr.mxu0 0.0
    %2838 = vmatpush2.msra.mxu0 0.0
    %2839 = vmatprep.mubr.f32.mxu0 0.0
    %2840 = vmatmul.mubr.f32.gmra.mxu0 %v2698
    %v2841 = vpop.f32.mrf.mxu0
    %v2842 = vadd.f32 0.0, %v2841
    %v2843 = vpop.f32.mrf.mxu0
    %v2844 = vadd.f32 0.0, %v2843
    %2845 = vdwg.mxu0
    %v2846 = vadd.f32 %v2700, %v2771
    %v2847 = vadd.f32 %v2701, %v2773
    %v2848 = vadd.f32 %v2702, %v2842
    %v2849 = vadd.f32 %v2703, %v2844
    %v2850 = vxor.u32 %v2846, 2147483648
    %v2851 = vxor.u32 %v2847, 2147483648
    %v2852 = vxor.u32 %v2848, 2147483648
    %v2853 = vmul.f32 %v2850, 1.442695
    %v2854 = vpow.pop %v2853
    %v2855 = vmul.f32 %v2851, 1.442695
    %v2856 = vpow.pop %v2855
    %v2857 = vmul.f32 %v2852, 1.442695
    %v2858 = vpow.pop %v2857
    %v2859 = vadd.f32 %v2854, 1.0
    %v2860 = vadd.f32 %v2856, 1.0
    %v2861 = vadd.f32 %v2858, 1.0
    %v2862 = vrcp.pop %v2859
    %v2863 = vmul.f32 1.0, %v2862
    %v2864 = vrcp.pop %v2860
    %v2865 = vmul.f32 1.0, %v2864
    %v2866 = vrcp.pop %v2861
    %v2867 = vmul.f32 1.0, %v2866
    %v2868 = vtanh.pop %v2849
    %v2869 = vmul.f32 %v2865, %v2696
    %v2870 = vmul.f32 %v2863, %v2868
    %v2871 = vadd.f32 %v2869, %v2870
    %v2872 = vtanh.pop %v2871
    %v2873 = vmul.f32 %v2867, %v2872
    %2874 = vst [vmem:[%s1047] sm:$0xff] %v2873
    %v2875 = vld [vmem:[%s1049] sm:$0xff]
    %v2876 = vld [vmem:[%s1049 + $0x8] sm:$0xff]
    %v2877 = vld [vmem:[%s1049 + $0x10] sm:$0xff]
    %v2878 = vld [vmem:[%s1049 + $0x18] sm:$0xff]
    %2879 = vmatprep.subr.mxu0 %v2347
    %2880 = vmatpush1.msra.mxu0 %v2346
    %2881 = vmatprep.subr.mxu0 %v2343
    %2882 = vmatpush1.msra.mxu0 %v2342
    %2883 = vmatprep.subr.mxu0 %v2339
    %2884 = vmatpush1.msra.mxu0 %v2338
    %2885 = vmatprep.subr.mxu0 %v2335
    %2886 = vmatpush1.msra.mxu0 %v2334
    %2887 = vmatprep.subr.mxu0 %v2331
    %2888 = vmatpush1.msra.mxu0 %v2330
    %2889 = vmatprep.subr.mxu0 %v2327
    %2890 = vmatpush1.msra.mxu0 %v2326
    %2891 = vmatprep.subr.mxu0 %v2323
    %2892 = vmatpush1.msra.mxu0 %v2322
    %2893 = vmatprep.subr.mxu0 %v2319
    %2894 = vmatpush1.msra.mxu0 %v2318
    %2895 = vmatprep.subr.mxu0 %v2315
    %2896 = vmatpush1.msra.mxu0 %v2314
    %2897 = vmatprep.subr.mxu0 %v2311
    %2898 = vmatpush1.msra.mxu0 %v2310
    %2899 = vmatprep.subr.mxu0 %v2307
    %2900 = vmatpush1.msra.mxu0 %v2306
    %2901 = vmatprep.subr.mxu0 %v2303
    %2902 = vmatpush1.msra.mxu0 %v2302
    %2903 = vmatprep.subr.mxu0 %v2299
    %2904 = vmatpush1.msra.mxu0 %v2298
    %2905 = vmatprep.subr.mxu0 %v2295
    %2906 = vmatpush1.msra.mxu0 %v2294
    %2907 = vmatprep.subr.mxu0 %v2291
    %2908 = vmatpush1.msra.mxu0 %v2290
    %2909 = vmatprep.subr.mxu0 %v2287
    %2910 = vmatpush1.msra.mxu0 %v2286
    %2911 = vmatprep.subr.mxu0 0.0
    %2912 = vmatpush2.msra.mxu0 0.0
    %2913 = vmatprep.subr.mxu0 0.0
    %2914 = vmatpush2.msra.mxu0 0.0
    %2915 = vmatprep.subr.mxu0 0.0
    %2916 = vmatpush2.msra.mxu0 0.0
    %2917 = vmatprep.subr.mxu0 0.0
    %2918 = vmatpush2.msra.mxu0 0.0
    %2919 = vmatprep.subr.mxu0 0.0
    %2920 = vmatpush2.msra.mxu0 0.0
    %2921 = vmatprep.subr.mxu0 0.0
    %2922 = vmatpush2.msra.mxu0 0.0
    %2923 = vmatprep.subr.mxu0 0.0
    %2924 = vmatpush2.msra.mxu0 0.0
    %2925 = vmatprep.subr.mxu0 0.0
    %2926 = vmatpush2.msra.mxu0 0.0
    %2927 = vmatprep.subr.mxu0 0.0
    %2928 = vmatpush2.msra.mxu0 0.0
    %2929 = vmatprep.subr.mxu0 0.0
    %2930 = vmatpush2.msra.mxu0 0.0
    %2931 = vmatprep.subr.mxu0 0.0
    %2932 = vmatpush2.msra.mxu0 0.0
    %2933 = vmatprep.subr.mxu0 0.0
    %2934 = vmatpush2.msra.mxu0 0.0
    %2935 = vmatprep.subr.mxu0 0.0
    %2936 = vmatpush2.msra.mxu0 0.0
    %2937 = vmatprep.subr.mxu0 0.0
    %2938 = vmatpush2.msra.mxu0 0.0
    %2939 = vmatprep.subr.mxu0 0.0
    %2940 = vmatpush2.msra.mxu0 0.0
    %2941 = vmatprep.subr.mxu0 0.0
    %2942 = vmatpush2.msra.mxu0 0.0
    %2943 = vmatprep.mubr.f32.mxu0 0.0
    %2944 = vmatmul.mubr.f32.gmra.mxu0 %v2873
    %v2945 = vpop.f32.mrf.mxu0
    %v2946 = vadd.f32 0.0, %v2945
    %v2947 = vpop.f32.mrf.mxu0
    %v2948 = vadd.f32 0.0, %v2947
    %2949 = vdwg.mxu0
    %2950 = vmatprep.subr.mxu0 %v2349
    %2951 = vmatpush1.msra.mxu0 %v2348
    %2952 = vmatprep.subr.mxu0 %v2345
    %2953 = vmatpush1.msra.mxu0 %v2344
    %2954 = vmatprep.subr.mxu0 %v2341
    %2955 = vmatpush1.msra.mxu0 %v2340
    %2956 = vmatprep.subr.mxu0 %v2337
    %2957 = vmatpush1.msra.mxu0 %v2336
    %2958 = vmatprep.subr.mxu0 %v2333
    %2959 = vmatpush1.msra.mxu0 %v2332
    %2960 = vmatprep.subr.mxu0 %v2329
    %2961 = vmatpush1.msra.mxu0 %v2328
    %2962 = vmatprep.subr.mxu0 %v2325
    %2963 = vmatpush1.msra.mxu0 %v2324
    %2964 = vmatprep.subr.mxu0 %v2321
    %2965 = vmatpush1.msra.mxu0 %v2320
    %2966 = vmatprep.subr.mxu0 %v2317
    %2967 = vmatpush1.msra.mxu0 %v2316
    %2968 = vmatprep.subr.mxu0 %v2313
    %2969 = vmatpush1.msra.mxu0 %v2312
    %2970 = vmatprep.subr.mxu0 %v2309
    %2971 = vmatpush1.msra.mxu0 %v2308
    %2972 = vmatprep.subr.mxu0 %v2305
    %2973 = vmatpush1.msra.mxu0 %v2304
    %2974 = vmatprep.subr.mxu0 %v2301
    %2975 = vmatpush1.msra.mxu0 %v2300
    %2976 = vmatprep.subr.mxu0 %v2297
    %2977 = vmatpush1.msra.mxu0 %v2296
    %2978 = vmatprep.subr.mxu0 %v2293
    %2979 = vmatpush1.msra.mxu0 %v2292
    %2980 = vmatprep.subr.mxu0 %v2289
    %2981 = vmatpush1.msra.mxu0 %v2288
    %2982 = vmatprep.subr.mxu0 0.0
    %2983 = vmatpush2.msra.mxu0 0.0
    %2984 = vmatprep.subr.mxu0 0.0
    %2985 = vmatpush2.msra.mxu0 0.0
    %2986 = vmatprep.subr.mxu0 0.0
    %2987 = vmatpush2.msra.mxu0 0.0
    %2988 = vmatprep.subr.mxu0 0.0
    %2989 = vmatpush2.msra.mxu0 0.0
    %2990 = vmatprep.subr.mxu0 0.0
    %2991 = vmatpush2.msra.mxu0 0.0
    %2992 = vmatprep.subr.mxu0 0.0
    %2993 = vmatpush2.msra.mxu0 0.0
    %2994 = vmatprep.subr.mxu0 0.0
    %2995 = vmatpush2.msra.mxu0 0.0
    %2996 = vmatprep.subr.mxu0 0.0
    %2997 = vmatpush2.msra.mxu0 0.0
    %2998 = vmatprep.subr.mxu0 0.0
    %2999 = vmatpush2.msra.mxu0 0.0
    %3000 = vmatprep.subr.mxu0 0.0
    %3001 = vmatpush2.msra.mxu0 0.0
    %3002 = vmatprep.subr.mxu0 0.0
    %3003 = vmatpush2.msra.mxu0 0.0
    %3004 = vmatprep.subr.mxu0 0.0
    %3005 = vmatpush2.msra.mxu0 0.0
    %3006 = vmatprep.subr.mxu0 0.0
    %3007 = vmatpush2.msra.mxu0 0.0
    %3008 = vmatprep.subr.mxu0 0.0
    %3009 = vmatpush2.msra.mxu0 0.0
    %3010 = vmatprep.subr.mxu0 0.0
    %3011 = vmatpush2.msra.mxu0 0.0
    %3012 = vmatprep.subr.mxu0 0.0
    %3013 = vmatpush2.msra.mxu0 0.0
    %3014 = vmatprep.mubr.f32.mxu0 0.0
    %3015 = vmatmul.mubr.f32.gmra.mxu0 %v2873
    %v3016 = vpop.f32.mrf.mxu0
    %v3017 = vadd.f32 0.0, %v3016
    %v3018 = vpop.f32.mrf.mxu0
    %v3019 = vadd.f32 0.0, %v3018
    %3020 = vdwg.mxu0
    %v3021 = vadd.f32 %v2875, %v2946
    %v3022 = vadd.f32 %v2876, %v2948
    %v3023 = vadd.f32 %v2877, %v3017
    %v3024 = vadd.f32 %v2878, %v3019
    %v3025 = vxor.u32 %v3021, 2147483648
    %v3026 = vxor.u32 %v3022, 2147483648
    %v3027 = vxor.u32 %v3023, 2147483648
    %v3028 = vmul.f32 %v3025, 1.442695
    %v3029 = vpow.pop %v3028
    %v3030 = vmul.f32 %v3026, 1.442695
    %v3031 = vpow.pop %v3030
    %v3032 = vmul.f32 %v3027, 1.442695
    %v3033 = vpow.pop %v3032
    %v3034 = vadd.f32 %v3029, 1.0
    %v3035 = vadd.f32 %v3031, 1.0
    %v3036 = vadd.f32 %v3033, 1.0
    %v3037 = vrcp.pop %v3034
    %v3038 = vmul.f32 1.0, %v3037
    %v3039 = vrcp.pop %v3035
    %v3040 = vmul.f32 1.0, %v3039
    %v3041 = vrcp.pop %v3036
    %v3042 = vmul.f32 1.0, %v3041
    %v3043 = vtanh.pop %v3024
    %v3044 = vmul.f32 %v3040, %v2871
    %v3045 = vmul.f32 %v3038, %v3043
    %v3046 = vadd.f32 %v3044, %v3045
    %v3047 = vtanh.pop %v3046
    %v3048 = vmul.f32 %v3042, %v3047
    %3049 = vst [vmem:[%s1224] sm:$0xff] %v3048
    %v3050 = vld [vmem:[%s1226] sm:$0xff]
    %v3051 = vld [vmem:[%s1226 + $0x8] sm:$0xff]
    %v3052 = vld [vmem:[%s1226 + $0x10] sm:$0xff]
    %v3053 = vld [vmem:[%s1226 + $0x18] sm:$0xff]
    %3054 = vmatprep.subr.mxu0 %v2347
    %3055 = vmatpush1.msra.mxu0 %v2346
    %3056 = vmatprep.subr.mxu0 %v2343
    %3057 = vmatpush1.msra.mxu0 %v2342
    %3058 = vmatprep.subr.mxu0 %v2339
    %3059 = vmatpush1.msra.mxu0 %v2338
    %3060 = vmatprep.subr.mxu0 %v2335
    %3061 = vmatpush1.msra.mxu0 %v2334
    %3062 = vmatprep.subr.mxu0 %v2331
    %3063 = vmatpush1.msra.mxu0 %v2330
    %3064 = vmatprep.subr.mxu0 %v2327
    %3065 = vmatpush1.msra.mxu0 %v2326
    %3066 = vmatprep.subr.mxu0 %v2323
    %3067 = vmatpush1.msra.mxu0 %v2322
    %3068 = vmatprep.subr.mxu0 %v2319
    %3069 = vmatpush1.msra.mxu0 %v2318
    %3070 = vmatprep.subr.mxu0 %v2315
    %3071 = vmatpush1.msra.mxu0 %v2314
    %3072 = vmatprep.subr.mxu0 %v2311
    %3073 = vmatpush1.msra.mxu0 %v2310
    %3074 = vmatprep.subr.mxu0 %v2307
    %3075 = vmatpush1.msra.mxu0 %v2306
    %3076 = vmatprep.subr.mxu0 %v2303
    %3077 = vmatpush1.msra.mxu0 %v2302
    %3078 = vmatprep.subr.mxu0 %v2299
    %3079 = vmatpush1.msra.mxu0 %v2298
    %3080 = vmatprep.subr.mxu0 %v2295
    %3081 = vmatpush1.msra.mxu0 %v2294
    %3082 = vmatprep.subr.mxu0 %v2291
    %3083 = vmatpush1.msra.mxu0 %v2290
    %3084 = vmatprep.subr.mxu0 %v2287
    %3085 = vmatpush1.msra.mxu0 %v2286
    %3086 = vmatprep.subr.mxu0 0.0
    %3087 = vmatpush2.msra.mxu0 0.0
    %3088 = vmatprep.subr.mxu0 0.0
    %3089 = vmatpush2.msra.mxu0 0.0
    %3090 = vmatprep.subr.mxu0 0.0
    %3091 = vmatpush2.msra.mxu0 0.0
    %3092 = vmatprep.subr.mxu0 0.0
    %3093 = vmatpush2.msra.mxu0 0.0
    %3094 = vmatprep.subr.mxu0 0.0
    %3095 = vmatpush2.msra.mxu0 0.0
    %3096 = vmatprep.subr.mxu0 0.0
    %3097 = vmatpush2.msra.mxu0 0.0
    %3098 = vmatprep.subr.mxu0 0.0
    %3099 = vmatpush2.msra.mxu0 0.0
    %3100 = vmatprep.subr.mxu0 0.0
    %3101 = vmatpush2.msra.mxu0 0.0
    %3102 = vmatprep.subr.mxu0 0.0
    %3103 = vmatpush2.msra.mxu0 0.0
    %3104 = vmatprep.subr.mxu0 0.0
    %3105 = vmatpush2.msra.mxu0 0.0
    %3106 = vmatprep.subr.mxu0 0.0
    %3107 = vmatpush2.msra.mxu0 0.0
    %3108 = vmatprep.subr.mxu0 0.0
    %3109 = vmatpush2.msra.mxu0 0.0
    %3110 = vmatprep.subr.mxu0 0.0
    %3111 = vmatpush2.msra.mxu0 0.0
    %3112 = vmatprep.subr.mxu0 0.0
    %3113 = vmatpush2.msra.mxu0 0.0
    %3114 = vmatprep.subr.mxu0 0.0
    %3115 = vmatpush2.msra.mxu0 0.0
    %3116 = vmatprep.subr.mxu0 0.0
    %3117 = vmatpush2.msra.mxu0 0.0
    %3118 = vmatprep.mubr.f32.mxu0 0.0
    %3119 = vmatmul.mubr.f32.gmra.mxu0 %v3048
    %v3120 = vpop.f32.mrf.mxu0
    %v3121 = vadd.f32 0.0, %v3120
    %v3122 = vpop.f32.mrf.mxu0
    %v3123 = vadd.f32 0.0, %v3122
    %3124 = vdwg.mxu0
    %3125 = vmatprep.subr.mxu0 %v2349
    %3126 = vmatpush1.msra.mxu0 %v2348
    %3127 = vmatprep.subr.mxu0 %v2345
    %3128 = vmatpush1.msra.mxu0 %v2344
    %3129 = vmatprep.subr.mxu0 %v2341
    %3130 = vmatpush1.msra.mxu0 %v2340
    %3131 = vmatprep.subr.mxu0 %v2337
    %3132 = vmatpush1.msra.mxu0 %v2336
    %3133 = vmatprep.subr.mxu0 %v2333
    %3134 = vmatpush1.msra.mxu0 %v2332
    %3135 = vmatprep.subr.mxu0 %v2329
    %3136 = vmatpush1.msra.mxu0 %v2328
    %3137 = vmatprep.subr.mxu0 %v2325
    %3138 = vmatpush1.msra.mxu0 %v2324
    %3139 = vmatprep.subr.mxu0 %v2321
    %3140 = vmatpush1.msra.mxu0 %v2320
    %3141 = vmatprep.subr.mxu0 %v2317
    %3142 = vmatpush1.msra.mxu0 %v2316
    %3143 = vmatprep.subr.mxu0 %v2313
    %3144 = vmatpush1.msra.mxu0 %v2312
    %3145 = vmatprep.subr.mxu0 %v2309
    %3146 = vmatpush1.msra.mxu0 %v2308
    %3147 = vmatprep.subr.mxu0 %v2305
    %3148 = vmatpush1.msra.mxu0 %v2304
    %3149 = vmatprep.subr.mxu0 %v2301
    %3150 = vmatpush1.msra.mxu0 %v2300
    %3151 = vmatprep.subr.mxu0 %v2297
    %3152 = vmatpush1.msra.mxu0 %v2296
    %3153 = vmatprep.subr.mxu0 %v2293
    %3154 = vmatpush1.msra.mxu0 %v2292
    %3155 = vmatprep.subr.mxu0 %v2289
    %3156 = vmatpush1.msra.mxu0 %v2288
    %3157 = vmatprep.subr.mxu0 0.0
    %3158 = vmatpush2.msra.mxu0 0.0
    %3159 = vmatprep.subr.mxu0 0.0
    %3160 = vmatpush2.msra.mxu0 0.0
    %3161 = vmatprep.subr.mxu0 0.0
    %3162 = vmatpush2.msra.mxu0 0.0
    %3163 = vmatprep.subr.mxu0 0.0
    %3164 = vmatpush2.msra.mxu0 0.0
    %3165 = vmatprep.subr.mxu0 0.0
    %3166 = vmatpush2.msra.mxu0 0.0
    %3167 = vmatprep.subr.mxu0 0.0
    %3168 = vmatpush2.msra.mxu0 0.0
    %3169 = vmatprep.subr.mxu0 0.0
    %3170 = vmatpush2.msra.mxu0 0.0
    %3171 = vmatprep.subr.mxu0 0.0
    %3172 = vmatpush2.msra.mxu0 0.0
    %3173 = vmatprep.subr.mxu0 0.0
    %3174 = vmatpush2.msra.mxu0 0.0
    %3175 = vmatprep.subr.mxu0 0.0
    %3176 = vmatpush2.msra.mxu0 0.0
    %3177 = vmatprep.subr.mxu0 0.0
    %3178 = vmatpush2.msra.mxu0 0.0
    %3179 = vmatprep.subr.mxu0 0.0
    %3180 = vmatpush2.msra.mxu0 0.0
    %3181 = vmatprep.subr.mxu0 0.0
    %3182 = vmatpush2.msra.mxu0 0.0
    %3183 = vmatprep.subr.mxu0 0.0
    %3184 = vmatpush2.msra.mxu0 0.0
    %3185 = vmatprep.subr.mxu0 0.0
    %3186 = vmatpush2.msra.mxu0 0.0
    %3187 = vmatprep.subr.mxu0 0.0
    %3188 = vmatpush2.msra.mxu0 0.0
    %3189 = vmatprep.mubr.f32.mxu0 0.0
    %3190 = vmatmul.mubr.f32.gmra.mxu0 %v3048
    %v3191 = vpop.f32.mrf.mxu0
    %v3192 = vadd.f32 0.0, %v3191
    %v3193 = vpop.f32.mrf.mxu0
    %v3194 = vadd.f32 0.0, %v3193
    %3195 = vdwg.mxu0
    %v3196 = vadd.f32 %v3050, %v3121
    %v3197 = vadd.f32 %v3051, %v3123
    %v3198 = vadd.f32 %v3052, %v3192
    %v3199 = vadd.f32 %v3053, %v3194
    %v3200 = vxor.u32 %v3196, 2147483648
    %v3201 = vxor.u32 %v3197, 2147483648
    %v3202 = vxor.u32 %v3198, 2147483648
    %v3203 = vmul.f32 %v3200, 1.442695
    %v3204 = vpow.pop %v3203
    %v3205 = vmul.f32 %v3201, 1.442695
    %v3206 = vpow.pop %v3205
    %v3207 = vmul.f32 %v3202, 1.442695
    %v3208 = vpow.pop %v3207
    %v3209 = vadd.f32 %v3204, 1.0
    %v3210 = vadd.f32 %v3206, 1.0
    %v3211 = vadd.f32 %v3208, 1.0
    %v3212 = vrcp.pop %v3209
    %v3213 = vmul.f32 1.0, %v3212
    %v3214 = vrcp.pop %v3210
    %v3215 = vmul.f32 1.0, %v3214
    %v3216 = vrcp.pop %v3211
    %v3217 = vmul.f32 1.0, %v3216
    %v3218 = vtanh.pop %v3199
    %v3219 = vmul.f32 %v3215, %v3046
    %v3220 = vmul.f32 %v3213, %v3218
    %v3221 = vadd.f32 %v3219, %v3220
    %v3222 = vtanh.pop %v3221
    %v3223 = vmul.f32 %v3217, %v3222
    %3224 = vst [vmem:[%s1401] sm:$0xff] %v3223
    %v3225 = vld [vmem:[%s1403] sm:$0xff]
    %v3226 = vld [vmem:[%s1403 + $0x8] sm:$0xff]
    %v3227 = vld [vmem:[%s1403 + $0x10] sm:$0xff]
    %v3228 = vld [vmem:[%s1403 + $0x18] sm:$0xff]
    %3229 = vmatprep.subr.mxu0 %v2347
    %3230 = vmatpush1.msra.mxu0 %v2346
    %3231 = vmatprep.subr.mxu0 %v2343
    %3232 = vmatpush1.msra.mxu0 %v2342
    %3233 = vmatprep.subr.mxu0 %v2339
    %3234 = vmatpush1.msra.mxu0 %v2338
    %3235 = vmatprep.subr.mxu0 %v2335
    %3236 = vmatpush1.msra.mxu0 %v2334
    %3237 = vmatprep.subr.mxu0 %v2331
    %3238 = vmatpush1.msra.mxu0 %v2330
    %3239 = vmatprep.subr.mxu0 %v2327
    %3240 = vmatpush1.msra.mxu0 %v2326
    %3241 = vmatprep.subr.mxu0 %v2323
    %3242 = vmatpush1.msra.mxu0 %v2322
    %3243 = vmatprep.subr.mxu0 %v2319
    %3244 = vmatpush1.msra.mxu0 %v2318
    %3245 = vmatprep.subr.mxu0 %v2315
    %3246 = vmatpush1.msra.mxu0 %v2314
    %3247 = vmatprep.subr.mxu0 %v2311
    %3248 = vmatpush1.msra.mxu0 %v2310
    %3249 = vmatprep.subr.mxu0 %v2307
    %3250 = vmatpush1.msra.mxu0 %v2306
    %3251 = vmatprep.subr.mxu0 %v2303
    %3252 = vmatpush1.msra.mxu0 %v2302
    %3253 = vmatprep.subr.mxu0 %v2299
    %3254 = vmatpush1.msra.mxu0 %v2298
    %3255 = vmatprep.subr.mxu0 %v2295
    %3256 = vmatpush1.msra.mxu0 %v2294
    %3257 = vmatprep.subr.mxu0 %v2291
    %3258 = vmatpush1.msra.mxu0 %v2290
    %3259 = vmatprep.subr.mxu0 %v2287
    %3260 = vmatpush1.msra.mxu0 %v2286
    %3261 = vmatprep.subr.mxu0 0.0
    %3262 = vmatpush2.msra.mxu0 0.0
    %3263 = vmatprep.subr.mxu0 0.0
    %3264 = vmatpush2.msra.mxu0 0.0
    %3265 = vmatprep.subr.mxu0 0.0
    %3266 = vmatpush2.msra.mxu0 0.0
    %3267 = vmatprep.subr.mxu0 0.0
    %3268 = vmatpush2.msra.mxu0 0.0
    %3269 = vmatprep.subr.mxu0 0.0
    %3270 = vmatpush2.msra.mxu0 0.0
    %3271 = vmatprep.subr.mxu0 0.0
    %3272 = vmatpush2.msra.mxu0 0.0
    %3273 = vmatprep.subr.mxu0 0.0
    %3274 = vmatpush2.msra.mxu0 0.0
    %3275 = vmatprep.subr.mxu0 0.0
    %3276 = vmatpush2.msra.mxu0 0.0
    %3277 = vmatprep.subr.mxu0 0.0
    %3278 = vmatpush2.msra.mxu0 0.0
    %3279 = vmatprep.subr.mxu0 0.0
    %3280 = vmatpush2.msra.mxu0 0.0
    %3281 = vmatprep.subr.mxu0 0.0
    %3282 = vmatpush2.msra.mxu0 0.0
    %3283 = vmatprep.subr.mxu0 0.0
    %3284 = vmatpush2.msra.mxu0 0.0
    %3285 = vmatprep.subr.mxu0 0.0
    %3286 = vmatpush2.msra.mxu0 0.0
    %3287 = vmatprep.subr.mxu0 0.0
    %3288 = vmatpush2.msra.mxu0 0.0
    %3289 = vmatprep.subr.mxu0 0.0
    %3290 = vmatpush2.msra.mxu0 0.0
    %3291 = vmatprep.subr.mxu0 0.0
    %3292 = vmatpush2.msra.mxu0 0.0
    %3293 = vmatprep.mubr.f32.mxu0 0.0
    %3294 = vmatmul.mubr.f32.gmra.mxu0 %v3223
    %v3295 = vpop.f32.mrf.mxu0
    %v3296 = vadd.f32 0.0, %v3295
    %v3297 = vpop.f32.mrf.mxu0
    %v3298 = vadd.f32 0.0, %v3297
    %3299 = vdwg.mxu0
    %3300 = vmatprep.subr.mxu0 %v2349
    %3301 = vmatpush1.msra.mxu0 %v2348
    %3302 = vmatprep.subr.mxu0 %v2345
    %3303 = vmatpush1.msra.mxu0 %v2344
    %3304 = vmatprep.subr.mxu0 %v2341
    %3305 = vmatpush1.msra.mxu0 %v2340
    %3306 = vmatprep.subr.mxu0 %v2337
    %3307 = vmatpush1.msra.mxu0 %v2336
    %3308 = vmatprep.subr.mxu0 %v2333
    %3309 = vmatpush1.msra.mxu0 %v2332
    %3310 = vmatprep.subr.mxu0 %v2329
    %3311 = vmatpush1.msra.mxu0 %v2328
    %3312 = vmatprep.subr.mxu0 %v2325
    %3313 = vmatpush1.msra.mxu0 %v2324
    %3314 = vmatprep.subr.mxu0 %v2321
    %3315 = vmatpush1.msra.mxu0 %v2320
    %3316 = vmatprep.subr.mxu0 %v2317
    %3317 = vmatpush1.msra.mxu0 %v2316
    %3318 = vmatprep.subr.mxu0 %v2313
    %3319 = vmatpush1.msra.mxu0 %v2312
    %3320 = vmatprep.subr.mxu0 %v2309
    %3321 = vmatpush1.msra.mxu0 %v2308
    %3322 = vmatprep.subr.mxu0 %v2305
    %3323 = vmatpush1.msra.mxu0 %v2304
    %3324 = vmatprep.subr.mxu0 %v2301
    %3325 = vmatpush1.msra.mxu0 %v2300
    %3326 = vmatprep.subr.mxu0 %v2297
    %3327 = vmatpush1.msra.mxu0 %v2296
    %3328 = vmatprep.subr.mxu0 %v2293
    %3329 = vmatpush1.msra.mxu0 %v2292
    %3330 = vmatprep.subr.mxu0 %v2289
    %3331 = vmatpush1.msra.mxu0 %v2288
    %3332 = vmatprep.subr.mxu0 0.0
    %3333 = vmatpush2.msra.mxu0 0.0
    %3334 = vmatprep.subr.mxu0 0.0
    %3335 = vmatpush2.msra.mxu0 0.0
    %3336 = vmatprep.subr.mxu0 0.0
    %3337 = vmatpush2.msra.mxu0 0.0
    %3338 = vmatprep.subr.mxu0 0.0
    %3339 = vmatpush2.msra.mxu0 0.0
    %3340 = vmatprep.subr.mxu0 0.0
    %3341 = vmatpush2.msra.mxu0 0.0
    %3342 = vmatprep.subr.mxu0 0.0
    %3343 = vmatpush2.msra.mxu0 0.0
    %3344 = vmatprep.subr.mxu0 0.0
    %3345 = vmatpush2.msra.mxu0 0.0
    %3346 = vmatprep.subr.mxu0 0.0
    %3347 = vmatpush2.msra.mxu0 0.0
    %3348 = vmatprep.subr.mxu0 0.0
    %3349 = vmatpush2.msra.mxu0 0.0
    %3350 = vmatprep.subr.mxu0 0.0
    %3351 = vmatpush2.msra.mxu0 0.0
    %3352 = vmatprep.subr.mxu0 0.0
    %3353 = vmatpush2.msra.mxu0 0.0
    %3354 = vmatprep.subr.mxu0 0.0
    %3355 = vmatpush2.msra.mxu0 0.0
    %3356 = vmatprep.subr.mxu0 0.0
    %3357 = vmatpush2.msra.mxu0 0.0
    %3358 = vmatprep.subr.mxu0 0.0
    %3359 = vmatpush2.msra.mxu0 0.0
    %3360 = vmatprep.subr.mxu0 0.0
    %3361 = vmatpush2.msra.mxu0 0.0
    %3362 = vmatprep.subr.mxu0 0.0
    %3363 = vmatpush2.msra.mxu0 0.0
    %3364 = vmatprep.mubr.f32.mxu0 0.0
    %3365 = vmatmul.mubr.f32.gmra.mxu0 %v3223
    %v3366 = vpop.f32.mrf.mxu0
    %v3367 = vadd.f32 0.0, %v3366
    %v3368 = vpop.f32.mrf.mxu0
    %v3369 = vadd.f32 0.0, %v3368
    %3370 = vdwg.mxu0
    %v3371 = vadd.f32 %v3225, %v3296
    %v3372 = vadd.f32 %v3226, %v3298
    %v3373 = vadd.f32 %v3227, %v3367
    %v3374 = vadd.f32 %v3228, %v3369
    %v3375 = vxor.u32 %v3371, 2147483648
    %v3376 = vxor.u32 %v3372, 2147483648
    %v3377 = vxor.u32 %v3373, 2147483648
    %v3378 = vmul.f32 %v3375, 1.442695
    %v3379 = vpow.pop %v3378
    %v3380 = vmul.f32 %v3376, 1.442695
    %v3381 = vpow.pop %v3380
    %v3382 = vmul.f32 %v3377, 1.442695
    %v3383 = vpow.pop %v3382
    %v3384 = vadd.f32 %v3379, 1.0
    %v3385 = vadd.f32 %v3381, 1.0
    %v3386 = vadd.f32 %v3383, 1.0
    %v3387 = vrcp.pop %v3384
    %v3388 = vmul.f32 1.0, %v3387
    %v3389 = vrcp.pop %v3385
    %v3390 = vmul.f32 1.0, %v3389
    %v3391 = vrcp.pop %v3386
    %v3392 = vmul.f32 1.0, %v3391
    %v3393 = vtanh.pop %v3374
    %v3394 = vmul.f32 %v3390, %v3221
    %v3395 = vmul.f32 %v3388, %v3393
    %v3396 = vadd.f32 %v3394, %v3395
    %v3397 = vtanh.pop %v3396
    %v3398 = vmul.f32 %v3392, %v3397
    %3399 = vst [vmem:[%s1578] sm:$0xff] %v3398
    %v3400 = vld [vmem:[%s1580] sm:$0xff]
    %v3401 = vld [vmem:[%s1580 + $0x8] sm:$0xff]
    %v3402 = vld [vmem:[%s1580 + $0x10] sm:$0xff]
    %v3403 = vld [vmem:[%s1580 + $0x18] sm:$0xff]
    %3404 = vmatprep.subr.mxu0 %v2347
    %3405 = vmatpush1.msra.mxu0 %v2346
    %3406 = vmatprep.subr.mxu0 %v2343
    %3407 = vmatpush1.msra.mxu0 %v2342
    %3408 = vmatprep.subr.mxu0 %v2339
    %3409 = vmatpush1.msra.mxu0 %v2338
    %3410 = vmatprep.subr.mxu0 %v2335
    %3411 = vmatpush1.msra.mxu0 %v2334
    %3412 = vmatprep.subr.mxu0 %v2331
    %3413 = vmatpush1.msra.mxu0 %v2330
    %3414 = vmatprep.subr.mxu0 %v2327
    %3415 = vmatpush1.msra.mxu0 %v2326
    %3416 = vmatprep.subr.mxu0 %v2323
    %3417 = vmatpush1.msra.mxu0 %v2322
    %3418 = vmatprep.subr.mxu0 %v2319
    %3419 = vmatpush1.msra.mxu0 %v2318
    %3420 = vmatprep.subr.mxu0 %v2315
    %3421 = vmatpush1.msra.mxu0 %v2314
    %3422 = vmatprep.subr.mxu0 %v2311
    %3423 = vmatpush1.msra.mxu0 %v2310
    %3424 = vmatprep.subr.mxu0 %v2307
    %3425 = vmatpush1.msra.mxu0 %v2306
    %3426 = vmatprep.subr.mxu0 %v2303
    %3427 = vmatpush1.msra.mxu0 %v2302
    %3428 = vmatprep.subr.mxu0 %v2299
    %3429 = vmatpush1.msra.mxu0 %v2298
    %3430 = vmatprep.subr.mxu0 %v2295
    %3431 = vmatpush1.msra.mxu0 %v2294
    %3432 = vmatprep.subr.mxu0 %v2291
    %3433 = vmatpush1.msra.mxu0 %v2290
    %3434 = vmatprep.subr.mxu0 %v2287
    %3435 = vmatpush1.msra.mxu0 %v2286
    %3436 = vmatprep.subr.mxu0 0.0
    %3437 = vmatpush2.msra.mxu0 0.0
    %3438 = vmatprep.subr.mxu0 0.0
    %3439 = vmatpush2.msra.mxu0 0.0
    %3440 = vmatprep.subr.mxu0 0.0
    %3441 = vmatpush2.msra.mxu0 0.0
    %3442 = vmatprep.subr.mxu0 0.0
    %3443 = vmatpush2.msra.mxu0 0.0
    %3444 = vmatprep.subr.mxu0 0.0
    %3445 = vmatpush2.msra.mxu0 0.0
    %3446 = vmatprep.subr.mxu0 0.0
    %3447 = vmatpush2.msra.mxu0 0.0
    %3448 = vmatprep.subr.mxu0 0.0
    %3449 = vmatpush2.msra.mxu0 0.0
    %3450 = vmatprep.subr.mxu0 0.0
    %3451 = vmatpush2.msra.mxu0 0.0
    %3452 = vmatprep.subr.mxu0 0.0
    %3453 = vmatpush2.msra.mxu0 0.0
    %3454 = vmatprep.subr.mxu0 0.0
    %3455 = vmatpush2.msra.mxu0 0.0
    %3456 = vmatprep.subr.mxu0 0.0
    %3457 = vmatpush2.msra.mxu0 0.0
    %3458 = vmatprep.subr.mxu0 0.0
    %3459 = vmatpush2.msra.mxu0 0.0
    %3460 = vmatprep.subr.mxu0 0.0
    %3461 = vmatpush2.msra.mxu0 0.0
    %3462 = vmatprep.subr.mxu0 0.0
    %3463 = vmatpush2.msra.mxu0 0.0
    %3464 = vmatprep.subr.mxu0 0.0
    %3465 = vmatpush2.msra.mxu0 0.0
    %3466 = vmatprep.subr.mxu0 0.0
    %3467 = vmatpush2.msra.mxu0 0.0
    %3468 = vmatprep.mubr.f32.mxu0 0.0
    %3469 = vmatmul.mubr.f32.gmra.mxu0 %v3398
    %v3470 = vpop.f32.mrf.mxu0
    %v3471 = vadd.f32 0.0, %v3470
    %v3472 = vpop.f32.mrf.mxu0
    %v3473 = vadd.f32 0.0, %v3472
    %3474 = vdwg.mxu0
    %3475 = vmatprep.subr.mxu0 %v2349
    %3476 = vmatpush1.msra.mxu0 %v2348
    %3477 = vmatprep.subr.mxu0 %v2345
    %3478 = vmatpush1.msra.mxu0 %v2344
    %3479 = vmatprep.subr.mxu0 %v2341
    %3480 = vmatpush1.msra.mxu0 %v2340
    %3481 = vmatprep.subr.mxu0 %v2337
    %3482 = vmatpush1.msra.mxu0 %v2336
    %3483 = vmatprep.subr.mxu0 %v2333
    %3484 = vmatpush1.msra.mxu0 %v2332
    %3485 = vmatprep.subr.mxu0 %v2329
    %3486 = vmatpush1.msra.mxu0 %v2328
    %3487 = vmatprep.subr.mxu0 %v2325
    %3488 = vmatpush1.msra.mxu0 %v2324
    %3489 = vmatprep.subr.mxu0 %v2321
    %3490 = vmatpush1.msra.mxu0 %v2320
    %3491 = vmatprep.subr.mxu0 %v2317
    %3492 = vmatpush1.msra.mxu0 %v2316
    %3493 = vmatprep.subr.mxu0 %v2313
    %3494 = vmatpush1.msra.mxu0 %v2312
    %3495 = vmatprep.subr.mxu0 %v2309
    %3496 = vmatpush1.msra.mxu0 %v2308
    %3497 = vmatprep.subr.mxu0 %v2305
    %3498 = vmatpush1.msra.mxu0 %v2304
    %3499 = vmatprep.subr.mxu0 %v2301
    %3500 = vmatpush1.msra.mxu0 %v2300
    %3501 = vmatprep.subr.mxu0 %v2297
    %3502 = vmatpush1.msra.mxu0 %v2296
    %3503 = vmatprep.subr.mxu0 %v2293
    %3504 = vmatpush1.msra.mxu0 %v2292
    %3505 = vmatprep.subr.mxu0 %v2289
    %3506 = vmatpush1.msra.mxu0 %v2288
    %3507 = vmatprep.subr.mxu0 0.0
    %3508 = vmatpush2.msra.mxu0 0.0
    %3509 = vmatprep.subr.mxu0 0.0
    %3510 = vmatpush2.msra.mxu0 0.0
    %3511 = vmatprep.subr.mxu0 0.0
    %3512 = vmatpush2.msra.mxu0 0.0
    %3513 = vmatprep.subr.mxu0 0.0
    %3514 = vmatpush2.msra.mxu0 0.0
    %3515 = vmatprep.subr.mxu0 0.0
    %3516 = vmatpush2.msra.mxu0 0.0
    %3517 = vmatprep.subr.mxu0 0.0
    %3518 = vmatpush2.msra.mxu0 0.0
    %3519 = vmatprep.subr.mxu0 0.0
    %3520 = vmatpush2.msra.mxu0 0.0
    %3521 = vmatprep.subr.mxu0 0.0
    %3522 = vmatpush2.msra.mxu0 0.0
    %3523 = vmatprep.subr.mxu0 0.0
    %3524 = vmatpush2.msra.mxu0 0.0
    %3525 = vmatprep.subr.mxu0 0.0
    %3526 = vmatpush2.msra.mxu0 0.0
    %3527 = vmatprep.subr.mxu0 0.0
    %3528 = vmatpush2.msra.mxu0 0.0
    %3529 = vmatprep.subr.mxu0 0.0
    %3530 = vmatpush2.msra.mxu0 0.0
    %3531 = vmatprep.subr.mxu0 0.0
    %3532 = vmatpush2.msra.mxu0 0.0
    %3533 = vmatprep.subr.mxu0 0.0
    %3534 = vmatpush2.msra.mxu0 0.0
    %3535 = vmatprep.subr.mxu0 0.0
    %3536 = vmatpush2.msra.mxu0 0.0
    %3537 = vmatprep.subr.mxu0 0.0
    %3538 = vmatpush2.msra.mxu0 0.0
    %3539 = vmatprep.mubr.f32.mxu0 0.0
    %3540 = vmatmul.mubr.f32.gmra.mxu0 %v3398
    %v3541 = vpop.f32.mrf.mxu0
    %v3542 = vadd.f32 0.0, %v3541
    %v3543 = vpop.f32.mrf.mxu0
    %v3544 = vadd.f32 0.0, %v3543
    %3545 = vdwg.mxu0
    %v3546 = vadd.f32 %v3400, %v3471
    %v3547 = vadd.f32 %v3401, %v3473
    %v3548 = vadd.f32 %v3402, %v3542
    %v3549 = vadd.f32 %v3403, %v3544
    %v3550 = vxor.u32 %v3546, 2147483648
    %v3551 = vxor.u32 %v3547, 2147483648
    %v3552 = vxor.u32 %v3548, 2147483648
    %v3553 = vmul.f32 %v3550, 1.442695
    %v3554 = vpow.pop %v3553
    %v3555 = vmul.f32 %v3551, 1.442695
    %v3556 = vpow.pop %v3555
    %v3557 = vmul.f32 %v3552, 1.442695
    %v3558 = vpow.pop %v3557
    %v3559 = vadd.f32 %v3554, 1.0
    %v3560 = vadd.f32 %v3556, 1.0
    %v3561 = vadd.f32 %v3558, 1.0
    %v3562 = vrcp.pop %v3559
    %v3563 = vmul.f32 1.0, %v3562
    %v3564 = vrcp.pop %v3560
    %v3565 = vmul.f32 1.0, %v3564
    %v3566 = vrcp.pop %v3561
    %v3567 = vmul.f32 1.0, %v3566
    %v3568 = vtanh.pop %v3549
    %v3569 = vmul.f32 %v3565, %v3396
    %v3570 = vmul.f32 %v3563, %v3568
    %v3571 = vadd.f32 %v3569, %v3570
    %v3572 = vtanh.pop %v3571
    %v3573 = vmul.f32 %v3567, %v3572
    %3574 = vst [vmem:[%s1755] sm:$0xff] %v3573
    %v3575 = vld [vmem:[%s1757] sm:$0xff]
    %v3576 = vld [vmem:[%s1757 + $0x8] sm:$0xff]
    %v3577 = vld [vmem:[%s1757 + $0x10] sm:$0xff]
    %v3578 = vld [vmem:[%s1757 + $0x18] sm:$0xff]
    %3579 = vmatprep.subr.mxu0 %v2347
    %3580 = vmatpush1.msra.mxu0 %v2346
    %3581 = vmatprep.subr.mxu0 %v2343
    %3582 = vmatpush1.msra.mxu0 %v2342
    %3583 = vmatprep.subr.mxu0 %v2339
    %3584 = vmatpush1.msra.mxu0 %v2338
    %3585 = vmatprep.subr.mxu0 %v2335
    %3586 = vmatpush1.msra.mxu0 %v2334
    %3587 = vmatprep.subr.mxu0 %v2331
    %3588 = vmatpush1.msra.mxu0 %v2330
    %3589 = vmatprep.subr.mxu0 %v2327
    %3590 = vmatpush1.msra.mxu0 %v2326
    %3591 = vmatprep.subr.mxu0 %v2323
    %3592 = vmatpush1.msra.mxu0 %v2322
    %3593 = vmatprep.subr.mxu0 %v2319
    %3594 = vmatpush1.msra.mxu0 %v2318
    %3595 = vmatprep.subr.mxu0 %v2315
    %3596 = vmatpush1.msra.mxu0 %v2314
    %3597 = vmatprep.subr.mxu0 %v2311
    %3598 = vmatpush1.msra.mxu0 %v2310
    %3599 = vmatprep.subr.mxu0 %v2307
    %3600 = vmatpush1.msra.mxu0 %v2306
    %3601 = vmatprep.subr.mxu0 %v2303
    %3602 = vmatpush1.msra.mxu0 %v2302
    %3603 = vmatprep.subr.mxu0 %v2299
    %3604 = vmatpush1.msra.mxu0 %v2298
    %3605 = vmatprep.subr.mxu0 %v2295
    %3606 = vmatpush1.msra.mxu0 %v2294
    %3607 = vmatprep.subr.mxu0 %v2291
    %3608 = vmatpush1.msra.mxu0 %v2290
    %3609 = vmatprep.subr.mxu0 %v2287
    %3610 = vmatpush1.msra.mxu0 %v2286
    %3611 = vmatprep.subr.mxu0 0.0
    %3612 = vmatpush2.msra.mxu0 0.0
    %3613 = vmatprep.subr.mxu0 0.0
    %3614 = vmatpush2.msra.mxu0 0.0
    %3615 = vmatprep.subr.mxu0 0.0
    %3616 = vmatpush2.msra.mxu0 0.0
    %3617 = vmatprep.subr.mxu0 0.0
    %3618 = vmatpush2.msra.mxu0 0.0
    %3619 = vmatprep.subr.mxu0 0.0
    %3620 = vmatpush2.msra.mxu0 0.0
    %3621 = vmatprep.subr.mxu0 0.0
    %3622 = vmatpush2.msra.mxu0 0.0
    %3623 = vmatprep.subr.mxu0 0.0
    %3624 = vmatpush2.msra.mxu0 0.0
    %3625 = vmatprep.subr.mxu0 0.0
    %3626 = vmatpush2.msra.mxu0 0.0
    %3627 = vmatprep.subr.mxu0 0.0
    %3628 = vmatpush2.msra.mxu0 0.0
    %3629 = vmatprep.subr.mxu0 0.0
    %3630 = vmatpush2.msra.mxu0 0.0
    %3631 = vmatprep.subr.mxu0 0.0
    %3632 = vmatpush2.msra.mxu0 0.0
    %3633 = vmatprep.subr.mxu0 0.0
    %3634 = vmatpush2.msra.mxu0 0.0
    %3635 = vmatprep.subr.mxu0 0.0
    %3636 = vmatpush2.msra.mxu0 0.0
    %3637 = vmatprep.subr.mxu0 0.0
    %3638 = vmatpush2.msra.mxu0 0.0
    %3639 = vmatprep.subr.mxu0 0.0
    %3640 = vmatpush2.msra.mxu0 0.0
    %3641 = vmatprep.subr.mxu0 0.0
    %3642 = vmatpush2.msra.mxu0 0.0
    %3643 = vmatprep.mubr.f32.mxu0 0.0
    %3644 = vmatmul.mubr.f32.gmra.mxu0 %v3573
    %v3645 = vpop.f32.mrf.mxu0
    %v3646 = vadd.f32 0.0, %v3645
    %v3647 = vpop.f32.mrf.mxu0
    %v3648 = vadd.f32 0.0, %v3647
    %3649 = vdwg.mxu0
    %3650 = vmatprep.subr.mxu0 %v2349
    %3651 = vmatpush1.msra.mxu0 %v2348
    %3652 = vmatprep.subr.mxu0 %v2345
    %3653 = vmatpush1.msra.mxu0 %v2344
    %3654 = vmatprep.subr.mxu0 %v2341
    %3655 = vmatpush1.msra.mxu0 %v2340
    %3656 = vmatprep.subr.mxu0 %v2337
    %3657 = vmatpush1.msra.mxu0 %v2336
    %3658 = vmatprep.subr.mxu0 %v2333
    %3659 = vmatpush1.msra.mxu0 %v2332
    %3660 = vmatprep.subr.mxu0 %v2329
    %3661 = vmatpush1.msra.mxu0 %v2328
    %3662 = vmatprep.subr.mxu0 %v2325
    %3663 = vmatpush1.msra.mxu0 %v2324
    %3664 = vmatprep.subr.mxu0 %v2321
    %3665 = vmatpush1.msra.mxu0 %v2320
    %3666 = vmatprep.subr.mxu0 %v2317
    %3667 = vmatpush1.msra.mxu0 %v2316
    %3668 = vmatprep.subr.mxu0 %v2313
    %3669 = vmatpush1.msra.mxu0 %v2312
    %3670 = vmatprep.subr.mxu0 %v2309
    %3671 = vmatpush1.msra.mxu0 %v2308
    %3672 = vmatprep.subr.mxu0 %v2305
    %3673 = vmatpush1.msra.mxu0 %v2304
    %3674 = vmatprep.subr.mxu0 %v2301
    %3675 = vmatpush1.msra.mxu0 %v2300
    %3676 = vmatprep.subr.mxu0 %v2297
    %3677 = vmatpush1.msra.mxu0 %v2296
    %3678 = vmatprep.subr.mxu0 %v2293
    %3679 = vmatpush1.msra.mxu0 %v2292
    %3680 = vmatprep.subr.mxu0 %v2289
    %3681 = vmatpush1.msra.mxu0 %v2288
    %3682 = vmatprep.subr.mxu0 0.0
    %3683 = vmatpush2.msra.mxu0 0.0
    %3684 = vmatprep.subr.mxu0 0.0
    %3685 = vmatpush2.msra.mxu0 0.0
    %3686 = vmatprep.subr.mxu0 0.0
    %3687 = vmatpush2.msra.mxu0 0.0
    %3688 = vmatprep.subr.mxu0 0.0
    %3689 = vmatpush2.msra.mxu0 0.0
    %3690 = vmatprep.subr.mxu0 0.0
    %3691 = vmatpush2.msra.mxu0 0.0
    %3692 = vmatprep.subr.mxu0 0.0
    %3693 = vmatpush2.msra.mxu0 0.0
    %3694 = vmatprep.subr.mxu0 0.0
    %3695 = vmatpush2.msra.mxu0 0.0
    %3696 = vmatprep.subr.mxu0 0.0
    %3697 = vmatpush2.msra.mxu0 0.0
    %3698 = vmatprep.subr.mxu0 0.0
    %3699 = vmatpush2.msra.mxu0 0.0
    %3700 = vmatprep.subr.mxu0 0.0
    %3701 = vmatpush2.msra.mxu0 0.0
    %3702 = vmatprep.subr.mxu0 0.0
    %3703 = vmatpush2.msra.mxu0 0.0
    %3704 = vmatprep.subr.mxu0 0.0
    %3705 = vmatpush2.msra.mxu0 0.0
    %3706 = vmatprep.subr.mxu0 0.0
    %3707 = vmatpush2.msra.mxu0 0.0
    %3708 = vmatprep.subr.mxu0 0.0
    %3709 = vmatpush2.msra.mxu0 0.0
    %3710 = vmatprep.subr.mxu0 0.0
    %3711 = vmatpush2.msra.mxu0 0.0
    %3712 = vmatprep.subr.mxu0 0.0
    %3713 = vmatpush2.msra.mxu0 0.0
    %3714 = vmatprep.mubr.f32.mxu0 0.0
    %3715 = vmatmul.mubr.f32.gmra.mxu0 %v3573
    %v3716 = vpop.f32.mrf.mxu0
    %v3717 = vadd.f32 0.0, %v3716
    %v3718 = vpop.f32.mrf.mxu0
    %v3719 = vadd.f32 0.0, %v3718
    %3720 = vdwg.mxu0
    %v3721 = vadd.f32 %v3575, %v3646
    %v3722 = vadd.f32 %v3576, %v3648
    %v3723 = vadd.f32 %v3577, %v3717
    %v3724 = vadd.f32 %v3578, %v3719
    %v3725 = vxor.u32 %v3721, 2147483648
    %v3726 = vxor.u32 %v3722, 2147483648
    %v3727 = vxor.u32 %v3723, 2147483648
    %v3728 = vmul.f32 %v3725, 1.442695
    %v3729 = vpow.pop %v3728
    %v3730 = vmul.f32 %v3726, 1.442695
    %v3731 = vpow.pop %v3730
    %v3732 = vmul.f32 %v3727, 1.442695
    %v3733 = vpow.pop %v3732
    %v3734 = vadd.f32 %v3729, 1.0
    %v3735 = vadd.f32 %v3731, 1.0
    %v3736 = vadd.f32 %v3733, 1.0
    %v3737 = vrcp.pop %v3734
    %v3738 = vmul.f32 1.0, %v3737
    %v3739 = vrcp.pop %v3735
    %v3740 = vmul.f32 1.0, %v3739
    %v3741 = vrcp.pop %v3736
    %v3742 = vmul.f32 1.0, %v3741
    %v3743 = vtanh.pop %v3724
    %v3744 = vmul.f32 %v3740, %v3571
    %v3745 = vmul.f32 %v3738, %v3743
    %v3746 = vadd.f32 %v3744, %v3745
    %v3747 = vtanh.pop %v3746
    %v3748 = vmul.f32 %v3742, %v3747
    %3749 = vst [vmem:[%s1932] sm:$0xff] %v3748
    %v3750 = vld [vmem:[#allocation3] sm:$0xff]
    %v3751 = vld [vmem:[#allocation3 + $0x8] sm:$0xff]
    %v3752 = vld [vmem:[#allocation3 + $0x10] sm:$0xff]
    %v3753 = vld [vmem:[#allocation3 + $0x18] sm:$0xff]
    %v3754 = vld [vmem:[#allocation3 + $0x20] sm:$0xff]
    %v3755 = vld [vmem:[#allocation3 + $0x28] sm:$0xff]
    %v3756 = vld [vmem:[#allocation3 + $0x30] sm:$0xff]
    %v3757 = vld [vmem:[#allocation3 + $0x38] sm:$0xff]
    %v3758 = vld [vmem:[#allocation9] sm:$0xff]
    %v3759 = vld [vmem:[#allocation9 + $0x8] sm:$0xff]
    %v3760 = vld [vmem:[#allocation9 + $0x10] sm:$0xff]
    %v3761 = vld [vmem:[#allocation9 + $0x18] sm:$0xff]
    %v3762 = vld [vmem:[#allocation9 + $0x20] sm:$0xff]
    %v3763 = vld [vmem:[#allocation9 + $0x28] sm:$0xff]
    %v3764 = vld [vmem:[#allocation9 + $0x30] sm:$0xff]
    %v3765 = vld [vmem:[#allocation9 + $0x38] sm:$0xff]
    %v3766 = vld [vmem:[#allocation9 + $0x40] sm:$0xff]
    %v3767 = vld [vmem:[#allocation9 + $0x48] sm:$0xff]
    %v3768 = vld [vmem:[#allocation9 + $0x50] sm:$0xff]
    %v3769 = vld [vmem:[#allocation9 + $0x58] sm:$0xff]
    %v3770 = vld [vmem:[#allocation9 + $0x60] sm:$0xff]
    %v3771 = vld [vmem:[#allocation9 + $0x68] sm:$0xff]
    %v3772 = vld [vmem:[#allocation9 + $0x70] sm:$0xff]
    %v3773 = vld [vmem:[#allocation9 + $0x78] sm:$0xff]
    %v3774 = vld [vmem:[#allocation9 + $0x80] sm:$0xff]
    %v3775 = vld [vmem:[#allocation9 + $0x88] sm:$0xff]
    %v3776 = vld [vmem:[#allocation9 + $0x90] sm:$0xff]
    %v3777 = vld [vmem:[#allocation9 + $0x98] sm:$0xff]
    %v3778 = vld [vmem:[#allocation9 + $0xa0] sm:$0xff]
    %v3779 = vld [vmem:[#allocation9 + $0xa8] sm:$0xff]
    %v3780 = vld [vmem:[#allocation9 + $0xb0] sm:$0xff]
    %v3781 = vld [vmem:[#allocation9 + $0xb8] sm:$0xff]
    %v3782 = vld [vmem:[#allocation9 + $0xc0] sm:$0xff]
    %v3783 = vld [vmem:[#allocation9 + $0xc8] sm:$0xff]
    %v3784 = vld [vmem:[#allocation9 + $0xd0] sm:$0xff]
    %v3785 = vld [vmem:[#allocation9 + $0xd8] sm:$0xff]
    %v3786 = vld [vmem:[#allocation9 + $0xe0] sm:$0xff]
    %v3787 = vld [vmem:[#allocation9 + $0xe8] sm:$0xff]
    %v3788 = vld [vmem:[#allocation9 + $0xf0] sm:$0xff]
    %v3789 = vld [vmem:[#allocation9 + $0xf8] sm:$0xff]
    %v3790 = vld [vmem:[#allocation9 + $0x100] sm:$0xff]
    %v3791 = vld [vmem:[#allocation9 + $0x108] sm:$0xff]
    %v3792 = vld [vmem:[#allocation9 + $0x110] sm:$0xff]
    %v3793 = vld [vmem:[#allocation9 + $0x118] sm:$0xff]
    %v3794 = vld [vmem:[#allocation9 + $0x120] sm:$0xff]
    %v3795 = vld [vmem:[#allocation9 + $0x128] sm:$0xff]
    %v3796 = vld [vmem:[#allocation9 + $0x130] sm:$0xff]
    %v3797 = vld [vmem:[#allocation9 + $0x138] sm:$0xff]
    %v3798 = vld [vmem:[#allocation9 + $0x140] sm:$0xff]
    %v3799 = vld [vmem:[#allocation9 + $0x148] sm:$0xff]
    %v3800 = vld [vmem:[#allocation9 + $0x150] sm:$0xff]
    %v3801 = vld [vmem:[#allocation9 + $0x158] sm:$0xff]
    %v3802 = vld [vmem:[#allocation9 + $0x160] sm:$0xff]
    %v3803 = vld [vmem:[#allocation9 + $0x168] sm:$0xff]
    %v3804 = vld [vmem:[#allocation9 + $0x170] sm:$0xff]
    %v3805 = vld [vmem:[#allocation9 + $0x178] sm:$0xff]
    %v3806 = vld [vmem:[#allocation9 + $0x180] sm:$0xff]
    %v3807 = vld [vmem:[#allocation9 + $0x188] sm:$0xff]
    %v3808 = vld [vmem:[#allocation9 + $0x190] sm:$0xff]
    %v3809 = vld [vmem:[#allocation9 + $0x198] sm:$0xff]
    %v3810 = vld [vmem:[#allocation9 + $0x1a0] sm:$0xff]
    %v3811 = vld [vmem:[#allocation9 + $0x1a8] sm:$0xff]
    %v3812 = vld [vmem:[#allocation9 + $0x1b0] sm:$0xff]
    %v3813 = vld [vmem:[#allocation9 + $0x1b8] sm:$0xff]
    %v3814 = vld [vmem:[#allocation9 + $0x1c0] sm:$0xff]
    %v3815 = vld [vmem:[#allocation9 + $0x1c8] sm:$0xff]
    %v3816 = vld [vmem:[#allocation9 + $0x1d0] sm:$0xff]
    %v3817 = vld [vmem:[#allocation9 + $0x1d8] sm:$0xff]
    %v3818 = vld [vmem:[#allocation9 + $0x1e0] sm:$0xff]
    %v3819 = vld [vmem:[#allocation9 + $0x1e8] sm:$0xff]
    %v3820 = vld [vmem:[#allocation9 + $0x1f0] sm:$0xff]
    %v3821 = vld [vmem:[#allocation9 + $0x1f8] sm:$0xff]
    %v3822 = vld [vmem:[%s9] sm:$0xf]
    %v3824 = vlaneseq
    %v3825 = vshrl.u32 %v3824, 7
    %v3826 = vsub.s32 0, %v3825
    %v3827 = vrot.slane %v3822, %v3826
    %v3828 = vlaneseq
    %v3829 = vshrl.u32 %v3828, 7
    %v3830 = vsub.s32 1, %v3829
    %v3831 = vrot.slane %v3822, %v3830
    %v3832 = vlaneseq
    %v3833 = vshrl.u32 %v3832, 7
    %v3834 = vsub.s32 2, %v3833
    %v3835 = vrot.slane %v3822, %v3834
    %v3836 = vlaneseq
    %v3837 = vshrl.u32 %v3836, 7
    %v3838 = vsub.s32 3, %v3837
    %v3839 = vrot.slane %v3822, %v3838
    %3844 = vmatprep.subr.mxu0 %v3819
    %3845 = vmatpush1.msra.mxu0 %v3818
    %3846 = vmatprep.subr.mxu0 %v3815
    %3847 = vmatpush1.msra.mxu0 %v3814
    %3848 = vmatprep.subr.mxu0 %v3811
    %3849 = vmatpush1.msra.mxu0 %v3810
    %3850 = vmatprep.subr.mxu0 %v3807
    %3851 = vmatpush1.msra.mxu0 %v3806
    %3852 = vmatprep.subr.mxu0 %v3803
    %3853 = vmatpush1.msra.mxu0 %v3802
    %3854 = vmatprep.subr.mxu0 %v3799
    %3855 = vmatpush1.msra.mxu0 %v3798
    %3856 = vmatprep.subr.mxu0 %v3795
    %3857 = vmatpush1.msra.mxu0 %v3794
    %3858 = vmatprep.subr.mxu0 %v3791
    %3859 = vmatpush1.msra.mxu0 %v3790
    %3860 = vmatprep.subr.mxu0 %v3787
    %3861 = vmatpush1.msra.mxu0 %v3786
    %3862 = vmatprep.subr.mxu0 %v3783
    %3863 = vmatpush1.msra.mxu0 %v3782
    %3864 = vmatprep.subr.mxu0 %v3779
    %3865 = vmatpush1.msra.mxu0 %v3778
    %3866 = vmatprep.subr.mxu0 %v3775
    %3867 = vmatpush1.msra.mxu0 %v3774
    %3868 = vmatprep.subr.mxu0 %v3771
    %3869 = vmatpush1.msra.mxu0 %v3770
    %3870 = vmatprep.subr.mxu0 %v3767
    %3871 = vmatpush1.msra.mxu0 %v3766
    %3872 = vmatprep.subr.mxu0 %v3763
    %3873 = vmatpush1.msra.mxu0 %v3762
    %3874 = vmatprep.subr.mxu0 %v3759
    %3875 = vmatpush1.msra.mxu0 %v3758
    %3876 = vmatprep.subr.mxu0 0.0
    %3877 = vmatpush2.msra.mxu0 0.0
    %3878 = vmatprep.subr.mxu0 0.0
    %3879 = vmatpush2.msra.mxu0 0.0
    %3880 = vmatprep.subr.mxu0 0.0
    %3881 = vmatpush2.msra.mxu0 0.0
    %3882 = vmatprep.subr.mxu0 0.0
    %3883 = vmatpush2.msra.mxu0 0.0
    %3884 = vmatprep.subr.mxu0 0.0
    %3885 = vmatpush2.msra.mxu0 0.0
    %3886 = vmatprep.subr.mxu0 0.0
    %3887 = vmatpush2.msra.mxu0 0.0
    %3888 = vmatprep.subr.mxu0 0.0
    %3889 = vmatpush2.msra.mxu0 0.0
    %3890 = vmatprep.subr.mxu0 0.0
    %3891 = vmatpush2.msra.mxu0 0.0
    %3892 = vmatprep.subr.mxu0 0.0
    %3893 = vmatpush2.msra.mxu0 0.0
    %3894 = vmatprep.subr.mxu0 0.0
    %3895 = vmatpush2.msra.mxu0 0.0
    %3896 = vmatprep.subr.mxu0 0.0
    %3897 = vmatpush2.msra.mxu0 0.0
    %3898 = vmatprep.subr.mxu0 0.0
    %3899 = vmatpush2.msra.mxu0 0.0
    %3900 = vmatprep.subr.mxu0 0.0
    %3901 = vmatpush2.msra.mxu0 0.0
    %3902 = vmatprep.subr.mxu0 0.0
    %3903 = vmatpush2.msra.mxu0 0.0
    %3904 = vmatprep.subr.mxu0 0.0
    %3905 = vmatpush2.msra.mxu0 0.0
    %3906 = vmatprep.subr.mxu0 0.0
    %3907 = vmatpush2.msra.mxu0 0.0
    %3908 = vmatprep.mubr.f32.mxu0 0.0
    %3909 = vmatmul.mubr.f32.gmra.mxu0 %v3750
    %v3910 = vpop.f32.mrf.mxu0
    %v3911 = vadd.f32 %v3827, %v3910
    %v3912 = vpop.f32.mrf.mxu0
    %v3913 = vadd.f32 %v3831, %v3912
    %3914 = vmatprep.mubr.f32.mxu0 0.0
    %3915 = vmatmul.mubr.f32.gmra.mxu0 %v3751
    %v3916 = vpop.f32.mrf.mxu0
    %v3917 = vadd.f32 %v3827, %v3916
    %v3918 = vpop.f32.mrf.mxu0
    %v3919 = vadd.f32 %v3831, %v3918
    %3920 = vmatprep.mubr.f32.mxu0 0.0
    %3921 = vmatmul.mubr.f32.gmra.mxu0 %v3752
    %v3922 = vpop.f32.mrf.mxu0
    %v3923 = vadd.f32 %v3827, %v3922
    %v3924 = vpop.f32.mrf.mxu0
    %v3925 = vadd.f32 %v3831, %v3924
    %3926 = vmatprep.mubr.f32.mxu0 0.0
    %3927 = vmatmul.mubr.f32.gmra.mxu0 %v3753
    %v3928 = vpop.f32.mrf.mxu0
    %v3929 = vadd.f32 %v3827, %v3928
    %v3930 = vpop.f32.mrf.mxu0
    %v3931 = vadd.f32 %v3831, %v3930
    %3932 = vmatprep.mubr.f32.mxu0 0.0
    %3933 = vmatmul.mubr.f32.gmra.mxu0 %v3754
    %v3934 = vpop.f32.mrf.mxu0
    %v3935 = vadd.f32 %v3827, %v3934
    %v3936 = vpop.f32.mrf.mxu0
    %v3937 = vadd.f32 %v3831, %v3936
    %3938 = vmatprep.mubr.f32.mxu0 0.0
    %3939 = vmatmul.mubr.f32.gmra.mxu0 %v3755
    %v3940 = vpop.f32.mrf.mxu0
    %v3941 = vadd.f32 %v3827, %v3940
    %v3942 = vpop.f32.mrf.mxu0
    %v3943 = vadd.f32 %v3831, %v3942
    %3944 = vmatprep.mubr.f32.mxu0 0.0
    %3945 = vmatmul.mubr.f32.gmra.mxu0 %v3756
    %v3946 = vpop.f32.mrf.mxu0
    %v3947 = vadd.f32 %v3827, %v3946
    %v3948 = vpop.f32.mrf.mxu0
    %v3949 = vadd.f32 %v3831, %v3948
    %3950 = vmatprep.mubr.f32.mxu0 0.0
    %3951 = vmatmul.mubr.f32.gmra.mxu0 %v3757
    %v3952 = vpop.f32.mrf.mxu0
    %v3953 = vadd.f32 %v3827, %v3952
    %v3954 = vpop.f32.mrf.mxu0
    %v3955 = vadd.f32 %v3831, %v3954
    %3956 = vdwg.mxu0
    %3957 = vmatprep.subr.mxu0 %v3821
    %3958 = vmatpush1.msra.mxu0 %v3820
    %3959 = vmatprep.subr.mxu0 %v3817
    %3960 = vmatpush1.msra.mxu0 %v3816
    %3961 = vmatprep.subr.mxu0 %v3813
    %3962 = vmatpush1.msra.mxu0 %v3812
    %3963 = vmatprep.subr.mxu0 %v3809
    %3964 = vmatpush1.msra.mxu0 %v3808
    %3965 = vmatprep.subr.mxu0 %v3805
    %3966 = vmatpush1.msra.mxu0 %v3804
    %3967 = vmatprep.subr.mxu0 %v3801
    %3968 = vmatpush1.msra.mxu0 %v3800
    %3969 = vmatprep.subr.mxu0 %v3797
    %3970 = vmatpush1.msra.mxu0 %v3796
    %3971 = vmatprep.subr.mxu0 %v3793
    %3972 = vmatpush1.msra.mxu0 %v3792
    %3973 = vmatprep.subr.mxu0 %v3789
    %3974 = vmatpush1.msra.mxu0 %v3788
    %3975 = vmatprep.subr.mxu0 %v3785
    %3976 = vmatpush1.msra.mxu0 %v3784
    %3977 = vmatprep.subr.mxu0 %v3781
    %3978 = vmatpush1.msra.mxu0 %v3780
    %3979 = vmatprep.subr.mxu0 %v3777
    %3980 = vmatpush1.msra.mxu0 %v3776
    %3981 = vmatprep.subr.mxu0 %v3773
    %3982 = vmatpush1.msra.mxu0 %v3772
    %3983 = vmatprep.subr.mxu0 %v3769
    %3984 = vmatpush1.msra.mxu0 %v3768
    %3985 = vmatprep.subr.mxu0 %v3765
    %3986 = vmatpush1.msra.mxu0 %v3764
    %3987 = vmatprep.subr.mxu0 %v3761
    %3988 = vmatpush1.msra.mxu0 %v3760
    %3989 = vmatprep.subr.mxu0 0.0
    %3990 = vmatpush2.msra.mxu0 0.0
    %3991 = vmatprep.subr.mxu0 0.0
    %3992 = vmatpush2.msra.mxu0 0.0
    %3993 = vmatprep.subr.mxu0 0.0
    %3994 = vmatpush2.msra.mxu0 0.0
    %3995 = vmatprep.subr.mxu0 0.0
    %3996 = vmatpush2.msra.mxu0 0.0
    %3997 = vmatprep.subr.mxu0 0.0
    %3998 = vmatpush2.msra.mxu0 0.0
    %3999 = vmatprep.subr.mxu0 0.0
    %4000 = vmatpush2.msra.mxu0 0.0
    %4001 = vmatprep.subr.mxu0 0.0
    %4002 = vmatpush2.msra.mxu0 0.0
    %4003 = vmatprep.subr.mxu0 0.0
    %4004 = vmatpush2.msra.mxu0 0.0
    %4005 = vmatprep.subr.mxu0 0.0
    %4006 = vmatpush2.msra.mxu0 0.0
    %4007 = vmatprep.subr.mxu0 0.0
    %4008 = vmatpush2.msra.mxu0 0.0
    %4009 = vmatprep.subr.mxu0 0.0
    %4010 = vmatpush2.msra.mxu0 0.0
    %4011 = vmatprep.subr.mxu0 0.0
    %4012 = vmatpush2.msra.mxu0 0.0
    %4013 = vmatprep.subr.mxu0 0.0
    %4014 = vmatpush2.msra.mxu0 0.0
    %4015 = vmatprep.subr.mxu0 0.0
    %4016 = vmatpush2.msra.mxu0 0.0
    %4017 = vmatprep.subr.mxu0 0.0
    %4018 = vmatpush2.msra.mxu0 0.0
    %4019 = vmatprep.subr.mxu0 0.0
    %4020 = vmatpush2.msra.mxu0 0.0
    %4021 = vmatprep.mubr.f32.mxu0 0.0
    %4022 = vmatmul.mubr.f32.gmra.mxu0 %v3750
    %v4023 = vpop.f32.mrf.mxu0
    %v4024 = vadd.f32 %v3835, %v4023
    %v4025 = vpop.f32.mrf.mxu0
    %v4026 = vadd.f32 %v3839, %v4025
    %4027 = vmatprep.mubr.f32.mxu0 0.0
    %4028 = vmatmul.mubr.f32.gmra.mxu0 %v3751
    %v4029 = vpop.f32.mrf.mxu0
    %v4030 = vadd.f32 %v3835, %v4029
    %v4031 = vpop.f32.mrf.mxu0
    %v4032 = vadd.f32 %v3839, %v4031
    %4033 = vmatprep.mubr.f32.mxu0 0.0
    %4034 = vmatmul.mubr.f32.gmra.mxu0 %v3752
    %v4035 = vpop.f32.mrf.mxu0
    %v4036 = vadd.f32 %v3835, %v4035
    %v4037 = vpop.f32.mrf.mxu0
    %v4038 = vadd.f32 %v3839, %v4037
    %4039 = vmatprep.mubr.f32.mxu0 0.0
    %4040 = vmatmul.mubr.f32.gmra.mxu0 %v3753
    %v4041 = vpop.f32.mrf.mxu0
    %v4042 = vadd.f32 %v3835, %v4041
    %v4043 = vpop.f32.mrf.mxu0
    %v4044 = vadd.f32 %v3839, %v4043
    %4045 = vmatprep.mubr.f32.mxu0 0.0
    %4046 = vmatmul.mubr.f32.gmra.mxu0 %v3754
    %v4047 = vpop.f32.mrf.mxu0
    %v4048 = vadd.f32 %v3835, %v4047
    %v4049 = vpop.f32.mrf.mxu0
    %v4050 = vadd.f32 %v3839, %v4049
    %4051 = vmatprep.mubr.f32.mxu0 0.0
    %4052 = vmatmul.mubr.f32.gmra.mxu0 %v3755
    %v4053 = vpop.f32.mrf.mxu0
    %v4054 = vadd.f32 %v3835, %v4053
    %v4055 = vpop.f32.mrf.mxu0
    %v4056 = vadd.f32 %v3839, %v4055
    %4057 = vmatprep.mubr.f32.mxu0 0.0
    %4058 = vmatmul.mubr.f32.gmra.mxu0 %v3756
    %v4059 = vpop.f32.mrf.mxu0
    %v4060 = vadd.f32 %v3835, %v4059
    %v4061 = vpop.f32.mrf.mxu0
    %v4062 = vadd.f32 %v3839, %v4061
    %4063 = vmatprep.mubr.f32.mxu0 0.0
    %4064 = vmatmul.mubr.f32.gmra.mxu0 %v3757
    %v4065 = vpop.f32.mrf.mxu0
    %v4066 = vadd.f32 %v3835, %v4065
    %v4067 = vpop.f32.mrf.mxu0
    %v4068 = vadd.f32 %v3839, %v4067
    %4069 = vdwg.mxu0
    %4070 = vst [vmem:[#allocation2] sm:$0xff] %v3911
    %4071 = vst [vmem:[#allocation2 + $0x8] sm:$0xff] %v3913
    %4072 = vst [vmem:[#allocation2 + $0x10] sm:$0xff] %v4024
    %4073 = vst [vmem:[#allocation2 + $0x18] sm:$0xff] %v4026
    %4074 = vst [vmem:[#allocation2 + $0x20] sm:$0xff] %v3917
    %4075 = vst [vmem:[#allocation2 + $0x28] sm:$0xff] %v3919
    %4076 = vst [vmem:[#allocation2 + $0x30] sm:$0xff] %v4030
    %4077 = vst [vmem:[#allocation2 + $0x38] sm:$0xff] %v4032
    %4078 = vst [vmem:[#allocation2 + $0x40] sm:$0xff] %v3923
    %4079 = vst [vmem:[#allocation2 + $0x48] sm:$0xff] %v3925
    %4080 = vst [vmem:[#allocation2 + $0x50] sm:$0xff] %v4036
    %4081 = vst [vmem:[#allocation2 + $0x58] sm:$0xff] %v4038
    %4082 = vst [vmem:[#allocation2 + $0x60] sm:$0xff] %v3929
    %4083 = vst [vmem:[#allocation2 + $0x68] sm:$0xff] %v3931
    %4084 = vst [vmem:[#allocation2 + $0x70] sm:$0xff] %v4042
    %4085 = vst [vmem:[#allocation2 + $0x78] sm:$0xff] %v4044
    %4086 = vst [vmem:[#allocation2 + $0x80] sm:$0xff] %v3935
    %4087 = vst [vmem:[#allocation2 + $0x88] sm:$0xff] %v3937
    %4088 = vst [vmem:[#allocation2 + $0x90] sm:$0xff] %v4048
    %4089 = vst [vmem:[#allocation2 + $0x98] sm:$0xff] %v4050
    %4090 = vst [vmem:[#allocation2 + $0xa0] sm:$0xff] %v3941
    %4091 = vst [vmem:[#allocation2 + $0xa8] sm:$0xff] %v3943
    %4092 = vst [vmem:[#allocation2 + $0xb0] sm:$0xff] %v4054
    %4093 = vst [vmem:[#allocation2 + $0xb8] sm:$0xff] %v4056
    %4094 = vst [vmem:[#allocation2 + $0xc0] sm:$0xff] %v3947
    %4095 = vst [vmem:[#allocation2 + $0xc8] sm:$0xff] %v3949
    %4096 = vst [vmem:[#allocation2 + $0xd0] sm:$0xff] %v4060
    %4097 = vst [vmem:[#allocation2 + $0xd8] sm:$0xff] %v4062
    %4098 = vst [vmem:[#allocation2 + $0xe0] sm:$0xff] %v3953
    %4099 = vst [vmem:[#allocation2 + $0xe8] sm:$0xff] %v3955
    %4100 = vst [vmem:[#allocation2 + $0xf0] sm:$0xff] %v4066
    %4101 = vst [vmem:[#allocation2 + $0xf8] sm:$0xff] %v4068
    %v4102 = vld [vmem:[#allocation11] sm:$0xff]
    %v4103 = vld [vmem:[#allocation11 + $0x8] sm:$0xff]
    %v4104 = vld [vmem:[#allocation11 + $0x10] sm:$0xff]
    %v4105 = vld [vmem:[#allocation11 + $0x18] sm:$0xff]
    %v4106 = vld [vmem:[#allocation11 + $0x20] sm:$0xff]
    %v4107 = vld [vmem:[#allocation11 + $0x28] sm:$0xff]
    %v4108 = vld [vmem:[#allocation11 + $0x30] sm:$0xff]
    %v4109 = vld [vmem:[#allocation11 + $0x38] sm:$0xff]
    %v4110 = vld [vmem:[#allocation11 + $0x40] sm:$0xff]
    %v4111 = vld [vmem:[#allocation11 + $0x48] sm:$0xff]
    %v4112 = vld [vmem:[#allocation11 + $0x50] sm:$0xff]
    %v4113 = vld [vmem:[#allocation11 + $0x58] sm:$0xff]
    %v4114 = vld [vmem:[#allocation11 + $0x60] sm:$0xff]
    %v4115 = vld [vmem:[#allocation11 + $0x68] sm:$0xff]
    %v4116 = vld [vmem:[#allocation11 + $0x70] sm:$0xff]
    %v4117 = vld [vmem:[#allocation11 + $0x78] sm:$0xff]
    %v4118 = vld [vmem:[#allocation11 + $0x80] sm:$0xff]
    %v4119 = vld [vmem:[#allocation11 + $0x88] sm:$0xff]
    %v4120 = vld [vmem:[#allocation11 + $0x90] sm:$0xff]
    %v4121 = vld [vmem:[#allocation11 + $0x98] sm:$0xff]
    %v4122 = vld [vmem:[#allocation11 + $0xa0] sm:$0xff]
    %v4123 = vld [vmem:[#allocation11 + $0xa8] sm:$0xff]
    %v4124 = vld [vmem:[#allocation11 + $0xb0] sm:$0xff]
    %v4125 = vld [vmem:[#allocation11 + $0xb8] sm:$0xff]
    %v4126 = vld [vmem:[#allocation11 + $0xc0] sm:$0xff]
    %v4127 = vld [vmem:[#allocation11 + $0xc8] sm:$0xff]
    %v4128 = vld [vmem:[#allocation11 + $0xd0] sm:$0xff]
    %v4129 = vld [vmem:[#allocation11 + $0xd8] sm:$0xff]
    %v4130 = vld [vmem:[#allocation11 + $0xe0] sm:$0xff]
    %v4131 = vld [vmem:[#allocation11 + $0xe8] sm:$0xff]
    %v4132 = vld [vmem:[#allocation11 + $0xf0] sm:$0xff]
    %v4133 = vld [vmem:[#allocation11 + $0xf8] sm:$0xff]
    %v4134 = vld [vmem:[#allocation11 + $0x100] sm:$0xff]
    %v4135 = vld [vmem:[#allocation11 + $0x108] sm:$0xff]
    %v4136 = vld [vmem:[#allocation11 + $0x110] sm:$0xff]
    %v4137 = vld [vmem:[#allocation11 + $0x118] sm:$0xff]
    %v4138 = vld [vmem:[#allocation11 + $0x120] sm:$0xff]
    %v4139 = vld [vmem:[#allocation11 + $0x128] sm:$0xff]
    %v4140 = vld [vmem:[#allocation11 + $0x130] sm:$0xff]
    %v4141 = vld [vmem:[#allocation11 + $0x138] sm:$0xff]
    %v4142 = vld [vmem:[#allocation11 + $0x140] sm:$0xff]
    %v4143 = vld [vmem:[#allocation11 + $0x148] sm:$0xff]
    %v4144 = vld [vmem:[#allocation11 + $0x150] sm:$0xff]
    %v4145 = vld [vmem:[#allocation11 + $0x158] sm:$0xff]
    %v4146 = vld [vmem:[#allocation11 + $0x160] sm:$0xff]
    %v4147 = vld [vmem:[#allocation11 + $0x168] sm:$0xff]
    %v4148 = vld [vmem:[#allocation11 + $0x170] sm:$0xff]
    %v4149 = vld [vmem:[#allocation11 + $0x178] sm:$0xff]
    %v4150 = vld [vmem:[#allocation11 + $0x180] sm:$0xff]
    %v4151 = vld [vmem:[#allocation11 + $0x188] sm:$0xff]
    %v4152 = vld [vmem:[#allocation11 + $0x190] sm:$0xff]
    %v4153 = vld [vmem:[#allocation11 + $0x198] sm:$0xff]
    %v4154 = vld [vmem:[#allocation11 + $0x1a0] sm:$0xff]
    %v4155 = vld [vmem:[#allocation11 + $0x1a8] sm:$0xff]
    %v4156 = vld [vmem:[#allocation11 + $0x1b0] sm:$0xff]
    %v4157 = vld [vmem:[#allocation11 + $0x1b8] sm:$0xff]
    %v4158 = vld [vmem:[#allocation11 + $0x1c0] sm:$0xff]
    %v4159 = vld [vmem:[#allocation11 + $0x1c8] sm:$0xff]
    %v4160 = vld [vmem:[#allocation11 + $0x1d0] sm:$0xff]
    %v4161 = vld [vmem:[#allocation11 + $0x1d8] sm:$0xff]
    %v4162 = vld [vmem:[#allocation11 + $0x1e0] sm:$0xff]
    %v4163 = vld [vmem:[#allocation11 + $0x1e8] sm:$0xff]
    %v4164 = vld [vmem:[#allocation11 + $0x1f0] sm:$0xff]
    %v4165 = vld [vmem:[#allocation11 + $0x1f8] sm:$0xff]
    %v4166 = vld [vmem:[#allocation2] sm:$0xff]
    %v4167 = vld [vmem:[#allocation2 + $0x8] sm:$0xff]
    %v4168 = vld [vmem:[#allocation2 + $0x10] sm:$0xff]
    %v4169 = vld [vmem:[#allocation2 + $0x18] sm:$0xff]
    %4170 = vmatprep.subr.mxu0 %v4163
    %4171 = vmatpush1.msra.mxu0 %v4162
    %4172 = vmatprep.subr.mxu0 %v4159
    %4173 = vmatpush1.msra.mxu0 %v4158
    %4174 = vmatprep.subr.mxu0 %v4155
    %4175 = vmatpush1.msra.mxu0 %v4154
    %4176 = vmatprep.subr.mxu0 %v4151
    %4177 = vmatpush1.msra.mxu0 %v4150
    %4178 = vmatprep.subr.mxu0 %v4147
    %4179 = vmatpush1.msra.mxu0 %v4146
    %4180 = vmatprep.subr.mxu0 %v4143
    %4181 = vmatpush1.msra.mxu0 %v4142
    %4182 = vmatprep.subr.mxu0 %v4139
    %4183 = vmatpush1.msra.mxu0 %v4138
    %4184 = vmatprep.subr.mxu0 %v4135
    %4185 = vmatpush1.msra.mxu0 %v4134
    %4186 = vmatprep.subr.mxu0 %v4131
    %4187 = vmatpush1.msra.mxu0 %v4130
    %4188 = vmatprep.subr.mxu0 %v4127
    %4189 = vmatpush1.msra.mxu0 %v4126
    %4190 = vmatprep.subr.mxu0 %v4123
    %4191 = vmatpush1.msra.mxu0 %v4122
    %4192 = vmatprep.subr.mxu0 %v4119
    %4193 = vmatpush1.msra.mxu0 %v4118
    %4194 = vmatprep.subr.mxu0 %v4115
    %4195 = vmatpush1.msra.mxu0 %v4114
    %4196 = vmatprep.subr.mxu0 %v4111
    %4197 = vmatpush1.msra.mxu0 %v4110
    %4198 = vmatprep.subr.mxu0 %v4107
    %4199 = vmatpush1.msra.mxu0 %v4106
    %4200 = vmatprep.subr.mxu0 %v4103
    %4201 = vmatpush1.msra.mxu0 %v4102
    %4202 = vmatprep.subr.mxu0 0.0
    %4203 = vmatpush2.msra.mxu0 0.0
    %4204 = vmatprep.subr.mxu0 0.0
    %4205 = vmatpush2.msra.mxu0 0.0
    %4206 = vmatprep.subr.mxu0 0.0
    %4207 = vmatpush2.msra.mxu0 0.0
    %4208 = vmatprep.subr.mxu0 0.0
    %4209 = vmatpush2.msra.mxu0 0.0
    %4210 = vmatprep.subr.mxu0 0.0
    %4211 = vmatpush2.msra.mxu0 0.0
    %4212 = vmatprep.subr.mxu0 0.0
    %4213 = vmatpush2.msra.mxu0 0.0
    %4214 = vmatprep.subr.mxu0 0.0
    %4215 = vmatpush2.msra.mxu0 0.0
    %4216 = vmatprep.subr.mxu0 0.0
    %4217 = vmatpush2.msra.mxu0 0.0
    %4218 = vmatprep.subr.mxu0 0.0
    %4219 = vmatpush2.msra.mxu0 0.0
    %4220 = vmatprep.subr.mxu0 0.0
    %4221 = vmatpush2.msra.mxu0 0.0
    %4222 = vmatprep.subr.mxu0 0.0
    %4223 = vmatpush2.msra.mxu0 0.0
    %4224 = vmatprep.subr.mxu0 0.0
    %4225 = vmatpush2.msra.mxu0 0.0
    %4226 = vmatprep.subr.mxu0 0.0
    %4227 = vmatpush2.msra.mxu0 0.0
    %4228 = vmatprep.subr.mxu0 0.0
    %4229 = vmatpush2.msra.mxu0 0.0
    %4230 = vmatprep.subr.mxu0 0.0
    %4231 = vmatpush2.msra.mxu0 0.0
    %4232 = vmatprep.subr.mxu0 0.0
    %4233 = vmatpush2.msra.mxu0 0.0
    %4234 = vmatprep.mubr.f32.mxu0 0.0
    %4235 = vmatmul.mubr.f32.gmra.mxu0 0.0
    %v4236 = vpop.f32.mrf.mxu0
    %v4237 = vadd.f32 0.0, %v4236
    %v4238 = vpop.f32.mrf.mxu0
    %v4239 = vadd.f32 0.0, %v4238
    %4240 = vdwg.mxu0
    %4241 = vmatprep.subr.mxu0 %v4165
    %4242 = vmatpush1.msra.mxu0 %v4164
    %4243 = vmatprep.subr.mxu0 %v4161
    %4244 = vmatpush1.msra.mxu0 %v4160
    %4245 = vmatprep.subr.mxu0 %v4157
    %4246 = vmatpush1.msra.mxu0 %v4156
    %4247 = vmatprep.subr.mxu0 %v4153
    %4248 = vmatpush1.msra.mxu0 %v4152
    %4249 = vmatprep.subr.mxu0 %v4149
    %4250 = vmatpush1.msra.mxu0 %v4148
    %4251 = vmatprep.subr.mxu0 %v4145
    %4252 = vmatpush1.msra.mxu0 %v4144
    %4253 = vmatprep.subr.mxu0 %v4141
    %4254 = vmatpush1.msra.mxu0 %v4140
    %4255 = vmatprep.subr.mxu0 %v4137
    %4256 = vmatpush1.msra.mxu0 %v4136
    %4257 = vmatprep.subr.mxu0 %v4133
    %4258 = vmatpush1.msra.mxu0 %v4132
    %4259 = vmatprep.subr.mxu0 %v4129
    %4260 = vmatpush1.msra.mxu0 %v4128
    %4261 = vmatprep.subr.mxu0 %v4125
    %4262 = vmatpush1.msra.mxu0 %v4124
    %4263 = vmatprep.subr.mxu0 %v4121
    %4264 = vmatpush1.msra.mxu0 %v4120
    %4265 = vmatprep.subr.mxu0 %v4117
    %4266 = vmatpush1.msra.mxu0 %v4116
    %4267 = vmatprep.subr.mxu0 %v4113
    %4268 = vmatpush1.msra.mxu0 %v4112
    %4269 = vmatprep.subr.mxu0 %v4109
    %4270 = vmatpush1.msra.mxu0 %v4108
    %4271 = vmatprep.subr.mxu0 %v4105
    %4272 = vmatpush1.msra.mxu0 %v4104
    %4273 = vmatprep.subr.mxu0 0.0
    %4274 = vmatpush2.msra.mxu0 0.0
    %4275 = vmatprep.subr.mxu0 0.0
    %4276 = vmatpush2.msra.mxu0 0.0
    %4277 = vmatprep.subr.mxu0 0.0
    %4278 = vmatpush2.msra.mxu0 0.0
    %4279 = vmatprep.subr.mxu0 0.0
    %4280 = vmatpush2.msra.mxu0 0.0
    %4281 = vmatprep.subr.mxu0 0.0
    %4282 = vmatpush2.msra.mxu0 0.0
    %4283 = vmatprep.subr.mxu0 0.0
    %4284 = vmatpush2.msra.mxu0 0.0
    %4285 = vmatprep.subr.mxu0 0.0
    %4286 = vmatpush2.msra.mxu0 0.0
    %4287 = vmatprep.subr.mxu0 0.0
    %4288 = vmatpush2.msra.mxu0 0.0
    %4289 = vmatprep.subr.mxu0 0.0
    %4290 = vmatpush2.msra.mxu0 0.0
    %4291 = vmatprep.subr.mxu0 0.0
    %4292 = vmatpush2.msra.mxu0 0.0
    %4293 = vmatprep.subr.mxu0 0.0
    %4294 = vmatpush2.msra.mxu0 0.0
    %4295 = vmatprep.subr.mxu0 0.0
    %4296 = vmatpush2.msra.mxu0 0.0
    %4297 = vmatprep.subr.mxu0 0.0
    %4298 = vmatpush2.msra.mxu0 0.0
    %4299 = vmatprep.subr.mxu0 0.0
    %4300 = vmatpush2.msra.mxu0 0.0
    %4301 = vmatprep.subr.mxu0 0.0
    %4302 = vmatpush2.msra.mxu0 0.0
    %4303 = vmatprep.subr.mxu0 0.0
    %4304 = vmatpush2.msra.mxu0 0.0
    %4305 = vmatprep.mubr.f32.mxu0 0.0
    %4306 = vmatmul.mubr.f32.gmra.mxu0 0.0
    %v4307 = vpop.f32.mrf.mxu0
    %v4308 = vadd.f32 0.0, %v4307
    %v4309 = vpop.f32.mrf.mxu0
    %v4310 = vadd.f32 0.0, %v4309
    %4311 = vdwg.mxu0
    %v4312 = vadd.f32 %v4166, %v4237
    %v4313 = vadd.f32 %v4167, %v4239
    %v4314 = vadd.f32 %v4168, %v4308
    %v4315 = vadd.f32 %v4169, %v4310
    %v4316 = vxor.u32 %v4312, 2147483648
    %v4317 = vxor.u32 %v4313, 2147483648
    %v4318 = vxor.u32 %v4314, 2147483648
    %v4319 = vmul.f32 %v4316, 1.442695
    %v4320 = vpow.pop %v4319
    %v4321 = vmul.f32 %v4317, 1.442695
    %v4322 = vpow.pop %v4321
    %v4323 = vmul.f32 %v4318, 1.442695
    %v4324 = vpow.pop %v4323
    %v4325 = vadd.f32 %v4320, 1.0
    %v4326 = vadd.f32 %v4322, 1.0
    %v4327 = vadd.f32 %v4324, 1.0
    %v4328 = vrcp.pop %v4325
    %v4329 = vmul.f32 1.0, %v4328
    %v4330 = vrcp.pop %v4326
    %v4331 = vmul.f32 1.0, %v4330
    %v4332 = vrcp.pop %v4327
    %v4333 = vmul.f32 1.0, %v4332
    %v4334 = vtanh.pop %v4315
    %v4335 = vmul.f32 %v4331, 0.0
    %v4336 = vmul.f32 %v4329, %v4334
    %v4337 = vadd.f32 %v4335, %v4336
    %v4338 = vtanh.pop %v4337
    %v4339 = vmul.f32 %v4333, %v4338
    %v4340 = vld [vmem:[%s695] sm:$0xff]
    %v4341 = vld [vmem:[%s695 + $0x8] sm:$0xff]
    %v4342 = vld [vmem:[%s695 + $0x10] sm:$0xff]
    %v4343 = vld [vmem:[%s695 + $0x18] sm:$0xff]
    %4344 = vmatprep.subr.mxu0 %v4163
    %4345 = vmatpush1.msra.mxu0 %v4162
    %4346 = vmatprep.subr.mxu0 %v4159
    %4347 = vmatpush1.msra.mxu0 %v4158
    %4348 = vmatprep.subr.mxu0 %v4155
    %4349 = vmatpush1.msra.mxu0 %v4154
    %4350 = vmatprep.subr.mxu0 %v4151
    %4351 = vmatpush1.msra.mxu0 %v4150
    %4352 = vmatprep.subr.mxu0 %v4147
    %4353 = vmatpush1.msra.mxu0 %v4146
    %4354 = vmatprep.subr.mxu0 %v4143
    %4355 = vmatpush1.msra.mxu0 %v4142
    %4356 = vmatprep.subr.mxu0 %v4139
    %4357 = vmatpush1.msra.mxu0 %v4138
    %4358 = vmatprep.subr.mxu0 %v4135
    %4359 = vmatpush1.msra.mxu0 %v4134
    %4360 = vmatprep.subr.mxu0 %v4131
    %4361 = vmatpush1.msra.mxu0 %v4130
    %4362 = vmatprep.subr.mxu0 %v4127
    %4363 = vmatpush1.msra.mxu0 %v4126
    %4364 = vmatprep.subr.mxu0 %v4123
    %4365 = vmatpush1.msra.mxu0 %v4122
    %4366 = vmatprep.subr.mxu0 %v4119
    %4367 = vmatpush1.msra.mxu0 %v4118
    %4368 = vmatprep.subr.mxu0 %v4115
    %4369 = vmatpush1.msra.mxu0 %v4114
    %4370 = vmatprep.subr.mxu0 %v4111
    %4371 = vmatpush1.msra.mxu0 %v4110
    %4372 = vmatprep.subr.mxu0 %v4107
    %4373 = vmatpush1.msra.mxu0 %v4106
    %4374 = vmatprep.subr.mxu0 %v4103
    %4375 = vmatpush1.msra.mxu0 %v4102
    %4376 = vmatprep.subr.mxu0 0.0
    %4377 = vmatpush2.msra.mxu0 0.0
    %4378 = vmatprep.subr.mxu0 0.0
    %4379 = vmatpush2.msra.mxu0 0.0
    %4380 = vmatprep.subr.mxu0 0.0
    %4381 = vmatpush2.msra.mxu0 0.0
    %4382 = vmatprep.subr.mxu0 0.0
    %4383 = vmatpush2.msra.mxu0 0.0
    %4384 = vmatprep.subr.mxu0 0.0
    %4385 = vmatpush2.msra.mxu0 0.0
    %4386 = vmatprep.subr.mxu0 0.0
    %4387 = vmatpush2.msra.mxu0 0.0
    %4388 = vmatprep.subr.mxu0 0.0
    %4389 = vmatpush2.msra.mxu0 0.0
    %4390 = vmatprep.subr.mxu0 0.0
    %4391 = vmatpush2.msra.mxu0 0.0
    %4392 = vmatprep.subr.mxu0 0.0
    %4393 = vmatpush2.msra.mxu0 0.0
    %4394 = vmatprep.subr.mxu0 0.0
    %4395 = vmatpush2.msra.mxu0 0.0
    %4396 = vmatprep.subr.mxu0 0.0
    %4397 = vmatpush2.msra.mxu0 0.0
    %4398 = vmatprep.subr.mxu0 0.0
    %4399 = vmatpush2.msra.mxu0 0.0
    %4400 = vmatprep.subr.mxu0 0.0
    %4401 = vmatpush2.msra.mxu0 0.0
    %4402 = vmatprep.subr.mxu0 0.0
    %4403 = vmatpush2.msra.mxu0 0.0
    %4404 = vmatprep.subr.mxu0 0.0
    %4405 = vmatpush2.msra.mxu0 0.0
    %4406 = vmatprep.subr.mxu0 0.0
    %4407 = vmatpush2.msra.mxu0 0.0
    %4408 = vmatprep.mubr.f32.mxu0 0.0
    %4409 = vmatmul.mubr.f32.gmra.mxu0 %v4339
    %v4410 = vpop.f32.mrf.mxu0
    %v4411 = vadd.f32 0.0, %v4410
    %v4412 = vpop.f32.mrf.mxu0
    %v4413 = vadd.f32 0.0, %v4412
    %4414 = vdwg.mxu0
    %4415 = vmatprep.subr.mxu0 %v4165
    %4416 = vmatpush1.msra.mxu0 %v4164
    %4417 = vmatprep.subr.mxu0 %v4161
    %4418 = vmatpush1.msra.mxu0 %v4160
    %4419 = vmatprep.subr.mxu0 %v4157
    %4420 = vmatpush1.msra.mxu0 %v4156
    %4421 = vmatprep.subr.mxu0 %v4153
    %4422 = vmatpush1.msra.mxu0 %v4152
    %4423 = vmatprep.subr.mxu0 %v4149
    %4424 = vmatpush1.msra.mxu0 %v4148
    %4425 = vmatprep.subr.mxu0 %v4145
    %4426 = vmatpush1.msra.mxu0 %v4144
    %4427 = vmatprep.subr.mxu0 %v4141
    %4428 = vmatpush1.msra.mxu0 %v4140
    %4429 = vmatprep.subr.mxu0 %v4137
    %4430 = vmatpush1.msra.mxu0 %v4136
    %4431 = vmatprep.subr.mxu0 %v4133
    %4432 = vmatpush1.msra.mxu0 %v4132
    %4433 = vmatprep.subr.mxu0 %v4129
    %4434 = vmatpush1.msra.mxu0 %v4128
    %4435 = vmatprep.subr.mxu0 %v4125
    %4436 = vmatpush1.msra.mxu0 %v4124
    %4437 = vmatprep.subr.mxu0 %v4121
    %4438 = vmatpush1.msra.mxu0 %v4120
    %4439 = vmatprep.subr.mxu0 %v4117
    %4440 = vmatpush1.msra.mxu0 %v4116
    %4441 = vmatprep.subr.mxu0 %v4113
    %4442 = vmatpush1.msra.mxu0 %v4112
    %4443 = vmatprep.subr.mxu0 %v4109
    %4444 = vmatpush1.msra.mxu0 %v4108
    %4445 = vmatprep.subr.mxu0 %v4105
    %4446 = vmatpush1.msra.mxu0 %v4104
    %4447 = vmatprep.subr.mxu0 0.0
    %4448 = vmatpush2.msra.mxu0 0.0
    %4449 = vmatprep.subr.mxu0 0.0
    %4450 = vmatpush2.msra.mxu0 0.0
    %4451 = vmatprep.subr.mxu0 0.0
    %4452 = vmatpush2.msra.mxu0 0.0
    %4453 = vmatprep.subr.mxu0 0.0
    %4454 = vmatpush2.msra.mxu0 0.0
    %4455 = vmatprep.subr.mxu0 0.0
    %4456 = vmatpush2.msra.mxu0 0.0
    %4457 = vmatprep.subr.mxu0 0.0
    %4458 = vmatpush2.msra.mxu0 0.0
    %4459 = vmatprep.subr.mxu0 0.0
    %4460 = vmatpush2.msra.mxu0 0.0
    %4461 = vmatprep.subr.mxu0 0.0
    %4462 = vmatpush2.msra.mxu0 0.0
    %4463 = vmatprep.subr.mxu0 0.0
    %4464 = vmatpush2.msra.mxu0 0.0
    %4465 = vmatprep.subr.mxu0 0.0
    %4466 = vmatpush2.msra.mxu0 0.0
    %4467 = vmatprep.subr.mxu0 0.0
    %4468 = vmatpush2.msra.mxu0 0.0
    %4469 = vmatprep.subr.mxu0 0.0
    %4470 = vmatpush2.msra.mxu0 0.0
    %4471 = vmatprep.subr.mxu0 0.0
    %4472 = vmatpush2.msra.mxu0 0.0
    %4473 = vmatprep.subr.mxu0 0.0
    %4474 = vmatpush2.msra.mxu0 0.0
    %4475 = vmatprep.subr.mxu0 0.0
    %4476 = vmatpush2.msra.mxu0 0.0
    %4477 = vmatprep.subr.mxu0 0.0
    %4478 = vmatpush2.msra.mxu0 0.0
    %4479 = vmatprep.mubr.f32.mxu0 0.0
    %4480 = vmatmul.mubr.f32.gmra.mxu0 %v4339
    %v4481 = vpop.f32.mrf.mxu0
    %v4482 = vadd.f32 0.0, %v4481
    %v4483 = vpop.f32.mrf.mxu0
    %v4484 = vadd.f32 0.0, %v4483
    %4485 = vdwg.mxu0
    %v4486 = vadd.f32 %v4340, %v4411
    %v4487 = vadd.f32 %v4341, %v4413
    %v4488 = vadd.f32 %v4342, %v4482
    %v4489 = vadd.f32 %v4343, %v4484
    %v4490 = vxor.u32 %v4486, 2147483648
    %v4491 = vxor.u32 %v4487, 2147483648
    %v4492 = vxor.u32 %v4488, 2147483648
    %v4493 = vmul.f32 %v4490, 1.442695
    %v4494 = vpow.pop %v4493
    %v4495 = vmul.f32 %v4491, 1.442695
    %v4496 = vpow.pop %v4495
    %v4497 = vmul.f32 %v4492, 1.442695
    %v4498 = vpow.pop %v4497
    %v4499 = vadd.f32 %v4494, 1.0
    %v4500 = vadd.f32 %v4496, 1.0
    %v4501 = vadd.f32 %v4498, 1.0
    %v4502 = vrcp.pop %v4499
    %v4503 = vmul.f32 1.0, %v4502
    %v4504 = vrcp.pop %v4500
    %v4505 = vmul.f32 1.0, %v4504
    %v4506 = vrcp.pop %v4501
    %v4507 = vmul.f32 1.0, %v4506
    %v4508 = vtanh.pop %v4489
    %v4509 = vmul.f32 %v4505, %v4337
    %v4510 = vmul.f32 %v4503, %v4508
    %v4511 = vadd.f32 %v4509, %v4510
    %v4512 = vtanh.pop %v4511
    %v4513 = vmul.f32 %v4507, %v4512
    %v4514 = vld [vmem:[%s872] sm:$0xff]
    %v4515 = vld [vmem:[%s872 + $0x8] sm:$0xff]
    %v4516 = vld [vmem:[%s872 + $0x10] sm:$0xff]
    %v4517 = vld [vmem:[%s872 + $0x18] sm:$0xff]
    %4518 = vmatprep.subr.mxu0 %v4163
    %4519 = vmatpush1.msra.mxu0 %v4162
    %4520 = vmatprep.subr.mxu0 %v4159
    %4521 = vmatpush1.msra.mxu0 %v4158
    %4522 = vmatprep.subr.mxu0 %v4155
    %4523 = vmatpush1.msra.mxu0 %v4154
    %4524 = vmatprep.subr.mxu0 %v4151
    %4525 = vmatpush1.msra.mxu0 %v4150
    %4526 = vmatprep.subr.mxu0 %v4147
    %4527 = vmatpush1.msra.mxu0 %v4146
    %4528 = vmatprep.subr.mxu0 %v4143
    %4529 = vmatpush1.msra.mxu0 %v4142
    %4530 = vmatprep.subr.mxu0 %v4139
    %4531 = vmatpush1.msra.mxu0 %v4138
    %4532 = vmatprep.subr.mxu0 %v4135
    %4533 = vmatpush1.msra.mxu0 %v4134
    %4534 = vmatprep.subr.mxu0 %v4131
    %4535 = vmatpush1.msra.mxu0 %v4130
    %4536 = vmatprep.subr.mxu0 %v4127
    %4537 = vmatpush1.msra.mxu0 %v4126
    %4538 = vmatprep.subr.mxu0 %v4123
    %4539 = vmatpush1.msra.mxu0 %v4122
    %4540 = vmatprep.subr.mxu0 %v4119
    %4541 = vmatpush1.msra.mxu0 %v4118
    %4542 = vmatprep.subr.mxu0 %v4115
    %4543 = vmatpush1.msra.mxu0 %v4114
    %4544 = vmatprep.subr.mxu0 %v4111
    %4545 = vmatpush1.msra.mxu0 %v4110
    %4546 = vmatprep.subr.mxu0 %v4107
    %4547 = vmatpush1.msra.mxu0 %v4106
    %4548 = vmatprep.subr.mxu0 %v4103
    %4549 = vmatpush1.msra.mxu0 %v4102
    %4550 = vmatprep.subr.mxu0 0.0
    %4551 = vmatpush2.msra.mxu0 0.0
    %4552 = vmatprep.subr.mxu0 0.0
    %4553 = vmatpush2.msra.mxu0 0.0
    %4554 = vmatprep.subr.mxu0 0.0
    %4555 = vmatpush2.msra.mxu0 0.0
    %4556 = vmatprep.subr.mxu0 0.0
    %4557 = vmatpush2.msra.mxu0 0.0
    %4558 = vmatprep.subr.mxu0 0.0
    %4559 = vmatpush2.msra.mxu0 0.0
    %4560 = vmatprep.subr.mxu0 0.0
    %4561 = vmatpush2.msra.mxu0 0.0
    %4562 = vmatprep.subr.mxu0 0.0
    %4563 = vmatpush2.msra.mxu0 0.0
    %4564 = vmatprep.subr.mxu0 0.0
    %4565 = vmatpush2.msra.mxu0 0.0
    %4566 = vmatprep.subr.mxu0 0.0
    %4567 = vmatpush2.msra.mxu0 0.0
    %4568 = vmatprep.subr.mxu0 0.0
    %4569 = vmatpush2.msra.mxu0 0.0
    %4570 = vmatprep.subr.mxu0 0.0
    %4571 = vmatpush2.msra.mxu0 0.0
    %4572 = vmatprep.subr.mxu0 0.0
    %4573 = vmatpush2.msra.mxu0 0.0
    %4574 = vmatprep.subr.mxu0 0.0
    %4575 = vmatpush2.msra.mxu0 0.0
    %4576 = vmatprep.subr.mxu0 0.0
    %4577 = vmatpush2.msra.mxu0 0.0
    %4578 = vmatprep.subr.mxu0 0.0
    %4579 = vmatpush2.msra.mxu0 0.0
    %4580 = vmatprep.subr.mxu0 0.0
    %4581 = vmatpush2.msra.mxu0 0.0
    %4582 = vmatprep.mubr.f32.mxu0 0.0
    %4583 = vmatmul.mubr.f32.gmra.mxu0 %v4513
    %v4584 = vpop.f32.mrf.mxu0
    %v4585 = vadd.f32 0.0, %v4584
    %v4586 = vpop.f32.mrf.mxu0
    %v4587 = vadd.f32 0.0, %v4586
    %4588 = vdwg.mxu0
    %4589 = vmatprep.subr.mxu0 %v4165
    %4590 = vmatpush1.msra.mxu0 %v4164
    %4591 = vmatprep.subr.mxu0 %v4161
    %4592 = vmatpush1.msra.mxu0 %v4160
    %4593 = vmatprep.subr.mxu0 %v4157
    %4594 = vmatpush1.msra.mxu0 %v4156
    %4595 = vmatprep.subr.mxu0 %v4153
    %4596 = vmatpush1.msra.mxu0 %v4152
    %4597 = vmatprep.subr.mxu0 %v4149
    %4598 = vmatpush1.msra.mxu0 %v4148
    %4599 = vmatprep.subr.mxu0 %v4145
    %4600 = vmatpush1.msra.mxu0 %v4144
    %4601 = vmatprep.subr.mxu0 %v4141
    %4602 = vmatpush1.msra.mxu0 %v4140
    %4603 = vmatprep.subr.mxu0 %v4137
    %4604 = vmatpush1.msra.mxu0 %v4136
    %4605 = vmatprep.subr.mxu0 %v4133
    %4606 = vmatpush1.msra.mxu0 %v4132
    %4607 = vmatprep.subr.mxu0 %v4129
    %4608 = vmatpush1.msra.mxu0 %v4128
    %4609 = vmatprep.subr.mxu0 %v4125
    %4610 = vmatpush1.msra.mxu0 %v4124
    %4611 = vmatprep.subr.mxu0 %v4121
    %4612 = vmatpush1.msra.mxu0 %v4120
    %4613 = vmatprep.subr.mxu0 %v4117
    %4614 = vmatpush1.msra.mxu0 %v4116
    %4615 = vmatprep.subr.mxu0 %v4113
    %4616 = vmatpush1.msra.mxu0 %v4112
    %4617 = vmatprep.subr.mxu0 %v4109
    %4618 = vmatpush1.msra.mxu0 %v4108
    %4619 = vmatprep.subr.mxu0 %v4105
    %4620 = vmatpush1.msra.mxu0 %v4104
    %4621 = vmatprep.subr.mxu0 0.0
    %4622 = vmatpush2.msra.mxu0 0.0
    %4623 = vmatprep.subr.mxu0 0.0
    %4624 = vmatpush2.msra.mxu0 0.0
    %4625 = vmatprep.subr.mxu0 0.0
    %4626 = vmatpush2.msra.mxu0 0.0
    %4627 = vmatprep.subr.mxu0 0.0
    %4628 = vmatpush2.msra.mxu0 0.0
    %4629 = vmatprep.subr.mxu0 0.0
    %4630 = vmatpush2.msra.mxu0 0.0
    %4631 = vmatprep.subr.mxu0 0.0
    %4632 = vmatpush2.msra.mxu0 0.0
    %4633 = vmatprep.subr.mxu0 0.0
    %4634 = vmatpush2.msra.mxu0 0.0
    %4635 = vmatprep.subr.mxu0 0.0
    %4636 = vmatpush2.msra.mxu0 0.0
    %4637 = vmatprep.subr.mxu0 0.0
    %4638 = vmatpush2.msra.mxu0 0.0
    %4639 = vmatprep.subr.mxu0 0.0
    %4640 = vmatpush2.msra.mxu0 0.0
    %4641 = vmatprep.subr.mxu0 0.0
    %4642 = vmatpush2.msra.mxu0 0.0
    %4643 = vmatprep.subr.mxu0 0.0
    %4644 = vmatpush2.msra.mxu0 0.0
    %4645 = vmatprep.subr.mxu0 0.0
    %4646 = vmatpush2.msra.mxu0 0.0
    %4647 = vmatprep.subr.mxu0 0.0
    %4648 = vmatpush2.msra.mxu0 0.0
    %4649 = vmatprep.subr.mxu0 0.0
    %4650 = vmatpush2.msra.mxu0 0.0
    %4651 = vmatprep.subr.mxu0 0.0
    %4652 = vmatpush2.msra.mxu0 0.0
    %4653 = vmatprep.mubr.f32.mxu0 0.0
    %4654 = vmatmul.mubr.f32.gmra.mxu0 %v4513
    %v4655 = vpop.f32.mrf.mxu0
    %v4656 = vadd.f32 0.0, %v4655
    %v4657 = vpop.f32.mrf.mxu0
    %v4658 = vadd.f32 0.0, %v4657
    %4659 = vdwg.mxu0
    %v4660 = vadd.f32 %v4514, %v4585
    %v4661 = vadd.f32 %v4515, %v4587
    %v4662 = vadd.f32 %v4516, %v4656
    %v4663 = vadd.f32 %v4517, %v4658
    %v4664 = vxor.u32 %v4660, 2147483648
    %v4665 = vxor.u32 %v4661, 2147483648
    %v4666 = vxor.u32 %v4662, 2147483648
    %v4667 = vmul.f32 %v4664, 1.442695
    %v4668 = vpow.pop %v4667
    %v4669 = vmul.f32 %v4665, 1.442695
    %v4670 = vpow.pop %v4669
    %v4671 = vmul.f32 %v4666, 1.442695
    %v4672 = vpow.pop %v4671
    %v4673 = vadd.f32 %v4668, 1.0
    %v4674 = vadd.f32 %v4670, 1.0
    %v4675 = vadd.f32 %v4672, 1.0
    %v4676 = vrcp.pop %v4673
    %v4677 = vmul.f32 1.0, %v4676
    %v4678 = vrcp.pop %v4674
    %v4679 = vmul.f32 1.0, %v4678
    %v4680 = vrcp.pop %v4675
    %v4681 = vmul.f32 1.0, %v4680
    %v4682 = vtanh.pop %v4663
    %v4683 = vmul.f32 %v4679, %v4511
    %v4684 = vmul.f32 %v4677, %v4682
    %v4685 = vadd.f32 %v4683, %v4684
    %v4686 = vtanh.pop %v4685
    %v4687 = vmul.f32 %v4681, %v4686
    %v4688 = vld [vmem:[%s1049] sm:$0xff]
    %v4689 = vld [vmem:[%s1049 + $0x8] sm:$0xff]
    %v4690 = vld [vmem:[%s1049 + $0x10] sm:$0xff]
    %v4691 = vld [vmem:[%s1049 + $0x18] sm:$0xff]
    %4692 = vmatprep.subr.mxu0 %v4163
    %4693 = vmatpush1.msra.mxu0 %v4162
    %4694 = vmatprep.subr.mxu0 %v4159
    %4695 = vmatpush1.msra.mxu0 %v4158
    %4696 = vmatprep.subr.mxu0 %v4155
    %4697 = vmatpush1.msra.mxu0 %v4154
    %4698 = vmatprep.subr.mxu0 %v4151
    %4699 = vmatpush1.msra.mxu0 %v4150
    %4700 = vmatprep.subr.mxu0 %v4147
    %4701 = vmatpush1.msra.mxu0 %v4146
    %4702 = vmatprep.subr.mxu0 %v4143
    %4703 = vmatpush1.msra.mxu0 %v4142
    %4704 = vmatprep.subr.mxu0 %v4139
    %4705 = vmatpush1.msra.mxu0 %v4138
    %4706 = vmatprep.subr.mxu0 %v4135
    %4707 = vmatpush1.msra.mxu0 %v4134
    %4708 = vmatprep.subr.mxu0 %v4131
    %4709 = vmatpush1.msra.mxu0 %v4130
    %4710 = vmatprep.subr.mxu0 %v4127
    %4711 = vmatpush1.msra.mxu0 %v4126
    %4712 = vmatprep.subr.mxu0 %v4123
    %4713 = vmatpush1.msra.mxu0 %v4122
    %4714 = vmatprep.subr.mxu0 %v4119
    %4715 = vmatpush1.msra.mxu0 %v4118
    %4716 = vmatprep.subr.mxu0 %v4115
    %4717 = vmatpush1.msra.mxu0 %v4114
    %4718 = vmatprep.subr.mxu0 %v4111
    %4719 = vmatpush1.msra.mxu0 %v4110
    %4720 = vmatprep.subr.mxu0 %v4107
    %4721 = vmatpush1.msra.mxu0 %v4106
    %4722 = vmatprep.subr.mxu0 %v4103
    %4723 = vmatpush1.msra.mxu0 %v4102
    %4724 = vmatprep.subr.mxu0 0.0
    %4725 = vmatpush2.msra.mxu0 0.0
    %4726 = vmatprep.subr.mxu0 0.0
    %4727 = vmatpush2.msra.mxu0 0.0
    %4728 = vmatprep.subr.mxu0 0.0
    %4729 = vmatpush2.msra.mxu0 0.0
    %4730 = vmatprep.subr.mxu0 0.0
    %4731 = vmatpush2.msra.mxu0 0.0
    %4732 = vmatprep.subr.mxu0 0.0
    %4733 = vmatpush2.msra.mxu0 0.0
    %4734 = vmatprep.subr.mxu0 0.0
    %4735 = vmatpush2.msra.mxu0 0.0
    %4736 = vmatprep.subr.mxu0 0.0
    %4737 = vmatpush2.msra.mxu0 0.0
    %4738 = vmatprep.subr.mxu0 0.0
    %4739 = vmatpush2.msra.mxu0 0.0
    %4740 = vmatprep.subr.mxu0 0.0
    %4741 = vmatpush2.msra.mxu0 0.0
    %4742 = vmatprep.subr.mxu0 0.0
    %4743 = vmatpush2.msra.mxu0 0.0
    %4744 = vmatprep.subr.mxu0 0.0
    %4745 = vmatpush2.msra.mxu0 0.0
    %4746 = vmatprep.subr.mxu0 0.0
    %4747 = vmatpush2.msra.mxu0 0.0
    %4748 = vmatprep.subr.mxu0 0.0
    %4749 = vmatpush2.msra.mxu0 0.0
    %4750 = vmatprep.subr.mxu0 0.0
    %4751 = vmatpush2.msra.mxu0 0.0
    %4752 = vmatprep.subr.mxu0 0.0
    %4753 = vmatpush2.msra.mxu0 0.0
    %4754 = vmatprep.subr.mxu0 0.0
    %4755 = vmatpush2.msra.mxu0 0.0
    %4756 = vmatprep.mubr.f32.mxu0 0.0
    %4757 = vmatmul.mubr.f32.gmra.mxu0 %v4687
    %v4758 = vpop.f32.mrf.mxu0
    %v4759 = vadd.f32 0.0, %v4758
    %v4760 = vpop.f32.mrf.mxu0
    %v4761 = vadd.f32 0.0, %v4760
    %4762 = vdwg.mxu0
    %4763 = vmatprep.subr.mxu0 %v4165
    %4764 = vmatpush1.msra.mxu0 %v4164
    %4765 = vmatprep.subr.mxu0 %v4161
    %4766 = vmatpush1.msra.mxu0 %v4160
    %4767 = vmatprep.subr.mxu0 %v4157
    %4768 = vmatpush1.msra.mxu0 %v4156
    %4769 = vmatprep.subr.mxu0 %v4153
    %4770 = vmatpush1.msra.mxu0 %v4152
    %4771 = vmatprep.subr.mxu0 %v4149
    %4772 = vmatpush1.msra.mxu0 %v4148
    %4773 = vmatprep.subr.mxu0 %v4145
    %4774 = vmatpush1.msra.mxu0 %v4144
    %4775 = vmatprep.subr.mxu0 %v4141
    %4776 = vmatpush1.msra.mxu0 %v4140
    %4777 = vmatprep.subr.mxu0 %v4137
    %4778 = vmatpush1.msra.mxu0 %v4136
    %4779 = vmatprep.subr.mxu0 %v4133
    %4780 = vmatpush1.msra.mxu0 %v4132
    %4781 = vmatprep.subr.mxu0 %v4129
    %4782 = vmatpush1.msra.mxu0 %v4128
    %4783 = vmatprep.subr.mxu0 %v4125
    %4784 = vmatpush1.msra.mxu0 %v4124
    %4785 = vmatprep.subr.mxu0 %v4121
    %4786 = vmatpush1.msra.mxu0 %v4120
    %4787 = vmatprep.subr.mxu0 %v4117
    %4788 = vmatpush1.msra.mxu0 %v4116
    %4789 = vmatprep.subr.mxu0 %v4113
    %4790 = vmatpush1.msra.mxu0 %v4112
    %4791 = vmatprep.subr.mxu0 %v4109
    %4792 = vmatpush1.msra.mxu0 %v4108
    %4793 = vmatprep.subr.mxu0 %v4105
    %4794 = vmatpush1.msra.mxu0 %v4104
    %4795 = vmatprep.subr.mxu0 0.0
    %4796 = vmatpush2.msra.mxu0 0.0
    %4797 = vmatprep.subr.mxu0 0.0
    %4798 = vmatpush2.msra.mxu0 0.0
    %4799 = vmatprep.subr.mxu0 0.0
    %4800 = vmatpush2.msra.mxu0 0.0
    %4801 = vmatprep.subr.mxu0 0.0
    %4802 = vmatpush2.msra.mxu0 0.0
    %4803 = vmatprep.subr.mxu0 0.0
    %4804 = vmatpush2.msra.mxu0 0.0
    %4805 = vmatprep.subr.mxu0 0.0
    %4806 = vmatpush2.msra.mxu0 0.0
    %4807 = vmatprep.subr.mxu0 0.0
    %4808 = vmatpush2.msra.mxu0 0.0
    %4809 = vmatprep.subr.mxu0 0.0
    %4810 = vmatpush2.msra.mxu0 0.0
    %4811 = vmatprep.subr.mxu0 0.0
    %4812 = vmatpush2.msra.mxu0 0.0
    %4813 = vmatprep.subr.mxu0 0.0
    %4814 = vmatpush2.msra.mxu0 0.0
    %4815 = vmatprep.subr.mxu0 0.0
    %4816 = vmatpush2.msra.mxu0 0.0
    %4817 = vmatprep.subr.mxu0 0.0
    %4818 = vmatpush2.msra.mxu0 0.0
    %4819 = vmatprep.subr.mxu0 0.0
    %4820 = vmatpush2.msra.mxu0 0.0
    %4821 = vmatprep.subr.mxu0 0.0
    %4822 = vmatpush2.msra.mxu0 0.0
    %4823 = vmatprep.subr.mxu0 0.0
    %4824 = vmatpush2.msra.mxu0 0.0
    %4825 = vmatprep.subr.mxu0 0.0
    %4826 = vmatpush2.msra.mxu0 0.0
    %4827 = vmatprep.mubr.f32.mxu0 0.0
    %4828 = vmatmul.mubr.f32.gmra.mxu0 %v4687
    %v4829 = vpop.f32.mrf.mxu0
    %v4830 = vadd.f32 0.0, %v4829
    %v4831 = vpop.f32.mrf.mxu0
    %v4832 = vadd.f32 0.0, %v4831
    %4833 = vdwg.mxu0
    %v4834 = vadd.f32 %v4688, %v4759
    %v4835 = vadd.f32 %v4689, %v4761
    %v4836 = vadd.f32 %v4690, %v4830
    %v4837 = vadd.f32 %v4691, %v4832
    %v4838 = vxor.u32 %v4834, 2147483648
    %v4839 = vxor.u32 %v4835, 2147483648
    %v4840 = vxor.u32 %v4836, 2147483648
    %v4841 = vmul.f32 %v4838, 1.442695
    %v4842 = vpow.pop %v4841
    %v4843 = vmul.f32 %v4839, 1.442695
    %v4844 = vpow.pop %v4843
    %v4845 = vmul.f32 %v4840, 1.442695
    %v4846 = vpow.pop %v4845
    %v4847 = vadd.f32 %v4842, 1.0
    %v4848 = vadd.f32 %v4844, 1.0
    %v4849 = vadd.f32 %v4846, 1.0
    %v4850 = vrcp.pop %v4847
    %v4851 = vmul.f32 1.0, %v4850
    %v4852 = vrcp.pop %v4848
    %v4853 = vmul.f32 1.0, %v4852
    %v4854 = vrcp.pop %v4849
    %v4855 = vmul.f32 1.0, %v4854
    %v4856 = vtanh.pop %v4837
    %v4857 = vmul.f32 %v4853, %v4685
    %v4858 = vmul.f32 %v4851, %v4856
    %v4859 = vadd.f32 %v4857, %v4858
    %v4860 = vtanh.pop %v4859
    %v4861 = vmul.f32 %v4855, %v4860
    %v4862 = vld [vmem:[%s1226] sm:$0xff]
    %v4863 = vld [vmem:[%s1226 + $0x8] sm:$0xff]
    %v4864 = vld [vmem:[%s1226 + $0x10] sm:$0xff]
    %v4865 = vld [vmem:[%s1226 + $0x18] sm:$0xff]
    %4866 = vmatprep.subr.mxu0 %v4163
    %4867 = vmatpush1.msra.mxu0 %v4162
    %4868 = vmatprep.subr.mxu0 %v4159
    %4869 = vmatpush1.msra.mxu0 %v4158
    %4870 = vmatprep.subr.mxu0 %v4155
    %4871 = vmatpush1.msra.mxu0 %v4154
    %4872 = vmatprep.subr.mxu0 %v4151
    %4873 = vmatpush1.msra.mxu0 %v4150
    %4874 = vmatprep.subr.mxu0 %v4147
    %4875 = vmatpush1.msra.mxu0 %v4146
    %4876 = vmatprep.subr.mxu0 %v4143
    %4877 = vmatpush1.msra.mxu0 %v4142
    %4878 = vmatprep.subr.mxu0 %v4139
    %4879 = vmatpush1.msra.mxu0 %v4138
    %4880 = vmatprep.subr.mxu0 %v4135
    %4881 = vmatpush1.msra.mxu0 %v4134
    %4882 = vmatprep.subr.mxu0 %v4131
    %4883 = vmatpush1.msra.mxu0 %v4130
    %4884 = vmatprep.subr.mxu0 %v4127
    %4885 = vmatpush1.msra.mxu0 %v4126
    %4886 = vmatprep.subr.mxu0 %v4123
    %4887 = vmatpush1.msra.mxu0 %v4122
    %4888 = vmatprep.subr.mxu0 %v4119
    %4889 = vmatpush1.msra.mxu0 %v4118
    %4890 = vmatprep.subr.mxu0 %v4115
    %4891 = vmatpush1.msra.mxu0 %v4114
    %4892 = vmatprep.subr.mxu0 %v4111
    %4893 = vmatpush1.msra.mxu0 %v4110
    %4894 = vmatprep.subr.mxu0 %v4107
    %4895 = vmatpush1.msra.mxu0 %v4106
    %4896 = vmatprep.subr.mxu0 %v4103
    %4897 = vmatpush1.msra.mxu0 %v4102
    %4898 = vmatprep.subr.mxu0 0.0
    %4899 = vmatpush2.msra.mxu0 0.0
    %4900 = vmatprep.subr.mxu0 0.0
    %4901 = vmatpush2.msra.mxu0 0.0
    %4902 = vmatprep.subr.mxu0 0.0
    %4903 = vmatpush2.msra.mxu0 0.0
    %4904 = vmatprep.subr.mxu0 0.0
    %4905 = vmatpush2.msra.mxu0 0.0
    %4906 = vmatprep.subr.mxu0 0.0
    %4907 = vmatpush2.msra.mxu0 0.0
    %4908 = vmatprep.subr.mxu0 0.0
    %4909 = vmatpush2.msra.mxu0 0.0
    %4910 = vmatprep.subr.mxu0 0.0
    %4911 = vmatpush2.msra.mxu0 0.0
    %4912 = vmatprep.subr.mxu0 0.0
    %4913 = vmatpush2.msra.mxu0 0.0
    %4914 = vmatprep.subr.mxu0 0.0
    %4915 = vmatpush2.msra.mxu0 0.0
    %4916 = vmatprep.subr.mxu0 0.0
    %4917 = vmatpush2.msra.mxu0 0.0
    %4918 = vmatprep.subr.mxu0 0.0
    %4919 = vmatpush2.msra.mxu0 0.0
    %4920 = vmatprep.subr.mxu0 0.0
    %4921 = vmatpush2.msra.mxu0 0.0
    %4922 = vmatprep.subr.mxu0 0.0
    %4923 = vmatpush2.msra.mxu0 0.0
    %4924 = vmatprep.subr.mxu0 0.0
    %4925 = vmatpush2.msra.mxu0 0.0
    %4926 = vmatprep.subr.mxu0 0.0
    %4927 = vmatpush2.msra.mxu0 0.0
    %4928 = vmatprep.subr.mxu0 0.0
    %4929 = vmatpush2.msra.mxu0 0.0
    %4930 = vmatprep.mubr.f32.mxu0 0.0
    %4931 = vmatmul.mubr.f32.gmra.mxu0 %v4861
    %v4932 = vpop.f32.mrf.mxu0
    %v4933 = vadd.f32 0.0, %v4932
    %v4934 = vpop.f32.mrf.mxu0
    %v4935 = vadd.f32 0.0, %v4934
    %4936 = vdwg.mxu0
    %4937 = vmatprep.subr.mxu0 %v4165
    %4938 = vmatpush1.msra.mxu0 %v4164
    %4939 = vmatprep.subr.mxu0 %v4161
    %4940 = vmatpush1.msra.mxu0 %v4160
    %4941 = vmatprep.subr.mxu0 %v4157
    %4942 = vmatpush1.msra.mxu0 %v4156
    %4943 = vmatprep.subr.mxu0 %v4153
    %4944 = vmatpush1.msra.mxu0 %v4152
    %4945 = vmatprep.subr.mxu0 %v4149
    %4946 = vmatpush1.msra.mxu0 %v4148
    %4947 = vmatprep.subr.mxu0 %v4145
    %4948 = vmatpush1.msra.mxu0 %v4144
    %4949 = vmatprep.subr.mxu0 %v4141
    %4950 = vmatpush1.msra.mxu0 %v4140
    %4951 = vmatprep.subr.mxu0 %v4137
    %4952 = vmatpush1.msra.mxu0 %v4136
    %4953 = vmatprep.subr.mxu0 %v4133
    %4954 = vmatpush1.msra.mxu0 %v4132
    %4955 = vmatprep.subr.mxu0 %v4129
    %4956 = vmatpush1.msra.mxu0 %v4128
    %4957 = vmatprep.subr.mxu0 %v4125
    %4958 = vmatpush1.msra.mxu0 %v4124
    %4959 = vmatprep.subr.mxu0 %v4121
    %4960 = vmatpush1.msra.mxu0 %v4120
    %4961 = vmatprep.subr.mxu0 %v4117
    %4962 = vmatpush1.msra.mxu0 %v4116
    %4963 = vmatprep.subr.mxu0 %v4113
    %4964 = vmatpush1.msra.mxu0 %v4112
    %4965 = vmatprep.subr.mxu0 %v4109
    %4966 = vmatpush1.msra.mxu0 %v4108
    %4967 = vmatprep.subr.mxu0 %v4105
    %4968 = vmatpush1.msra.mxu0 %v4104
    %4969 = vmatprep.subr.mxu0 0.0
    %4970 = vmatpush2.msra.mxu0 0.0
    %4971 = vmatprep.subr.mxu0 0.0
    %4972 = vmatpush2.msra.mxu0 0.0
    %4973 = vmatprep.subr.mxu0 0.0
    %4974 = vmatpush2.msra.mxu0 0.0
    %4975 = vmatprep.subr.mxu0 0.0
    %4976 = vmatpush2.msra.mxu0 0.0
    %4977 = vmatprep.subr.mxu0 0.0
    %4978 = vmatpush2.msra.mxu0 0.0
    %4979 = vmatprep.subr.mxu0 0.0
    %4980 = vmatpush2.msra.mxu0 0.0
    %4981 = vmatprep.subr.mxu0 0.0
    %4982 = vmatpush2.msra.mxu0 0.0
    %4983 = vmatprep.subr.mxu0 0.0
    %4984 = vmatpush2.msra.mxu0 0.0
    %4985 = vmatprep.subr.mxu0 0.0
    %4986 = vmatpush2.msra.mxu0 0.0
    %4987 = vmatprep.subr.mxu0 0.0
    %4988 = vmatpush2.msra.mxu0 0.0
    %4989 = vmatprep.subr.mxu0 0.0
    %4990 = vmatpush2.msra.mxu0 0.0
    %4991 = vmatprep.subr.mxu0 0.0
    %4992 = vmatpush2.msra.mxu0 0.0
    %4993 = vmatprep.subr.mxu0 0.0
    %4994 = vmatpush2.msra.mxu0 0.0
    %4995 = vmatprep.subr.mxu0 0.0
    %4996 = vmatpush2.msra.mxu0 0.0
    %4997 = vmatprep.subr.mxu0 0.0
    %4998 = vmatpush2.msra.mxu0 0.0
    %4999 = vmatprep.subr.mxu0 0.0
    %5000 = vmatpush2.msra.mxu0 0.0
    %5001 = vmatprep.mubr.f32.mxu0 0.0
    %5002 = vmatmul.mubr.f32.gmra.mxu0 %v4861
    %v5003 = vpop.f32.mrf.mxu0
    %v5004 = vadd.f32 0.0, %v5003
    %v5005 = vpop.f32.mrf.mxu0
    %v5006 = vadd.f32 0.0, %v5005
    %5007 = vdwg.mxu0
    %v5008 = vadd.f32 %v4862, %v4933
    %v5009 = vadd.f32 %v4863, %v4935
    %v5010 = vadd.f32 %v4864, %v5004
    %v5011 = vadd.f32 %v4865, %v5006
    %v5012 = vxor.u32 %v5008, 2147483648
    %v5013 = vxor.u32 %v5009, 2147483648
    %v5014 = vxor.u32 %v5010, 2147483648
    %v5015 = vmul.f32 %v5012, 1.442695
    %v5016 = vpow.pop %v5015
    %v5017 = vmul.f32 %v5013, 1.442695
    %v5018 = vpow.pop %v5017
    %v5019 = vmul.f32 %v5014, 1.442695
    %v5020 = vpow.pop %v5019
    %v5021 = vadd.f32 %v5016, 1.0
    %v5022 = vadd.f32 %v5018, 1.0
    %v5023 = vadd.f32 %v5020, 1.0
    %v5024 = vrcp.pop %v5021
    %v5025 = vmul.f32 1.0, %v5024
    %v5026 = vrcp.pop %v5022
    %v5027 = vmul.f32 1.0, %v5026
    %v5028 = vrcp.pop %v5023
    %v5029 = vmul.f32 1.0, %v5028
    %v5030 = vtanh.pop %v5011
    %v5031 = vmul.f32 %v5027, %v4859
    %v5032 = vmul.f32 %v5025, %v5030
    %v5033 = vadd.f32 %v5031, %v5032
    %v5034 = vtanh.pop %v5033
    %v5035 = vmul.f32 %v5029, %v5034
    %v5036 = vld [vmem:[%s1403] sm:$0xff]
    %v5037 = vld [vmem:[%s1403 + $0x8] sm:$0xff]
    %v5038 = vld [vmem:[%s1403 + $0x10] sm:$0xff]
    %v5039 = vld [vmem:[%s1403 + $0x18] sm:$0xff]
    %5040 = vmatprep.subr.mxu0 %v4163
    %5041 = vmatpush1.msra.mxu0 %v4162
    %5042 = vmatprep.subr.mxu0 %v4159
    %5043 = vmatpush1.msra.mxu0 %v4158
    %5044 = vmatprep.subr.mxu0 %v4155
    %5045 = vmatpush1.msra.mxu0 %v4154
    %5046 = vmatprep.subr.mxu0 %v4151
    %5047 = vmatpush1.msra.mxu0 %v4150
    %5048 = vmatprep.subr.mxu0 %v4147
    %5049 = vmatpush1.msra.mxu0 %v4146
    %5050 = vmatprep.subr.mxu0 %v4143
    %5051 = vmatpush1.msra.mxu0 %v4142
    %5052 = vmatprep.subr.mxu0 %v4139
    %5053 = vmatpush1.msra.mxu0 %v4138
    %5054 = vmatprep.subr.mxu0 %v4135
    %5055 = vmatpush1.msra.mxu0 %v4134
    %5056 = vmatprep.subr.mxu0 %v4131
    %5057 = vmatpush1.msra.mxu0 %v4130
    %5058 = vmatprep.subr.mxu0 %v4127
    %5059 = vmatpush1.msra.mxu0 %v4126
    %5060 = vmatprep.subr.mxu0 %v4123
    %5061 = vmatpush1.msra.mxu0 %v4122
    %5062 = vmatprep.subr.mxu0 %v4119
    %5063 = vmatpush1.msra.mxu0 %v4118
    %5064 = vmatprep.subr.mxu0 %v4115
    %5065 = vmatpush1.msra.mxu0 %v4114
    %5066 = vmatprep.subr.mxu0 %v4111
    %5067 = vmatpush1.msra.mxu0 %v4110
    %5068 = vmatprep.subr.mxu0 %v4107
    %5069 = vmatpush1.msra.mxu0 %v4106
    %5070 = vmatprep.subr.mxu0 %v4103
    %5071 = vmatpush1.msra.mxu0 %v4102
    %5072 = vmatprep.subr.mxu0 0.0
    %5073 = vmatpush2.msra.mxu0 0.0
    %5074 = vmatprep.subr.mxu0 0.0
    %5075 = vmatpush2.msra.mxu0 0.0
    %5076 = vmatprep.subr.mxu0 0.0
    %5077 = vmatpush2.msra.mxu0 0.0
    %5078 = vmatprep.subr.mxu0 0.0
    %5079 = vmatpush2.msra.mxu0 0.0
    %5080 = vmatprep.subr.mxu0 0.0
    %5081 = vmatpush2.msra.mxu0 0.0
    %5082 = vmatprep.subr.mxu0 0.0
    %5083 = vmatpush2.msra.mxu0 0.0
    %5084 = vmatprep.subr.mxu0 0.0
    %5085 = vmatpush2.msra.mxu0 0.0
    %5086 = vmatprep.subr.mxu0 0.0
    %5087 = vmatpush2.msra.mxu0 0.0
    %5088 = vmatprep.subr.mxu0 0.0
    %5089 = vmatpush2.msra.mxu0 0.0
    %5090 = vmatprep.subr.mxu0 0.0
    %5091 = vmatpush2.msra.mxu0 0.0
    %5092 = vmatprep.subr.mxu0 0.0
    %5093 = vmatpush2.msra.mxu0 0.0
    %5094 = vmatprep.subr.mxu0 0.0
    %5095 = vmatpush2.msra.mxu0 0.0
    %5096 = vmatprep.subr.mxu0 0.0
    %5097 = vmatpush2.msra.mxu0 0.0
    %5098 = vmatprep.subr.mxu0 0.0
    %5099 = vmatpush2.msra.mxu0 0.0
    %5100 = vmatprep.subr.mxu0 0.0
    %5101 = vmatpush2.msra.mxu0 0.0
    %5102 = vmatprep.subr.mxu0 0.0
    %5103 = vmatpush2.msra.mxu0 0.0
    %5104 = vmatprep.mubr.f32.mxu0 0.0
    %5105 = vmatmul.mubr.f32.gmra.mxu0 %v5035
    %v5106 = vpop.f32.mrf.mxu0
    %v5107 = vadd.f32 0.0, %v5106
    %v5108 = vpop.f32.mrf.mxu0
    %v5109 = vadd.f32 0.0, %v5108
    %5110 = vdwg.mxu0
    %5111 = vmatprep.subr.mxu0 %v4165
    %5112 = vmatpush1.msra.mxu0 %v4164
    %5113 = vmatprep.subr.mxu0 %v4161
    %5114 = vmatpush1.msra.mxu0 %v4160
    %5115 = vmatprep.subr.mxu0 %v4157
    %5116 = vmatpush1.msra.mxu0 %v4156
    %5117 = vmatprep.subr.mxu0 %v4153
    %5118 = vmatpush1.msra.mxu0 %v4152
    %5119 = vmatprep.subr.mxu0 %v4149
    %5120 = vmatpush1.msra.mxu0 %v4148
    %5121 = vmatprep.subr.mxu0 %v4145
    %5122 = vmatpush1.msra.mxu0 %v4144
    %5123 = vmatprep.subr.mxu0 %v4141
    %5124 = vmatpush1.msra.mxu0 %v4140
    %5125 = vmatprep.subr.mxu0 %v4137
    %5126 = vmatpush1.msra.mxu0 %v4136
    %5127 = vmatprep.subr.mxu0 %v4133
    %5128 = vmatpush1.msra.mxu0 %v4132
    %5129 = vmatprep.subr.mxu0 %v4129
    %5130 = vmatpush1.msra.mxu0 %v4128
    %5131 = vmatprep.subr.mxu0 %v4125
    %5132 = vmatpush1.msra.mxu0 %v4124
    %5133 = vmatprep.subr.mxu0 %v4121
    %5134 = vmatpush1.msra.mxu0 %v4120
    %5135 = vmatprep.subr.mxu0 %v4117
    %5136 = vmatpush1.msra.mxu0 %v4116
    %5137 = vmatprep.subr.mxu0 %v4113
    %5138 = vmatpush1.msra.mxu0 %v4112
    %5139 = vmatprep.subr.mxu0 %v4109
    %5140 = vmatpush1.msra.mxu0 %v4108
    %5141 = vmatprep.subr.mxu0 %v4105
    %5142 = vmatpush1.msra.mxu0 %v4104
    %5143 = vmatprep.subr.mxu0 0.0
    %5144 = vmatpush2.msra.mxu0 0.0
    %5145 = vmatprep.subr.mxu0 0.0
    %5146 = vmatpush2.msra.mxu0 0.0
    %5147 = vmatprep.subr.mxu0 0.0
    %5148 = vmatpush2.msra.mxu0 0.0
    %5149 = vmatprep.subr.mxu0 0.0
    %5150 = vmatpush2.msra.mxu0 0.0
    %5151 = vmatprep.subr.mxu0 0.0
    %5152 = vmatpush2.msra.mxu0 0.0
    %5153 = vmatprep.subr.mxu0 0.0
    %5154 = vmatpush2.msra.mxu0 0.0
    %5155 = vmatprep.subr.mxu0 0.0
    %5156 = vmatpush2.msra.mxu0 0.0
    %5157 = vmatprep.subr.mxu0 0.0
    %5158 = vmatpush2.msra.mxu0 0.0
    %5159 = vmatprep.subr.mxu0 0.0
    %5160 = vmatpush2.msra.mxu0 0.0
    %5161 = vmatprep.subr.mxu0 0.0
    %5162 = vmatpush2.msra.mxu0 0.0
    %5163 = vmatprep.subr.mxu0 0.0
    %5164 = vmatpush2.msra.mxu0 0.0
    %5165 = vmatprep.subr.mxu0 0.0
    %5166 = vmatpush2.msra.mxu0 0.0
    %5167 = vmatprep.subr.mxu0 0.0
    %5168 = vmatpush2.msra.mxu0 0.0
    %5169 = vmatprep.subr.mxu0 0.0
    %5170 = vmatpush2.msra.mxu0 0.0
    %5171 = vmatprep.subr.mxu0 0.0
    %5172 = vmatpush2.msra.mxu0 0.0
    %5173 = vmatprep.subr.mxu0 0.0
    %5174 = vmatpush2.msra.mxu0 0.0
    %5175 = vmatprep.mubr.f32.mxu0 0.0
    %5176 = vmatmul.mubr.f32.gmra.mxu0 %v5035
    %v5177 = vpop.f32.mrf.mxu0
    %v5178 = vadd.f32 0.0, %v5177
    %v5179 = vpop.f32.mrf.mxu0
    %v5180 = vadd.f32 0.0, %v5179
    %5181 = vdwg.mxu0
    %v5182 = vadd.f32 %v5036, %v5107
    %v5183 = vadd.f32 %v5037, %v5109
    %v5184 = vadd.f32 %v5038, %v5178
    %v5185 = vadd.f32 %v5039, %v5180
    %v5186 = vxor.u32 %v5182, 2147483648
    %v5187 = vxor.u32 %v5183, 2147483648
    %v5188 = vxor.u32 %v5184, 2147483648
    %v5189 = vmul.f32 %v5186, 1.442695
    %v5190 = vpow.pop %v5189
    %v5191 = vmul.f32 %v5187, 1.442695
    %v5192 = vpow.pop %v5191
    %v5193 = vmul.f32 %v5188, 1.442695
    %v5194 = vpow.pop %v5193
    %v5195 = vadd.f32 %v5190, 1.0
    %v5196 = vadd.f32 %v5192, 1.0
    %v5197 = vadd.f32 %v5194, 1.0
    %v5198 = vrcp.pop %v5195
    %v5199 = vmul.f32 1.0, %v5198
    %v5200 = vrcp.pop %v5196
    %v5201 = vmul.f32 1.0, %v5200
    %v5202 = vrcp.pop %v5197
    %v5203 = vmul.f32 1.0, %v5202
    %v5204 = vtanh.pop %v5185
    %v5205 = vmul.f32 %v5201, %v5033
    %v5206 = vmul.f32 %v5199, %v5204
    %v5207 = vadd.f32 %v5205, %v5206
    %v5208 = vtanh.pop %v5207
    %v5209 = vmul.f32 %v5203, %v5208
    %v5210 = vld [vmem:[%s1580] sm:$0xff]
    %v5211 = vld [vmem:[%s1580 + $0x8] sm:$0xff]
    %v5212 = vld [vmem:[%s1580 + $0x10] sm:$0xff]
    %v5213 = vld [vmem:[%s1580 + $0x18] sm:$0xff]
    %5214 = vmatprep.subr.mxu0 %v4163
    %5215 = vmatpush1.msra.mxu0 %v4162
    %5216 = vmatprep.subr.mxu0 %v4159
    %5217 = vmatpush1.msra.mxu0 %v4158
    %5218 = vmatprep.subr.mxu0 %v4155
    %5219 = vmatpush1.msra.mxu0 %v4154
    %5220 = vmatprep.subr.mxu0 %v4151
    %5221 = vmatpush1.msra.mxu0 %v4150
    %5222 = vmatprep.subr.mxu0 %v4147
    %5223 = vmatpush1.msra.mxu0 %v4146
    %5224 = vmatprep.subr.mxu0 %v4143
    %5225 = vmatpush1.msra.mxu0 %v4142
    %5226 = vmatprep.subr.mxu0 %v4139
    %5227 = vmatpush1.msra.mxu0 %v4138
    %5228 = vmatprep.subr.mxu0 %v4135
    %5229 = vmatpush1.msra.mxu0 %v4134
    %5230 = vmatprep.subr.mxu0 %v4131
    %5231 = vmatpush1.msra.mxu0 %v4130
    %5232 = vmatprep.subr.mxu0 %v4127
    %5233 = vmatpush1.msra.mxu0 %v4126
    %5234 = vmatprep.subr.mxu0 %v4123
    %5235 = vmatpush1.msra.mxu0 %v4122
    %5236 = vmatprep.subr.mxu0 %v4119
    %5237 = vmatpush1.msra.mxu0 %v4118
    %5238 = vmatprep.subr.mxu0 %v4115
    %5239 = vmatpush1.msra.mxu0 %v4114
    %5240 = vmatprep.subr.mxu0 %v4111
    %5241 = vmatpush1.msra.mxu0 %v4110
    %5242 = vmatprep.subr.mxu0 %v4107
    %5243 = vmatpush1.msra.mxu0 %v4106
    %5244 = vmatprep.subr.mxu0 %v4103
    %5245 = vmatpush1.msra.mxu0 %v4102
    %5246 = vmatprep.subr.mxu0 0.0
    %5247 = vmatpush2.msra.mxu0 0.0
    %5248 = vmatprep.subr.mxu0 0.0
    %5249 = vmatpush2.msra.mxu0 0.0
    %5250 = vmatprep.subr.mxu0 0.0
    %5251 = vmatpush2.msra.mxu0 0.0
    %5252 = vmatprep.subr.mxu0 0.0
    %5253 = vmatpush2.msra.mxu0 0.0
    %5254 = vmatprep.subr.mxu0 0.0
    %5255 = vmatpush2.msra.mxu0 0.0
    %5256 = vmatprep.subr.mxu0 0.0
    %5257 = vmatpush2.msra.mxu0 0.0
    %5258 = vmatprep.subr.mxu0 0.0
    %5259 = vmatpush2.msra.mxu0 0.0
    %5260 = vmatprep.subr.mxu0 0.0
    %5261 = vmatpush2.msra.mxu0 0.0
    %5262 = vmatprep.subr.mxu0 0.0
    %5263 = vmatpush2.msra.mxu0 0.0
    %5264 = vmatprep.subr.mxu0 0.0
    %5265 = vmatpush2.msra.mxu0 0.0
    %5266 = vmatprep.subr.mxu0 0.0
    %5267 = vmatpush2.msra.mxu0 0.0
    %5268 = vmatprep.subr.mxu0 0.0
    %5269 = vmatpush2.msra.mxu0 0.0
    %5270 = vmatprep.subr.mxu0 0.0
    %5271 = vmatpush2.msra.mxu0 0.0
    %5272 = vmatprep.subr.mxu0 0.0
    %5273 = vmatpush2.msra.mxu0 0.0
    %5274 = vmatprep.subr.mxu0 0.0
    %5275 = vmatpush2.msra.mxu0 0.0
    %5276 = vmatprep.subr.mxu0 0.0
    %5277 = vmatpush2.msra.mxu0 0.0
    %5278 = vmatprep.mubr.f32.mxu0 0.0
    %5279 = vmatmul.mubr.f32.gmra.mxu0 %v5209
    %v5280 = vpop.f32.mrf.mxu0
    %v5281 = vadd.f32 0.0, %v5280
    %v5282 = vpop.f32.mrf.mxu0
    %v5283 = vadd.f32 0.0, %v5282
    %5284 = vdwg.mxu0
    %5285 = vmatprep.subr.mxu0 %v4165
    %5286 = vmatpush1.msra.mxu0 %v4164
    %5287 = vmatprep.subr.mxu0 %v4161
    %5288 = vmatpush1.msra.mxu0 %v4160
    %5289 = vmatprep.subr.mxu0 %v4157
    %5290 = vmatpush1.msra.mxu0 %v4156
    %5291 = vmatprep.subr.mxu0 %v4153
    %5292 = vmatpush1.msra.mxu0 %v4152
    %5293 = vmatprep.subr.mxu0 %v4149
    %5294 = vmatpush1.msra.mxu0 %v4148
    %5295 = vmatprep.subr.mxu0 %v4145
    %5296 = vmatpush1.msra.mxu0 %v4144
    %5297 = vmatprep.subr.mxu0 %v4141
    %5298 = vmatpush1.msra.mxu0 %v4140
    %5299 = vmatprep.subr.mxu0 %v4137
    %5300 = vmatpush1.msra.mxu0 %v4136
    %5301 = vmatprep.subr.mxu0 %v4133
    %5302 = vmatpush1.msra.mxu0 %v4132
    %5303 = vmatprep.subr.mxu0 %v4129
    %5304 = vmatpush1.msra.mxu0 %v4128
    %5305 = vmatprep.subr.mxu0 %v4125
    %5306 = vmatpush1.msra.mxu0 %v4124
    %5307 = vmatprep.subr.mxu0 %v4121
    %5308 = vmatpush1.msra.mxu0 %v4120
    %5309 = vmatprep.subr.mxu0 %v4117
    %5310 = vmatpush1.msra.mxu0 %v4116
    %5311 = vmatprep.subr.mxu0 %v4113
    %5312 = vmatpush1.msra.mxu0 %v4112
    %5313 = vmatprep.subr.mxu0 %v4109
    %5314 = vmatpush1.msra.mxu0 %v4108
    %5315 = vmatprep.subr.mxu0 %v4105
    %5316 = vmatpush1.msra.mxu0 %v4104
    %5317 = vmatprep.subr.mxu0 0.0
    %5318 = vmatpush2.msra.mxu0 0.0
    %5319 = vmatprep.subr.mxu0 0.0
    %5320 = vmatpush2.msra.mxu0 0.0
    %5321 = vmatprep.subr.mxu0 0.0
    %5322 = vmatpush2.msra.mxu0 0.0
    %5323 = vmatprep.subr.mxu0 0.0
    %5324 = vmatpush2.msra.mxu0 0.0
    %5325 = vmatprep.subr.mxu0 0.0
    %5326 = vmatpush2.msra.mxu0 0.0
    %5327 = vmatprep.subr.mxu0 0.0
    %5328 = vmatpush2.msra.mxu0 0.0
    %5329 = vmatprep.subr.mxu0 0.0
    %5330 = vmatpush2.msra.mxu0 0.0
    %5331 = vmatprep.subr.mxu0 0.0
    %5332 = vmatpush2.msra.mxu0 0.0
    %5333 = vmatprep.subr.mxu0 0.0
    %5334 = vmatpush2.msra.mxu0 0.0
    %5335 = vmatprep.subr.mxu0 0.0
    %5336 = vmatpush2.msra.mxu0 0.0
    %5337 = vmatprep.subr.mxu0 0.0
    %5338 = vmatpush2.msra.mxu0 0.0
    %5339 = vmatprep.subr.mxu0 0.0
    %5340 = vmatpush2.msra.mxu0 0.0
    %5341 = vmatprep.subr.mxu0 0.0
    %5342 = vmatpush2.msra.mxu0 0.0
    %5343 = vmatprep.subr.mxu0 0.0
    %5344 = vmatpush2.msra.mxu0 0.0
    %5345 = vmatprep.subr.mxu0 0.0
    %5346 = vmatpush2.msra.mxu0 0.0
    %5347 = vmatprep.subr.mxu0 0.0
    %5348 = vmatpush2.msra.mxu0 0.0
    %5349 = vmatprep.mubr.f32.mxu0 0.0
    %5350 = vmatmul.mubr.f32.gmra.mxu0 %v5209
    %v5351 = vpop.f32.mrf.mxu0
    %v5352 = vadd.f32 0.0, %v5351
    %v5353 = vpop.f32.mrf.mxu0
    %v5354 = vadd.f32 0.0, %v5353
    %5355 = vdwg.mxu0
    %v5356 = vadd.f32 %v5210, %v5281
    %v5357 = vadd.f32 %v5211, %v5283
    %v5358 = vadd.f32 %v5212, %v5352
    %v5359 = vadd.f32 %v5213, %v5354
    %v5360 = vxor.u32 %v5356, 2147483648
    %v5361 = vxor.u32 %v5357, 2147483648
    %v5362 = vxor.u32 %v5358, 2147483648
    %v5363 = vmul.f32 %v5360, 1.442695
    %v5364 = vpow.pop %v5363
    %v5365 = vmul.f32 %v5361, 1.442695
    %v5366 = vpow.pop %v5365
    %v5367 = vmul.f32 %v5362, 1.442695
    %v5368 = vpow.pop %v5367
    %v5369 = vadd.f32 %v5364, 1.0
    %v5370 = vadd.f32 %v5366, 1.0
    %v5371 = vadd.f32 %v5368, 1.0
    %v5372 = vrcp.pop %v5369
    %v5373 = vmul.f32 1.0, %v5372
    %v5374 = vrcp.pop %v5370
    %v5375 = vmul.f32 1.0, %v5374
    %v5376 = vrcp.pop %v5371
    %v5377 = vmul.f32 1.0, %v5376
    %v5378 = vtanh.pop %v5359
    %v5379 = vmul.f32 %v5375, %v5207
    %v5380 = vmul.f32 %v5373, %v5378
    %v5381 = vadd.f32 %v5379, %v5380
    %v5382 = vtanh.pop %v5381
    %v5383 = vmul.f32 %v5377, %v5382
    %v5384 = vld [vmem:[%s1757] sm:$0xff]
    %v5385 = vld [vmem:[%s1757 + $0x8] sm:$0xff]
    %v5386 = vld [vmem:[%s1757 + $0x10] sm:$0xff]
    %v5387 = vld [vmem:[%s1757 + $0x18] sm:$0xff]
    %5388 = vmatprep.subr.mxu0 %v4163
    %5389 = vmatpush1.msra.mxu0 %v4162
    %5390 = vmatprep.subr.mxu0 %v4159
    %5391 = vmatpush1.msra.mxu0 %v4158
    %5392 = vmatprep.subr.mxu0 %v4155
    %5393 = vmatpush1.msra.mxu0 %v4154
    %5394 = vmatprep.subr.mxu0 %v4151
    %5395 = vmatpush1.msra.mxu0 %v4150
    %5396 = vmatprep.subr.mxu0 %v4147
    %5397 = vmatpush1.msra.mxu0 %v4146
    %5398 = vmatprep.subr.mxu0 %v4143
    %5399 = vmatpush1.msra.mxu0 %v4142
    %5400 = vmatprep.subr.mxu0 %v4139
    %5401 = vmatpush1.msra.mxu0 %v4138
    %5402 = vmatprep.subr.mxu0 %v4135
    %5403 = vmatpush1.msra.mxu0 %v4134
    %5404 = vmatprep.subr.mxu0 %v4131
    %5405 = vmatpush1.msra.mxu0 %v4130
    %5406 = vmatprep.subr.mxu0 %v4127
    %5407 = vmatpush1.msra.mxu0 %v4126
    %5408 = vmatprep.subr.mxu0 %v4123
    %5409 = vmatpush1.msra.mxu0 %v4122
    %5410 = vmatprep.subr.mxu0 %v4119
    %5411 = vmatpush1.msra.mxu0 %v4118
    %5412 = vmatprep.subr.mxu0 %v4115
    %5413 = vmatpush1.msra.mxu0 %v4114
    %5414 = vmatprep.subr.mxu0 %v4111
    %5415 = vmatpush1.msra.mxu0 %v4110
    %5416 = vmatprep.subr.mxu0 %v4107
    %5417 = vmatpush1.msra.mxu0 %v4106
    %5418 = vmatprep.subr.mxu0 %v4103
    %5419 = vmatpush1.msra.mxu0 %v4102
    %5420 = vmatprep.subr.mxu0 0.0
    %5421 = vmatpush2.msra.mxu0 0.0
    %5422 = vmatprep.subr.mxu0 0.0
    %5423 = vmatpush2.msra.mxu0 0.0
    %5424 = vmatprep.subr.mxu0 0.0
    %5425 = vmatpush2.msra.mxu0 0.0
    %5426 = vmatprep.subr.mxu0 0.0
    %5427 = vmatpush2.msra.mxu0 0.0
    %5428 = vmatprep.subr.mxu0 0.0
    %5429 = vmatpush2.msra.mxu0 0.0
    %5430 = vmatprep.subr.mxu0 0.0
    %5431 = vmatpush2.msra.mxu0 0.0
    %5432 = vmatprep.subr.mxu0 0.0
    %5433 = vmatpush2.msra.mxu0 0.0
    %5434 = vmatprep.subr.mxu0 0.0
    %5435 = vmatpush2.msra.mxu0 0.0
    %5436 = vmatprep.subr.mxu0 0.0
    %5437 = vmatpush2.msra.mxu0 0.0
    %5438 = vmatprep.subr.mxu0 0.0
    %5439 = vmatpush2.msra.mxu0 0.0
    %5440 = vmatprep.subr.mxu0 0.0
    %5441 = vmatpush2.msra.mxu0 0.0
    %5442 = vmatprep.subr.mxu0 0.0
    %5443 = vmatpush2.msra.mxu0 0.0
    %5444 = vmatprep.subr.mxu0 0.0
    %5445 = vmatpush2.msra.mxu0 0.0
    %5446 = vmatprep.subr.mxu0 0.0
    %5447 = vmatpush2.msra.mxu0 0.0
    %5448 = vmatprep.subr.mxu0 0.0
    %5449 = vmatpush2.msra.mxu0 0.0
    %5450 = vmatprep.subr.mxu0 0.0
    %5451 = vmatpush2.msra.mxu0 0.0
    %5452 = vmatprep.mubr.f32.mxu0 0.0
    %5453 = vmatmul.mubr.f32.gmra.mxu0 %v5383
    %v5454 = vpop.f32.mrf.mxu0
    %v5455 = vadd.f32 0.0, %v5454
    %v5456 = vpop.f32.mrf.mxu0
    %v5457 = vadd.f32 0.0, %v5456
    %5458 = vdwg.mxu0
    %5459 = vmatprep.subr.mxu0 %v4165
    %5460 = vmatpush1.msra.mxu0 %v4164
    %5461 = vmatprep.subr.mxu0 %v4161
    %5462 = vmatpush1.msra.mxu0 %v4160
    %5463 = vmatprep.subr.mxu0 %v4157
    %5464 = vmatpush1.msra.mxu0 %v4156
    %5465 = vmatprep.subr.mxu0 %v4153
    %5466 = vmatpush1.msra.mxu0 %v4152
    %5467 = vmatprep.subr.mxu0 %v4149
    %5468 = vmatpush1.msra.mxu0 %v4148
    %5469 = vmatprep.subr.mxu0 %v4145
    %5470 = vmatpush1.msra.mxu0 %v4144
    %5471 = vmatprep.subr.mxu0 %v4141
    %5472 = vmatpush1.msra.mxu0 %v4140
    %5473 = vmatprep.subr.mxu0 %v4137
    %5474 = vmatpush1.msra.mxu0 %v4136
    %5475 = vmatprep.subr.mxu0 %v4133
    %5476 = vmatpush1.msra.mxu0 %v4132
    %5477 = vmatprep.subr.mxu0 %v4129
    %5478 = vmatpush1.msra.mxu0 %v4128
    %5479 = vmatprep.subr.mxu0 %v4125
    %5480 = vmatpush1.msra.mxu0 %v4124
    %5481 = vmatprep.subr.mxu0 %v4121
    %5482 = vmatpush1.msra.mxu0 %v4120
    %5483 = vmatprep.subr.mxu0 %v4117
    %5484 = vmatpush1.msra.mxu0 %v4116
    %5485 = vmatprep.subr.mxu0 %v4113
    %5486 = vmatpush1.msra.mxu0 %v4112
    %5487 = vmatprep.subr.mxu0 %v4109
    %5488 = vmatpush1.msra.mxu0 %v4108
    %5489 = vmatprep.subr.mxu0 %v4105
    %5490 = vmatpush1.msra.mxu0 %v4104
    %5491 = vmatprep.subr.mxu0 0.0
    %5492 = vmatpush2.msra.mxu0 0.0
    %5493 = vmatprep.subr.mxu0 0.0
    %5494 = vmatpush2.msra.mxu0 0.0
    %5495 = vmatprep.subr.mxu0 0.0
    %5496 = vmatpush2.msra.mxu0 0.0
    %5497 = vmatprep.subr.mxu0 0.0
    %5498 = vmatpush2.msra.mxu0 0.0
    %5499 = vmatprep.subr.mxu0 0.0
    %5500 = vmatpush2.msra.mxu0 0.0
    %5501 = vmatprep.subr.mxu0 0.0
    %5502 = vmatpush2.msra.mxu0 0.0
    %5503 = vmatprep.subr.mxu0 0.0
    %5504 = vmatpush2.msra.mxu0 0.0
    %5505 = vmatprep.subr.mxu0 0.0
    %5506 = vmatpush2.msra.mxu0 0.0
    %5507 = vmatprep.subr.mxu0 0.0
    %5508 = vmatpush2.msra.mxu0 0.0
    %5509 = vmatprep.subr.mxu0 0.0
    %5510 = vmatpush2.msra.mxu0 0.0
    %5511 = vmatprep.subr.mxu0 0.0
    %5512 = vmatpush2.msra.mxu0 0.0
    %5513 = vmatprep.subr.mxu0 0.0
    %5514 = vmatpush2.msra.mxu0 0.0
    %5515 = vmatprep.subr.mxu0 0.0
    %5516 = vmatpush2.msra.mxu0 0.0
    %5517 = vmatprep.subr.mxu0 0.0
    %5518 = vmatpush2.msra.mxu0 0.0
    %5519 = vmatprep.subr.mxu0 0.0
    %5520 = vmatpush2.msra.mxu0 0.0
    %5521 = vmatprep.subr.mxu0 0.0
    %5522 = vmatpush2.msra.mxu0 0.0
    %5523 = vmatprep.mubr.f32.mxu0 0.0
    %5524 = vmatmul.mubr.f32.gmra.mxu0 %v5383
    %v5525 = vpop.f32.mrf.mxu0
    %v5526 = vadd.f32 0.0, %v5525
    %v5527 = vpop.f32.mrf.mxu0
    %v5528 = vadd.f32 0.0, %v5527
    %5529 = vdwg.mxu0
    %v5530 = vadd.f32 %v5384, %v5455
    %v5531 = vadd.f32 %v5385, %v5457
    %v5532 = vadd.f32 %v5386, %v5526
    %v5533 = vadd.f32 %v5387, %v5528
    %v5534 = vxor.u32 %v5530, 2147483648
    %v5535 = vxor.u32 %v5531, 2147483648
    %v5536 = vxor.u32 %v5532, 2147483648
    %v5537 = vmul.f32 %v5534, 1.442695
    %v5538 = vpow.pop %v5537
    %v5539 = vmul.f32 %v5535, 1.442695
    %v5540 = vpow.pop %v5539
    %v5541 = vmul.f32 %v5536, 1.442695
    %v5542 = vpow.pop %v5541
    %v5543 = vadd.f32 %v5538, 1.0
    %v5544 = vadd.f32 %v5540, 1.0
    %v5545 = vadd.f32 %v5542, 1.0
    %v5546 = vrcp.pop %v5543
    %v5547 = vmul.f32 1.0, %v5546
    %v5548 = vrcp.pop %v5544
    %v5549 = vmul.f32 1.0, %v5548
    %v5550 = vrcp.pop %v5545
    %v5551 = vmul.f32 1.0, %v5550
    %v5552 = vtanh.pop %v5533
    %v5553 = vmul.f32 %v5549, %v5381
    %v5554 = vmul.f32 %v5547, %v5552
    %v5555 = vadd.f32 %v5553, %v5554
    %v5556 = vtanh.pop %v5555
    %v5557 = vmul.f32 %v5551, %v5556
    %v5558 = vld [vmem:[%s10] sm:$0xff]
    %v5559 = vld [vmem:[%s10 + $0x8] sm:$0xff]
    %v5560 = vld [vmem:[%s10 + $0x10] sm:$0xff]
    %v5561 = vld [vmem:[%s10 + $0x18] sm:$0xff]
    %v5562 = vld [vmem:[%s10 + $0x20] sm:$0xff]
    %v5563 = vld [vmem:[%s10 + $0x28] sm:$0xff]
    %v5564 = vld [vmem:[%s10 + $0x30] sm:$0xff]
    %v5565 = vld [vmem:[%s10 + $0x38] sm:$0xff]
    %v5566 = vld [vmem:[%s10 + $0x40] sm:$0xff]
    %v5567 = vld [vmem:[%s10 + $0x48] sm:$0xff]
    %v5568 = vld [vmem:[%s10 + $0x50] sm:$0xff]
    %v5569 = vld [vmem:[%s10 + $0x58] sm:$0xff]
    %v5570 = vld [vmem:[%s10 + $0x60] sm:$0xff]
    %v5571 = vld [vmem:[%s10 + $0x68] sm:$0xff]
    %v5572 = vld [vmem:[%s10 + $0x70] sm:$0xff]
    %v5573 = vld [vmem:[%s10 + $0x78] sm:$0xff]
    %v5574 = vld [vmem:[%s11] sm:$0x1]
    %v5576 = vlaneseq
    %v5577 = vshrl.u32 %v5576, 7
    %v5578 = vsub.s32 0, %v5577
    %v5579 = vrot.slane %v5574, %v5578
    %5581 = vmatprep.subr.mxu0 0.0
    %5582 = vmatpush1.msra.mxu0 %v5573
    %5583 = vmatprep.subr.mxu0 0.0
    %5584 = vmatpush1.msra.mxu0 %v5572
    %5585 = vmatprep.subr.mxu0 0.0
    %5586 = vmatpush1.msra.mxu0 %v5571
    %5587 = vmatprep.subr.mxu0 0.0
    %5588 = vmatpush1.msra.mxu0 %v5570
    %5589 = vmatprep.subr.mxu0 0.0
    %5590 = vmatpush1.msra.mxu0 %v5569
    %5591 = vmatprep.subr.mxu0 0.0
    %5592 = vmatpush1.msra.mxu0 %v5568
    %5593 = vmatprep.subr.mxu0 0.0
    %5594 = vmatpush1.msra.mxu0 %v5567
    %5595 = vmatprep.subr.mxu0 0.0
    %5596 = vmatpush1.msra.mxu0 %v5566
    %5597 = vmatprep.subr.mxu0 0.0
    %5598 = vmatpush1.msra.mxu0 %v5565
    %5599 = vmatprep.subr.mxu0 0.0
    %5600 = vmatpush1.msra.mxu0 %v5564
    %5601 = vmatprep.subr.mxu0 0.0
    %5602 = vmatpush1.msra.mxu0 %v5563
    %5603 = vmatprep.subr.mxu0 0.0
    %5604 = vmatpush1.msra.mxu0 %v5562
    %5605 = vmatprep.subr.mxu0 0.0
    %5606 = vmatpush1.msra.mxu0 %v5561
    %5607 = vmatprep.subr.mxu0 0.0
    %5608 = vmatpush1.msra.mxu0 %v5560
    %5609 = vmatprep.subr.mxu0 0.0
    %5610 = vmatpush1.msra.mxu0 %v5559
    %5611 = vmatprep.subr.mxu0 0.0
    %5612 = vmatpush1.msra.mxu0 %v5558
    %5613 = vmatprep.subr.mxu0 0.0
    %5614 = vmatpush2.msra.mxu0 0.0
    %5615 = vmatprep.subr.mxu0 0.0
    %5616 = vmatpush2.msra.mxu0 0.0
    %5617 = vmatprep.subr.mxu0 0.0
    %5618 = vmatpush2.msra.mxu0 0.0
    %5619 = vmatprep.subr.mxu0 0.0
    %5620 = vmatpush2.msra.mxu0 0.0
    %5621 = vmatprep.subr.mxu0 0.0
    %5622 = vmatpush2.msra.mxu0 0.0
    %5623 = vmatprep.subr.mxu0 0.0
    %5624 = vmatpush2.msra.mxu0 0.0
    %5625 = vmatprep.subr.mxu0 0.0
    %5626 = vmatpush2.msra.mxu0 0.0
    %5627 = vmatprep.subr.mxu0 0.0
    %5628 = vmatpush2.msra.mxu0 0.0
    %5629 = vmatprep.subr.mxu0 0.0
    %5630 = vmatpush2.msra.mxu0 0.0
    %5631 = vmatprep.subr.mxu0 0.0
    %5632 = vmatpush2.msra.mxu0 0.0
    %5633 = vmatprep.subr.mxu0 0.0
    %5634 = vmatpush2.msra.mxu0 0.0
    %5635 = vmatprep.subr.mxu0 0.0
    %5636 = vmatpush2.msra.mxu0 0.0
    %5637 = vmatprep.subr.mxu0 0.0
    %5638 = vmatpush2.msra.mxu0 0.0
    %5639 = vmatprep.subr.mxu0 0.0
    %5640 = vmatpush2.msra.mxu0 0.0
    %5641 = vmatprep.subr.mxu0 0.0
    %5642 = vmatpush2.msra.mxu0 0.0
    %5643 = vmatprep.subr.mxu0 0.0
    %5644 = vmatpush2.msra.mxu0 0.0
    %5645 = vmatprep.mubr.f32.mxu0 0.0
    %5646 = vmatmul.mubr.f32.gmra.mxu0 %v5557
    %v5647 = vpop.f32.mrf.mxu0
    %v5648 = vadd.f32 %v5579, %v5647
    %v5649 = vpop.f32.mrf.mxu0
    %5650 = vdwg.mxu0
    %v5651 = vmax.f32 %v5648, 0.0
    %v5652 = vld [vmem:[%s12] sm:$0xff]
    %v5653 = vld [vmem:[%s12 + $0x8] sm:$0xff]
    %v5654 = vld [vmem:[%s12 + $0x10] sm:$0xff]
    %v5655 = vld [vmem:[%s12 + $0x18] sm:$0xff]
    %v5656 = vld [vmem:[%s12 + $0x20] sm:$0xff]
    %v5657 = vld [vmem:[%s12 + $0x28] sm:$0xff]
    %v5658 = vld [vmem:[%s12 + $0x30] sm:$0xff]
    %v5659 = vld [vmem:[%s12 + $0x38] sm:$0xff]
    %v5660 = vld [vmem:[%s13] sm:$0x1]
    %v5662 = vlaneseq
    %v5663 = vshrl.u32 %v5662, 7
    %v5664 = vsub.s32 0, %v5663
    %v5665 = vrot.slane %v5660, %v5664
    %vm5667 = vcmask 523264
    %v5669 = vsel %vm5667, %v5651, 0
    %5671 = vmatprep.subr.mxu0 0.0
    %5672 = vmatpush1.msra.mxu0 0.0
    %5673 = vmatprep.subr.mxu0 0.0
    %5674 = vmatpush1.msra.mxu0 0.0
    %5675 = vmatprep.subr.mxu0 0.0
    %5676 = vmatpush1.msra.mxu0 0.0
    %5677 = vmatprep.subr.mxu0 0.0
    %5678 = vmatpush1.msra.mxu0 0.0
    %5679 = vmatprep.subr.mxu0 0.0
    %5680 = vmatpush1.msra.mxu0 0.0
    %5681 = vmatprep.subr.mxu0 0.0
    %5682 = vmatpush1.msra.mxu0 0.0
    %5683 = vmatprep.subr.mxu0 0.0
    %5684 = vmatpush1.msra.mxu0 0.0
    %5685 = vmatprep.subr.mxu0 0.0
    %5686 = vmatpush1.msra.mxu0 0.0
    %5687 = vmatprep.subr.mxu0 0.0
    %5688 = vmatpush1.msra.mxu0 %v5659
    %5689 = vmatprep.subr.mxu0 0.0
    %5690 = vmatpush1.msra.mxu0 %v5658
    %5691 = vmatprep.subr.mxu0 0.0
    %5692 = vmatpush1.msra.mxu0 %v5657
    %5693 = vmatprep.subr.mxu0 0.0
    %5694 = vmatpush1.msra.mxu0 %v5656
    %5695 = vmatprep.subr.mxu0 0.0
    %5696 = vmatpush1.msra.mxu0 %v5655
    %5697 = vmatprep.subr.mxu0 0.0
    %5698 = vmatpush1.msra.mxu0 %v5654
    %5699 = vmatprep.subr.mxu0 0.0
    %5700 = vmatpush1.msra.mxu0 %v5653
    %5701 = vmatprep.subr.mxu0 0.0
    %5702 = vmatpush1.msra.mxu0 %v5652
    %5703 = vmatprep.subr.mxu0 0.0
    %5704 = vmatpush2.msra.mxu0 0.0
    %5705 = vmatprep.subr.mxu0 0.0
    %5706 = vmatpush2.msra.mxu0 0.0
    %5707 = vmatprep.subr.mxu0 0.0
    %5708 = vmatpush2.msra.mxu0 0.0
    %5709 = vmatprep.subr.mxu0 0.0
    %5710 = vmatpush2.msra.mxu0 0.0
    %5711 = vmatprep.subr.mxu0 0.0
    %5712 = vmatpush2.msra.mxu0 0.0
    %5713 = vmatprep.subr.mxu0 0.0
    %5714 = vmatpush2.msra.mxu0 0.0
    %5715 = vmatprep.subr.mxu0 0.0
    %5716 = vmatpush2.msra.mxu0 0.0
    %5717 = vmatprep.subr.mxu0 0.0
    %5718 = vmatpush2.msra.mxu0 0.0
    %5719 = vmatprep.subr.mxu0 0.0
    %5720 = vmatpush2.msra.mxu0 0.0
    %5721 = vmatprep.subr.mxu0 0.0
    %5722 = vmatpush2.msra.mxu0 0.0
    %5723 = vmatprep.subr.mxu0 0.0
    %5724 = vmatpush2.msra.mxu0 0.0
    %5725 = vmatprep.subr.mxu0 0.0
    %5726 = vmatpush2.msra.mxu0 0.0
    %5727 = vmatprep.subr.mxu0 0.0
    %5728 = vmatpush2.msra.mxu0 0.0
    %5729 = vmatprep.subr.mxu0 0.0
    %5730 = vmatpush2.msra.mxu0 0.0
    %5731 = vmatprep.subr.mxu0 0.0
    %5732 = vmatpush2.msra.mxu0 0.0
    %5733 = vmatprep.subr.mxu0 0.0
    %5734 = vmatpush2.msra.mxu0 0.0
    %5735 = vmatprep.mubr.f32.mxu0 0.0
    %5736 = vmatmul.mubr.f32.gmra.mxu0 %v5669
    %v5737 = vpop.f32.mrf.mxu0
    %v5738 = vadd.f32 %v5665, %v5737
    %v5739 = vpop.f32.mrf.mxu0
    %5740 = vdwg.mxu0
    %5741 = vst.msk [vmem:[%s14] sm:$0xff] %vm164, %v5738
    // Predicated region
    $region78: #{traj_lstm_forward.1} parent=1 // pred_check
      _
    $region79: #{traj_lstm_forward.1} parent=1 // pred_check_branch
      %5743 = sbr.rel (0) target = $region81
    $region80: #{traj_lstm_forward.1} parent=1 // pred_region
      _
    $region81: #{traj_lstm_forward.1} parent=1 // pred_fallthru
      _
    // Predicated region
    $region82: #{traj_lstm_forward.1} parent=1 // pred_check
      _
    $region83: #{traj_lstm_forward.1} parent=1 // pred_check_branch
      %5745 = sbr.rel (0) target = $region85
    $region84: #{traj_lstm_forward.1} parent=1 // pred_region
      _
    $region85: #{traj_lstm_forward.1} parent=1 // pred_fallthru
      _
    %5746 = vsyncpa [#allocation5], 1
    %5747 = vsyncpa [#allocation7], 1
    %5748 = vsyncpa [#allocation10], 1

</llo_original>
